<compile_context>
chip_gen: v7x
topology: tpu7x:2x2x1
jax: 0.10.0
libtpu: 0.0.40
codegen_flags: <defaults>
</compile_context>

<pallas_src>
import functools

import numpy as np

import jax
import jax.numpy as jnp
from jax.experimental import pallas as pl
from jax.experimental.pallas import tpu as pltpu

# ------------------------------ static geometry ------------------------------ #
IMG = 28                     # input spatial side
PAD = 2                      # conv1 padding
TAPS = 25                    # 5x5 taps
TAPS_PAD = 32                # taps padded for lane-friendly im2col operand
C1_ROWS = IMG * IMG          # 784 conv1 output positions (row = h*28 + w)
P1_ROWS = 256                # pooled-1 rows (14*14 = 196 valid)
C2_ROWS = 136                # conv2 output rows in 14-wide flat layout (9*14 + 9 + 1)
P2_ROWS = 32                 # pooled-2 rows (5*5 = 25 valid)
CPAD = 128                   # lane-padded channel / feature width
FC_IN = 512                  # 400 real fc1 features padded to 512


def _make_pool_matrix(out_hw, in_w, rows_out, rows_in):
    """Constant matrix P with P[q, p] = 0.25 implementing 2x2/stride-2 avg pooling
    on a row-major flat spatial layout of width `in_w`."""
    P = np.zeros((rows_out, rows_in), np.float32)
    for ph in range(out_hw):
        for pw in range(out_hw):
            q = ph * out_hw + pw
            for dh in range(2):
                for dw in range(2):
                    P[q, (2 * ph + dh) * in_w + (2 * pw + dw)] = 0.25
    return P


_P1_NP = _make_pool_matrix(14, IMG, P1_ROWS, C1_ROWS)   # 28x28 -> 14x14
_P2_NP = _make_pool_matrix(5, 14, P2_ROWS, C2_ROWS)     # 10x10 -> 5x5


# ------------------------------- Pallas kernels ------------------------------ #
def _conv_stage_kernel(x_ref, w1_ref, b1_ref, p1m_ref, w2_ref, b2_ref, p2m_ref,
                       feat_ref, c1_ref, pool1_ref, im2_ref, *, bb):
    """conv1(5x5,pad2)+ReLU+avgpool2 -> conv2(5x5)+ReLU+avgpool2 for bb images.

    x_ref:    (bb, 784, 32) bf16  conv1 im2col (row = h*28+w, col = tap, zero-padded)
    w1_ref:   (32, 128)     bf16  conv1 weights (tap-major, channels lane-padded)
    p1m_ref:  (256, 784)    bf16  pool-1 matrix; w2_ref: (3200, 128); p2m_ref: (32, 136)
    feat_ref: (bb, 32, 128) f32   lane-dense pooled features (row = h*5+w, col = channel)
    """
    b1 = b1_ref[...]                      # (1, 128) f32
    b2 = b2_ref[...]                      # (1, 128) f32
    w1 = w1_ref[...]                      # (32, 128) bf16

    for b in range(bb):                   # statically unrolled over the batch block
        # ---- conv1: one MXU matmul on the pre-built im2col operand ----
        c1 = jnp.dot(x_ref[b], w1, preferred_element_type=jnp.float32)   # (784, 128)
        c1_ref[...] = jnp.maximum(c1 + b1, 0.0).astype(jnp.bfloat16)

        # ---- 2x2 avg-pool fused as an MXU matmul against a constant 0.25 matrix ----
        pool1_ref[...] = jnp.dot(p1m_ref[...], c1_ref[...],
                                 preferred_element_type=jnp.float32)     # (256, 128)

        # ---- conv2: build (136, 3200) im2col from shifted windows, one contraction ----
        for t in range(TAPS):
            off = (t // 5) * 14 + (t % 5)
            im2_ref[:, t * CPAD:(t + 1) * CPAD] = (
                pool1_ref[pl.ds(off, C2_ROWS), :].astype(jnp.bfloat16))
        h2 = jnp.dot(im2_ref[...], w2_ref[...],
                     preferred_element_type=jnp.float32)                 # (136, 128)
        h2 = jnp.maximum(h2 + b2, 0.0).astype(jnp.bfloat16)

        # ---- 2x2 avg-pool as matmul -> lane-dense (32, 128) feature block ----
        feat_ref[b] = jnp.dot(p2m_ref[...], h2,
                              preferred_element_type=jnp.float32)


def _fc_stage_kernel(x_ref, w1_ref, b1_ref, w2_ref, b2_ref, w3_ref, b3_ref, o_ref):
    """fc1+ReLU -> fc2+ReLU -> fc3; bf16 operands, f32 accumulation, lane-dense."""
    h = jnp.dot(x_ref[...], w1_ref[...],
                preferred_element_type=jnp.float32) + b1_ref[...]
    h = jnp.maximum(h, 0.0).astype(jnp.bfloat16)
    h = jnp.dot(h, w2_ref[...],
                preferred_element_type=jnp.float32) + b2_ref[...]
    h = jnp.maximum(h, 0.0).astype(jnp.bfloat16)
    o_ref[...] = jnp.dot(h, w3_ref[...],
                         preferred_element_type=jnp.float32) + b3_ref[...]


# ------------------------------- pallas wrappers ------------------------------ #
def _conv_stage(cols, pp, bb):
    n_pad = cols.shape[0]
    kernel = functools.partial(_conv_stage_kernel, bb=bb)
    return pl.pallas_call(
        kernel,
        out_shape=jax.ShapeDtypeStruct((n_pad, P2_ROWS, CPAD), jnp.float32),
        grid_spec=pltpu.PrefetchScalarGridSpec(
            num_scalar_prefetch=0,
            grid=(n_pad // bb,),
            in_specs=[
                pl.BlockSpec((bb, C1_ROWS, TAPS_PAD), lambda i: (i, 0, 0)),
                pl.BlockSpec((TAPS_PAD, CPAD), lambda i: (0, 0)),
                pl.BlockSpec((1, CPAD), lambda i: (0, 0)),
                pl.BlockSpec((P1_ROWS, C1_ROWS), lambda i: (0, 0)),
                pl.BlockSpec((TAPS * CPAD, CPAD), lambda i: (0, 0)),
                pl.BlockSpec((1, CPAD), lambda i: (0, 0)),
                pl.BlockSpec((P2_ROWS, C2_ROWS), lambda i: (0, 0)),
            ],
            out_specs=pl.BlockSpec((bb, P2_ROWS, CPAD), lambda i: (i, 0, 0)),
            scratch_shapes=[
                pltpu.VMEM((C1_ROWS, CPAD), jnp.bfloat16),        # conv1+ReLU output
                pltpu.VMEM((P1_ROWS, CPAD), jnp.float32),         # pooled-1
                pltpu.VMEM((C2_ROWS, TAPS * CPAD), jnp.bfloat16), # conv2 im2col
            ],
        ),
        compiler_params=pltpu.CompilerParams(
            dimension_semantics=("parallel",)),
    )(cols, pp["w1"], pp["b1"], pp["p1m"], pp["w2"], pp["b2"], pp["p2m"])


def _fc_stage(flat, wf1, bf1, wf2, bf2, wf3, bf3):
    mp = flat.shape[0]
    tm = mp if mp <= 128 else 128          # single grid step for small batches
    return pl.pallas_call(
        _fc_stage_kernel,
        out_shape=jax.ShapeDtypeStruct((mp, CPAD), jnp.float32),
        grid_spec=pltpu.PrefetchScalarGridSpec(
            num_scalar_prefetch=0,
            grid=(mp // tm,),
            in_specs=[
                pl.BlockSpec((tm, FC_IN), lambda i: (i, 0)),
                pl.BlockSpec((FC_IN, CPAD), lambda i: (0, 0)),
                pl.BlockSpec((1, CPAD), lambda i: (0, 0)),
                pl.BlockSpec((CPAD, CPAD), lambda i: (0, 0)),
                pl.BlockSpec((1, CPAD), lambda i: (0, 0)),
                pl.BlockSpec((CPAD, CPAD), lambda i: (0, 0)),
                pl.BlockSpec((1, CPAD), lambda i: (0, 0)),
            ],
            out_specs=pl.BlockSpec((tm, CPAD), lambda i: (i, 0)),
        ),
        compiler_params=pltpu.CompilerParams(
            dimension_semantics=("parallel",)),
    )(flat, wf1, bf1, wf2, bf2, wf3, bf3)


# --------------------------- trace-time data plumbing -------------------------- #
def _pick_bb(n):
    """Images per conv-stage grid step; always keeps >= 2 steps for n >= 2 (v7x 2 TCs)."""
    if n >= 32:
        return 8
    if n >= 8:
        return 4
    if n >= 4:
        return 2
    return 1


def _prep_input(x_nchw, bb):
    """(N,1,28,28) -> lane-dense bf16 conv1 im2col operand (N_pad, 784, 32)."""
    n = x_nchw.shape[0]
    n_pad = ((n + bb - 1) // bb) * bb
    x = x_nchw[:, 0].astype(jnp.float32)
    if n_pad != n:
        x = jnp.pad(x, ((0, n_pad - n), (0, 0), (0, 0)))
    xp = jnp.pad(x, ((0, 0), (PAD, PAD), (PAD, PAD)))             # (N_pad, 32, 32)
    patches = [xp[:, dh:dh + IMG, dw:dw + IMG]
               for dh in range(5) for dw in range(5)]             # 25 x (N_pad, 28, 28)
    cols = jnp.stack(patches, axis=-1).reshape(n_pad, C1_ROWS, TAPS)
    cols = jnp.pad(cols, ((0, 0), (0, 0), (0, TAPS_PAD - TAPS)))  # (N_pad, 784, 32)
    return cols.astype(jnp.bfloat16), n_pad


def _prep_params(p):
    bf16, f32 = jnp.bfloat16, jnp.float32
    # conv1: (CO,1,KH,KW) -> tap-major (25, 6), padded to (32, 128) bf16
    w1 = jnp.transpose(p["conv1_w"][:, 0], (1, 2, 0)).reshape(TAPS, 6)
    w1 = jnp.pad(w1, ((0, TAPS_PAD - TAPS), (0, CPAD - 6))).astype(bf16)
    b1 = jnp.pad(p["conv1_b"], (0, CPAD - 6)).reshape(1, CPAD).astype(f32)
    # conv2: (CO,CI,KH,KW) -> (tap, ci, co) -> flat (25*128, 128) bf16
    w2 = jnp.transpose(p["conv2_w"], (2, 3, 1, 0)).reshape(TAPS, 6, 16)
    w2 = jnp.pad(w2, ((0, 0), (0, CPAD - 6), (0, CPAD - 16)))
    w2 = w2.reshape(TAPS * CPAD, CPAD).astype(bf16)
    b2 = jnp.pad(p["conv2_b"], (0, CPAD - 16)).reshape(1, CPAD).astype(f32)
    # pooling matrices (0.25 is exact in bf16)
    p1m = jnp.asarray(_P1_NP).astype(bf16)
    p2m = jnp.asarray(_P2_NP).astype(bf16)
    # fc1: fold PyTorch C-major Flatten into the compacted (row = r*16 + c) layout
    wf1 = jnp.transpose(p["fc1_w"].reshape(120, 16, TAPS), (2, 1, 0)).reshape(400, 120)
    wf1 = jnp.pad(wf1, ((0, FC_IN - 400), (0, CPAD - 120))).astype(bf16)
    bf1 = jnp.pad(p["fc1_b"], (0, CPAD - 120)).reshape(1, CPAD).astype(f32)
    wf2 = jnp.pad(p["fc2_w"].T, ((0, CPAD - 120), (0, CPAD - 84))).astype(bf16)
    bf2 = jnp.pad(p["fc2_b"], (0, CPAD - 84)).reshape(1, CPAD).astype(f32)
    wf3 = jnp.pad(p["fc3_w"].T, ((0, CPAD - 84), (0, CPAD - 10))).astype(bf16)
    bf3 = jnp.pad(p["fc3_b"], (0, CPAD - 10)).reshape(1, CPAD).astype(f32)
    return dict(w1=w1, b1=b1, w2=w2, b2=b2, p1m=p1m, p2m=p2m,
                wf1=wf1, bf1=bf1, wf2=wf2, bf2=bf2, wf3=wf3, bf3=bf3)


# --------------------------------- full model ---------------------------------- #
def lenet_forward(x_nchw, params):
    n = x_nchw.shape[0]
    pp = _prep_params(params)
    bb = _pick_bb(n)
    cols, _ = _prep_input(x_nchw, bb)

    feats = _conv_stage(cols, pp, bb)                       # (n_pad, 32, 128) f32

    # Compact the 400 real features (25 spatial rows x 16 channels), pad to 512, bf16.
    flat = feats[:n, :25, :16].reshape(n, 400)
    if n <= 128:
        mp = max(8, ((n + 7) // 8) * 8)
    else:
        mp = ((n + 127) // 128) * 128
    flat = jnp.pad(flat, ((0, mp - n), (0, FC_IN - 400))).astype(jnp.bfloat16)

    out = _fc_stage(flat, pp["wf1"], pp["bf1"], pp["wf2"], pp["bf2"],
                    pp["wf3"], pp["bf3"])                   # (mp, 128) f32
    return out[:n, :10]


# ----------------------------- pure-JAX reference ------------------------------ #
def reference_forward(x, p):
    hi = jax.lax.Precision.HIGHEST

    def pool_nchw(y):
        n, c, h, w = y.shape
        return y.reshape(n, c, h // 2, 2, w // 2, 2).mean(axis=(3, 5))

    y = jax.lax.conv_general_dilated(
        x, p["conv1_w"], (1, 1), ((2, 2), (2, 2)),
        dimension_numbers=("NCHW", "OIHW", "NCHW"), precision=hi)
    y = jax.nn.relu(y + p["conv1_b"][None, :, None, None])
    y = pool_nchw(y)
    y = jax.lax.conv_general_dilated(
        y, p["conv2_w"], (1, 1), ((0, 0), (0, 0)),
        dimension_numbers=("NCHW", "OIHW", "NCHW"), precision=hi)
    y = jax.nn.relu(y + p["conv2_b"][None, :, None, None])
    y = pool_nchw(y)
    y = y.reshape(y.shape[0], -1)
    y = jax.nn.relu(jnp.matmul(y, p["fc1_w"].T, precision=hi) + p["fc1_b"])
    y = jax.nn.relu(jnp.matmul(y, p["fc2_w"].T, precision=hi) + p["fc2_b"])
    return jnp.matmul(y, p["fc3_w"].T, precision=hi) + p["fc3_b"]


# -------------------------------- param init ----------------------------------- #
def init_params(key):
    def uniform(k, shape, fan_in):
        s = 1.0 / jnp.sqrt(jnp.float32(fan_in))
        return jax.random.uniform(k, shape, jnp.float32, -s, s)

    ks = jax.random.split(key, 10)
    return {
        "conv1_w": uniform(ks[0], (6, 1, 5, 5), 1 * 5 * 5),
        "conv1_b": uniform(ks[1], (6,), 1 * 5 * 5),
        "conv2_w": uniform(ks[2], (16, 6, 5, 5), 6 * 5 * 5),
        "conv2_b": uniform(ks[3], (16,), 6 * 5 * 5),
        "fc1_w": uniform(ks[4], (120, 400), 400),
        "fc1_b": uniform(ks[5], (120,), 400),
        "fc2_w": uniform(ks[6], (84, 120), 120),
        "fc2_b": uniform(ks[7], (84,), 120),
        "fc3_w": uniform(ks[8], (10, 84), 84),
        "fc3_b": uniform(ks[9], (10,), 84),
    }


if __name__ == "__main__":
    key = jax.random.PRNGKey(0)
    k_params, k_x = jax.random.split(key)
    params = init_params(k_params)
    # LeNet requires 28x28 inputs (Flatten produces 16*5*5 = 400 features).
    x = jax.random.normal(k_x, (2, 1, 28, 28), jnp.float32)

    out = jax.block_until_ready(jax.jit(lenet_forward)(x, params))
    assert out.shape == (2, 10) and out.dtype == jnp.float32

    ref = jax.block_until_ready(jax.jit(reference_forward)(x, params))
    assert jnp.allclose(out, ref, rtol=1e-2, atol=1e-2), (
        f"max abs err {jnp.max(jnp.abs(out - ref))}")

    print("KERNEL_OK")
</pallas_src>

<mosaic_0001>
module attributes {stable_mosaic.version = 11 : i64} {
  func.func @_conv_stage_kernel(%arg0: i32, %arg1: memref<1x784x32xbf16, #tpu.memory_space<vmem>>, %arg2: memref<32x128xbf16, #tpu.memory_space<vmem>>, %arg3: memref<1x128xf32, #tpu.memory_space<vmem>>, %arg4: memref<256x784xbf16, #tpu.memory_space<vmem>>, %arg5: memref<3200x128xbf16, #tpu.memory_space<vmem>>, %arg6: memref<1x128xf32, #tpu.memory_space<vmem>>, %arg7: memref<32x136xbf16, #tpu.memory_space<vmem>>, %arg8: memref<1x32x128xf32, #tpu.memory_space<vmem>>, %arg9: memref<784x128xbf16, #tpu.memory_space<vmem>>, %arg10: memref<256x128xf32, #tpu.memory_space<vmem>>, %arg11: memref<136x3200xbf16, #tpu.memory_space<vmem>>) attributes {dimension_semantics = [#tpu.dimension_semantics<parallel>], iteration_bounds = array<i64: 2>, scalar_prefetch = 0 : i64, scratch_operands = 3 : i64, tpu.core_type = #tpu.core_type<tc>, window_params = [{transform_indices = @transform_0, window_bounds = array<i64: 1, 784, 32>}, {pipeline_mode = #tpu.pipeline_mode<synchronous>, transform_indices = @transform_1, window_bounds = array<i64: 32, 128>}, {pipeline_mode = #tpu.pipeline_mode<synchronous>, transform_indices = @transform_2, window_bounds = array<i64: 1, 128>}, {pipeline_mode = #tpu.pipeline_mode<synchronous>, transform_indices = @transform_3, window_bounds = array<i64: 256, 784>}, {pipeline_mode = #tpu.pipeline_mode<synchronous>, transform_indices = @transform_4, window_bounds = array<i64: 3200, 128>}, {pipeline_mode = #tpu.pipeline_mode<synchronous>, transform_indices = @transform_5, window_bounds = array<i64: 1, 128>}, {pipeline_mode = #tpu.pipeline_mode<synchronous>, transform_indices = @transform_6, window_bounds = array<i64: 32, 136>}, {transform_indices = @transform_7, window_bounds = array<i64: 1, 32, 128>}]} {
    %c0 = arith.constant 0 : index
    %c0_0 = arith.constant 0 : index
    %0 = vector.load %arg3[%c0, %c0_0] : memref<1x128xf32, #tpu.memory_space<vmem>>, vector<1x128xf32>
    %c0_1 = arith.constant 0 : index
    %c0_2 = arith.constant 0 : index
    %1 = vector.load %arg6[%c0_1, %c0_2] : memref<1x128xf32, #tpu.memory_space<vmem>>, vector<1x128xf32>
    %c0_3 = arith.constant 0 : index
    %c0_4 = arith.constant 0 : index
    %2 = vector.load %arg2[%c0_3, %c0_4] : memref<32x128xbf16, #tpu.memory_space<vmem>>, vector<32x128xbf16>
    %c0_5 = arith.constant 0 : index
    %c0_6 = arith.constant 0 : index
    %c0_7 = arith.constant 0 : index
    %3 = vector.load %arg1[%c0_5, %c0_6, %c0_7] : memref<1x784x32xbf16, #tpu.memory_space<vmem>>, vector<1x784x32xbf16>
    %4 = vector.shape_cast %3 : vector<1x784x32xbf16> to vector<784x32xbf16>
    %cst = arith.constant dense<0.000000e+00> : vector<784x128xf32>
    %5 = tpu.matmul %4, %2, %cst {dimension_numbers = #tpu.dot_dimension_numbers<[1], [0], [0], [1], [0, 0, 1, 1], [], []>} : vector<784x32xbf16>, vector<32x128xbf16>, vector<784x128xf32> -> vector<784x128xf32>
    %6 = vector.broadcast %0 : vector<1x128xf32> to vector<784x128xf32>
    %7 = arith.addf %5, %6 : vector<784x128xf32>
    %cst_8 = arith.constant 0.000000e+00 : f32
    %8 = vector.broadcast %cst_8 : f32 to vector<784x128xf32>
    %9 = arith.maximumf %7, %8 : vector<784x128xf32>
    %10 = arith.truncf %9 : vector<784x128xf32> to vector<784x128xbf16>
    %c0_9 = arith.constant 0 : index
    %c0_10 = arith.constant 0 : index
    %11 = vector.load %arg9[%c0_9, %c0_10] : memref<784x128xbf16, #tpu.memory_space<vmem>>, vector<784x128xbf16>
    tpu.vector_store %arg9[%c0_9, %c0_10], %10 {strides = array<i32>} : memref<784x128xbf16, #tpu.memory_space<vmem>>, vector<784x128xbf16>,
    %c0_11 = arith.constant 0 : index
    %c0_12 = arith.constant 0 : index
    %12 = vector.load %arg4[%c0_11, %c0_12] : memref<256x784xbf16, #tpu.memory_space<vmem>>, vector<256x784xbf16>
    %c0_13 = arith.constant 0 : index
    %c0_14 = arith.constant 0 : index
    %13 = vector.load %arg9[%c0_13, %c0_14] : memref<784x128xbf16, #tpu.memory_space<vmem>>, vector<784x128xbf16>
    %cst_15 = arith.constant dense<0.000000e+00> : vector<256x128xf32>
    %14 = tpu.matmul %12, %13, %cst_15 {dimension_numbers = #tpu.dot_dimension_numbers<[1], [0], [0], [1], [0, 0, 1, 1], [], []>} : vector<256x784xbf16>, vector<784x128xbf16>, vector<256x128xf32> -> vector<256x128xf32>
    %c0_16 = arith.constant 0 : index
    %c0_17 = arith.constant 0 : index
    %15 = vector.load %arg10[%c0_16, %c0_17] : memref<256x128xf32, #tpu.memory_space<vmem>>, vector<256x128xf32>
    tpu.vector_store %arg10[%c0_16, %c0_17], %14 {strides = array<i32>} : memref<256x128xf32, #tpu.memory_space<vmem>>, vector<256x128xf32>,
    %c0_18 = arith.constant 0 : index
    %c0_19 = arith.constant 0 : index
    %16 = vector.load %arg10[%c0_18, %c0_19] : memref<256x128xf32, #tpu.memory_space<vmem>>, vector<136x128xf32>
    %17 = arith.truncf %16 : vector<136x128xf32> to vector<136x128xbf16>
    %c0_20 = arith.constant 0 : index
    %c0_21 = arith.constant 0 : index
    %18 = vector.load %arg11[%c0_20, %c0_21] : memref<136x3200xbf16, #tpu.memory_space<vmem>>, vector<136x128xbf16>
    tpu.vector_store %arg11[%c0_20, %c0_21], %17 {strides = array<i32>} : memref<136x3200xbf16, #tpu.memory_space<vmem>>, vector<136x128xbf16>,
    %c1 = arith.constant 1 : index
    %c0_22 = arith.constant 0 : index
    %19 = vector.load %arg10[%c1, %c0_22] : memref<256x128xf32, #tpu.memory_space<vmem>>, vector<136x128xf32>
    %20 = arith.truncf %19 : vector<136x128xf32> to vector<136x128xbf16>
    %c0_23 = arith.constant 0 : index
    %c128 = arith.constant 128 : index
    %21 = vector.load %arg11[%c0_23, %c128] : memref<136x3200xbf16, #tpu.memory_space<vmem>>, vector<136x128xbf16>
    tpu.vector_store %arg11[%c0_23, %c128], %20 {strides = array<i32>} : memref<136x3200xbf16, #tpu.memory_space<vmem>>, vector<136x128xbf16>,
    %c2 = arith.constant 2 : index
    %c0_24 = arith.constant 0 : index
    %22 = vector.load %arg10[%c2, %c0_24] : memref<256x128xf32, #tpu.memory_space<vmem>>, vector<136x128xf32>
    %23 = arith.truncf %22 : vector<136x128xf32> to vector<136x128xbf16>
    %c0_25 = arith.constant 0 : index
    %c256 = arith.constant 256 : index
    %24 = vector.load %arg11[%c0_25, %c256] : memref<136x3200xbf16, #tpu.memory_space<vmem>>, vector<136x128xbf16>
    tpu.vector_store %arg11[%c0_25, %c256], %23 {strides = array<i32>} : memref<136x3200xbf16, #tpu.memory_space<vmem>>, vector<136x128xbf16>,
    %c3 = arith.constant 3 : index
    %c0_26 = arith.constant 0 : index
    %25 = vector.load %arg10[%c3, %c0_26] : memref<256x128xf32, #tpu.memory_space<vmem>>, vector<136x128xf32>
    %26 = arith.truncf %25 : vector<136x128xf32> to vector<136x128xbf16>
    %c0_27 = arith.constant 0 : index
    %c384 = arith.constant 384 : index
    %27 = vector.load %arg11[%c0_27, %c384] : memref<136x3200xbf16, #tpu.memory_space<vmem>>, vector<136x128xbf16>
    tpu.vector_store %arg11[%c0_27, %c384], %26 {strides = array<i32>} : memref<136x3200xbf16, #tpu.memory_space<vmem>>, vector<136x128xbf16>,
    %c4 = arith.constant 4 : index
    %c0_28 = arith.constant 0 : index
    %28 = vector.load %arg10[%c4, %c0_28] : memref<256x128xf32, #tpu.memory_space<vmem>>, vector<136x128xf32>
    %29 = arith.truncf %28 : vector<136x128xf32> to vector<136x128xbf16>
    %c0_29 = arith.constant 0 : index
    %c512 = arith.constant 512 : index
    %30 = vector.load %arg11[%c0_29, %c512] : memref<136x3200xbf16, #tpu.memory_space<vmem>>, vector<136x128xbf16>
    tpu.vector_store %arg11[%c0_29, %c512], %29 {strides = array<i32>} : memref<136x3200xbf16, #tpu.memory_space<vmem>>, vector<136x128xbf16>,
    %c14 = arith.constant 14 : index
    %c0_30 = arith.constant 0 : index
    %31 = vector.load %arg10[%c14, %c0_30] : memref<256x128xf32, #tpu.memory_space<vmem>>, vector<136x128xf32>
    %32 = arith.truncf %31 : vector<136x128xf32> to vector<136x128xbf16>
    %c0_31 = arith.constant 0 : index
    %c640 = arith.constant 640 : index
    %33 = vector.load %arg11[%c0_31, %c640] : memref<136x3200xbf16, #tpu.memory_space<vmem>>, vector<136x128xbf16>
    tpu.vector_store %arg11[%c0_31, %c640], %32 {strides = array<i32>} : memref<136x3200xbf16, #tpu.memory_space<vmem>>, vector<136x128xbf16>,
    %c15 = arith.constant 15 : index
    %c0_32 = arith.constant 0 : index
    %34 = vector.load %arg10[%c15, %c0_32] : memref<256x128xf32, #tpu.memory_space<vmem>>, vector<136x128xf32>
    %35 = arith.truncf %34 : vector<136x128xf32> to vector<136x128xbf16>
    %c0_33 = arith.constant 0 : index
    %c768 = arith.constant 768 : index
    %36 = vector.load %arg11[%c0_33, %c768] : memref<136x3200xbf16, #tpu.memory_space<vmem>>, vector<136x128xbf16>
    tpu.vector_store %arg11[%c0_33, %c768], %35 {strides = array<i32>} : memref<136x3200xbf16, #tpu.memory_space<vmem>>, vector<136x128xbf16>,
    %c16 = arith.constant 16 : index
    %c0_34 = arith.constant 0 : index
    %37 = vector.load %arg10[%c16, %c0_34] : memref<256x128xf32, #tpu.memory_space<vmem>>, vector<136x128xf32>
    %38 = arith.truncf %37 : vector<136x128xf32> to vector<136x128xbf16>
    %c0_35 = arith.constant 0 : index
    %c896 = arith.constant 896 : index
    %39 = vector.load %arg11[%c0_35, %c896] : memref<136x3200xbf16, #tpu.memory_space<vmem>>, vector<136x128xbf16>
    tpu.vector_store %arg11[%c0_35, %c896], %38 {strides = array<i32>} : memref<136x3200xbf16, #tpu.memory_space<vmem>>, vector<136x128xbf16>,
    %c17 = arith.constant 17 : index
    %c0_36 = arith.constant 0 : index
    %40 = vector.load %arg10[%c17, %c0_36] : memref<256x128xf32, #tpu.memory_space<vmem>>, vector<136x128xf32>
    %41 = arith.truncf %40 : vector<136x128xf32> to vector<136x128xbf16>
    %c0_37 = arith.constant 0 : index
    %c1024 = arith.constant 1024 : index
    %42 = vector.load %arg11[%c0_37, %c1024] : memref<136x3200xbf16, #tpu.memory_space<vmem>>, vector<136x128xbf16>
    tpu.vector_store %arg11[%c0_37, %c1024], %41 {strides = array<i32>} : memref<136x3200xbf16, #tpu.memory_space<vmem>>, vector<136x128xbf16>,
    %c18 = arith.constant 18 : index
    %c0_38 = arith.constant 0 : index
    %43 = vector.load %arg10[%c18, %c0_38] : memref<256x128xf32, #tpu.memory_space<vmem>>, vector<136x128xf32>
    %44 = arith.truncf %43 : vector<136x128xf32> to vector<136x128xbf16>
    %c0_39 = arith.constant 0 : index
    %c1152 = arith.constant 1152 : index
    %45 = vector.load %arg11[%c0_39, %c1152] : memref<136x3200xbf16, #tpu.memory_space<vmem>>, vector<136x128xbf16>
    tpu.vector_store %arg11[%c0_39, %c1152], %44 {strides = array<i32>} : memref<136x3200xbf16, #tpu.memory_space<vmem>>, vector<136x128xbf16>,
    %c28 = arith.constant 28 : index
    %c0_40 = arith.constant 0 : index
    %46 = vector.load %arg10[%c28, %c0_40] : memref<256x128xf32, #tpu.memory_space<vmem>>, vector<136x128xf32>
    %47 = arith.truncf %46 : vector<136x128xf32> to vector<136x128xbf16>
    %c0_41 = arith.constant 0 : index
    %c1280 = arith.constant 1280 : index
    %48 = vector.load %arg11[%c0_41, %c1280] : memref<136x3200xbf16, #tpu.memory_space<vmem>>, vector<136x128xbf16>
    tpu.vector_store %arg11[%c0_41, %c1280], %47 {strides = array<i32>} : memref<136x3200xbf16, #tpu.memory_space<vmem>>, vector<136x128xbf16>,
    %c29 = arith.constant 29 : index
    %c0_42 = arith.constant 0 : index
    %49 = vector.load %arg10[%c29, %c0_42] : memref<256x128xf32, #tpu.memory_space<vmem>>, vector<136x128xf32>
    %50 = arith.truncf %49 : vector<136x128xf32> to vector<136x128xbf16>
    %c0_43 = arith.constant 0 : index
    %c1408 = arith.constant 1408 : index
    %51 = vector.load %arg11[%c0_43, %c1408] : memref<136x3200xbf16, #tpu.memory_space<vmem>>, vector<136x128xbf16>
    tpu.vector_store %arg11[%c0_43, %c1408], %50 {strides = array<i32>} : memref<136x3200xbf16, #tpu.memory_space<vmem>>, vector<136x128xbf16>,
    %c30 = arith.constant 30 : index
    %c0_44 = arith.constant 0 : index
    %52 = vector.load %arg10[%c30, %c0_44] : memref<256x128xf32, #tpu.memory_space<vmem>>, vector<136x128xf32>
    %53 = arith.truncf %52 : vector<136x128xf32> to vector<136x128xbf16>
    %c0_45 = arith.constant 0 : index
    %c1536 = arith.constant 1536 : index
    %54 = vector.load %arg11[%c0_45, %c1536] : memref<136x3200xbf16, #tpu.memory_space<vmem>>, vector<136x128xbf16>
    tpu.vector_store %arg11[%c0_45, %c1536], %53 {strides = array<i32>} : memref<136x3200xbf16, #tpu.memory_space<vmem>>, vector<136x128xbf16>,
    %c31 = arith.constant 31 : index
    %c0_46 = arith.constant 0 : index
    %55 = vector.load %arg10[%c31, %c0_46] : memref<256x128xf32, #tpu.memory_space<vmem>>, vector<136x128xf32>
    %56 = arith.truncf %55 : vector<136x128xf32> to vector<136x128xbf16>
    %c0_47 = arith.constant 0 : index
    %c1664 = arith.constant 1664 : index
    %57 = vector.load %arg11[%c0_47, %c1664] : memref<136x3200xbf16, #tpu.memory_space<vmem>>, vector<136x128xbf16>
    tpu.vector_store %arg11[%c0_47, %c1664], %56 {strides = array<i32>} : memref<136x3200xbf16, #tpu.memory_space<vmem>>, vector<136x128xbf16>,
    %c32 = arith.constant 32 : index
    %c0_48 = arith.constant 0 : index
    %58 = vector.load %arg10[%c32, %c0_48] : memref<256x128xf32, #tpu.memory_space<vmem>>, vector<136x128xf32>
    %59 = arith.truncf %58 : vector<136x128xf32> to vector<136x128xbf16>
    %c0_49 = arith.constant 0 : index
    %c1792 = arith.constant 1792 : index
    %60 = vector.load %arg11[%c0_49, %c1792] : memref<136x3200xbf16, #tpu.memory_space<vmem>>, vector<136x128xbf16>
    tpu.vector_store %arg11[%c0_49, %c1792], %59 {strides = array<i32>} : memref<136x3200xbf16, #tpu.memory_space<vmem>>, vector<136x128xbf16>,
    %c42 = arith.constant 42 : index
    %c0_50 = arith.constant 0 : index
    %61 = vector.load %arg10[%c42, %c0_50] : memref<256x128xf32, #tpu.memory_space<vmem>>, vector<136x128xf32>
    %62 = arith.truncf %61 : vector<136x128xf32> to vector<136x128xbf16>
    %c0_51 = arith.constant 0 : index
    %c1920 = arith.constant 1920 : index
    %63 = vector.load %arg11[%c0_51, %c1920] : memref<136x3200xbf16, #tpu.memory_space<vmem>>, vector<136x128xbf16>
    tpu.vector_store %arg11[%c0_51, %c1920], %62 {strides = array<i32>} : memref<136x3200xbf16, #tpu.memory_space<vmem>>, vector<136x128xbf16>,
    %c43 = arith.constant 43 : index
    %c0_52 = arith.constant 0 : index
    %64 = vector.load %arg10[%c43, %c0_52] : memref<256x128xf32, #tpu.memory_space<vmem>>, vector<136x128xf32>
    %65 = arith.truncf %64 : vector<136x128xf32> to vector<136x128xbf16>
    %c0_53 = arith.constant 0 : index
    %c2048 = arith.constant 2048 : index
    %66 = vector.load %arg11[%c0_53, %c2048] : memref<136x3200xbf16, #tpu.memory_space<vmem>>, vector<136x128xbf16>
    tpu.vector_store %arg11[%c0_53, %c2048], %65 {strides = array<i32>} : memref<136x3200xbf16, #tpu.memory_space<vmem>>, vector<136x128xbf16>,
    %c44 = arith.constant 44 : index
    %c0_54 = arith.constant 0 : index
    %67 = vector.load %arg10[%c44, %c0_54] : memref<256x128xf32, #tpu.memory_space<vmem>>, vector<136x128xf32>
    %68 = arith.truncf %67 : vector<136x128xf32> to vector<136x128xbf16>
    %c0_55 = arith.constant 0 : index
    %c2176 = arith.constant 2176 : index
    %69 = vector.load %arg11[%c0_55, %c2176] : memref<136x3200xbf16, #tpu.memory_space<vmem>>, vector<136x128xbf16>
    tpu.vector_store %arg11[%c0_55, %c2176], %68 {strides = array<i32>} : memref<136x3200xbf16, #tpu.memory_space<vmem>>, vector<136x128xbf16>,
    %c45 = arith.constant 45 : index
    %c0_56 = arith.constant 0 : index
    %70 = vector.load %arg10[%c45, %c0_56] : memref<256x128xf32, #tpu.memory_space<vmem>>, vector<136x128xf32>
    %71 = arith.truncf %70 : vector<136x128xf32> to vector<136x128xbf16>
    %c0_57 = arith.constant 0 : index
    %c2304 = arith.constant 2304 : index
    %72 = vector.load %arg11[%c0_57, %c2304] : memref<136x3200xbf16, #tpu.memory_space<vmem>>, vector<136x128xbf16>
    tpu.vector_store %arg11[%c0_57, %c2304], %71 {strides = array<i32>} : memref<136x3200xbf16, #tpu.memory_space<vmem>>, vector<136x128xbf16>,
    %c46 = arith.constant 46 : index
    %c0_58 = arith.constant 0 : index
    %73 = vector.load %arg10[%c46, %c0_58] : memref<256x128xf32, #tpu.memory_space<vmem>>, vector<136x128xf32>
    %74 = arith.truncf %73 : vector<136x128xf32> to vector<136x128xbf16>
    %c0_59 = arith.constant 0 : index
    %c2432 = arith.constant 2432 : index
    %75 = vector.load %arg11[%c0_59, %c2432] : memref<136x3200xbf16, #tpu.memory_space<vmem>>, vector<136x128xbf16>
    tpu.vector_store %arg11[%c0_59, %c2432], %74 {strides = array<i32>} : memref<136x3200xbf16, #tpu.memory_space<vmem>>, vector<136x128xbf16>,
    %c56 = arith.constant 56 : index
    %c0_60 = arith.constant 0 : index
    %76 = vector.load %arg10[%c56, %c0_60] : memref<256x128xf32, #tpu.memory_space<vmem>>, vector<136x128xf32>
    %77 = arith.truncf %76 : vector<136x128xf32> to vector<136x128xbf16>
    %c0_61 = arith.constant 0 : index
    %c2560 = arith.constant 2560 : index
    %78 = vector.load %arg11[%c0_61, %c2560] : memref<136x3200xbf16, #tpu.memory_space<vmem>>, vector<136x128xbf16>
    tpu.vector_store %arg11[%c0_61, %c2560], %77 {strides = array<i32>} : memref<136x3200xbf16, #tpu.memory_space<vmem>>, vector<136x128xbf16>,
    %c57 = arith.constant 57 : index
    %c0_62 = arith.constant 0 : index
    %79 = vector.load %arg10[%c57, %c0_62] : memref<256x128xf32, #tpu.memory_space<vmem>>, vector<136x128xf32>
    %80 = arith.truncf %79 : vector<136x128xf32> to vector<136x128xbf16>
    %c0_63 = arith.constant 0 : index
    %c2688 = arith.constant 2688 : index
    %81 = vector.load %arg11[%c0_63, %c2688] : memref<136x3200xbf16, #tpu.memory_space<vmem>>, vector<136x128xbf16>
    tpu.vector_store %arg11[%c0_63, %c2688], %80 {strides = array<i32>} : memref<136x3200xbf16, #tpu.memory_space<vmem>>, vector<136x128xbf16>,
    %c58 = arith.constant 58 : index
    %c0_64 = arith.constant 0 : index
    %82 = vector.load %arg10[%c58, %c0_64] : memref<256x128xf32, #tpu.memory_space<vmem>>, vector<136x128xf32>
    %83 = arith.truncf %82 : vector<136x128xf32> to vector<136x128xbf16>
    %c0_65 = arith.constant 0 : index
    %c2816 = arith.constant 2816 : index
    %84 = vector.load %arg11[%c0_65, %c2816] : memref<136x3200xbf16, #tpu.memory_space<vmem>>, vector<136x128xbf16>
    tpu.vector_store %arg11[%c0_65, %c2816], %83 {strides = array<i32>} : memref<136x3200xbf16, #tpu.memory_space<vmem>>, vector<136x128xbf16>,
    %c59 = arith.constant 59 : index
    %c0_66 = arith.constant 0 : index
    %85 = vector.load %arg10[%c59, %c0_66] : memref<256x128xf32, #tpu.memory_space<vmem>>, vector<136x128xf32>
    %86 = arith.truncf %85 : vector<136x128xf32> to vector<136x128xbf16>
    %c0_67 = arith.constant 0 : index
    %c2944 = arith.constant 2944 : index
    %87 = vector.load %arg11[%c0_67, %c2944] : memref<136x3200xbf16, #tpu.memory_space<vmem>>, vector<136x128xbf16>
    tpu.vector_store %arg11[%c0_67, %c2944], %86 {strides = array<i32>} : memref<136x3200xbf16, #tpu.memory_space<vmem>>, vector<136x128xbf16>,
    %c60 = arith.constant 60 : index
    %c0_68 = arith.constant 0 : index
    %88 = vector.load %arg10[%c60, %c0_68] : memref<256x128xf32, #tpu.memory_space<vmem>>, vector<136x128xf32>
    %89 = arith.truncf %88 : vector<136x128xf32> to vector<136x128xbf16>
    %c0_69 = arith.constant 0 : index
    %c3072 = arith.constant 3072 : index
    %90 = vector.load %arg11[%c0_69, %c3072] : memref<136x3200xbf16, #tpu.memory_space<vmem>>, vector<136x128xbf16>
    tpu.vector_store %arg11[%c0_69, %c3072], %89 {strides = array<i32>} : memref<136x3200xbf16, #tpu.memory_space<vmem>>, vector<136x128xbf16>,
    %c0_70 = arith.constant 0 : index
    %c0_71 = arith.constant 0 : index
    %91 = vector.load %arg11[%c0_70, %c0_71] : memref<136x3200xbf16, #tpu.memory_space<vmem>>, vector<136x3200xbf16>
    %c0_72 = arith.constant 0 : index
    %c0_73 = arith.constant 0 : index
    %92 = vector.load %arg5[%c0_72, %c0_73] : memref<3200x128xbf16, #tpu.memory_space<vmem>>, vector<3200x128xbf16>
    %cst_74 = arith.constant dense<0.000000e+00> : vector<136x128xf32>
    %93 = tpu.matmul %91, %92, %cst_74 {dimension_numbers = #tpu.dot_dimension_numbers<[1], [0], [0], [1], [0, 0, 1, 1], [], []>} : vector<136x3200xbf16>, vector<3200x128xbf16>, vector<136x128xf32> -> vector<136x128xf32>
    %94 = vector.broadcast %1 : vector<1x128xf32> to vector<136x128xf32>
    %95 = arith.addf %93, %94 : vector<136x128xf32>
    %cst_75 = arith.constant 0.000000e+00 : f32
    %96 = vector.broadcast %cst_75 : f32 to vector<136x128xf32>
    %97 = arith.maximumf %95, %96 : vector<136x128xf32>
    %98 = arith.truncf %97 : vector<136x128xf32> to vector<136x128xbf16>
    %c0_76 = arith.constant 0 : index
    %c0_77 = arith.constant 0 : index
    %99 = vector.load %arg7[%c0_76, %c0_77] : memref<32x136xbf16, #tpu.memory_space<vmem>>, vector<32x136xbf16>
    %cst_78 = arith.constant dense<0.000000e+00> : vector<32x128xf32>
    %100 = tpu.matmul %99, %98, %cst_78 {dimension_numbers = #tpu.dot_dimension_numbers<[1], [0], [0], [1], [0, 0, 1, 1], [], []>} : vector<32x136xbf16>, vector<136x128xbf16>, vector<32x128xf32> -> vector<32x128xf32>
    %c0_79 = arith.constant 0 : index
    %c0_80 = arith.constant 0 : index
    %c0_81 = arith.constant 0 : index
    %101 = vector.load %arg8[%c0_79, %c0_80, %c0_81] : memref<1x32x128xf32, #tpu.memory_space<vmem>>, vector<1x32x128xf32>
    %102 = vector.shape_cast %101 : vector<1x32x128xf32> to vector<32x128xf32>
    %103 = vector.shape_cast %100 : vector<32x128xf32> to vector<1x32x128xf32>
    tpu.vector_store %arg8[%c0_79, %c0_80, %c0_81], %103 {strides = array<i32>} : memref<1x32x128xf32, #tpu.memory_space<vmem>>, vector<1x32x128xf32>,
    return
  }
  func.func @transform_0(%arg0: i32) -> (i32, i32, i32) {
    %c0_i32 = arith.constant 0 : i32
    %c0_i32_0 = arith.constant 0 : i32
    %c0_i32_1 = arith.constant 0 : i32
    return %arg0, %c0_i32, %c0_i32_0 : i32, i32, i32
  }
  func.func @transform_1(%arg0: i32) -> (i32, i32) {
    %c0_i32 = arith.constant 0 : i32
    %c0_i32_0 = arith.constant 0 : i32
    %c0_i32_1 = arith.constant 0 : i32
    return %c0_i32, %c0_i32_0 : i32, i32
  }
  func.func @transform_2(%arg0: i32) -> (i32, i32) {
    %c0_i32 = arith.constant 0 : i32
    %c0_i32_0 = arith.constant 0 : i32
    %c0_i32_1 = arith.constant 0 : i32
    return %c0_i32, %c0_i32_0 : i32, i32
  }
  func.func @transform_3(%arg0: i32) -> (i32, i32) {
    %c0_i32 = arith.constant 0 : i32
    %c0_i32_0 = arith.constant 0 : i32
    %c0_i32_1 = arith.constant 0 : i32
    return %c0_i32, %c0_i32_0 : i32, i32
  }
  func.func @transform_4(%arg0: i32) -> (i32, i32) {
    %c0_i32 = arith.constant 0 : i32
    %c0_i32_0 = arith.constant 0 : i32
    %c0_i32_1 = arith.constant 0 : i32
    return %c0_i32, %c0_i32_0 : i32, i32
  }
  func.func @transform_5(%arg0: i32) -> (i32, i32) {
    %c0_i32 = arith.constant 0 : i32
    %c0_i32_0 = arith.constant 0 : i32
    %c0_i32_1 = arith.constant 0 : i32
    return %c0_i32, %c0_i32_0 : i32, i32
  }
  func.func @transform_6(%arg0: i32) -> (i32, i32) {
    %c0_i32 = arith.constant 0 : i32
    %c0_i32_0 = arith.constant 0 : i32
    %c0_i32_1 = arith.constant 0 : i32
    return %c0_i32, %c0_i32_0 : i32, i32
  }
  func.func @transform_7(%arg0: i32) -> (i32, i32, i32) {
    %c0_i32 = arith.constant 0 : i32
    %c0_i32_0 = arith.constant 0 : i32
    %c0_i32_1 = arith.constant 0 : i32
    return %arg0, %c0_i32, %c0_i32_0 : i32, i32, i32
  }
}

module attributes {stable_mosaic.version = 11 : i64} {
  func.func @_fc_stage_kernel(%arg0: i32, %arg1: memref<8x512xbf16, #tpu.memory_space<vmem>>, %arg2: memref<512x128xbf16, #tpu.memory_space<vmem>>, %arg3: memref<1x128xf32, #tpu.memory_space<vmem>>, %arg4: memref<128x128xbf16, #tpu.memory_space<vmem>>, %arg5: memref<1x128xf32, #tpu.memory_space<vmem>>, %arg6: memref<128x128xbf16, #tpu.memory_space<vmem>>, %arg7: memref<1x128xf32, #tpu.memory_space<vmem>>, %arg8: memref<8x128xf32, #tpu.memory_space<vmem>>) attributes {dimension_semantics = [#tpu.dimension_semantics<parallel>], iteration_bounds = array<i64: 1>, scalar_prefetch = 0 : i64, scratch_operands = 0 : i64, tpu.core_type = #tpu.core_type<tc>, window_params = [{transform_indices = @transform_0, window_bounds = array<i64: 8, 512>}, {pipeline_mode = #tpu.pipeline_mode<synchronous>, transform_indices = @transform_1, window_bounds = array<i64: 512, 128>}, {pipeline_mode = #tpu.pipeline_mode<synchronous>, transform_indices = @transform_2, window_bounds = array<i64: 1, 128>}, {pipeline_mode = #tpu.pipeline_mode<synchronous>, transform_indices = @transform_3, window_bounds = array<i64: 128, 128>}, {pipeline_mode = #tpu.pipeline_mode<synchronous>, transform_indices = @transform_4, window_bounds = array<i64: 1, 128>}, {pipeline_mode = #tpu.pipeline_mode<synchronous>, transform_indices = @transform_5, window_bounds = array<i64: 128, 128>}, {pipeline_mode = #tpu.pipeline_mode<synchronous>, transform_indices = @transform_6, window_bounds = array<i64: 1, 128>}, {transform_indices = @transform_7, window_bounds = array<i64: 8, 128>}]} {
    %c0 = arith.constant 0 : index
    %c0_0 = arith.constant 0 : index
    %0 = vector.load %arg1[%c0, %c0_0] : memref<8x512xbf16, #tpu.memory_space<vmem>>, vector<8x512xbf16>
    %c0_1 = arith.constant 0 : index
    %c0_2 = arith.constant 0 : index
    %1 = vector.load %arg2[%c0_1, %c0_2] : memref<512x128xbf16, #tpu.memory_space<vmem>>, vector<512x128xbf16>
    %cst = arith.constant dense<0.000000e+00> : vector<8x128xf32>
    %2 = tpu.matmul %0, %1, %cst {dimension_numbers = #tpu.dot_dimension_numbers<[1], [0], [0], [1], [0, 0, 1, 1], [], []>} : vector<8x512xbf16>, vector<512x128xbf16>, vector<8x128xf32> -> vector<8x128xf32>
    %c0_3 = arith.constant 0 : index
    %c0_4 = arith.constant 0 : index
    %3 = vector.load %arg3[%c0_3, %c0_4] : memref<1x128xf32, #tpu.memory_space<vmem>>, vector<1x128xf32>
    %4 = vector.broadcast %3 : vector<1x128xf32> to vector<8x128xf32>
    %5 = arith.addf %2, %4 : vector<8x128xf32>
    %cst_5 = arith.constant 0.000000e+00 : f32
    %6 = vector.broadcast %cst_5 : f32 to vector<8x128xf32>
    %7 = arith.maximumf %5, %6 : vector<8x128xf32>
    %8 = arith.truncf %7 : vector<8x128xf32> to vector<8x128xbf16>
    %c0_6 = arith.constant 0 : index
    %c0_7 = arith.constant 0 : index
    %9 = vector.load %arg4[%c0_6, %c0_7] : memref<128x128xbf16, #tpu.memory_space<vmem>>, vector<128x128xbf16>
    %cst_8 = arith.constant dense<0.000000e+00> : vector<8x128xf32>
    %10 = tpu.matmul %8, %9, %cst_8 {dimension_numbers = #tpu.dot_dimension_numbers<[1], [0], [0], [1], [0, 0, 1, 1], [], []>} : vector<8x128xbf16>, vector<128x128xbf16>, vector<8x128xf32> -> vector<8x128xf32>
    %c0_9 = arith.constant 0 : index
    %c0_10 = arith.constant 0 : index
    %11 = vector.load %arg5[%c0_9, %c0_10] : memref<1x128xf32, #tpu.memory_space<vmem>>, vector<1x128xf32>
    %12 = vector.broadcast %11 : vector<1x128xf32> to vector<8x128xf32>
    %13 = arith.addf %10, %12 : vector<8x128xf32>
    %cst_11 = arith.constant 0.000000e+00 : f32
    %14 = vector.broadcast %cst_11 : f32 to vector<8x128xf32>
    %15 = arith.maximumf %13, %14 : vector<8x128xf32>
    %16 = arith.truncf %15 : vector<8x128xf32> to vector<8x128xbf16>
    %c0_12 = arith.constant 0 : index
    %c0_13 = arith.constant 0 : index
    %17 = vector.load %arg6[%c0_12, %c0_13] : memref<128x128xbf16, #tpu.memory_space<vmem>>, vector<128x128xbf16>
    %cst_14 = arith.constant dense<0.000000e+00> : vector<8x128xf32>
    %18 = tpu.matmul %16, %17, %cst_14 {dimension_numbers = #tpu.dot_dimension_numbers<[1], [0], [0], [1], [0, 0, 1, 1], [], []>} : vector<8x128xbf16>, vector<128x128xbf16>, vector<8x128xf32> -> vector<8x128xf32>
    %c0_15 = arith.constant 0 : index
    %c0_16 = arith.constant 0 : index
    %19 = vector.load %arg7[%c0_15, %c0_16] : memref<1x128xf32, #tpu.memory_space<vmem>>, vector<1x128xf32>
    %20 = vector.broadcast %19 : vector<1x128xf32> to vector<8x128xf32>
    %21 = arith.addf %18, %20 : vector<8x128xf32>
    %c0_17 = arith.constant 0 : index
    %c0_18 = arith.constant 0 : index
    %22 = vector.load %arg8[%c0_17, %c0_18] : memref<8x128xf32, #tpu.memory_space<vmem>>, vector<8x128xf32>
    tpu.vector_store %arg8[%c0_17, %c0_18], %21 {strides = array<i32>} : memref<8x128xf32, #tpu.memory_space<vmem>>, vector<8x128xf32>,
    return
  }
  func.func @transform_0(%arg0: i32) -> (i32, i32) {
    %c0_i32 = arith.constant 0 : i32
    %c0_i32_0 = arith.constant 0 : i32
    return %arg0, %c0_i32 : i32, i32
  }
  func.func @transform_1(%arg0: i32) -> (i32, i32) {
    %c0_i32 = arith.constant 0 : i32
    %c0_i32_0 = arith.constant 0 : i32
    %c0_i32_1 = arith.constant 0 : i32
    return %c0_i32, %c0_i32_0 : i32, i32
  }
  func.func @transform_2(%arg0: i32) -> (i32, i32) {
    %c0_i32 = arith.constant 0 : i32
    %c0_i32_0 = arith.constant 0 : i32
    %c0_i32_1 = arith.constant 0 : i32
    return %c0_i32, %c0_i32_0 : i32, i32
  }
  func.func @transform_3(%arg0: i32) -> (i32, i32) {
    %c0_i32 = arith.constant 0 : i32
    %c0_i32_0 = arith.constant 0 : i32
    %c0_i32_1 = arith.constant 0 : i32
    return %c0_i32, %c0_i32_0 : i32, i32
  }
  func.func @transform_4(%arg0: i32) -> (i32, i32) {
    %c0_i32 = arith.constant 0 : i32
    %c0_i32_0 = arith.constant 0 : i32
    %c0_i32_1 = arith.constant 0 : i32
    return %c0_i32, %c0_i32_0 : i32, i32
  }
  func.func @transform_5(%arg0: i32) -> (i32, i32) {
    %c0_i32 = arith.constant 0 : i32
    %c0_i32_0 = arith.constant 0 : i32
    %c0_i32_1 = arith.constant 0 : i32
    return %c0_i32, %c0_i32_0 : i32, i32
  }
  func.func @transform_6(%arg0: i32) -> (i32, i32) {
    %c0_i32 = arith.constant 0 : i32
    %c0_i32_0 = arith.constant 0 : i32
    %c0_i32_1 = arith.constant 0 : i32
    return %c0_i32, %c0_i32_0 : i32, i32
  }
  func.func @transform_7(%arg0: i32) -> (i32, i32) {
    %c0_i32 = arith.constant 0 : i32
    %c0_i32_0 = arith.constant 0 : i32
    return %arg0, %c0_i32 : i32, i32
  }
}

</mosaic_0001>

<llo_original>
// kernel: lenet_forward.3
$region0: #{lenet_forward.3}
  #allocation0 [shape = 'u32[]', space=smem, size = 0x4, offset = 0x4, fixed_abs, tag = 'smem constant byte address 0x4 - core index']
  #allocation1 [shape = 'u32[144,128]{1,0:T(1,128)}', space=vmem, size = 0x12000, scoped, tag = 'internal scratch']
  %s0 = inlined_call_operand.vmem [shape: bf16[8,512], index: 0, kind: input, shape index: {}]
  %s1 = inlined_call_operand.vmem [shape: bf16[512,128], index: 1, kind: input, shape index: {}]
  %s2 = inlined_call_operand.vmem [shape: f32[1,128], index: 2, kind: input, shape index: {}]
  %s3 = inlined_call_operand.vmem [shape: bf16[128,128], index: 3, kind: input, shape index: {}]
  %s4 = inlined_call_operand.vmem [shape: f32[1,128], index: 4, kind: input, shape index: {}]
  %s5 = inlined_call_operand.vmem [shape: bf16[128,128], index: 5, kind: input, shape index: {}]
  %s6 = inlined_call_operand.vmem [shape: f32[1,128], index: 6, kind: input, shape index: {}]
  %s7 = inlined_call_operand.vmem [shape: f32[8,128], index: 7, kind: output, shape index: {}]
  %s8 = sld [smem:[#allocation0]]
  $region38: #{lenet_forward.3} parent=0
    _
  %s10 = ssub.s32 1, %s8
  %s11 = scalar_select 0, %s10, %s8
  // Predicated region
  $region2: #{lenet_forward.3} parent=0 // pred_check
    _
  $region3: #{lenet_forward.3} parent=0 // pred_check_branch
    %13 = sbr.rel (0) target = $region5
  $region4: #{lenet_forward.3} parent=0 // pred_region
    _
  $region5: #{lenet_forward.3} parent=0 // pred_fallthru
    _
  // Predicated region
  $region6: #{lenet_forward.3} parent=0 // pred_check
    _
  $region7: #{lenet_forward.3} parent=0 // pred_check_branch
    %15 = sbr.rel (0) target = $region9
  $region8: #{lenet_forward.3} parent=0 // pred_region
    _
  $region9: #{lenet_forward.3} parent=0 // pred_fallthru
    _
  // Predicated region
  $region10: #{lenet_forward.3} parent=0 // pred_check
    _
  $region11: #{lenet_forward.3} parent=0 // pred_check_branch
    %17 = sbr.rel (0) target = $region13
  $region12: #{lenet_forward.3} parent=0 // pred_region
    _
  $region13: #{lenet_forward.3} parent=0 // pred_fallthru
    _
  // Predicated region
  $region14: #{lenet_forward.3} parent=0 // pred_check
    _
  $region15: #{lenet_forward.3} parent=0 // pred_check_branch
    %19 = sbr.rel (0) target = $region17
  $region16: #{lenet_forward.3} parent=0 // pred_region
    _
  $region17: #{lenet_forward.3} parent=0 // pred_fallthru
    _
  // Predicated region
  $region18: #{lenet_forward.3} parent=0 // pred_check
    _
  $region19: #{lenet_forward.3} parent=0 // pred_check_branch
    %21 = sbr.rel (0) target = $region21
  $region20: #{lenet_forward.3} parent=0 // pred_region
    _
  $region21: #{lenet_forward.3} parent=0 // pred_fallthru
    _
  // Predicated region
  $region22: #{lenet_forward.3} parent=0 // pred_check
    _
  $region23: #{lenet_forward.3} parent=0 // pred_check_branch
    %23 = sbr.rel (0) target = $region25
  $region24: #{lenet_forward.3} parent=0 // pred_region
    _
  $region25: #{lenet_forward.3} parent=0 // pred_fallthru
    _
  // Predicated region
  $region26: #{lenet_forward.3} parent=0 // pred_check
    _
  $region27: #{lenet_forward.3} parent=0 // pred_check_branch
    %25 = sbr.rel (0) target = $region29
  $region28: #{lenet_forward.3} parent=0 // pred_region
    _
  $region29: #{lenet_forward.3} parent=0 // pred_fallthru
    _
  %v27 = vld [vmem:[%s0] sm:$0xff]
  %v28 = vld [vmem:[%s0 + $0x8] sm:$0xff]
  %v29 = vld [vmem:[%s1] sm:$0xf]
  %v30 = vld [vmem:[%s1 + $0x4] sm:$0xf]
  %v31 = vld [vmem:[%s1 + $0x8] sm:$0xf]
  %v32 = vld [vmem:[%s1 + $0xc] sm:$0xf]
  %v33 = vld [vmem:[%s1 + $0x10] sm:$0xf]
  %v34 = vld [vmem:[%s1 + $0x14] sm:$0xf]
  %v35 = vld [vmem:[%s1 + $0x18] sm:$0xf]
  %v36 = vld [vmem:[%s1 + $0x1c] sm:$0xf]
  %v37 = vld [vmem:[%s1 + $0x20] sm:$0xf]
  %v38 = vld [vmem:[%s1 + $0x24] sm:$0xf]
  %v39 = vld [vmem:[%s1 + $0x28] sm:$0xf]
  %v40 = vld [vmem:[%s1 + $0x2c] sm:$0xf]
  %v41 = vld [vmem:[%s1 + $0x30] sm:$0xf]
  %v42 = vld [vmem:[%s1 + $0x34] sm:$0xf]
  %v43 = vld [vmem:[%s1 + $0x38] sm:$0xf]
  %v44 = vld [vmem:[%s1 + $0x3c] sm:$0xf]
  %v45 = vld [vmem:[%s1 + $0x40] sm:$0xf]
  %v46 = vld [vmem:[%s1 + $0x44] sm:$0xf]
  %v47 = vld [vmem:[%s1 + $0x48] sm:$0xf]
  %v48 = vld [vmem:[%s1 + $0x4c] sm:$0xf]
  %v49 = vld [vmem:[%s1 + $0x50] sm:$0xf]
  %v50 = vld [vmem:[%s1 + $0x54] sm:$0xf]
  %v51 = vld [vmem:[%s1 + $0x58] sm:$0xf]
  %v52 = vld [vmem:[%s1 + $0x5c] sm:$0xf]
  %v53 = vld [vmem:[%s1 + $0x60] sm:$0xf]
  %v54 = vld [vmem:[%s1 + $0x64] sm:$0xf]
  %v55 = vld [vmem:[%s1 + $0x68] sm:$0xf]
  %v56 = vld [vmem:[%s1 + $0x6c] sm:$0xf]
  %v57 = vld [vmem:[%s1 + $0x70] sm:$0xf]
  %v58 = vld [vmem:[%s1 + $0x74] sm:$0xf]
  %v59 = vld [vmem:[%s1 + $0x78] sm:$0xf]
  %v60 = vld [vmem:[%s1 + $0x7c] sm:$0xf]
  %v61 = vld [vmem:[%s1 + $0x80] sm:$0xf]
  %v62 = vld [vmem:[%s1 + $0x84] sm:$0xf]
  %v63 = vld [vmem:[%s1 + $0x88] sm:$0xf]
  %v64 = vld [vmem:[%s1 + $0x8c] sm:$0xf]
  %v65 = vld [vmem:[%s1 + $0x90] sm:$0xf]
  %v66 = vld [vmem:[%s1 + $0x94] sm:$0xf]
  %v67 = vld [vmem:[%s1 + $0x98] sm:$0xf]
  %v68 = vld [vmem:[%s1 + $0x9c] sm:$0xf]
  %v69 = vld [vmem:[%s1 + $0xa0] sm:$0xf]
  %v70 = vld [vmem:[%s1 + $0xa4] sm:$0xf]
  %v71 = vld [vmem:[%s1 + $0xa8] sm:$0xf]
  %v72 = vld [vmem:[%s1 + $0xac] sm:$0xf]
  %v73 = vld [vmem:[%s1 + $0xb0] sm:$0xf]
  %v74 = vld [vmem:[%s1 + $0xb4] sm:$0xf]
  %v75 = vld [vmem:[%s1 + $0xb8] sm:$0xf]
  %v76 = vld [vmem:[%s1 + $0xbc] sm:$0xf]
  %v77 = vld [vmem:[%s1 + $0xc0] sm:$0xf]
  %v78 = vld [vmem:[%s1 + $0xc4] sm:$0xf]
  %v79 = vld [vmem:[%s1 + $0xc8] sm:$0xf]
  %v80 = vld [vmem:[%s1 + $0xcc] sm:$0xf]
  %v81 = vld [vmem:[%s1 + $0xd0] sm:$0xf]
  %v82 = vld [vmem:[%s1 + $0xd4] sm:$0xf]
  %v83 = vld [vmem:[%s1 + $0xd8] sm:$0xf]
  %v84 = vld [vmem:[%s1 + $0xdc] sm:$0xf]
  %v85 = vld [vmem:[%s1 + $0xe0] sm:$0xf]
  %v86 = vld [vmem:[%s1 + $0xe4] sm:$0xf]
  %v87 = vld [vmem:[%s1 + $0xe8] sm:$0xf]
  %v88 = vld [vmem:[%s1 + $0xec] sm:$0xf]
  %v89 = vld [vmem:[%s1 + $0xf0] sm:$0xf]
  %v90 = vld [vmem:[%s1 + $0xf4] sm:$0xf]
  %v91 = vld [vmem:[%s1 + $0xf8] sm:$0xf]
  %v92 = vld [vmem:[%s1 + $0xfc] sm:$0xf]
  %v93 = vld [vmem:[%s2] sm:$0x1]
  %v95 = vlaneseq
  %v96 = vshrl.u32 %v95, 7
  %v97 = vsub.s32 0, %v96
  %v98 = vrot.slane %v93, %v97
  %v102 = vunpack.c.l.b16 %v27
  %v103 = vunpack.c.h.b16 %v27
  %v104 = vunpack.c.l.b16 %v28
  %v105 = vunpack.c.h.b16 %v28
  %v106 = vpack.c.b16 %v102, %v102
  %v107 = vpack.c.b16 %v103, %v103
  %v108 = vpack.c.b16 %v104, %v104
  %v109 = vpack.c.b16 %v105, %v105
  %v178 = vunpack.c.l.b16 %v29
  %v179 = vunpack.c.l.b16 %v30
  %v180 = vunpack.c.l.b16 %v31
  %v181 = vunpack.c.l.b16 %v32
  %v182 = vunpack.c.l.b16 %v33
  %v183 = vunpack.c.l.b16 %v34
  %v184 = vunpack.c.l.b16 %v35
  %v185 = vunpack.c.l.b16 %v36
  %v186 = vunpack.c.l.b16 %v37
  %v187 = vunpack.c.l.b16 %v38
  %v188 = vunpack.c.l.b16 %v39
  %v189 = vunpack.c.l.b16 %v40
  %v190 = vunpack.c.l.b16 %v41
  %v191 = vunpack.c.l.b16 %v42
  %v192 = vunpack.c.l.b16 %v43
  %v193 = vunpack.c.l.b16 %v44
  %v194 = vunpack.c.l.b16 %v45
  %v195 = vunpack.c.l.b16 %v46
  %v196 = vunpack.c.l.b16 %v47
  %v197 = vunpack.c.l.b16 %v48
  %v198 = vunpack.c.l.b16 %v49
  %v199 = vunpack.c.l.b16 %v50
  %v200 = vunpack.c.l.b16 %v51
  %v201 = vunpack.c.l.b16 %v52
  %v202 = vunpack.c.l.b16 %v53
  %v203 = vunpack.c.l.b16 %v54
  %v204 = vunpack.c.l.b16 %v55
  %v205 = vunpack.c.l.b16 %v56
  %v206 = vunpack.c.l.b16 %v57
  %v207 = vunpack.c.l.b16 %v58
  %v208 = vunpack.c.l.b16 %v59
  %v209 = vunpack.c.l.b16 %v60
  %v210 = vunpack.c.l.b16 %v61
  %v211 = vunpack.c.l.b16 %v62
  %v212 = vunpack.c.l.b16 %v63
  %v213 = vunpack.c.l.b16 %v64
  %v214 = vunpack.c.l.b16 %v65
  %v215 = vunpack.c.l.b16 %v66
  %v216 = vunpack.c.l.b16 %v67
  %v217 = vunpack.c.l.b16 %v68
  %v218 = vunpack.c.l.b16 %v69
  %v219 = vunpack.c.l.b16 %v70
  %v220 = vunpack.c.l.b16 %v71
  %v221 = vunpack.c.l.b16 %v72
  %v222 = vunpack.c.l.b16 %v73
  %v223 = vunpack.c.l.b16 %v74
  %v224 = vunpack.c.l.b16 %v75
  %v225 = vunpack.c.l.b16 %v76
  %v226 = vunpack.c.l.b16 %v77
  %v227 = vunpack.c.l.b16 %v78
  %v228 = vunpack.c.l.b16 %v79
  %v229 = vunpack.c.l.b16 %v80
  %v230 = vunpack.c.l.b16 %v81
  %v231 = vunpack.c.l.b16 %v82
  %v232 = vunpack.c.l.b16 %v83
  %v233 = vunpack.c.l.b16 %v84
  %v234 = vunpack.c.l.b16 %v85
  %v235 = vunpack.c.l.b16 %v86
  %v236 = vunpack.c.l.b16 %v87
  %v237 = vunpack.c.l.b16 %v88
  %v238 = vunpack.c.l.b16 %v89
  %v239 = vunpack.c.l.b16 %v90
  %v240 = vunpack.c.l.b16 %v91
  %v241 = vunpack.c.l.b16 %v92
  %v242 = vpack.c.b16 %v179, %v178
  %v243 = vpack.c.b16 %v181, %v180
  %v244 = vpack.c.b16 %v183, %v182
  %v245 = vpack.c.b16 %v185, %v184
  %v246 = vpack.c.b16 %v187, %v186
  %v247 = vpack.c.b16 %v189, %v188
  %v248 = vpack.c.b16 %v191, %v190
  %v249 = vpack.c.b16 %v193, %v192
  %v250 = vpack.c.b16 %v195, %v194
  %v251 = vpack.c.b16 %v197, %v196
  %v252 = vpack.c.b16 %v199, %v198
  %v253 = vpack.c.b16 %v201, %v200
  %v254 = vpack.c.b16 %v203, %v202
  %v255 = vpack.c.b16 %v205, %v204
  %v256 = vpack.c.b16 %v207, %v206
  %v257 = vpack.c.b16 %v209, %v208
  %v258 = vpack.c.b16 %v211, %v210
  %v259 = vpack.c.b16 %v213, %v212
  %v260 = vpack.c.b16 %v215, %v214
  %v261 = vpack.c.b16 %v217, %v216
  %v262 = vpack.c.b16 %v219, %v218
  %v263 = vpack.c.b16 %v221, %v220
  %v264 = vpack.c.b16 %v223, %v222
  %v265 = vpack.c.b16 %v225, %v224
  %v266 = vpack.c.b16 %v227, %v226
  %v267 = vpack.c.b16 %v229, %v228
  %v268 = vpack.c.b16 %v231, %v230
  %v269 = vpack.c.b16 %v233, %v232
  %v270 = vpack.c.b16 %v235, %v234
  %v271 = vpack.c.b16 %v237, %v236
  %v272 = vpack.c.b16 %v239, %v238
  %v273 = vpack.c.b16 %v241, %v240
  %306 = vmatprep.subr.bf16.mxu0 0
  %307 = vmatpush1.bf16.msra.mxu0 %v242
  %308 = vmatprep.subr.bf16.mxu0 0
  %309 = vmatpush1.bf16.msra.mxu0 %v243
  %310 = vmatprep.subr.bf16.mxu0 0
  %311 = vmatpush1.bf16.msra.mxu0 %v244
  %312 = vmatprep.subr.bf16.mxu0 0
  %313 = vmatpush1.bf16.msra.mxu0 %v245
  %314 = vmatprep.subr.bf16.mxu0 0
  %315 = vmatpush1.bf16.msra.mxu0 %v246
  %316 = vmatprep.subr.bf16.mxu0 0
  %317 = vmatpush1.bf16.msra.mxu0 %v247
  %318 = vmatprep.subr.bf16.mxu0 0
  %319 = vmatpush1.bf16.msra.mxu0 %v248
  %320 = vmatprep.subr.bf16.mxu0 0
  %321 = vmatpush1.bf16.msra.mxu0 %v249
  %322 = vmatprep.subr.bf16.mxu0 0
  %323 = vmatpush1.bf16.msra.mxu0 %v250
  %324 = vmatprep.subr.bf16.mxu0 0
  %325 = vmatpush1.bf16.msra.mxu0 %v251
  %326 = vmatprep.subr.bf16.mxu0 0
  %327 = vmatpush1.bf16.msra.mxu0 %v252
  %328 = vmatprep.subr.bf16.mxu0 0
  %329 = vmatpush1.bf16.msra.mxu0 %v253
  %330 = vmatprep.subr.bf16.mxu0 0
  %331 = vmatpush1.bf16.msra.mxu0 %v254
  %332 = vmatprep.subr.bf16.mxu0 0
  %333 = vmatpush1.bf16.msra.mxu0 %v255
  %334 = vmatprep.subr.bf16.mxu0 0
  %335 = vmatpush1.bf16.msra.mxu0 %v256
  %336 = vmatprep.subr.bf16.mxu0 0
  %337 = vmatpush1.bf16.msra.mxu0 %v257
  %338 = vmatprep.mubr.bf16.mxu0 %v107
  %339 = vmatmul.mubr.bf16.gmra.mrb[0].mxu0 %v106
  %v340 = vpop.f32.mrb[0].mxu0
  %v341 = vadd.f32 %v98, %v340
  %v342 = vpop.f32.mrb[0].mxu0
  %v343 = vpop.f32.mrb[0].mxu0
  %v344 = vpop.f32.mrb[0].mxu0
  %345 = vdwg.mxu0
  %346 = vmatprep.subr.bf16.mxu0 0
  %347 = vmatpush1.bf16.msra.mxu0 %v258
  %348 = vmatprep.subr.bf16.mxu0 0
  %349 = vmatpush1.bf16.msra.mxu0 %v259
  %350 = vmatprep.subr.bf16.mxu0 0
  %351 = vmatpush1.bf16.msra.mxu0 %v260
  %352 = vmatprep.subr.bf16.mxu0 0
  %353 = vmatpush1.bf16.msra.mxu0 %v261
  %354 = vmatprep.subr.bf16.mxu0 0
  %355 = vmatpush1.bf16.msra.mxu0 %v262
  %356 = vmatprep.subr.bf16.mxu0 0
  %357 = vmatpush1.bf16.msra.mxu0 %v263
  %358 = vmatprep.subr.bf16.mxu0 0
  %359 = vmatpush1.bf16.msra.mxu0 %v264
  %360 = vmatprep.subr.bf16.mxu0 0
  %361 = vmatpush1.bf16.msra.mxu0 %v265
  %362 = vmatprep.subr.bf16.mxu0 0
  %363 = vmatpush1.bf16.msra.mxu0 %v266
  %364 = vmatprep.subr.bf16.mxu0 0
  %365 = vmatpush1.bf16.msra.mxu0 %v267
  %366 = vmatprep.subr.bf16.mxu0 0
  %367 = vmatpush1.bf16.msra.mxu0 %v268
  %368 = vmatprep.subr.bf16.mxu0 0
  %369 = vmatpush1.bf16.msra.mxu0 %v269
  %370 = vmatprep.subr.bf16.mxu0 0
  %371 = vmatpush1.bf16.msra.mxu0 %v270
  %372 = vmatprep.subr.bf16.mxu0 0
  %373 = vmatpush1.bf16.msra.mxu0 %v271
  %374 = vmatprep.subr.bf16.mxu0 0
  %375 = vmatpush1.bf16.msra.mxu0 %v272
  %376 = vmatprep.subr.bf16.mxu0 0
  %377 = vmatpush1.bf16.msra.mxu0 %v273
  %378 = vmatprep.mubr.bf16.mxu0 %v109
  %379 = vmatmul.mubr.bf16.gmra.mrb[0].mxu0 %v108
  %v380 = vpop.f32.mrb[0].mxu0
  %v381 = vadd.f32 %v341, %v380
  %v382 = vpop.f32.mrb[0].mxu0
  %v383 = vpop.f32.mrb[0].mxu0
  %v384 = vpop.f32.mrb[0].mxu0
  %385 = vdwg.mxu0
  %v386 = vmax.f32 %v381, 0.0
  %v387 = vpack.c.bf16 %v386, %v386
  %v388 = vld [vmem:[%s3] sm:$0xf]
  %v389 = vld [vmem:[%s3 + $0x4] sm:$0xf]
  %v390 = vld [vmem:[%s3 + $0x8] sm:$0xf]
  %v391 = vld [vmem:[%s3 + $0xc] sm:$0xf]
  %v392 = vld [vmem:[%s3 + $0x10] sm:$0xf]
  %v393 = vld [vmem:[%s3 + $0x14] sm:$0xf]
  %v394 = vld [vmem:[%s3 + $0x18] sm:$0xf]
  %v395 = vld [vmem:[%s3 + $0x1c] sm:$0xf]
  %v396 = vld [vmem:[%s3 + $0x20] sm:$0xf]
  %v397 = vld [vmem:[%s3 + $0x24] sm:$0xf]
  %v398 = vld [vmem:[%s3 + $0x28] sm:$0xf]
  %v399 = vld [vmem:[%s3 + $0x2c] sm:$0xf]
  %v400 = vld [vmem:[%s3 + $0x30] sm:$0xf]
  %v401 = vld [vmem:[%s3 + $0x34] sm:$0xf]
  %v402 = vld [vmem:[%s3 + $0x38] sm:$0xf]
  %v403 = vld [vmem:[%s3 + $0x3c] sm:$0xf]
  %v404 = vld [vmem:[%s4] sm:$0x1]
  %v406 = vlaneseq
  %v407 = vshrl.u32 %v406, 7
  %v408 = vsub.s32 0, %v407
  %v409 = vrot.slane %v404, %v408
  %v427 = vunpack.c.l.b16 %v388
  %v428 = vunpack.c.l.b16 %v389
  %v429 = vunpack.c.l.b16 %v390
  %v430 = vunpack.c.l.b16 %v391
  %v431 = vunpack.c.l.b16 %v392
  %v432 = vunpack.c.l.b16 %v393
  %v433 = vunpack.c.l.b16 %v394
  %v434 = vunpack.c.l.b16 %v395
  %v435 = vunpack.c.l.b16 %v396
  %v436 = vunpack.c.l.b16 %v397
  %v437 = vunpack.c.l.b16 %v398
  %v438 = vunpack.c.l.b16 %v399
  %v439 = vunpack.c.l.b16 %v400
  %v440 = vunpack.c.l.b16 %v401
  %v441 = vunpack.c.l.b16 %v402
  %v442 = vunpack.c.l.b16 %v403
  %v443 = vpack.c.b16 %v428, %v427
  %v444 = vpack.c.b16 %v430, %v429
  %v445 = vpack.c.b16 %v432, %v431
  %v446 = vpack.c.b16 %v434, %v433
  %v447 = vpack.c.b16 %v436, %v435
  %v448 = vpack.c.b16 %v438, %v437
  %v449 = vpack.c.b16 %v440, %v439
  %v450 = vpack.c.b16 %v442, %v441
  %459 = vmatprep.subr.bf16.mxu0 0
  %460 = vmatpush1.bf16.msra.mxu0 %v443
  %461 = vmatprep.subr.bf16.mxu0 0
  %462 = vmatpush1.bf16.msra.mxu0 %v444
  %463 = vmatprep.subr.bf16.mxu0 0
  %464 = vmatpush1.bf16.msra.mxu0 %v445
  %465 = vmatprep.subr.bf16.mxu0 0
  %466 = vmatpush1.bf16.msra.mxu0 %v446
  %467 = vmatprep.subr.bf16.mxu0 0
  %468 = vmatpush1.bf16.msra.mxu0 %v447
  %469 = vmatprep.subr.bf16.mxu0 0
  %470 = vmatpush1.bf16.msra.mxu0 %v448
  %471 = vmatprep.subr.bf16.mxu0 0
  %472 = vmatpush1.bf16.msra.mxu0 %v449
  %473 = vmatprep.subr.bf16.mxu0 0
  %474 = vmatpush1.bf16.msra.mxu0 %v450
  %475 = vmatprep.subr.bf16.mxu0 0
  %476 = vmatpush1.bf16.msra.mxu0 0
  %477 = vmatprep.subr.bf16.mxu0 0
  %478 = vmatpush1.bf16.msra.mxu0 0
  %479 = vmatprep.subr.bf16.mxu0 0
  %480 = vmatpush1.bf16.msra.mxu0 0
  %481 = vmatprep.subr.bf16.mxu0 0
  %482 = vmatpush1.bf16.msra.mxu0 0
  %483 = vmatprep.subr.bf16.mxu0 0
  %484 = vmatpush1.bf16.msra.mxu0 0
  %485 = vmatprep.subr.bf16.mxu0 0
  %486 = vmatpush1.bf16.msra.mxu0 0
  %487 = vmatprep.subr.bf16.mxu0 0
  %488 = vmatpush1.bf16.msra.mxu0 0
  %489 = vmatprep.subr.bf16.mxu0 0
  %490 = vmatpush1.bf16.msra.mxu0 0
  %491 = vmatprep.mubr.bf16.mxu0 0
  %492 = vmatmul.mubr.bf16.gmra.mrb[0].mxu0 %v387
  %v493 = vpop.f32.mrb[0].mxu0
  %v494 = vadd.f32 %v409, %v493
  %v495 = vpop.f32.mrb[0].mxu0
  %v496 = vpop.f32.mrb[0].mxu0
  %v497 = vpop.f32.mrb[0].mxu0
  %498 = vdwg.mxu0
  %v499 = vmax.f32 %v494, 0.0
  %v500 = vpack.c.bf16 %v499, %v499
  %v501 = vld [vmem:[%s5] sm:$0xf]
  %v502 = vld [vmem:[%s5 + $0x4] sm:$0xf]
  %v503 = vld [vmem:[%s5 + $0x8] sm:$0xf]
  %v504 = vld [vmem:[%s5 + $0xc] sm:$0xf]
  %v505 = vld [vmem:[%s5 + $0x10] sm:$0xf]
  %v506 = vld [vmem:[%s5 + $0x14] sm:$0xf]
  %v507 = vld [vmem:[%s5 + $0x18] sm:$0xf]
  %v508 = vld [vmem:[%s5 + $0x1c] sm:$0xf]
  %v509 = vld [vmem:[%s5 + $0x20] sm:$0xf]
  %v510 = vld [vmem:[%s5 + $0x24] sm:$0xf]
  %v511 = vld [vmem:[%s5 + $0x28] sm:$0xf]
  %v512 = vld [vmem:[%s5 + $0x2c] sm:$0xf]
  %v513 = vld [vmem:[%s5 + $0x30] sm:$0xf]
  %v514 = vld [vmem:[%s5 + $0x34] sm:$0xf]
  %v515 = vld [vmem:[%s5 + $0x38] sm:$0xf]
  %v516 = vld [vmem:[%s5 + $0x3c] sm:$0xf]
  %v517 = vld [vmem:[%s6] sm:$0x1]
  %v519 = vlaneseq
  %v520 = vshrl.u32 %v519, 7
  %v521 = vsub.s32 0, %v520
  %v522 = vrot.slane %v517, %v521
  %v540 = vunpack.c.l.b16 %v501
  %v541 = vunpack.c.l.b16 %v502
  %v542 = vunpack.c.l.b16 %v503
  %v543 = vunpack.c.l.b16 %v504
  %v544 = vunpack.c.l.b16 %v505
  %v545 = vunpack.c.l.b16 %v506
  %v546 = vunpack.c.l.b16 %v507
  %v547 = vunpack.c.l.b16 %v508
  %v548 = vunpack.c.l.b16 %v509
  %v549 = vunpack.c.l.b16 %v510
  %v550 = vunpack.c.l.b16 %v511
  %v551 = vunpack.c.l.b16 %v512
  %v552 = vunpack.c.l.b16 %v513
  %v553 = vunpack.c.l.b16 %v514
  %v554 = vunpack.c.l.b16 %v515
  %v555 = vunpack.c.l.b16 %v516
  %v556 = vpack.c.b16 %v541, %v540
  %v557 = vpack.c.b16 %v543, %v542
  %v558 = vpack.c.b16 %v545, %v544
  %v559 = vpack.c.b16 %v547, %v546
  %v560 = vpack.c.b16 %v549, %v548
  %v561 = vpack.c.b16 %v551, %v550
  %v562 = vpack.c.b16 %v553, %v552
  %v563 = vpack.c.b16 %v555, %v554
  %572 = vmatprep.subr.bf16.mxu0 0
  %573 = vmatpush1.bf16.msra.mxu0 %v556
  %574 = vmatprep.subr.bf16.mxu0 0
  %575 = vmatpush1.bf16.msra.mxu0 %v557
  %576 = vmatprep.subr.bf16.mxu0 0
  %577 = vmatpush1.bf16.msra.mxu0 %v558
  %578 = vmatprep.subr.bf16.mxu0 0
  %579 = vmatpush1.bf16.msra.mxu0 %v559
  %580 = vmatprep.subr.bf16.mxu0 0
  %581 = vmatpush1.bf16.msra.mxu0 %v560
  %582 = vmatprep.subr.bf16.mxu0 0
  %583 = vmatpush1.bf16.msra.mxu0 %v561
  %584 = vmatprep.subr.bf16.mxu0 0
  %585 = vmatpush1.bf16.msra.mxu0 %v562
  %586 = vmatprep.subr.bf16.mxu0 0
  %587 = vmatpush1.bf16.msra.mxu0 %v563
  %588 = vmatprep.subr.bf16.mxu0 0
  %589 = vmatpush1.bf16.msra.mxu0 0
  %590 = vmatprep.subr.bf16.mxu0 0
  %591 = vmatpush1.bf16.msra.mxu0 0
  %592 = vmatprep.subr.bf16.mxu0 0
  %593 = vmatpush1.bf16.msra.mxu0 0
  %594 = vmatprep.subr.bf16.mxu0 0
  %595 = vmatpush1.bf16.msra.mxu0 0
  %596 = vmatprep.subr.bf16.mxu0 0
  %597 = vmatpush1.bf16.msra.mxu0 0
  %598 = vmatprep.subr.bf16.mxu0 0
  %599 = vmatpush1.bf16.msra.mxu0 0
  %600 = vmatprep.subr.bf16.mxu0 0
  %601 = vmatpush1.bf16.msra.mxu0 0
  %602 = vmatprep.subr.bf16.mxu0 0
  %603 = vmatpush1.bf16.msra.mxu0 0
  %604 = vmatprep.mubr.bf16.mxu0 0
  %605 = vmatmul.mubr.bf16.gmra.mrb[0].mxu0 %v500
  %v606 = vpop.f32.mrb[0].mxu0
  %v607 = vadd.f32 %v522, %v606
  %v608 = vpop.f32.mrb[0].mxu0
  %v609 = vpop.f32.mrb[0].mxu0
  %v610 = vpop.f32.mrb[0].mxu0
  %611 = vdwg.mxu0
  %612 = vst [vmem:[%s7] sm:$0xff] %v607
  // Predicated region
  $region30: #{lenet_forward.3} parent=0 // pred_check
    _
  $region31: #{lenet_forward.3} parent=0 // pred_check_branch
    %614 = sbr.rel (0) target = $region33
  $region32: #{lenet_forward.3} parent=0 // pred_region
    _
  $region33: #{lenet_forward.3} parent=0 // pred_fallthru
    _
  // Predicated region
  $region34: #{lenet_forward.3} parent=0 // pred_check
    _
  $region35: #{lenet_forward.3} parent=0 // pred_check_branch
    %616 = sbr.rel (0) target = $region37
  $region36: #{lenet_forward.3} parent=0 // pred_region
    _
  $region37: #{lenet_forward.3} parent=0 // pred_fallthru
    _

// kernel: lenet_forward.2
$region0: #{lenet_forward.2}
  #allocation0 [shape = 'u32[]', space=smem, size = 0x4, offset = 0x4, fixed_abs, tag = 'smem constant byte address 0x4 - core index']
  #allocation1 [shape = 'u32[144,128]{1,0:T(1,128)}', space=vmem, size = 0x12000, scoped, tag = 'internal scratch']
  #allocation2 [shape = 'bf16[784,128]{1,0:T(16,128)(2,1)}', space=vmem, size = 0x31000, scoped, tag = 'scratch operand']
  #allocation3 [shape = 'f32[256,128]{1,0:T(8,128)}', space=vmem, size = 0x20000, scoped, tag = 'scratch operand']
  #allocation4 [shape = 'bf16[136,3200]{1,0:T(8,128)(2,1)}', space=vmem, size = 0xd4800, scoped, tag = 'scratch operand']
  %s0 = inlined_call_operand.vmem [shape: bf16[2,784,32], index: 0, kind: input, shape index: {}]
  %s1 = inlined_call_operand.vmem [shape: bf16[32,128], index: 1, kind: input, shape index: {}]
  %s2 = inlined_call_operand.vmem [shape: f32[1,128], index: 2, kind: input, shape index: {}]
  %s3 = inlined_call_operand.vmem [shape: bf16[256,784], index: 3, kind: input, shape index: {}]
  %s4 = inlined_call_operand.vmem [shape: bf16[3200,128], index: 4, kind: input, shape index: {}]
  %s5 = inlined_call_operand.vmem [shape: f32[1,128], index: 5, kind: input, shape index: {}]
  %s6 = inlined_call_operand.vmem [shape: bf16[32,136], index: 6, kind: input, shape index: {}]
  %s7 = inlined_call_operand.vmem [shape: f32[2,32,128], index: 7, kind: output, shape index: {}]
  %s8 = sld [smem:[#allocation0]]
  $region61: #{lenet_forward.2} parent=0
    _
  %s10 = ssub.s32 1, %s8
  %s11 = scalar_select 0, %s10, %s8
  loop: start=0, step=1, limit=4
  $region2: #{lenet_forward.2} parent=0 // loop_pre_header
    _
  $region3: #{lenet_forward.2} parent=0 // loop_header
    %s13 = sphi 0, %s17
    %p14 = scmp.ge.s32.totalorder %s13, 4
    %s23 = sphi 0, %s25
    %s26 = sphi 0, %s23
    %s27 = sphi 0, %s26
    %s43 = sphi 0, %s27
    %s47 = sphi 0, %s47
    %s49 = sphi 0, %s47
    %s50 = sphi 0, %s49
    %s64 = sphi 0, %s50
    %s68 = sphi 0, %s68
    %s70 = sphi 0, %s68
    %s71 = sphi 0, %s70
    %s85 = sphi 0, %s71
    %s89 = sphi 0, %s89
    %s91 = sphi 0, %s89
    %s92 = sphi 0, %s91
    %s106 = sphi 0, %s92
    %s110 = sphi 0, %s110
    %s112 = sphi 0, %s110
    %s113 = sphi 0, %s112
    %s127 = sphi 0, %s113
    %s131 = sphi 0, %s131
    %s133 = sphi 0, %s131
    %s134 = sphi 0, %s133
    %s148 = sphi 0, %s134
    %s152 = sphi 0, %s152
    %s154 = sphi 0, %s152
    %s155 = sphi 0, %s154
    %s169 = sphi 0, %s155
    %s175 = sphi 0, %s177
    %s178 = sphi 0, %s175
    %s179 = sphi 0, %s178
    %s195 = sphi 0, %s179
  $region4: #{lenet_forward.2} parent=0 // loop_header_branch
    %16 = sbr.rel (%p14) target = $region8
  $region5: #{lenet_forward.2} parent=0 // loop_body
    %s18 = ssub.s32 %s13, 1
    %s19 = ssub.s32 %s13, 2
    %s20 = sadd.s32 %s13, 1
    %s21 = ssub.s32 %s13, %s20
    %p22 = scmp.eq.s32.totalorder %s21, 0
    %s24 = sadd.s32 %s23, 1
    %s25 = scalar_select %p22, %s23, %s24
    %p28 = pneg %p22
    %p29 = scmp.eq.s32.totalorder %s13, 1
    %p30 = por %p28, %p29
    %p31 = scmp.ne.s32.totalorder %s23, %s26
    %p32 = scmp.eq.s32.totalorder %s13, 0
    %p33 = por %p31, %p32
    %p34 = scmp.ne.s32.totalorder %s23, %s26
    %p35 = scmp.eq.s32.totalorder %s18, 1
    %p36 = por %p34, %p35
    %p37 = scmp.ne.s32.totalorder %s26, %s27
    %p38 = scmp.eq.s32.totalorder %s18, 0
    %p39 = por %p37, %p38
    %p40 = scmp.ne.s32.totalorder %s26, %s27
    %p41 = scmp.eq.s32.totalorder %s19, 1
    %p42 = por %p40, %p41
    %p44 = scmp.ne.s32.totalorder %s27, %s43
    %p45 = scmp.eq.s32.totalorder %s19, 0
    %p46 = por %p44, %p45
    %s48 = sadd.s32 %s47, 1
    %p51 = scmp.eq.s32.totalorder %s13, 1
    %p52 = scmp.ne.s32.totalorder %s47, %s49
    %p53 = scmp.eq.s32.totalorder %s13, 0
    %p54 = por %p52, %p53
    %p55 = scmp.ne.s32.totalorder %s47, %s49
    %p56 = scmp.eq.s32.totalorder %s18, 1
    %p57 = por %p55, %p56
    %p58 = scmp.ne.s32.totalorder %s49, %s50
    %p59 = scmp.eq.s32.totalorder %s18, 0
    %p60 = por %p58, %p59
    %p61 = scmp.ne.s32.totalorder %s49, %s50
    %p62 = scmp.eq.s32.totalorder %s19, 1
    %p63 = por %p61, %p62
    %p65 = scmp.ne.s32.totalorder %s50, %s64
    %p66 = scmp.eq.s32.totalorder %s19, 0
    %p67 = por %p65, %p66
    %s69 = sadd.s32 %s68, 1
    %p72 = scmp.eq.s32.totalorder %s13, 1
    %p73 = scmp.ne.s32.totalorder %s68, %s70
    %p74 = scmp.eq.s32.totalorder %s13, 0
    %p75 = por %p73, %p74
    %p76 = scmp.ne.s32.totalorder %s68, %s70
    %p77 = scmp.eq.s32.totalorder %s18, 1
    %p78 = por %p76, %p77
    %p79 = scmp.ne.s32.totalorder %s70, %s71
    %p80 = scmp.eq.s32.totalorder %s18, 0
    %p81 = por %p79, %p80
    %p82 = scmp.ne.s32.totalorder %s70, %s71
    %p83 = scmp.eq.s32.totalorder %s19, 1
    %p84 = por %p82, %p83
    %p86 = scmp.ne.s32.totalorder %s71, %s85
    %p87 = scmp.eq.s32.totalorder %s19, 0
    %p88 = por %p86, %p87
    %s90 = sadd.s32 %s89, 1
    %p93 = scmp.eq.s32.totalorder %s13, 1
    %p94 = scmp.ne.s32.totalorder %s89, %s91
    %p95 = scmp.eq.s32.totalorder %s13, 0
    %p96 = por %p94, %p95
    %p97 = scmp.ne.s32.totalorder %s89, %s91
    %p98 = scmp.eq.s32.totalorder %s18, 1
    %p99 = por %p97, %p98
    %p100 = scmp.ne.s32.totalorder %s91, %s92
    %p101 = scmp.eq.s32.totalorder %s18, 0
    %p102 = por %p100, %p101
    %p103 = scmp.ne.s32.totalorder %s91, %s92
    %p104 = scmp.eq.s32.totalorder %s19, 1
    %p105 = por %p103, %p104
    %p107 = scmp.ne.s32.totalorder %s92, %s106
    %p108 = scmp.eq.s32.totalorder %s19, 0
    %p109 = por %p107, %p108
    %s111 = sadd.s32 %s110, 1
    %p114 = scmp.eq.s32.totalorder %s13, 1
    %p115 = scmp.ne.s32.totalorder %s110, %s112
    %p116 = scmp.eq.s32.totalorder %s13, 0
    %p117 = por %p115, %p116
    %p118 = scmp.ne.s32.totalorder %s110, %s112
    %p119 = scmp.eq.s32.totalorder %s18, 1
    %p120 = por %p118, %p119
    %p121 = scmp.ne.s32.totalorder %s112, %s113
    %p122 = scmp.eq.s32.totalorder %s18, 0
    %p123 = por %p121, %p122
    %p124 = scmp.ne.s32.totalorder %s112, %s113
    %p125 = scmp.eq.s32.totalorder %s19, 1
    %p126 = por %p124, %p125
    %p128 = scmp.ne.s32.totalorder %s113, %s127
    %p129 = scmp.eq.s32.totalorder %s19, 0
    %p130 = por %p128, %p129
    %s132 = sadd.s32 %s131, 1
    %p135 = scmp.eq.s32.totalorder %s13, 1
    %p136 = scmp.ne.s32.totalorder %s131, %s133
    %p137 = scmp.eq.s32.totalorder %s13, 0
    %p138 = por %p136, %p137
    %p139 = scmp.ne.s32.totalorder %s131, %s133
    %p140 = scmp.eq.s32.totalorder %s18, 1
    %p141 = por %p139, %p140
    %p142 = scmp.ne.s32.totalorder %s133, %s134
    %p143 = scmp.eq.s32.totalorder %s18, 0
    %p144 = por %p142, %p143
    %p145 = scmp.ne.s32.totalorder %s133, %s134
    %p146 = scmp.eq.s32.totalorder %s19, 1
    %p147 = por %p145, %p146
    %p149 = scmp.ne.s32.totalorder %s134, %s148
    %p150 = scmp.eq.s32.totalorder %s19, 0
    %p151 = por %p149, %p150
    %s153 = sadd.s32 %s152, 1
    %p156 = scmp.eq.s32.totalorder %s13, 1
    %p157 = scmp.ne.s32.totalorder %s152, %s154
    %p158 = scmp.eq.s32.totalorder %s13, 0
    %p159 = por %p157, %p158
    %p160 = scmp.ne.s32.totalorder %s152, %s154
    %p161 = scmp.eq.s32.totalorder %s18, 1
    %p162 = por %p160, %p161
    %p163 = scmp.ne.s32.totalorder %s154, %s155
    %p164 = scmp.eq.s32.totalorder %s18, 0
    %p165 = por %p163, %p164
    %p166 = scmp.ne.s32.totalorder %s154, %s155
    %p167 = scmp.eq.s32.totalorder %s19, 1
    %p168 = por %p166, %p167
    %p170 = scmp.ne.s32.totalorder %s155, %s169
    %p171 = scmp.eq.s32.totalorder %s19, 0
    %p172 = por %p170, %p171
    %s173 = ssub.s32 %s13, %s20
    %p174 = scmp.eq.s32.totalorder %s173, 0
    %s176 = sadd.s32 %s175, 1
    %s177 = scalar_select %p174, %s175, %s176
    %p180 = pneg %p174
    %p181 = scmp.eq.s32.totalorder %s13, 1
    %p182 = por %p180, %p181
    %p183 = scmp.ne.s32.totalorder %s175, %s178
    %p184 = scmp.eq.s32.totalorder %s13, 0
    %p185 = por %p183, %p184
    %p186 = scmp.ne.s32.totalorder %s175, %s178
    %p187 = scmp.eq.s32.totalorder %s18, 1
    %p188 = por %p186, %p187
    %p189 = scmp.ne.s32.totalorder %s178, %s179
    %p190 = scmp.eq.s32.totalorder %s18, 0
    %p191 = por %p189, %p190
    %p192 = scmp.ne.s32.totalorder %s178, %s179
    %p193 = scmp.eq.s32.totalorder %s19, 1
    %p194 = por %p192, %p193
    %p196 = scmp.ne.s32.totalorder %s179, %s195
    %p197 = scmp.eq.s32.totalorder %s19, 0
    %p198 = por %p196, %p197
    %p199 = scmp.le.s32.totalorder 1, %s13
    %p200 = scmp.lt.s32.totalorder %s13, 3
    %p201 = pnand %p199, %p200
    %p202 = pneg %p201
    // Predicated region
    $region9: #{lenet_forward.2} parent=5 // pred_check
      _
    $region10: #{lenet_forward.2} parent=5 // pred_check_branch
      %204 = sbr.rel (%p201) target = $region12
    $region11: #{lenet_forward.2} parent=5 // pred_region
      %s205 = ssub.s32 %s13, 1
      // Predicated region
      $region13: #{lenet_forward.2} parent=11 // pred_check
        %p206 = pneg %p60
      $region14: #{lenet_forward.2} parent=11 // pred_check_branch
        %208 = sbr.rel (%p206) target = $region16
      $region15: #{lenet_forward.2} parent=11 // pred_region
        _
      $region16: #{lenet_forward.2} parent=11 // pred_fallthru
        _
      // Predicated region
      $region17: #{lenet_forward.2} parent=11 // pred_check
        %p209 = pneg %p81
      $region18: #{lenet_forward.2} parent=11 // pred_check_branch
        %211 = sbr.rel (%p209) target = $region20
      $region19: #{lenet_forward.2} parent=11 // pred_region
        _
      $region20: #{lenet_forward.2} parent=11 // pred_fallthru
        _
      // Predicated region
      $region21: #{lenet_forward.2} parent=11 // pred_check
        %p212 = pneg %p102
      $region22: #{lenet_forward.2} parent=11 // pred_check_branch
        %214 = sbr.rel (%p212) target = $region24
      $region23: #{lenet_forward.2} parent=11 // pred_region
        _
      $region24: #{lenet_forward.2} parent=11 // pred_fallthru
        _
      // Predicated region
      $region25: #{lenet_forward.2} parent=11 // pred_check
        %p215 = pneg %p123
      $region26: #{lenet_forward.2} parent=11 // pred_check_branch
        %217 = sbr.rel (%p215) target = $region28
      $region27: #{lenet_forward.2} parent=11 // pred_region
        _
      $region28: #{lenet_forward.2} parent=11 // pred_fallthru
        _
      // Predicated region
      $region29: #{lenet_forward.2} parent=11 // pred_check
        %p218 = pneg %p144
      $region30: #{lenet_forward.2} parent=11 // pred_check_branch
        %220 = sbr.rel (%p218) target = $region32
      $region31: #{lenet_forward.2} parent=11 // pred_region
        _
      $region32: #{lenet_forward.2} parent=11 // pred_fallthru
        _
      // Predicated region
      $region33: #{lenet_forward.2} parent=11 // pred_check
        %p221 = pneg %p165
      $region34: #{lenet_forward.2} parent=11 // pred_check_branch
        %223 = sbr.rel (%p221) target = $region36
      $region35: #{lenet_forward.2} parent=11 // pred_region
        _
      $region36: #{lenet_forward.2} parent=11 // pred_fallthru
        _
    $region12: #{lenet_forward.2} parent=5 // pred_fallthru
      _
    %p224 = scmp.lt.s32.totalorder %s13, 2
    // Predicated region
    $region37: #{lenet_forward.2} parent=5 // pred_check
      %p225 = pneg %p224
    $region38: #{lenet_forward.2} parent=5 // pred_check_branch
      %227 = sbr.rel (%p225) target = $region40
    $region39: #{lenet_forward.2} parent=5 // pred_region
      // Predicated region
      $region41: #{lenet_forward.2} parent=39 // pred_check
        %p228 = pneg %p33
      $region42: #{lenet_forward.2} parent=39 // pred_check_branch
        %230 = sbr.rel (%p228) target = $region44
      $region43: #{lenet_forward.2} parent=39 // pred_region
        %p231 = scmp.lt.s32.totalorder %s13, 1
        %s232 = scalar_select %p231, %s13, 1
        %s233 = smul.addr %s232, 98
        %s234 = smul.addr %s233, 4
        %s235 = scalar_lea.vmem %s0, %s234
      $region44: #{lenet_forward.2} parent=39 // pred_fallthru
        _
    $region40: #{lenet_forward.2} parent=5 // pred_fallthru
      _
    %p236 = scmp.le.s32.totalorder 1, %s13
    %p237 = scmp.lt.s32.totalorder %s13, 3
    %p238 = pnand %p236, %p237
    %p239 = pneg %p238
    // Predicated region
    $region45: #{lenet_forward.2} parent=5 // pred_check
      _
    $region46: #{lenet_forward.2} parent=5 // pred_check_branch
      %241 = sbr.rel (%p238) target = $region48
    $region47: #{lenet_forward.2} parent=5 // pred_region
      %s242 = ssub.s32 %s13, 1
      %p243 = scmp.lt.s32.totalorder %s18, 1
      %s244 = scalar_select %p243, %s18, 1
      %s245 = smul.addr %s244, 98
      %s246 = smul.addr %s245, 4
      %s247 = scalar_lea.vmem %s0, %s246
      %p248 = pneg %p39
      %p249 = pneg %p36
      %p250 = pneg %p60
      %p251 = pneg %p57
      %p252 = pneg %p81
      %p253 = pneg %p78
      %p254 = pneg %p102
      %p255 = pneg %p99
      %p256 = pneg %p123
      %p257 = pneg %p120
      %p258 = pneg %p144
      %p259 = pneg %p141
      %p260 = pneg %p165
      %p261 = pneg %p162
      %p262 = pneg %p191
      %p263 = pneg %p188
      %p264 = scmp.lt.s32.totalorder %s18, 1
      %s265 = scalar_select %p264, %s18, 1
      %s266 = smul.addr %s265, 4
      %s267 = smul.addr %s266, 8
      %s268 = scalar_lea.vmem %s7, %s267
      %p269 = scmp.lt.s32.totalorder %s18, 1
      %s270 = scalar_select %p269, %s18, 1
      %s271 = smul.addr %s270, 98
      %s272 = smul.addr %s271, 4
      %s273 = scalar_lea.vmem %s0, %s272
      %p274 = scmp.lt.s32.totalorder %s18, 1
      %s275 = scalar_select %p274, %s18, 1
      %s276 = smul.addr %s275, 4
      %s277 = smul.addr %s276, 8
      %s278 = scalar_lea.vmem %s7, %s277
      %v280 = vld [vmem:[%s2] sm:$0x1]
      %v281 = vld [vmem:[%s5] sm:$0x1]
      %v282 = vld [vmem:[%s1] sm:$0xf]
      %v283 = vld [vmem:[%s1 + $0x4] sm:$0xf]
      %v284 = vld [vmem:[%s1 + $0x8] sm:$0xf]
      %v285 = vld [vmem:[%s1 + $0xc] sm:$0xf]
      %v286 = vld [vmem:[%s273] sm:$0xf]
      %v287 = vld [vmem:[%s273 + $0x4] sm:$0xf]
      %v288 = vld [vmem:[%s273 + $0x8] sm:$0xf]
      %v289 = vld [vmem:[%s273 + $0xc] sm:$0xf]
      %v290 = vld [vmem:[%s273 + $0x10] sm:$0xf]
      %v291 = vld [vmem:[%s273 + $0x14] sm:$0xf]
      %v292 = vld [vmem:[%s273 + $0x18] sm:$0xf]
      %v293 = vld [vmem:[%s273 + $0x1c] sm:$0xf]
      %v294 = vld [vmem:[%s273 + $0x20] sm:$0xf]
      %v295 = vld [vmem:[%s273 + $0x24] sm:$0xf]
      %v296 = vld [vmem:[%s273 + $0x28] sm:$0xf]
      %v297 = vld [vmem:[%s273 + $0x2c] sm:$0xf]
      %v298 = vld [vmem:[%s273 + $0x30] sm:$0xf]
      %v299 = vld [vmem:[%s273 + $0x34] sm:$0xf]
      %v300 = vld [vmem:[%s273 + $0x38] sm:$0xf]
      %v301 = vld [vmem:[%s273 + $0x3c] sm:$0xf]
      %v302 = vld [vmem:[%s273 + $0x40] sm:$0xf]
      %v303 = vld [vmem:[%s273 + $0x44] sm:$0xf]
      %v304 = vld [vmem:[%s273 + $0x48] sm:$0xf]
      %v305 = vld [vmem:[%s273 + $0x4c] sm:$0xf]
      %v306 = vld [vmem:[%s273 + $0x50] sm:$0xf]
      %v307 = vld [vmem:[%s273 + $0x54] sm:$0xf]
      %v308 = vld [vmem:[%s273 + $0x58] sm:$0xf]
      %v309 = vld [vmem:[%s273 + $0x5c] sm:$0xf]
      %v310 = vld [vmem:[%s273 + $0x60] sm:$0xf]
      %v311 = vld [vmem:[%s273 + $0x64] sm:$0xf]
      %v312 = vld [vmem:[%s273 + $0x68] sm:$0xf]
      %v313 = vld [vmem:[%s273 + $0x6c] sm:$0xf]
      %v314 = vld [vmem:[%s273 + $0x70] sm:$0xf]
      %v315 = vld [vmem:[%s273 + $0x74] sm:$0xf]
      %v316 = vld [vmem:[%s273 + $0x78] sm:$0xf]
      %v317 = vld [vmem:[%s273 + $0x7c] sm:$0xf]
      %v318 = vld [vmem:[%s273 + $0x80] sm:$0xf]
      %v319 = vld [vmem:[%s273 + $0x84] sm:$0xf]
      %v320 = vld [vmem:[%s273 + $0x88] sm:$0xf]
      %v321 = vld [vmem:[%s273 + $0x8c] sm:$0xf]
      %v322 = vld [vmem:[%s273 + $0x90] sm:$0xf]
      %v323 = vld [vmem:[%s273 + $0x94] sm:$0xf]
      %v324 = vld [vmem:[%s273 + $0x98] sm:$0xf]
      %v325 = vld [vmem:[%s273 + $0x9c] sm:$0xf]
      %v326 = vld [vmem:[%s273 + $0xa0] sm:$0xf]
      %v327 = vld [vmem:[%s273 + $0xa4] sm:$0xf]
      %v328 = vld [vmem:[%s273 + $0xa8] sm:$0xf]
      %v329 = vld [vmem:[%s273 + $0xac] sm:$0xf]
      %v330 = vld [vmem:[%s273 + $0xb0] sm:$0xf]
      %v331 = vld [vmem:[%s273 + $0xb4] sm:$0xf]
      %v332 = vld [vmem:[%s273 + $0xb8] sm:$0xf]
      %v333 = vld [vmem:[%s273 + $0xbc] sm:$0xf]
      %v334 = vld [vmem:[%s273 + $0xc0] sm:$0xf]
      %v335 = vld [vmem:[%s273 + $0xc4] sm:$0xf]
      %v336 = vld [vmem:[%s273 + $0xc8] sm:$0xf]
      %v337 = vld [vmem:[%s273 + $0xcc] sm:$0xf]
      %v338 = vld [vmem:[%s273 + $0xd0] sm:$0xf]
      %v339 = vld [vmem:[%s273 + $0xd4] sm:$0xf]
      %v340 = vld [vmem:[%s273 + $0xd8] sm:$0xf]
      %v341 = vld [vmem:[%s273 + $0xdc] sm:$0xf]
      %v342 = vld [vmem:[%s273 + $0xe0] sm:$0xf]
      %v343 = vld [vmem:[%s273 + $0xe4] sm:$0xf]
      %v344 = vld [vmem:[%s273 + $0xe8] sm:$0xf]
      %v345 = vld [vmem:[%s273 + $0xec] sm:$0xf]
      %v346 = vld [vmem:[%s273 + $0xf0] sm:$0xf]
      %v347 = vld [vmem:[%s273 + $0xf4] sm:$0xf]
      %v348 = vld [vmem:[%s273 + $0xf8] sm:$0xf]
      %v349 = vld [vmem:[%s273 + $0xfc] sm:$0xf]
      %v350 = vld [vmem:[%s273 + $0x100] sm:$0xf]
      %v351 = vld [vmem:[%s273 + $0x104] sm:$0xf]
      %v352 = vld [vmem:[%s273 + $0x108] sm:$0xf]
      %v353 = vld [vmem:[%s273 + $0x10c] sm:$0xf]
      %v354 = vld [vmem:[%s273 + $0x110] sm:$0xf]
      %v355 = vld [vmem:[%s273 + $0x114] sm:$0xf]
      %v356 = vld [vmem:[%s273 + $0x118] sm:$0xf]
      %v357 = vld [vmem:[%s273 + $0x11c] sm:$0xf]
      %v358 = vld [vmem:[%s273 + $0x120] sm:$0xf]
      %v359 = vld [vmem:[%s273 + $0x124] sm:$0xf]
      %v360 = vld [vmem:[%s273 + $0x128] sm:$0xf]
      %v361 = vld [vmem:[%s273 + $0x12c] sm:$0xf]
      %v362 = vld [vmem:[%s273 + $0x130] sm:$0xf]
      %v363 = vld [vmem:[%s273 + $0x134] sm:$0xf]
      %v364 = vld [vmem:[%s273 + $0x138] sm:$0xf]
      %v365 = vld [vmem:[%s273 + $0x13c] sm:$0xf]
      %v366 = vld [vmem:[%s273 + $0x140] sm:$0xf]
      %v367 = vld [vmem:[%s273 + $0x144] sm:$0xf]
      %v368 = vld [vmem:[%s273 + $0x148] sm:$0xf]
      %v369 = vld [vmem:[%s273 + $0x14c] sm:$0xf]
      %v370 = vld [vmem:[%s273 + $0x150] sm:$0xf]
      %v371 = vld [vmem:[%s273 + $0x154] sm:$0xf]
      %v372 = vld [vmem:[%s273 + $0x158] sm:$0xf]
      %v373 = vld [vmem:[%s273 + $0x15c] sm:$0xf]
      %v374 = vld [vmem:[%s273 + $0x160] sm:$0xf]
      %v375 = vld [vmem:[%s273 + $0x164] sm:$0xf]
      %v376 = vld [vmem:[%s273 + $0x168] sm:$0xf]
      %v377 = vld [vmem:[%s273 + $0x16c] sm:$0xf]
      %v378 = vld [vmem:[%s273 + $0x170] sm:$0xf]
      %v379 = vld [vmem:[%s273 + $0x174] sm:$0xf]
      %v380 = vld [vmem:[%s273 + $0x178] sm:$0xf]
      %v381 = vld [vmem:[%s273 + $0x17c] sm:$0xf]
      %v382 = vld [vmem:[%s273 + $0x180] sm:$0xf]
      %v383 = vld [vmem:[%s273 + $0x184] sm:$0xf]
      %v385 = vlaneseq
      %v386 = vshrl.u32 %v385, 7
      %v387 = vsub.s32 0, %v386
      %v388 = vrot.slane %v280, %v387
      %v488 = vunpack.c.l.b16 %v286
      %v489 = vunpack.c.l.b16 %v287
      %v490 = vunpack.c.l.b16 %v288
      %v491 = vunpack.c.l.b16 %v289
      %v492 = vunpack.c.l.b16 %v290
      %v493 = vunpack.c.l.b16 %v291
      %v494 = vunpack.c.l.b16 %v292
      %v495 = vunpack.c.l.b16 %v293
      %v496 = vunpack.c.l.b16 %v294
      %v497 = vunpack.c.l.b16 %v295
      %v498 = vunpack.c.l.b16 %v296
      %v499 = vunpack.c.l.b16 %v297
      %v500 = vunpack.c.l.b16 %v298
      %v501 = vunpack.c.l.b16 %v299
      %v502 = vunpack.c.l.b16 %v300
      %v503 = vunpack.c.l.b16 %v301
      %v504 = vunpack.c.l.b16 %v302
      %v505 = vunpack.c.l.b16 %v303
      %v506 = vunpack.c.l.b16 %v304
      %v507 = vunpack.c.l.b16 %v305
      %v508 = vunpack.c.l.b16 %v306
      %v509 = vunpack.c.l.b16 %v307
      %v510 = vunpack.c.l.b16 %v308
      %v511 = vunpack.c.l.b16 %v309
      %v512 = vunpack.c.l.b16 %v310
      %v513 = vunpack.c.l.b16 %v311
      %v514 = vunpack.c.l.b16 %v312
      %v515 = vunpack.c.l.b16 %v313
      %v516 = vunpack.c.l.b16 %v314
      %v517 = vunpack.c.l.b16 %v315
      %v518 = vunpack.c.l.b16 %v316
      %v519 = vunpack.c.l.b16 %v317
      %v520 = vunpack.c.l.b16 %v318
      %v521 = vunpack.c.l.b16 %v319
      %v522 = vunpack.c.l.b16 %v320
      %v523 = vunpack.c.l.b16 %v321
      %v524 = vunpack.c.l.b16 %v322
      %v525 = vunpack.c.l.b16 %v323
      %v526 = vunpack.c.l.b16 %v324
      %v527 = vunpack.c.l.b16 %v325
      %v528 = vunpack.c.l.b16 %v326
      %v529 = vunpack.c.l.b16 %v327
      %v530 = vunpack.c.l.b16 %v328
      %v531 = vunpack.c.l.b16 %v329
      %v532 = vunpack.c.l.b16 %v330
      %v533 = vunpack.c.l.b16 %v331
      %v534 = vunpack.c.l.b16 %v332
      %v535 = vunpack.c.l.b16 %v333
      %v536 = vunpack.c.l.b16 %v334
      %v537 = vunpack.c.l.b16 %v335
      %v538 = vunpack.c.l.b16 %v336
      %v539 = vunpack.c.l.b16 %v337
      %v540 = vunpack.c.l.b16 %v338
      %v541 = vunpack.c.l.b16 %v339
      %v542 = vunpack.c.l.b16 %v340
      %v543 = vunpack.c.l.b16 %v341
      %v544 = vunpack.c.l.b16 %v342
      %v545 = vunpack.c.l.b16 %v343
      %v546 = vunpack.c.l.b16 %v344
      %v547 = vunpack.c.l.b16 %v345
      %v548 = vunpack.c.l.b16 %v346
      %v549 = vunpack.c.l.b16 %v347
      %v550 = vunpack.c.l.b16 %v348
      %v551 = vunpack.c.l.b16 %v349
      %v552 = vunpack.c.l.b16 %v350
      %v553 = vunpack.c.l.b16 %v351
      %v554 = vunpack.c.l.b16 %v352
      %v555 = vunpack.c.l.b16 %v353
      %v556 = vunpack.c.l.b16 %v354
      %v557 = vunpack.c.l.b16 %v355
      %v558 = vunpack.c.l.b16 %v356
      %v559 = vunpack.c.l.b16 %v357
      %v560 = vunpack.c.l.b16 %v358
      %v561 = vunpack.c.l.b16 %v359
      %v562 = vunpack.c.l.b16 %v360
      %v563 = vunpack.c.l.b16 %v361
      %v564 = vunpack.c.l.b16 %v362
      %v565 = vunpack.c.l.b16 %v363
      %v566 = vunpack.c.l.b16 %v364
      %v567 = vunpack.c.l.b16 %v365
      %v568 = vunpack.c.l.b16 %v366
      %v569 = vunpack.c.l.b16 %v367
      %v570 = vunpack.c.l.b16 %v368
      %v571 = vunpack.c.l.b16 %v369
      %v572 = vunpack.c.l.b16 %v370
      %v573 = vunpack.c.l.b16 %v371
      %v574 = vunpack.c.l.b16 %v372
      %v575 = vunpack.c.l.b16 %v373
      %v576 = vunpack.c.l.b16 %v374
      %v577 = vunpack.c.l.b16 %v375
      %v578 = vunpack.c.l.b16 %v376
      %v579 = vunpack.c.l.b16 %v377
      %v580 = vunpack.c.l.b16 %v378
      %v581 = vunpack.c.l.b16 %v379
      %v582 = vunpack.c.l.b16 %v380
      %v583 = vunpack.c.l.b16 %v381
      %v584 = vunpack.c.l.b16 %v382
      %v585 = vunpack.c.l.b16 %v383
      %v586 = vpack.c.b16 %v489, %v488
      %v587 = vpack.c.b16 %v491, %v490
      %v588 = vpack.c.b16 %v493, %v492
      %v589 = vpack.c.b16 %v495, %v494
      %v590 = vpack.c.b16 %v497, %v496
      %v591 = vpack.c.b16 %v499, %v498
      %v592 = vpack.c.b16 %v501, %v500
      %v593 = vpack.c.b16 %v503, %v502
      %v594 = vpack.c.b16 %v505, %v504
      %v595 = vpack.c.b16 %v507, %v506
      %v596 = vpack.c.b16 %v509, %v508
      %v597 = vpack.c.b16 %v511, %v510
      %v598 = vpack.c.b16 %v513, %v512
      %v599 = vpack.c.b16 %v515, %v514
      %v600 = vpack.c.b16 %v517, %v516
      %v601 = vpack.c.b16 %v519, %v518
      %v602 = vpack.c.b16 %v521, %v520
      %v603 = vpack.c.b16 %v523, %v522
      %v604 = vpack.c.b16 %v525, %v524
      %v605 = vpack.c.b16 %v527, %v526
      %v606 = vpack.c.b16 %v529, %v528
      %v607 = vpack.c.b16 %v531, %v530
      %v608 = vpack.c.b16 %v533, %v532
      %v609 = vpack.c.b16 %v535, %v534
      %v610 = vpack.c.b16 %v537, %v536
      %v611 = vpack.c.b16 %v539, %v538
      %v612 = vpack.c.b16 %v541, %v540
      %v613 = vpack.c.b16 %v543, %v542
      %v614 = vpack.c.b16 %v545, %v544
      %v615 = vpack.c.b16 %v547, %v546
      %v616 = vpack.c.b16 %v549, %v548
      %v617 = vpack.c.b16 %v551, %v550
      %v618 = vpack.c.b16 %v553, %v552
      %v619 = vpack.c.b16 %v555, %v554
      %v620 = vpack.c.b16 %v557, %v556
      %v621 = vpack.c.b16 %v559, %v558
      %v622 = vpack.c.b16 %v561, %v560
      %v623 = vpack.c.b16 %v563, %v562
      %v624 = vpack.c.b16 %v565, %v564
      %v625 = vpack.c.b16 %v567, %v566
      %v626 = vpack.c.b16 %v569, %v568
      %v627 = vpack.c.b16 %v571, %v570
      %v628 = vpack.c.b16 %v573, %v572
      %v629 = vpack.c.b16 %v575, %v574
      %v630 = vpack.c.b16 %v577, %v576
      %v631 = vpack.c.b16 %v579, %v578
      %v632 = vpack.c.b16 %v581, %v580
      %v633 = vpack.c.b16 %v583, %v582
      %v634 = vpack.c.b16 %v585, %v584
      %v639 = vunpack.c.l.b16 %v282
      %v640 = vunpack.c.l.b16 %v283
      %v641 = vunpack.c.l.b16 %v284
      %v642 = vunpack.c.l.b16 %v285
      %v643 = vpack.c.b16 %v640, %v639
      %v644 = vpack.c.b16 %v642, %v641
      %vm647 = vcmask 261120
      %v649 = vsel %vm647, %v586, 0
      %v652 = vsel %vm647, %v587, 0
      %v655 = vsel %vm647, %v588, 0
      %v658 = vsel %vm647, %v589, 0
      %v661 = vsel %vm647, %v590, 0
      %v664 = vsel %vm647, %v591, 0
      %v667 = vsel %vm647, %v592, 0
      %v670 = vsel %vm647, %v593, 0
      %v673 = vsel %vm647, %v594, 0
      %v676 = vsel %vm647, %v595, 0
      %v679 = vsel %vm647, %v596, 0
      %v682 = vsel %vm647, %v597, 0
      %v685 = vsel %vm647, %v598, 0
      %v688 = vsel %vm647, %v599, 0
      %v691 = vsel %vm647, %v600, 0
      %v694 = vsel %vm647, %v601, 0
      %v697 = vsel %vm647, %v602, 0
      %v700 = vsel %vm647, %v603, 0
      %v703 = vsel %vm647, %v604, 0
      %v706 = vsel %vm647, %v605, 0
      %v709 = vsel %vm647, %v606, 0
      %v712 = vsel %vm647, %v607, 0
      %v715 = vsel %vm647, %v608, 0
      %v718 = vsel %vm647, %v609, 0
      %v721 = vsel %vm647, %v610, 0
      %v724 = vsel %vm647, %v611, 0
      %v727 = vsel %vm647, %v612, 0
      %v730 = vsel %vm647, %v613, 0
      %v733 = vsel %vm647, %v614, 0
      %v736 = vsel %vm647, %v615, 0
      %v739 = vsel %vm647, %v616, 0
      %v742 = vsel %vm647, %v617, 0
      %v745 = vsel %vm647, %v618, 0
      %v748 = vsel %vm647, %v619, 0
      %v751 = vsel %vm647, %v620, 0
      %v754 = vsel %vm647, %v621, 0
      %v757 = vsel %vm647, %v622, 0
      %v760 = vsel %vm647, %v623, 0
      %v763 = vsel %vm647, %v624, 0
      %v766 = vsel %vm647, %v625, 0
      %v769 = vsel %vm647, %v626, 0
      %v772 = vsel %vm647, %v627, 0
      %v775 = vsel %vm647, %v628, 0
      %v778 = vsel %vm647, %v629, 0
      %v781 = vsel %vm647, %v630, 0
      %v784 = vsel %vm647, %v631, 0
      %v787 = vsel %vm647, %v632, 0
      %v790 = vsel %vm647, %v633, 0
      %v793 = vsel %vm647, %v634, 0
      %795 = vmatprep.subr.bf16.mxu0 0
      %796 = vmatpush1.bf16.msra.mxu0 %v643
      %797 = vmatprep.subr.bf16.mxu0 0
      %798 = vmatpush1.bf16.msra.mxu0 %v644
      %799 = vmatprep.subr.bf16.mxu0 0
      %800 = vmatpush1.bf16.msra.mxu0 0
      %801 = vmatprep.subr.bf16.mxu0 0
      %802 = vmatpush1.bf16.msra.mxu0 0
      %803 = vmatprep.subr.bf16.mxu0 0
      %804 = vmatpush1.bf16.msra.mxu0 0
      %805 = vmatprep.subr.bf16.mxu0 0
      %806 = vmatpush1.bf16.msra.mxu0 0
      %807 = vmatprep.subr.bf16.mxu0 0
      %808 = vmatpush1.bf16.msra.mxu0 0
      %809 = vmatprep.subr.bf16.mxu0 0
      %810 = vmatpush1.bf16.msra.mxu0 0
      %811 = vmatprep.subr.bf16.mxu0 0
      %812 = vmatpush1.bf16.msra.mxu0 0
      %813 = vmatprep.subr.bf16.mxu0 0
      %814 = vmatpush1.bf16.msra.mxu0 0
      %815 = vmatprep.subr.bf16.mxu0 0
      %816 = vmatpush1.bf16.msra.mxu0 0
      %817 = vmatprep.subr.bf16.mxu0 0
      %818 = vmatpush1.bf16.msra.mxu0 0
      %819 = vmatprep.subr.bf16.mxu0 0
      %820 = vmatpush1.bf16.msra.mxu0 0
      %821 = vmatprep.subr.bf16.mxu0 0
      %822 = vmatpush1.bf16.msra.mxu0 0
      %823 = vmatprep.subr.bf16.mxu0 0
      %824 = vmatpush1.bf16.msra.mxu0 0
      %825 = vmatprep.subr.bf16.mxu0 0
      %826 = vmatpush1.bf16.msra.mxu0 0
      %827 = vmatprep.mubr.bf16.mxu0 0
      %828 = vmatmul.mubr.bf16.gmra.mrb[0].mxu0 %v649
      %v829 = vpop.f32.mrb[0].mxu0
      %v830 = vadd.f32 %v388, %v829
      %v831 = vpop.f32.mrb[0].mxu0
      %v832 = vpop.f32.mrb[0].mxu0
      %v833 = vadd.f32 %v388, %v832
      %v834 = vpop.f32.mrb[0].mxu0
      %835 = vmatprep.mubr.bf16.mxu0 0
      %836 = vmatmul.mubr.bf16.gmra.mrb[0].mxu0 %v652
      %v837 = vpop.f32.mrb[0].mxu0
      %v838 = vadd.f32 %v388, %v837
      %v839 = vpop.f32.mrb[0].mxu0
      %v840 = vpop.f32.mrb[0].mxu0
      %v841 = vadd.f32 %v388, %v840
      %v842 = vpop.f32.mrb[0].mxu0
      %843 = vmatprep.mubr.bf16.mxu0 0
      %844 = vmatmul.mubr.bf16.gmra.mrb[0].mxu0 %v655
      %v845 = vpop.f32.mrb[0].mxu0
      %v846 = vadd.f32 %v388, %v845
      %v847 = vpop.f32.mrb[0].mxu0
      %v848 = vpop.f32.mrb[0].mxu0
      %v849 = vadd.f32 %v388, %v848
      %v850 = vpop.f32.mrb[0].mxu0
      %851 = vmatprep.mubr.bf16.mxu0 0
      %852 = vmatmul.mubr.bf16.gmra.mrb[0].mxu0 %v658
      %v853 = vpop.f32.mrb[0].mxu0
      %v854 = vadd.f32 %v388, %v853
      %v855 = vpop.f32.mrb[0].mxu0
      %v856 = vpop.f32.mrb[0].mxu0
      %v857 = vadd.f32 %v388, %v856
      %v858 = vpop.f32.mrb[0].mxu0
      %859 = vmatprep.mubr.bf16.mxu0 0
      %860 = vmatmul.mubr.bf16.gmra.mrb[0].mxu0 %v661
      %v861 = vpop.f32.mrb[0].mxu0
      %v862 = vadd.f32 %v388, %v861
      %v863 = vpop.f32.mrb[0].mxu0
      %v864 = vpop.f32.mrb[0].mxu0
      %v865 = vadd.f32 %v388, %v864
      %v866 = vpop.f32.mrb[0].mxu0
      %867 = vmatprep.mubr.bf16.mxu0 0
      %868 = vmatmul.mubr.bf16.gmra.mrb[0].mxu0 %v664
      %v869 = vpop.f32.mrb[0].mxu0
      %v870 = vadd.f32 %v388, %v869
      %v871 = vpop.f32.mrb[0].mxu0
      %v872 = vpop.f32.mrb[0].mxu0
      %v873 = vadd.f32 %v388, %v872
      %v874 = vpop.f32.mrb[0].mxu0
      %875 = vmatprep.mubr.bf16.mxu0 0
      %876 = vmatmul.mubr.bf16.gmra.mrb[0].mxu0 %v667
      %v877 = vpop.f32.mrb[0].mxu0
      %v878 = vadd.f32 %v388, %v877
      %v879 = vpop.f32.mrb[0].mxu0
      %v880 = vpop.f32.mrb[0].mxu0
      %v881 = vadd.f32 %v388, %v880
      %v882 = vpop.f32.mrb[0].mxu0
      %883 = vmatprep.mubr.bf16.mxu0 0
      %884 = vmatmul.mubr.bf16.gmra.mrb[0].mxu0 %v670
      %v885 = vpop.f32.mrb[0].mxu0
      %v886 = vadd.f32 %v388, %v885
      %v887 = vpop.f32.mrb[0].mxu0
      %v888 = vpop.f32.mrb[0].mxu0
      %v889 = vadd.f32 %v388, %v888
      %v890 = vpop.f32.mrb[0].mxu0
      %891 = vmatprep.mubr.bf16.mxu0 0
      %892 = vmatmul.mubr.bf16.gmra.mrb[0].mxu0 %v673
      %v893 = vpop.f32.mrb[0].mxu0
      %v894 = vadd.f32 %v388, %v893
      %v895 = vpop.f32.mrb[0].mxu0
      %v896 = vpop.f32.mrb[0].mxu0
      %v897 = vadd.f32 %v388, %v896
      %v898 = vpop.f32.mrb[0].mxu0
      %899 = vmatprep.mubr.bf16.mxu0 0
      %900 = vmatmul.mubr.bf16.gmra.mrb[0].mxu0 %v676
      %v901 = vpop.f32.mrb[0].mxu0
      %v902 = vadd.f32 %v388, %v901
      %v903 = vpop.f32.mrb[0].mxu0
      %v904 = vpop.f32.mrb[0].mxu0
      %v905 = vadd.f32 %v388, %v904
      %v906 = vpop.f32.mrb[0].mxu0
      %907 = vmatprep.mubr.bf16.mxu0 0
      %908 = vmatmul.mubr.bf16.gmra.mrb[0].mxu0 %v679
      %v909 = vpop.f32.mrb[0].mxu0
      %v910 = vadd.f32 %v388, %v909
      %v911 = vpop.f32.mrb[0].mxu0
      %v912 = vpop.f32.mrb[0].mxu0
      %v913 = vadd.f32 %v388, %v912
      %v914 = vpop.f32.mrb[0].mxu0
      %915 = vmatprep.mubr.bf16.mxu0 0
      %916 = vmatmul.mubr.bf16.gmra.mrb[0].mxu0 %v682
      %v917 = vpop.f32.mrb[0].mxu0
      %v918 = vadd.f32 %v388, %v917
      %v919 = vpop.f32.mrb[0].mxu0
      %v920 = vpop.f32.mrb[0].mxu0
      %v921 = vadd.f32 %v388, %v920
      %v922 = vpop.f32.mrb[0].mxu0
      %923 = vmatprep.mubr.bf16.mxu0 0
      %924 = vmatmul.mubr.bf16.gmra.mrb[0].mxu0 %v685
      %v925 = vpop.f32.mrb[0].mxu0
      %v926 = vadd.f32 %v388, %v925
      %v927 = vpop.f32.mrb[0].mxu0
      %v928 = vpop.f32.mrb[0].mxu0
      %v929 = vadd.f32 %v388, %v928
      %v930 = vpop.f32.mrb[0].mxu0
      %931 = vmatprep.mubr.bf16.mxu0 0
      %932 = vmatmul.mubr.bf16.gmra.mrb[0].mxu0 %v688
      %v933 = vpop.f32.mrb[0].mxu0
      %v934 = vadd.f32 %v388, %v933
      %v935 = vpop.f32.mrb[0].mxu0
      %v936 = vpop.f32.mrb[0].mxu0
      %v937 = vadd.f32 %v388, %v936
      %v938 = vpop.f32.mrb[0].mxu0
      %939 = vmatprep.mubr.bf16.mxu0 0
      %940 = vmatmul.mubr.bf16.gmra.mrb[0].mxu0 %v691
      %v941 = vpop.f32.mrb[0].mxu0
      %v942 = vadd.f32 %v388, %v941
      %v943 = vpop.f32.mrb[0].mxu0
      %v944 = vpop.f32.mrb[0].mxu0
      %v945 = vadd.f32 %v388, %v944
      %v946 = vpop.f32.mrb[0].mxu0
      %947 = vmatprep.mubr.bf16.mxu0 0
      %948 = vmatmul.mubr.bf16.gmra.mrb[0].mxu0 %v694
      %v949 = vpop.f32.mrb[0].mxu0
      %v950 = vadd.f32 %v388, %v949
      %v951 = vpop.f32.mrb[0].mxu0
      %v952 = vpop.f32.mrb[0].mxu0
      %v953 = vadd.f32 %v388, %v952
      %v954 = vpop.f32.mrb[0].mxu0
      %955 = vmatprep.mubr.bf16.mxu0 0
      %956 = vmatmul.mubr.bf16.gmra.mrb[0].mxu0 %v697
      %v957 = vpop.f32.mrb[0].mxu0
      %v958 = vadd.f32 %v388, %v957
      %v959 = vpop.f32.mrb[0].mxu0
      %v960 = vpop.f32.mrb[0].mxu0
      %v961 = vadd.f32 %v388, %v960
      %v962 = vpop.f32.mrb[0].mxu0
      %963 = vmatprep.mubr.bf16.mxu0 0
      %964 = vmatmul.mubr.bf16.gmra.mrb[0].mxu0 %v700
      %v965 = vpop.f32.mrb[0].mxu0
      %v966 = vadd.f32 %v388, %v965
      %v967 = vpop.f32.mrb[0].mxu0
      %v968 = vpop.f32.mrb[0].mxu0
      %v969 = vadd.f32 %v388, %v968
      %v970 = vpop.f32.mrb[0].mxu0
      %971 = vmatprep.mubr.bf16.mxu0 0
      %972 = vmatmul.mubr.bf16.gmra.mrb[0].mxu0 %v703
      %v973 = vpop.f32.mrb[0].mxu0
      %v974 = vadd.f32 %v388, %v973
      %v975 = vpop.f32.mrb[0].mxu0
      %v976 = vpop.f32.mrb[0].mxu0
      %v977 = vadd.f32 %v388, %v976
      %v978 = vpop.f32.mrb[0].mxu0
      %979 = vmatprep.mubr.bf16.mxu0 0
      %980 = vmatmul.mubr.bf16.gmra.mrb[0].mxu0 %v706
      %v981 = vpop.f32.mrb[0].mxu0
      %v982 = vadd.f32 %v388, %v981
      %v983 = vpop.f32.mrb[0].mxu0
      %v984 = vpop.f32.mrb[0].mxu0
      %v985 = vadd.f32 %v388, %v984
      %v986 = vpop.f32.mrb[0].mxu0
      %987 = vmatprep.mubr.bf16.mxu0 0
      %988 = vmatmul.mubr.bf16.gmra.mrb[0].mxu0 %v709
      %v989 = vpop.f32.mrb[0].mxu0
      %v990 = vadd.f32 %v388, %v989
      %v991 = vpop.f32.mrb[0].mxu0
      %v992 = vpop.f32.mrb[0].mxu0
      %v993 = vadd.f32 %v388, %v992
      %v994 = vpop.f32.mrb[0].mxu0
      %995 = vmatprep.mubr.bf16.mxu0 0
      %996 = vmatmul.mubr.bf16.gmra.mrb[0].mxu0 %v712
      %v997 = vpop.f32.mrb[0].mxu0
      %v998 = vadd.f32 %v388, %v997
      %v999 = vpop.f32.mrb[0].mxu0
      %v1000 = vpop.f32.mrb[0].mxu0
      %v1001 = vadd.f32 %v388, %v1000
      %v1002 = vpop.f32.mrb[0].mxu0
      %1003 = vmatprep.mubr.bf16.mxu0 0
      %1004 = vmatmul.mubr.bf16.gmra.mrb[0].mxu0 %v715
      %v1005 = vpop.f32.mrb[0].mxu0
      %v1006 = vadd.f32 %v388, %v1005
      %v1007 = vpop.f32.mrb[0].mxu0
      %v1008 = vpop.f32.mrb[0].mxu0
      %v1009 = vadd.f32 %v388, %v1008
      %v1010 = vpop.f32.mrb[0].mxu0
      %1011 = vmatprep.mubr.bf16.mxu0 0
      %1012 = vmatmul.mubr.bf16.gmra.mrb[0].mxu0 %v718
      %v1013 = vpop.f32.mrb[0].mxu0
      %v1014 = vadd.f32 %v388, %v1013
      %v1015 = vpop.f32.mrb[0].mxu0
      %v1016 = vpop.f32.mrb[0].mxu0
      %v1017 = vadd.f32 %v388, %v1016
      %v1018 = vpop.f32.mrb[0].mxu0
      %1019 = vmatprep.mubr.bf16.mxu0 0
      %1020 = vmatmul.mubr.bf16.gmra.mrb[0].mxu0 %v721
      %v1021 = vpop.f32.mrb[0].mxu0
      %v1022 = vadd.f32 %v388, %v1021
      %v1023 = vpop.f32.mrb[0].mxu0
      %v1024 = vpop.f32.mrb[0].mxu0
      %v1025 = vadd.f32 %v388, %v1024
      %v1026 = vpop.f32.mrb[0].mxu0
      %1027 = vmatprep.mubr.bf16.mxu0 0
      %1028 = vmatmul.mubr.bf16.gmra.mrb[0].mxu0 %v724
      %v1029 = vpop.f32.mrb[0].mxu0
      %v1030 = vadd.f32 %v388, %v1029
      %v1031 = vpop.f32.mrb[0].mxu0
      %v1032 = vpop.f32.mrb[0].mxu0
      %v1033 = vadd.f32 %v388, %v1032
      %v1034 = vpop.f32.mrb[0].mxu0
      %1035 = vmatprep.mubr.bf16.mxu0 0
      %1036 = vmatmul.mubr.bf16.gmra.mrb[0].mxu0 %v727
      %v1037 = vpop.f32.mrb[0].mxu0
      %v1038 = vadd.f32 %v388, %v1037
      %v1039 = vpop.f32.mrb[0].mxu0
      %v1040 = vpop.f32.mrb[0].mxu0
      %v1041 = vadd.f32 %v388, %v1040
      %v1042 = vpop.f32.mrb[0].mxu0
      %1043 = vmatprep.mubr.bf16.mxu0 0
      %1044 = vmatmul.mubr.bf16.gmra.mrb[0].mxu0 %v730
      %v1045 = vpop.f32.mrb[0].mxu0
      %v1046 = vadd.f32 %v388, %v1045
      %v1047 = vpop.f32.mrb[0].mxu0
      %v1048 = vpop.f32.mrb[0].mxu0
      %v1049 = vadd.f32 %v388, %v1048
      %v1050 = vpop.f32.mrb[0].mxu0
      %1051 = vmatprep.mubr.bf16.mxu0 0
      %1052 = vmatmul.mubr.bf16.gmra.mrb[0].mxu0 %v733
      %v1053 = vpop.f32.mrb[0].mxu0
      %v1054 = vadd.f32 %v388, %v1053
      %v1055 = vpop.f32.mrb[0].mxu0
      %v1056 = vpop.f32.mrb[0].mxu0
      %v1057 = vadd.f32 %v388, %v1056
      %v1058 = vpop.f32.mrb[0].mxu0
      %1059 = vmatprep.mubr.bf16.mxu0 0
      %1060 = vmatmul.mubr.bf16.gmra.mrb[0].mxu0 %v736
      %v1061 = vpop.f32.mrb[0].mxu0
      %v1062 = vadd.f32 %v388, %v1061
      %v1063 = vpop.f32.mrb[0].mxu0
      %v1064 = vpop.f32.mrb[0].mxu0
      %v1065 = vadd.f32 %v388, %v1064
      %v1066 = vpop.f32.mrb[0].mxu0
      %1067 = vmatprep.mubr.bf16.mxu0 0
      %1068 = vmatmul.mubr.bf16.gmra.mrb[0].mxu0 %v739
      %v1069 = vpop.f32.mrb[0].mxu0
      %v1070 = vadd.f32 %v388, %v1069
      %v1071 = vpop.f32.mrb[0].mxu0
      %v1072 = vpop.f32.mrb[0].mxu0
      %v1073 = vadd.f32 %v388, %v1072
      %v1074 = vpop.f32.mrb[0].mxu0
      %1075 = vmatprep.mubr.bf16.mxu0 0
      %1076 = vmatmul.mubr.bf16.gmra.mrb[0].mxu0 %v742
      %v1077 = vpop.f32.mrb[0].mxu0
      %v1078 = vadd.f32 %v388, %v1077
      %v1079 = vpop.f32.mrb[0].mxu0
      %v1080 = vpop.f32.mrb[0].mxu0
      %v1081 = vadd.f32 %v388, %v1080
      %v1082 = vpop.f32.mrb[0].mxu0
      %1083 = vmatprep.mubr.bf16.mxu0 0
      %1084 = vmatmul.mubr.bf16.gmra.mrb[0].mxu0 %v745
      %v1085 = vpop.f32.mrb[0].mxu0
      %v1086 = vadd.f32 %v388, %v1085
      %v1087 = vpop.f32.mrb[0].mxu0
      %v1088 = vpop.f32.mrb[0].mxu0
      %v1089 = vadd.f32 %v388, %v1088
      %v1090 = vpop.f32.mrb[0].mxu0
      %1091 = vmatprep.mubr.bf16.mxu0 0
      %1092 = vmatmul.mubr.bf16.gmra.mrb[0].mxu0 %v748
      %v1093 = vpop.f32.mrb[0].mxu0
      %v1094 = vadd.f32 %v388, %v1093
      %v1095 = vpop.f32.mrb[0].mxu0
      %v1096 = vpop.f32.mrb[0].mxu0
      %v1097 = vadd.f32 %v388, %v1096
      %v1098 = vpop.f32.mrb[0].mxu0
      %1099 = vmatprep.mubr.bf16.mxu0 0
      %1100 = vmatmul.mubr.bf16.gmra.mrb[0].mxu0 %v751
      %v1101 = vpop.f32.mrb[0].mxu0
      %v1102 = vadd.f32 %v388, %v1101
      %v1103 = vpop.f32.mrb[0].mxu0
      %v1104 = vpop.f32.mrb[0].mxu0
      %v1105 = vadd.f32 %v388, %v1104
      %v1106 = vpop.f32.mrb[0].mxu0
      %1107 = vmatprep.mubr.bf16.mxu0 0
      %1108 = vmatmul.mubr.bf16.gmra.mrb[0].mxu0 %v754
      %v1109 = vpop.f32.mrb[0].mxu0
      %v1110 = vadd.f32 %v388, %v1109
      %v1111 = vpop.f32.mrb[0].mxu0
      %v1112 = vpop.f32.mrb[0].mxu0
      %v1113 = vadd.f32 %v388, %v1112
      %v1114 = vpop.f32.mrb[0].mxu0
      %1115 = vmatprep.mubr.bf16.mxu0 0
      %1116 = vmatmul.mubr.bf16.gmra.mrb[0].mxu0 %v757
      %v1117 = vpop.f32.mrb[0].mxu0
      %v1118 = vadd.f32 %v388, %v1117
      %v1119 = vpop.f32.mrb[0].mxu0
      %v1120 = vpop.f32.mrb[0].mxu0
      %v1121 = vadd.f32 %v388, %v1120
      %v1122 = vpop.f32.mrb[0].mxu0
      %1123 = vmatprep.mubr.bf16.mxu0 0
      %1124 = vmatmul.mubr.bf16.gmra.mrb[0].mxu0 %v760
      %v1125 = vpop.f32.mrb[0].mxu0
      %v1126 = vadd.f32 %v388, %v1125
      %v1127 = vpop.f32.mrb[0].mxu0
      %v1128 = vpop.f32.mrb[0].mxu0
      %v1129 = vadd.f32 %v388, %v1128
      %v1130 = vpop.f32.mrb[0].mxu0
      %1131 = vmatprep.mubr.bf16.mxu0 0
      %1132 = vmatmul.mubr.bf16.gmra.mrb[0].mxu0 %v763
      %v1133 = vpop.f32.mrb[0].mxu0
      %v1134 = vadd.f32 %v388, %v1133
      %v1135 = vpop.f32.mrb[0].mxu0
      %v1136 = vpop.f32.mrb[0].mxu0
      %v1137 = vadd.f32 %v388, %v1136
      %v1138 = vpop.f32.mrb[0].mxu0
      %1139 = vmatprep.mubr.bf16.mxu0 0
      %1140 = vmatmul.mubr.bf16.gmra.mrb[0].mxu0 %v766
      %v1141 = vpop.f32.mrb[0].mxu0
      %v1142 = vadd.f32 %v388, %v1141
      %v1143 = vpop.f32.mrb[0].mxu0
      %v1144 = vpop.f32.mrb[0].mxu0
      %v1145 = vadd.f32 %v388, %v1144
      %v1146 = vpop.f32.mrb[0].mxu0
      %1147 = vmatprep.mubr.bf16.mxu0 0
      %1148 = vmatmul.mubr.bf16.gmra.mrb[0].mxu0 %v769
      %v1149 = vpop.f32.mrb[0].mxu0
      %v1150 = vadd.f32 %v388, %v1149
      %v1151 = vpop.f32.mrb[0].mxu0
      %v1152 = vpop.f32.mrb[0].mxu0
      %v1153 = vadd.f32 %v388, %v1152
      %v1154 = vpop.f32.mrb[0].mxu0
      %1155 = vmatprep.mubr.bf16.mxu0 0
      %1156 = vmatmul.mubr.bf16.gmra.mrb[0].mxu0 %v772
      %v1157 = vpop.f32.mrb[0].mxu0
      %v1158 = vadd.f32 %v388, %v1157
      %v1159 = vpop.f32.mrb[0].mxu0
      %v1160 = vpop.f32.mrb[0].mxu0
      %v1161 = vadd.f32 %v388, %v1160
      %v1162 = vpop.f32.mrb[0].mxu0
      %1163 = vmatprep.mubr.bf16.mxu0 0
      %1164 = vmatmul.mubr.bf16.gmra.mrb[0].mxu0 %v775
      %v1165 = vpop.f32.mrb[0].mxu0
      %v1166 = vadd.f32 %v388, %v1165
      %v1167 = vpop.f32.mrb[0].mxu0
      %v1168 = vpop.f32.mrb[0].mxu0
      %v1169 = vadd.f32 %v388, %v1168
      %v1170 = vpop.f32.mrb[0].mxu0
      %1171 = vmatprep.mubr.bf16.mxu0 0
      %1172 = vmatmul.mubr.bf16.gmra.mrb[0].mxu0 %v778
      %v1173 = vpop.f32.mrb[0].mxu0
      %v1174 = vadd.f32 %v388, %v1173
      %v1175 = vpop.f32.mrb[0].mxu0
      %v1176 = vpop.f32.mrb[0].mxu0
      %v1177 = vadd.f32 %v388, %v1176
      %v1178 = vpop.f32.mrb[0].mxu0
      %1179 = vmatprep.mubr.bf16.mxu0 0
      %1180 = vmatmul.mubr.bf16.gmra.mrb[0].mxu0 %v781
      %v1181 = vpop.f32.mrb[0].mxu0
      %v1182 = vadd.f32 %v388, %v1181
      %v1183 = vpop.f32.mrb[0].mxu0
      %v1184 = vpop.f32.mrb[0].mxu0
      %v1185 = vadd.f32 %v388, %v1184
      %v1186 = vpop.f32.mrb[0].mxu0
      %1187 = vmatprep.mubr.bf16.mxu0 0
      %1188 = vmatmul.mubr.bf16.gmra.mrb[0].mxu0 %v784
      %v1189 = vpop.f32.mrb[0].mxu0
      %v1190 = vadd.f32 %v388, %v1189
      %v1191 = vpop.f32.mrb[0].mxu0
      %v1192 = vpop.f32.mrb[0].mxu0
      %v1193 = vadd.f32 %v388, %v1192
      %v1194 = vpop.f32.mrb[0].mxu0
      %1195 = vmatprep.mubr.bf16.mxu0 0
      %1196 = vmatmul.mubr.bf16.gmra.mrb[0].mxu0 %v787
      %v1197 = vpop.f32.mrb[0].mxu0
      %v1198 = vadd.f32 %v388, %v1197
      %v1199 = vpop.f32.mrb[0].mxu0
      %v1200 = vpop.f32.mrb[0].mxu0
      %v1201 = vadd.f32 %v388, %v1200
      %v1202 = vpop.f32.mrb[0].mxu0
      %1203 = vmatprep.mubr.bf16.mxu0 0
      %1204 = vmatmul.mubr.bf16.gmra.mrb[0].mxu0 %v790
      %v1205 = vpop.f32.mrb[0].mxu0
      %v1206 = vadd.f32 %v388, %v1205
      %v1207 = vpop.f32.mrb[0].mxu0
      %v1208 = vpop.f32.mrb[0].mxu0
      %v1209 = vadd.f32 %v388, %v1208
      %v1210 = vpop.f32.mrb[0].mxu0
      %1211 = vmatprep.mubr.bf16.mxu0 0
      %1212 = vmatmul.mubr.bf16.gmra.mrb[0].mxu0 %v793
      %v1213 = vpop.f32.mrb[0].mxu0
      %v1214 = vadd.f32 %v388, %v1213
      %v1215 = vpop.f32.mrb[0].mxu0
      %v1216 = vpop.f32.mrb[0].mxu0
      %v1217 = vadd.f32 %v388, %v1216
      %v1218 = vpop.f32.mrb[0].mxu0
      %1219 = vdwg.mxu0
      %v1220 = vmax.f32 %v830, 0.0
      %v1221 = vmax.f32 %v833, 0.0
      %v1222 = vmax.f32 %v838, 0.0
      %v1223 = vmax.f32 %v841, 0.0
      %v1224 = vmax.f32 %v846, 0.0
      %v1225 = vmax.f32 %v849, 0.0
      %v1226 = vmax.f32 %v854, 0.0
      %v1227 = vmax.f32 %v857, 0.0
      %v1228 = vmax.f32 %v862, 0.0
      %v1229 = vmax.f32 %v865, 0.0
      %v1230 = vmax.f32 %v870, 0.0
      %v1231 = vmax.f32 %v873, 0.0
      %v1232 = vmax.f32 %v878, 0.0
      %v1233 = vmax.f32 %v881, 0.0
      %v1234 = vmax.f32 %v886, 0.0
      %v1235 = vmax.f32 %v889, 0.0
      %v1236 = vmax.f32 %v894, 0.0
      %v1237 = vmax.f32 %v897, 0.0
      %v1238 = vmax.f32 %v902, 0.0
      %v1239 = vmax.f32 %v905, 0.0
      %v1240 = vmax.f32 %v910, 0.0
      %v1241 = vmax.f32 %v913, 0.0
      %v1242 = vmax.f32 %v918, 0.0
      %v1243 = vmax.f32 %v921, 0.0
      %v1244 = vmax.f32 %v926, 0.0
      %v1245 = vmax.f32 %v929, 0.0
      %v1246 = vmax.f32 %v934, 0.0
      %v1247 = vmax.f32 %v937, 0.0
      %v1248 = vmax.f32 %v942, 0.0
      %v1249 = vmax.f32 %v945, 0.0
      %v1250 = vmax.f32 %v950, 0.0
      %v1251 = vmax.f32 %v953, 0.0
      %v1252 = vmax.f32 %v958, 0.0
      %v1253 = vmax.f32 %v961, 0.0
      %v1254 = vmax.f32 %v966, 0.0
      %v1255 = vmax.f32 %v969, 0.0
      %v1256 = vmax.f32 %v974, 0.0
      %v1257 = vmax.f32 %v977, 0.0
      %v1258 = vmax.f32 %v982, 0.0
      %v1259 = vmax.f32 %v985, 0.0
      %v1260 = vmax.f32 %v990, 0.0
      %v1261 = vmax.f32 %v993, 0.0
      %v1262 = vmax.f32 %v998, 0.0
      %v1263 = vmax.f32 %v1001, 0.0
      %v1264 = vmax.f32 %v1006, 0.0
      %v1265 = vmax.f32 %v1009, 0.0
      %v1266 = vmax.f32 %v1014, 0.0
      %v1267 = vmax.f32 %v1017, 0.0
      %v1268 = vmax.f32 %v1022, 0.0
      %v1269 = vmax.f32 %v1025, 0.0
      %v1270 = vmax.f32 %v1030, 0.0
      %v1271 = vmax.f32 %v1033, 0.0
      %v1272 = vmax.f32 %v1038, 0.0
      %v1273 = vmax.f32 %v1041, 0.0
      %v1274 = vmax.f32 %v1046, 0.0
      %v1275 = vmax.f32 %v1049, 0.0
      %v1276 = vmax.f32 %v1054, 0.0
      %v1277 = vmax.f32 %v1057, 0.0
      %v1278 = vmax.f32 %v1062, 0.0
      %v1279 = vmax.f32 %v1065, 0.0
      %v1280 = vmax.f32 %v1070, 0.0
      %v1281 = vmax.f32 %v1073, 0.0
      %v1282 = vmax.f32 %v1078, 0.0
      %v1283 = vmax.f32 %v1081, 0.0
      %v1284 = vmax.f32 %v1086, 0.0
      %v1285 = vmax.f32 %v1089, 0.0
      %v1286 = vmax.f32 %v1094, 0.0
      %v1287 = vmax.f32 %v1097, 0.0
      %v1288 = vmax.f32 %v1102, 0.0
      %v1289 = vmax.f32 %v1105, 0.0
      %v1290 = vmax.f32 %v1110, 0.0
      %v1291 = vmax.f32 %v1113, 0.0
      %v1292 = vmax.f32 %v1118, 0.0
      %v1293 = vmax.f32 %v1121, 0.0
      %v1294 = vmax.f32 %v1126, 0.0
      %v1295 = vmax.f32 %v1129, 0.0
      %v1296 = vmax.f32 %v1134, 0.0
      %v1297 = vmax.f32 %v1137, 0.0
      %v1298 = vmax.f32 %v1142, 0.0
      %v1299 = vmax.f32 %v1145, 0.0
      %v1300 = vmax.f32 %v1150, 0.0
      %v1301 = vmax.f32 %v1153, 0.0
      %v1302 = vmax.f32 %v1158, 0.0
      %v1303 = vmax.f32 %v1161, 0.0
      %v1304 = vmax.f32 %v1166, 0.0
      %v1305 = vmax.f32 %v1169, 0.0
      %v1306 = vmax.f32 %v1174, 0.0
      %v1307 = vmax.f32 %v1177, 0.0
      %v1308 = vmax.f32 %v1182, 0.0
      %v1309 = vmax.f32 %v1185, 0.0
      %v1310 = vmax.f32 %v1190, 0.0
      %v1311 = vmax.f32 %v1193, 0.0
      %v1312 = vmax.f32 %v1198, 0.0
      %v1313 = vmax.f32 %v1201, 0.0
      %v1314 = vmax.f32 %v1206, 0.0
      %v1315 = vmax.f32 %v1209, 0.0
      %v1316 = vmax.f32 %v1214, 0.0
      %v1317 = vmax.f32 %v1217, 0.0
      %v1318 = vpack.c.bf16 %v1221, %v1220
      %v1319 = vpack.c.bf16 %v1223, %v1222
      %v1320 = vpack.c.bf16 %v1225, %v1224
      %v1321 = vpack.c.bf16 %v1227, %v1226
      %v1322 = vpack.c.bf16 %v1229, %v1228
      %v1323 = vpack.c.bf16 %v1231, %v1230
      %v1324 = vpack.c.bf16 %v1233, %v1232
      %v1325 = vpack.c.bf16 %v1235, %v1234
      %v1326 = vpack.c.bf16 %v1237, %v1236
      %v1327 = vpack.c.bf16 %v1239, %v1238
      %v1328 = vpack.c.bf16 %v1241, %v1240
      %v1329 = vpack.c.bf16 %v1243, %v1242
      %v1330 = vpack.c.bf16 %v1245, %v1244
      %v1331 = vpack.c.bf16 %v1247, %v1246
      %v1332 = vpack.c.bf16 %v1249, %v1248
      %v1333 = vpack.c.bf16 %v1251, %v1250
      %v1334 = vpack.c.bf16 %v1253, %v1252
      %v1335 = vpack.c.bf16 %v1255, %v1254
      %v1336 = vpack.c.bf16 %v1257, %v1256
      %v1337 = vpack.c.bf16 %v1259, %v1258
      %v1338 = vpack.c.bf16 %v1261, %v1260
      %v1339 = vpack.c.bf16 %v1263, %v1262
      %v1340 = vpack.c.bf16 %v1265, %v1264
      %v1341 = vpack.c.bf16 %v1267, %v1266
      %v1342 = vpack.c.bf16 %v1269, %v1268
      %v1343 = vpack.c.bf16 %v1271, %v1270
      %v1344 = vpack.c.bf16 %v1273, %v1272
      %v1345 = vpack.c.bf16 %v1275, %v1274
      %v1346 = vpack.c.bf16 %v1277, %v1276
      %v1347 = vpack.c.bf16 %v1279, %v1278
      %v1348 = vpack.c.bf16 %v1281, %v1280
      %v1349 = vpack.c.bf16 %v1283, %v1282
      %v1350 = vpack.c.bf16 %v1285, %v1284
      %v1351 = vpack.c.bf16 %v1287, %v1286
      %v1352 = vpack.c.bf16 %v1289, %v1288
      %v1353 = vpack.c.bf16 %v1291, %v1290
      %v1354 = vpack.c.bf16 %v1293, %v1292
      %v1355 = vpack.c.bf16 %v1295, %v1294
      %v1356 = vpack.c.bf16 %v1297, %v1296
      %v1357 = vpack.c.bf16 %v1299, %v1298
      %v1358 = vpack.c.bf16 %v1301, %v1300
      %v1359 = vpack.c.bf16 %v1303, %v1302
      %v1360 = vpack.c.bf16 %v1305, %v1304
      %v1361 = vpack.c.bf16 %v1307, %v1306
      %v1362 = vpack.c.bf16 %v1309, %v1308
      %v1363 = vpack.c.bf16 %v1311, %v1310
      %v1364 = vpack.c.bf16 %v1313, %v1312
      %v1365 = vpack.c.bf16 %v1315, %v1314
      %v1366 = vpack.c.bf16 %v1317, %v1316
      %1367 = vst [vmem:[#allocation2] sm:$0xff] %v1318
      %1368 = vst [vmem:[#allocation2 + $0x8] sm:$0xff] %v1319
      %1369 = vst [vmem:[#allocation2 + $0x10] sm:$0xff] %v1320
      %1370 = vst [vmem:[#allocation2 + $0x18] sm:$0xff] %v1321
      %1371 = vst [vmem:[#allocation2 + $0x20] sm:$0xff] %v1322
      %1372 = vst [vmem:[#allocation2 + $0x28] sm:$0xff] %v1323
      %1373 = vst [vmem:[#allocation2 + $0x30] sm:$0xff] %v1324
      %1374 = vst [vmem:[#allocation2 + $0x38] sm:$0xff] %v1325
      %1375 = vst [vmem:[#allocation2 + $0x40] sm:$0xff] %v1326
      %1376 = vst [vmem:[#allocation2 + $0x48] sm:$0xff] %v1327
      %1377 = vst [vmem:[#allocation2 + $0x50] sm:$0xff] %v1328
      %1378 = vst [vmem:[#allocation2 + $0x58] sm:$0xff] %v1329
      %1379 = vst [vmem:[#allocation2 + $0x60] sm:$0xff] %v1330
      %1380 = vst [vmem:[#allocation2 + $0x68] sm:$0xff] %v1331
      %1381 = vst [vmem:[#allocation2 + $0x70] sm:$0xff] %v1332
      %1382 = vst [vmem:[#allocation2 + $0x78] sm:$0xff] %v1333
      %1383 = vst [vmem:[#allocation2 + $0x80] sm:$0xff] %v1334
      %1384 = vst [vmem:[#allocation2 + $0x88] sm:$0xff] %v1335
      %1385 = vst [vmem:[#allocation2 + $0x90] sm:$0xff] %v1336
      %1386 = vst [vmem:[#allocation2 + $0x98] sm:$0xff] %v1337
      %1387 = vst [vmem:[#allocation2 + $0xa0] sm:$0xff] %v1338
      %1388 = vst [vmem:[#allocation2 + $0xa8] sm:$0xff] %v1339
      %1389 = vst [vmem:[#allocation2 + $0xb0] sm:$0xff] %v1340
      %1390 = vst [vmem:[#allocation2 + $0xb8] sm:$0xff] %v1341
      %1391 = vst [vmem:[#allocation2 + $0xc0] sm:$0xff] %v1342
      %1392 = vst [vmem:[#allocation2 + $0xc8] sm:$0xff] %v1343
      %1393 = vst [vmem:[#allocation2 + $0xd0] sm:$0xff] %v1344
      %1394 = vst [vmem:[#allocation2 + $0xd8] sm:$0xff] %v1345
      %1395 = vst [vmem:[#allocation2 + $0xe0] sm:$0xff] %v1346
      %1396 = vst [vmem:[#allocation2 + $0xe8] sm:$0xff] %v1347
      %1397 = vst [vmem:[#allocation2 + $0xf0] sm:$0xff] %v1348
      %1398 = vst [vmem:[#allocation2 + $0xf8] sm:$0xff] %v1349
      %1399 = vst [vmem:[#allocation2 + $0x100] sm:$0xff] %v1350
      %1400 = vst [vmem:[#allocation2 + $0x108] sm:$0xff] %v1351
      %1401 = vst [vmem:[#allocation2 + $0x110] sm:$0xff] %v1352
      %1402 = vst [vmem:[#allocation2 + $0x118] sm:$0xff] %v1353
      %1403 = vst [vmem:[#allocation2 + $0x120] sm:$0xff] %v1354
      %1404 = vst [vmem:[#allocation2 + $0x128] sm:$0xff] %v1355
      %1405 = vst [vmem:[#allocation2 + $0x130] sm:$0xff] %v1356
      %1406 = vst [vmem:[#allocation2 + $0x138] sm:$0xff] %v1357
      %1407 = vst [vmem:[#allocation2 + $0x140] sm:$0xff] %v1358
      %1408 = vst [vmem:[#allocation2 + $0x148] sm:$0xff] %v1359
      %1409 = vst [vmem:[#allocation2 + $0x150] sm:$0xff] %v1360
      %1410 = vst [vmem:[#allocation2 + $0x158] sm:$0xff] %v1361
      %1411 = vst [vmem:[#allocation2 + $0x160] sm:$0xff] %v1362
      %1412 = vst [vmem:[#allocation2 + $0x168] sm:$0xff] %v1363
      %1413 = vst [vmem:[#allocation2 + $0x170] sm:$0xff] %v1364
      %1414 = vst [vmem:[#allocation2 + $0x178] sm:$0xff] %v1365
      %1415 = vst [vmem:[#allocation2 + $0x180] sm:$0xff] %v1366
      %v1416 = vld [vmem:[%s3] sm:$0xff]
      %v1417 = vld [vmem:[%s3 + $0x8] sm:$0xff]
      %v1418 = vld [vmem:[%s3 + $0x10] sm:$0xff]
      %v1419 = vld [vmem:[%s3 + $0x18] sm:$0xf]
      %v1420 = vld [vmem:[%s3 + $0x1c] sm:$0xff]
      %v1421 = vld [vmem:[%s3 + $0x24] sm:$0xff]
      %v1422 = vld [vmem:[%s3 + $0x2c] sm:$0xff]
      %v1423 = vld [vmem:[%s3 + $0x34] sm:$0xf]
      %v1424 = vld [vmem:[%s3 + $0x38] sm:$0xff]
      %v1425 = vld [vmem:[%s3 + $0x40] sm:$0xff]
      %v1426 = vld [vmem:[%s3 + $0x48] sm:$0xff]
      %v1427 = vld [vmem:[%s3 + $0x50] sm:$0xf]
      %v1428 = vld [vmem:[%s3 + $0x54] sm:$0xff]
      %v1429 = vld [vmem:[%s3 + $0x5c] sm:$0xff]
      %v1430 = vld [vmem:[%s3 + $0x64] sm:$0xff]
      %v1431 = vld [vmem:[%s3 + $0x6c] sm:$0xf]
      %v1432 = vld [vmem:[%s3 + $0x70] sm:$0xff]
      %v1433 = vld [vmem:[%s3 + $0x78] sm:$0xff]
      %v1434 = vld [vmem:[%s3 + $0x80] sm:$0xff]
      %v1435 = vld [vmem:[%s3 + $0x88] sm:$0xf]
      %v1436 = vld [vmem:[%s3 + $0x8c] sm:$0xff]
      %v1437 = vld [vmem:[%s3 + $0x94] sm:$0xff]
      %v1438 = vld [vmem:[%s3 + $0x9c] sm:$0xff]
      %v1439 = vld [vmem:[%s3 + $0xa4] sm:$0xf]
      %v1440 = vld [vmem:[%s3 + $0xa8] sm:$0xff]
      %v1441 = vld [vmem:[%s3 + $0xb0] sm:$0xff]
      %v1442 = vld [vmem:[%s3 + $0xb8] sm:$0xff]
      %v1443 = vld [vmem:[%s3 + $0xc0] sm:$0xf]
      %v1444 = vld [vmem:[%s3 + $0xc4] sm:$0xff]
      %v1445 = vld [vmem:[%s3 + $0xcc] sm:$0xff]
      %v1446 = vld [vmem:[%s3 + $0xd4] sm:$0xff]
      %v1447 = vld [vmem:[%s3 + $0xdc] sm:$0xf]
      %v1448 = vld [vmem:[%s3 + $0xe0] sm:$0xff]
      %v1449 = vld [vmem:[%s3 + $0xe8] sm:$0xff]
      %v1450 = vld [vmem:[%s3 + $0xf0] sm:$0xff]
      %v1451 = vld [vmem:[%s3 + $0xf8] sm:$0xf]
      %v1452 = vld [vmem:[%s3 + $0xfc] sm:$0xff]
      %v1453 = vld [vmem:[%s3 + $0x104] sm:$0xff]
      %v1454 = vld [vmem:[%s3 + $0x10c] sm:$0xff]
      %v1455 = vld [vmem:[%s3 + $0x114] sm:$0xf]
      %v1456 = vld [vmem:[%s3 + $0x118] sm:$0xff]
      %v1457 = vld [vmem:[%s3 + $0x120] sm:$0xff]
      %v1458 = vld [vmem:[%s3 + $0x128] sm:$0xff]
      %v1459 = vld [vmem:[%s3 + $0x130] sm:$0xf]
      %v1460 = vld [vmem:[%s3 + $0x134] sm:$0xff]
      %v1461 = vld [vmem:[%s3 + $0x13c] sm:$0xff]
      %v1462 = vld [vmem:[%s3 + $0x144] sm:$0xff]
      %v1463 = vld [vmem:[%s3 + $0x14c] sm:$0xf]
      %v1464 = vld [vmem:[%s3 + $0x150] sm:$0xff]
      %v1465 = vld [vmem:[%s3 + $0x158] sm:$0xff]
      %v1466 = vld [vmem:[%s3 + $0x160] sm:$0xff]
      %v1467 = vld [vmem:[%s3 + $0x168] sm:$0xf]
      %v1468 = vld [vmem:[%s3 + $0x16c] sm:$0xff]
      %v1469 = vld [vmem:[%s3 + $0x174] sm:$0xff]
      %v1470 = vld [vmem:[%s3 + $0x17c] sm:$0xff]
      %v1471 = vld [vmem:[%s3 + $0x184] sm:$0xf]
      %v1472 = vld [vmem:[%s3 + $0x188] sm:$0xff]
      %v1473 = vld [vmem:[%s3 + $0x190] sm:$0xff]
      %v1474 = vld [vmem:[%s3 + $0x198] sm:$0xff]
      %v1475 = vld [vmem:[%s3 + $0x1a0] sm:$0xf]
      %v1476 = vld [vmem:[%s3 + $0x1a4] sm:$0xff]
      %v1477 = vld [vmem:[%s3 + $0x1ac] sm:$0xff]
      %v1478 = vld [vmem:[%s3 + $0x1b4] sm:$0xff]
      %v1479 = vld [vmem:[%s3 + $0x1bc] sm:$0xf]
      %v1480 = vld [vmem:[%s3 + $0x1c0] sm:$0xff]
      %v1481 = vld [vmem:[%s3 + $0x1c8] sm:$0xff]
      %v1482 = vld [vmem:[%s3 + $0x1d0] sm:$0xff]
      %v1483 = vld [vmem:[%s3 + $0x1d8] sm:$0xf]
      %v1484 = vld [vmem:[%s3 + $0x1dc] sm:$0xff]
      %v1485 = vld [vmem:[%s3 + $0x1e4] sm:$0xff]
      %v1486 = vld [vmem:[%s3 + $0x1ec] sm:$0xff]
      %v1487 = vld [vmem:[%s3 + $0x1f4] sm:$0xf]
      %v1488 = vld [vmem:[%s3 + $0x1f8] sm:$0xff]
      %v1489 = vld [vmem:[%s3 + $0x200] sm:$0xff]
      %v1490 = vld [vmem:[%s3 + $0x208] sm:$0xff]
      %v1491 = vld [vmem:[%s3 + $0x210] sm:$0xf]
      %v1492 = vld [vmem:[%s3 + $0x214] sm:$0xff]
      %v1493 = vld [vmem:[%s3 + $0x21c] sm:$0xff]
      %v1494 = vld [vmem:[%s3 + $0x224] sm:$0xff]
      %v1495 = vld [vmem:[%s3 + $0x22c] sm:$0xf]
      %v1496 = vld [vmem:[%s3 + $0x230] sm:$0xff]
      %v1497 = vld [vmem:[%s3 + $0x238] sm:$0xff]
      %v1498 = vld [vmem:[%s3 + $0x240] sm:$0xff]
      %v1499 = vld [vmem:[%s3 + $0x248] sm:$0xf]
      %v1500 = vld [vmem:[%s3 + $0x24c] sm:$0xff]
      %v1501 = vld [vmem:[%s3 + $0x254] sm:$0xff]
      %v1502 = vld [vmem:[%s3 + $0x25c] sm:$0xff]
      %v1503 = vld [vmem:[%s3 + $0x264] sm:$0xf]
      %v1504 = vld [vmem:[%s3 + $0x268] sm:$0xff]
      %v1505 = vld [vmem:[%s3 + $0x270] sm:$0xff]
      %v1506 = vld [vmem:[%s3 + $0x278] sm:$0xff]
      %v1507 = vld [vmem:[%s3 + $0x280] sm:$0xf]
      %v1508 = vld [vmem:[%s3 + $0x284] sm:$0xff]
      %v1509 = vld [vmem:[%s3 + $0x28c] sm:$0xff]
      %v1510 = vld [vmem:[%s3 + $0x294] sm:$0xff]
      %v1511 = vld [vmem:[%s3 + $0x29c] sm:$0xf]
      %v1512 = vld [vmem:[%s3 + $0x2a0] sm:$0xff]
      %v1513 = vld [vmem:[%s3 + $0x2a8] sm:$0xff]
      %v1514 = vld [vmem:[%s3 + $0x2b0] sm:$0xff]
      %v1515 = vld [vmem:[%s3 + $0x2b8] sm:$0xf]
      %v1516 = vld [vmem:[%s3 + $0x2bc] sm:$0xff]
      %v1517 = vld [vmem:[%s3 + $0x2c4] sm:$0xff]
      %v1518 = vld [vmem:[%s3 + $0x2cc] sm:$0xff]
      %v1519 = vld [vmem:[%s3 + $0x2d4] sm:$0xf]
      %v1520 = vld [vmem:[%s3 + $0x2d8] sm:$0xff]
      %v1521 = vld [vmem:[%s3 + $0x2e0] sm:$0xff]
      %v1522 = vld [vmem:[%s3 + $0x2e8] sm:$0xff]
      %v1523 = vld [vmem:[%s3 + $0x2f0] sm:$0xf]
      %v1524 = vld [vmem:[%s3 + $0x2f4] sm:$0xff]
      %v1525 = vld [vmem:[%s3 + $0x2fc] sm:$0xff]
      %v1526 = vld [vmem:[%s3 + $0x304] sm:$0xff]
      %v1527 = vld [vmem:[%s3 + $0x30c] sm:$0xf]
      %v1528 = vld [vmem:[%s3 + $0x310] sm:$0xff]
      %v1529 = vld [vmem:[%s3 + $0x318] sm:$0xff]
      %v1530 = vld [vmem:[%s3 + $0x320] sm:$0xff]
      %v1531 = vld [vmem:[%s3 + $0x328] sm:$0xf]
      %v1532 = vld [vmem:[%s3 + $0x32c] sm:$0xff]
      %v1533 = vld [vmem:[%s3 + $0x334] sm:$0xff]
      %v1534 = vld [vmem:[%s3 + $0x33c] sm:$0xff]
      %v1535 = vld [vmem:[%s3 + $0x344] sm:$0xf]
      %v1536 = vld [vmem:[%s3 + $0x348] sm:$0xff]
      %v1537 = vld [vmem:[%s3 + $0x350] sm:$0xff]
      %v1538 = vld [vmem:[%s3 + $0x358] sm:$0xff]
      %v1539 = vld [vmem:[%s3 + $0x360] sm:$0xf]
      %v1540 = vld [vmem:[%s3 + $0x364] sm:$0xff]
      %v1541 = vld [vmem:[%s3 + $0x36c] sm:$0xff]
      %v1542 = vld [vmem:[%s3 + $0x374] sm:$0xff]
      %v1543 = vld [vmem:[%s3 + $0x37c] sm:$0xf]
      %v1544 = vld [vmem:[#allocation2] sm:$0xff]
      %v1545 = vld [vmem:[#allocation2 + $0x8] sm:$0xff]
      %v1546 = vld [vmem:[#allocation2 + $0x10] sm:$0xff]
      %v1547 = vld [vmem:[#allocation2 + $0x18] sm:$0xff]
      %v1548 = vld [vmem:[#allocation2 + $0x20] sm:$0xff]
      %v1549 = vld [vmem:[#allocation2 + $0x28] sm:$0xff]
      %v1550 = vld [vmem:[#allocation2 + $0x30] sm:$0xff]
      %v1551 = vld [vmem:[#allocation2 + $0x38] sm:$0xff]
      %v1552 = vld [vmem:[#allocation2 + $0x40] sm:$0xff]
      %v1553 = vld [vmem:[#allocation2 + $0x48] sm:$0xff]
      %v1554 = vld [vmem:[#allocation2 + $0x50] sm:$0xff]
      %v1555 = vld [vmem:[#allocation2 + $0x58] sm:$0xff]
      %v1556 = vld [vmem:[#allocation2 + $0x60] sm:$0xff]
      %v1557 = vld [vmem:[#allocation2 + $0x68] sm:$0xff]
      %v1558 = vld [vmem:[#allocation2 + $0x70] sm:$0xff]
      %v1559 = vld [vmem:[#allocation2 + $0x78] sm:$0xff]
      %v1560 = vld [vmem:[#allocation2 + $0x80] sm:$0xff]
      %v1561 = vld [vmem:[#allocation2 + $0x88] sm:$0xff]
      %v1562 = vld [vmem:[#allocation2 + $0x90] sm:$0xff]
      %v1563 = vld [vmem:[#allocation2 + $0x98] sm:$0xff]
      %v1564 = vld [vmem:[#allocation2 + $0xa0] sm:$0xff]
      %v1565 = vld [vmem:[#allocation2 + $0xa8] sm:$0xff]
      %v1566 = vld [vmem:[#allocation2 + $0xb0] sm:$0xff]
      %v1567 = vld [vmem:[#allocation2 + $0xb8] sm:$0xff]
      %v1568 = vld [vmem:[#allocation2 + $0xc0] sm:$0xff]
      %v1569 = vld [vmem:[#allocation2 + $0xc8] sm:$0xff]
      %v1570 = vld [vmem:[#allocation2 + $0xd0] sm:$0xff]
      %v1571 = vld [vmem:[#allocation2 + $0xd8] sm:$0xff]
      %v1572 = vld [vmem:[#allocation2 + $0xe0] sm:$0xff]
      %v1573 = vld [vmem:[#allocation2 + $0xe8] sm:$0xff]
      %v1574 = vld [vmem:[#allocation2 + $0xf0] sm:$0xff]
      %v1575 = vld [vmem:[#allocation2 + $0xf8] sm:$0xff]
      %v1576 = vld [vmem:[#allocation2 + $0x100] sm:$0xff]
      %v1577 = vld [vmem:[#allocation2 + $0x108] sm:$0xff]
      %v1578 = vld [vmem:[#allocation2 + $0x110] sm:$0xff]
      %v1579 = vld [vmem:[#allocation2 + $0x118] sm:$0xff]
      %v1580 = vld [vmem:[#allocation2 + $0x120] sm:$0xff]
      %v1581 = vld [vmem:[#allocation2 + $0x128] sm:$0xff]
      %v1582 = vld [vmem:[#allocation2 + $0x130] sm:$0xff]
      %v1583 = vld [vmem:[#allocation2 + $0x138] sm:$0xff]
      %v1584 = vld [vmem:[#allocation2 + $0x140] sm:$0xff]
      %v1585 = vld [vmem:[#allocation2 + $0x148] sm:$0xff]
      %v1586 = vld [vmem:[#allocation2 + $0x150] sm:$0xff]
      %v1587 = vld [vmem:[#allocation2 + $0x158] sm:$0xff]
      %v1588 = vld [vmem:[#allocation2 + $0x160] sm:$0xff]
      %v1589 = vld [vmem:[#allocation2 + $0x168] sm:$0xff]
      %v1590 = vld [vmem:[#allocation2 + $0x170] sm:$0xff]
      %v1591 = vld [vmem:[#allocation2 + $0x178] sm:$0xff]
      %v1592 = vld [vmem:[#allocation2 + $0x180] sm:$0xff]
      %v1721 = vunpack.c.l.b16 %v1416
      %v1722 = vunpack.c.h.b16 %v1416
      %v1723 = vunpack.c.l.b16 %v1417
      %v1724 = vunpack.c.h.b16 %v1417
      %v1725 = vunpack.c.l.b16 %v1418
      %v1726 = vunpack.c.h.b16 %v1418
      %v1727 = vunpack.c.l.b16 %v1419
      %v1728 = vunpack.c.l.b16 %v1420
      %v1729 = vunpack.c.h.b16 %v1420
      %v1730 = vunpack.c.l.b16 %v1421
      %v1731 = vunpack.c.h.b16 %v1421
      %v1732 = vunpack.c.l.b16 %v1422
      %v1733 = vunpack.c.h.b16 %v1422
      %v1734 = vunpack.c.l.b16 %v1423
      %v1735 = vunpack.c.l.b16 %v1424
      %v1736 = vunpack.c.h.b16 %v1424
      %v1737 = vunpack.c.l.b16 %v1425
      %v1738 = vunpack.c.h.b16 %v1425
      %v1739 = vunpack.c.l.b16 %v1426
      %v1740 = vunpack.c.h.b16 %v1426
      %v1741 = vunpack.c.l.b16 %v1427
      %v1742 = vunpack.c.l.b16 %v1428
      %v1743 = vunpack.c.h.b16 %v1428
      %v1744 = vunpack.c.l.b16 %v1429
      %v1745 = vunpack.c.h.b16 %v1429
      %v1746 = vunpack.c.l.b16 %v1430
      %v1747 = vunpack.c.h.b16 %v1430
      %v1748 = vunpack.c.l.b16 %v1431
      %v1749 = vunpack.c.l.b16 %v1432
      %v1750 = vunpack.c.h.b16 %v1432
      %v1751 = vunpack.c.l.b16 %v1433
      %v1752 = vunpack.c.h.b16 %v1433
      %v1753 = vunpack.c.l.b16 %v1434
      %v1754 = vunpack.c.h.b16 %v1434
      %v1755 = vunpack.c.l.b16 %v1435
      %v1756 = vunpack.c.l.b16 %v1436
      %v1757 = vunpack.c.h.b16 %v1436
      %v1758 = vunpack.c.l.b16 %v1437
      %v1759 = vunpack.c.h.b16 %v1437
      %v1760 = vunpack.c.l.b16 %v1438
      %v1761 = vunpack.c.h.b16 %v1438
      %v1762 = vunpack.c.l.b16 %v1439
      %v1763 = vunpack.c.l.b16 %v1440
      %v1764 = vunpack.c.h.b16 %v1440
      %v1765 = vunpack.c.l.b16 %v1441
      %v1766 = vunpack.c.h.b16 %v1441
      %v1767 = vunpack.c.l.b16 %v1442
      %v1768 = vunpack.c.h.b16 %v1442
      %v1769 = vunpack.c.l.b16 %v1443
      %v1770 = vunpack.c.l.b16 %v1444
      %v1771 = vunpack.c.h.b16 %v1444
      %v1772 = vunpack.c.l.b16 %v1445
      %v1773 = vunpack.c.h.b16 %v1445
      %v1774 = vunpack.c.l.b16 %v1446
      %v1775 = vunpack.c.h.b16 %v1446
      %v1776 = vunpack.c.l.b16 %v1447
      %v1777 = vunpack.c.l.b16 %v1448
      %v1778 = vunpack.c.h.b16 %v1448
      %v1779 = vunpack.c.l.b16 %v1449
      %v1780 = vunpack.c.h.b16 %v1449
      %v1781 = vunpack.c.l.b16 %v1450
      %v1782 = vunpack.c.h.b16 %v1450
      %v1783 = vunpack.c.l.b16 %v1451
      %v1784 = vunpack.c.l.b16 %v1452
      %v1785 = vunpack.c.h.b16 %v1452
      %v1786 = vunpack.c.l.b16 %v1453
      %v1787 = vunpack.c.h.b16 %v1453
      %v1788 = vunpack.c.l.b16 %v1454
      %v1789 = vunpack.c.h.b16 %v1454
      %v1790 = vunpack.c.l.b16 %v1455
      %v1791 = vunpack.c.l.b16 %v1456
      %v1792 = vunpack.c.h.b16 %v1456
      %v1793 = vunpack.c.l.b16 %v1457
      %v1794 = vunpack.c.h.b16 %v1457
      %v1795 = vunpack.c.l.b16 %v1458
      %v1796 = vunpack.c.h.b16 %v1458
      %v1797 = vunpack.c.l.b16 %v1459
      %v1798 = vunpack.c.l.b16 %v1460
      %v1799 = vunpack.c.h.b16 %v1460
      %v1800 = vunpack.c.l.b16 %v1461
      %v1801 = vunpack.c.h.b16 %v1461
      %v1802 = vunpack.c.l.b16 %v1462
      %v1803 = vunpack.c.h.b16 %v1462
      %v1804 = vunpack.c.l.b16 %v1463
      %v1805 = vunpack.c.l.b16 %v1464
      %v1806 = vunpack.c.h.b16 %v1464
      %v1807 = vunpack.c.l.b16 %v1465
      %v1808 = vunpack.c.h.b16 %v1465
      %v1809 = vunpack.c.l.b16 %v1466
      %v1810 = vunpack.c.h.b16 %v1466
      %v1811 = vunpack.c.l.b16 %v1467
      %v1812 = vunpack.c.l.b16 %v1468
      %v1813 = vunpack.c.h.b16 %v1468
      %v1814 = vunpack.c.l.b16 %v1469
      %v1815 = vunpack.c.h.b16 %v1469
      %v1816 = vunpack.c.l.b16 %v1470
      %v1817 = vunpack.c.h.b16 %v1470
      %v1818 = vunpack.c.l.b16 %v1471
      %v1819 = vunpack.c.l.b16 %v1472
      %v1820 = vunpack.c.h.b16 %v1472
      %v1821 = vunpack.c.l.b16 %v1473
      %v1822 = vunpack.c.h.b16 %v1473
      %v1823 = vunpack.c.l.b16 %v1474
      %v1824 = vunpack.c.h.b16 %v1474
      %v1825 = vunpack.c.l.b16 %v1475
      %v1826 = vunpack.c.l.b16 %v1476
      %v1827 = vunpack.c.h.b16 %v1476
      %v1828 = vunpack.c.l.b16 %v1477
      %v1829 = vunpack.c.h.b16 %v1477
      %v1830 = vunpack.c.l.b16 %v1478
      %v1831 = vunpack.c.h.b16 %v1478
      %v1832 = vunpack.c.l.b16 %v1479
      %v1833 = vunpack.c.l.b16 %v1480
      %v1834 = vunpack.c.h.b16 %v1480
      %v1835 = vunpack.c.l.b16 %v1481
      %v1836 = vunpack.c.h.b16 %v1481
      %v1837 = vunpack.c.l.b16 %v1482
      %v1838 = vunpack.c.h.b16 %v1482
      %v1839 = vunpack.c.l.b16 %v1483
      %v1840 = vunpack.c.l.b16 %v1484
      %v1841 = vunpack.c.h.b16 %v1484
      %v1842 = vunpack.c.l.b16 %v1485
      %v1843 = vunpack.c.h.b16 %v1485
      %v1844 = vunpack.c.l.b16 %v1486
      %v1845 = vunpack.c.h.b16 %v1486
      %v1846 = vunpack.c.l.b16 %v1487
      %v1847 = vunpack.c.l.b16 %v1488
      %v1848 = vunpack.c.h.b16 %v1488
      %v1849 = vunpack.c.l.b16 %v1489
      %v1850 = vunpack.c.h.b16 %v1489
      %v1851 = vunpack.c.l.b16 %v1490
      %v1852 = vunpack.c.h.b16 %v1490
      %v1853 = vunpack.c.l.b16 %v1491
      %v1854 = vunpack.c.l.b16 %v1492
      %v1855 = vunpack.c.h.b16 %v1492
      %v1856 = vunpack.c.l.b16 %v1493
      %v1857 = vunpack.c.h.b16 %v1493
      %v1858 = vunpack.c.l.b16 %v1494
      %v1859 = vunpack.c.h.b16 %v1494
      %v1860 = vunpack.c.l.b16 %v1495
      %v1861 = vunpack.c.l.b16 %v1496
      %v1862 = vunpack.c.h.b16 %v1496
      %v1863 = vunpack.c.l.b16 %v1497
      %v1864 = vunpack.c.h.b16 %v1497
      %v1865 = vunpack.c.l.b16 %v1498
      %v1866 = vunpack.c.h.b16 %v1498
      %v1867 = vunpack.c.l.b16 %v1499
      %v1868 = vunpack.c.l.b16 %v1500
      %v1869 = vunpack.c.h.b16 %v1500
      %v1870 = vunpack.c.l.b16 %v1501
      %v1871 = vunpack.c.h.b16 %v1501
      %v1872 = vunpack.c.l.b16 %v1502
      %v1873 = vunpack.c.h.b16 %v1502
      %v1874 = vunpack.c.l.b16 %v1503
      %v1875 = vunpack.c.l.b16 %v1504
      %v1876 = vunpack.c.h.b16 %v1504
      %v1877 = vunpack.c.l.b16 %v1505
      %v1878 = vunpack.c.h.b16 %v1505
      %v1879 = vunpack.c.l.b16 %v1506
      %v1880 = vunpack.c.h.b16 %v1506
      %v1881 = vunpack.c.l.b16 %v1507
      %v1882 = vunpack.c.l.b16 %v1508
      %v1883 = vunpack.c.h.b16 %v1508
      %v1884 = vunpack.c.l.b16 %v1509
      %v1885 = vunpack.c.h.b16 %v1509
      %v1886 = vunpack.c.l.b16 %v1510
      %v1887 = vunpack.c.h.b16 %v1510
      %v1888 = vunpack.c.l.b16 %v1511
      %v1889 = vunpack.c.l.b16 %v1512
      %v1890 = vunpack.c.h.b16 %v1512
      %v1891 = vunpack.c.l.b16 %v1513
      %v1892 = vunpack.c.h.b16 %v1513
      %v1893 = vunpack.c.l.b16 %v1514
      %v1894 = vunpack.c.h.b16 %v1514
      %v1895 = vunpack.c.l.b16 %v1515
      %v1896 = vunpack.c.l.b16 %v1516
      %v1897 = vunpack.c.h.b16 %v1516
      %v1898 = vunpack.c.l.b16 %v1517
      %v1899 = vunpack.c.h.b16 %v1517
      %v1900 = vunpack.c.l.b16 %v1518
      %v1901 = vunpack.c.h.b16 %v1518
      %v1902 = vunpack.c.l.b16 %v1519
      %v1903 = vunpack.c.l.b16 %v1520
      %v1904 = vunpack.c.h.b16 %v1520
      %v1905 = vunpack.c.l.b16 %v1521
      %v1906 = vunpack.c.h.b16 %v1521
      %v1907 = vunpack.c.l.b16 %v1522
      %v1908 = vunpack.c.h.b16 %v1522
      %v1909 = vunpack.c.l.b16 %v1523
      %v1910 = vunpack.c.l.b16 %v1524
      %v1911 = vunpack.c.h.b16 %v1524
      %v1912 = vunpack.c.l.b16 %v1525
      %v1913 = vunpack.c.h.b16 %v1525
      %v1914 = vunpack.c.l.b16 %v1526
      %v1915 = vunpack.c.h.b16 %v1526
      %v1916 = vunpack.c.l.b16 %v1527
      %v1917 = vunpack.c.l.b16 %v1528
      %v1918 = vunpack.c.h.b16 %v1528
      %v1919 = vunpack.c.l.b16 %v1529
      %v1920 = vunpack.c.h.b16 %v1529
      %v1921 = vunpack.c.l.b16 %v1530
      %v1922 = vunpack.c.h.b16 %v1530
      %v1923 = vunpack.c.l.b16 %v1531
      %v1924 = vunpack.c.l.b16 %v1532
      %v1925 = vunpack.c.h.b16 %v1532
      %v1926 = vunpack.c.l.b16 %v1533
      %v1927 = vunpack.c.h.b16 %v1533
      %v1928 = vunpack.c.l.b16 %v1534
      %v1929 = vunpack.c.h.b16 %v1534
      %v1930 = vunpack.c.l.b16 %v1535
      %v1931 = vunpack.c.l.b16 %v1536
      %v1932 = vunpack.c.h.b16 %v1536
      %v1933 = vunpack.c.l.b16 %v1537
      %v1934 = vunpack.c.h.b16 %v1537
      %v1935 = vunpack.c.l.b16 %v1538
      %v1936 = vunpack.c.h.b16 %v1538
      %v1937 = vunpack.c.l.b16 %v1539
      %v1938 = vunpack.c.l.b16 %v1540
      %v1939 = vunpack.c.h.b16 %v1540
      %v1940 = vunpack.c.l.b16 %v1541
      %v1941 = vunpack.c.h.b16 %v1541
      %v1942 = vunpack.c.l.b16 %v1542
      %v1943 = vunpack.c.h.b16 %v1542
      %v1944 = vunpack.c.l.b16 %v1543
      %v1945 = vpack.c.b16 %v1728, %v1721
      %v1946 = vpack.c.b16 %v1729, %v1722
      %v1947 = vpack.c.b16 %v1730, %v1723
      %v1948 = vpack.c.b16 %v1731, %v1724
      %v1949 = vpack.c.b16 %v1732, %v1725
      %v1950 = vpack.c.b16 %v1733, %v1726
      %v1951 = vpack.c.b16 %v1734, %v1727
      %v1952 = vpack.c.b16 %v1742, %v1735
      %v1953 = vpack.c.b16 %v1743, %v1736
      %v1954 = vpack.c.b16 %v1744, %v1737
      %v1955 = vpack.c.b16 %v1745, %v1738
      %v1956 = vpack.c.b16 %v1746, %v1739
      %v1957 = vpack.c.b16 %v1747, %v1740
      %v1958 = vpack.c.b16 %v1748, %v1741
      %v1959 = vpack.c.b16 %v1756, %v1749
      %v1960 = vpack.c.b16 %v1757, %v1750
      %v1961 = vpack.c.b16 %v1758, %v1751
      %v1962 = vpack.c.b16 %v1759, %v1752
      %v1963 = vpack.c.b16 %v1760, %v1753
      %v1964 = vpack.c.b16 %v1761, %v1754
      %v1965 = vpack.c.b16 %v1762, %v1755
      %v1966 = vpack.c.b16 %v1770, %v1763
      %v1967 = vpack.c.b16 %v1771, %v1764
      %v1968 = vpack.c.b16 %v1772, %v1765
      %v1969 = vpack.c.b16 %v1773, %v1766
      %v1970 = vpack.c.b16 %v1774, %v1767
      %v1971 = vpack.c.b16 %v1775, %v1768
      %v1972 = vpack.c.b16 %v1776, %v1769
      %v1973 = vpack.c.b16 %v1784, %v1777
      %v1974 = vpack.c.b16 %v1785, %v1778
      %v1975 = vpack.c.b16 %v1786, %v1779
      %v1976 = vpack.c.b16 %v1787, %v1780
      %v1977 = vpack.c.b16 %v1788, %v1781
      %v1978 = vpack.c.b16 %v1789, %v1782
      %v1979 = vpack.c.b16 %v1790, %v1783
      %v1980 = vpack.c.b16 %v1798, %v1791
      %v1981 = vpack.c.b16 %v1799, %v1792
      %v1982 = vpack.c.b16 %v1800, %v1793
      %v1983 = vpack.c.b16 %v1801, %v1794
      %v1984 = vpack.c.b16 %v1802, %v1795
      %v1985 = vpack.c.b16 %v1803, %v1796
      %v1986 = vpack.c.b16 %v1804, %v1797
      %v1987 = vpack.c.b16 %v1812, %v1805
      %v1988 = vpack.c.b16 %v1813, %v1806
      %v1989 = vpack.c.b16 %v1814, %v1807
      %v1990 = vpack.c.b16 %v1815, %v1808
      %v1991 = vpack.c.b16 %v1816, %v1809
      %v1992 = vpack.c.b16 %v1817, %v1810
      %v1993 = vpack.c.b16 %v1818, %v1811
      %v1994 = vpack.c.b16 %v1826, %v1819
      %v1995 = vpack.c.b16 %v1827, %v1820
      %v1996 = vpack.c.b16 %v1828, %v1821
      %v1997 = vpack.c.b16 %v1829, %v1822
      %v1998 = vpack.c.b16 %v1830, %v1823
      %v1999 = vpack.c.b16 %v1831, %v1824
      %v2000 = vpack.c.b16 %v1832, %v1825
      %v2001 = vpack.c.b16 %v1840, %v1833
      %v2002 = vpack.c.b16 %v1841, %v1834
      %v2003 = vpack.c.b16 %v1842, %v1835
      %v2004 = vpack.c.b16 %v1843, %v1836
      %v2005 = vpack.c.b16 %v1844, %v1837
      %v2006 = vpack.c.b16 %v1845, %v1838
      %v2007 = vpack.c.b16 %v1846, %v1839
      %v2008 = vpack.c.b16 %v1854, %v1847
      %v2009 = vpack.c.b16 %v1855, %v1848
      %v2010 = vpack.c.b16 %v1856, %v1849
      %v2011 = vpack.c.b16 %v1857, %v1850
      %v2012 = vpack.c.b16 %v1858, %v1851
      %v2013 = vpack.c.b16 %v1859, %v1852
      %v2014 = vpack.c.b16 %v1860, %v1853
      %v2015 = vpack.c.b16 %v1868, %v1861
      %v2016 = vpack.c.b16 %v1869, %v1862
      %v2017 = vpack.c.b16 %v1870, %v1863
      %v2018 = vpack.c.b16 %v1871, %v1864
      %v2019 = vpack.c.b16 %v1872, %v1865
      %v2020 = vpack.c.b16 %v1873, %v1866
      %v2021 = vpack.c.b16 %v1874, %v1867
      %v2022 = vpack.c.b16 %v1882, %v1875
      %v2023 = vpack.c.b16 %v1883, %v1876
      %v2024 = vpack.c.b16 %v1884, %v1877
      %v2025 = vpack.c.b16 %v1885, %v1878
      %v2026 = vpack.c.b16 %v1886, %v1879
      %v2027 = vpack.c.b16 %v1887, %v1880
      %v2028 = vpack.c.b16 %v1888, %v1881
      %v2029 = vpack.c.b16 %v1896, %v1889
      %v2030 = vpack.c.b16 %v1897, %v1890
      %v2031 = vpack.c.b16 %v1898, %v1891
      %v2032 = vpack.c.b16 %v1899, %v1892
      %v2033 = vpack.c.b16 %v1900, %v1893
      %v2034 = vpack.c.b16 %v1901, %v1894
      %v2035 = vpack.c.b16 %v1902, %v1895
      %v2036 = vpack.c.b16 %v1910, %v1903
      %v2037 = vpack.c.b16 %v1911, %v1904
      %v2038 = vpack.c.b16 %v1912, %v1905
      %v2039 = vpack.c.b16 %v1913, %v1906
      %v2040 = vpack.c.b16 %v1914, %v1907
      %v2041 = vpack.c.b16 %v1915, %v1908
      %v2042 = vpack.c.b16 %v1916, %v1909
      %v2043 = vpack.c.b16 %v1924, %v1917
      %v2044 = vpack.c.b16 %v1925, %v1918
      %v2045 = vpack.c.b16 %v1926, %v1919
      %v2046 = vpack.c.b16 %v1927, %v1920
      %v2047 = vpack.c.b16 %v1928, %v1921
      %v2048 = vpack.c.b16 %v1929, %v1922
      %v2049 = vpack.c.b16 %v1930, %v1923
      %v2050 = vpack.c.b16 %v1938, %v1931
      %v2051 = vpack.c.b16 %v1939, %v1932
      %v2052 = vpack.c.b16 %v1940, %v1933
      %v2053 = vpack.c.b16 %v1941, %v1934
      %v2054 = vpack.c.b16 %v1942, %v1935
      %v2055 = vpack.c.b16 %v1943, %v1936
      %v2056 = vpack.c.b16 %v1944, %v1937
      %vm2153 = vcmask 130048
      %v2155 = vsel %vm2153, %v1951, 0
      %v2158 = vsel %vm2153, %v1958, 0
      %v2161 = vsel %vm2153, %v1965, 0
      %v2164 = vsel %vm2153, %v1972, 0
      %v2167 = vsel %vm2153, %v1979, 0
      %v2170 = vsel %vm2153, %v1986, 0
      %v2173 = vsel %vm2153, %v1993, 0
      %v2176 = vsel %vm2153, %v2000, 0
      %v2179 = vsel %vm2153, %v2007, 0
      %v2182 = vsel %vm2153, %v2014, 0
      %v2185 = vsel %vm2153, %v2021, 0
      %v2188 = vsel %vm2153, %v2028, 0
      %v2191 = vsel %vm2153, %v2035, 0
      %v2194 = vsel %vm2153, %v2042, 0
      %v2197 = vsel %vm2153, %v2049, 0
      %v2200 = vsel %vm2153, %v2056, 0
      %2202 = vmatprep.subr.bf16.mxu0 0
      %2203 = vmatpush1.bf16.msra.mxu0 %v1544
      %2204 = vmatprep.subr.bf16.mxu0 0
      %2205 = vmatpush1.bf16.msra.mxu0 %v1545
      %2206 = vmatprep.subr.bf16.mxu0 0
      %2207 = vmatpush1.bf16.msra.mxu0 %v1546
      %2208 = vmatprep.subr.bf16.mxu0 0
      %2209 = vmatpush1.bf16.msra.mxu0 %v1547
      %2210 = vmatprep.subr.bf16.mxu0 0
      %2211 = vmatpush1.bf16.msra.mxu0 %v1548
      %2212 = vmatprep.subr.bf16.mxu0 0
      %2213 = vmatpush1.bf16.msra.mxu0 %v1549
      %2214 = vmatprep.subr.bf16.mxu0 0
      %2215 = vmatpush1.bf16.msra.mxu0 %v1550
      %2216 = vmatprep.subr.bf16.mxu0 0
      %2217 = vmatpush1.bf16.msra.mxu0 %v1551
      %2218 = vmatprep.subr.bf16.mxu0 0
      %2219 = vmatpush1.bf16.msra.mxu0 %v1552
      %2220 = vmatprep.subr.bf16.mxu0 0
      %2221 = vmatpush1.bf16.msra.mxu0 %v1553
      %2222 = vmatprep.subr.bf16.mxu0 0
      %2223 = vmatpush1.bf16.msra.mxu0 %v1554
      %2224 = vmatprep.subr.bf16.mxu0 0
      %2225 = vmatpush1.bf16.msra.mxu0 %v1555
      %2226 = vmatprep.subr.bf16.mxu0 0
      %2227 = vmatpush1.bf16.msra.mxu0 %v1556
      %2228 = vmatprep.subr.bf16.mxu0 0
      %2229 = vmatpush1.bf16.msra.mxu0 %v1557
      %2230 = vmatprep.subr.bf16.mxu0 0
      %2231 = vmatpush1.bf16.msra.mxu0 %v1558
      %2232 = vmatprep.subr.bf16.mxu0 0
      %2233 = vmatpush1.bf16.msra.mxu0 %v1559
      %2234 = vmatprep.mubr.bf16.mxu0 %v1946
      %2235 = vmatmul.mubr.bf16.gmra.mrb[0].mxu0 %v1945
      %v2236 = vpop.f32.mrb[0].mxu0
      %v2237 = vadd.f32 0.0, %v2236
      %v2238 = vpop.f32.mrb[0].mxu0
      %v2239 = vpop.f32.mrb[0].mxu0
      %v2240 = vadd.f32 0.0, %v2239
      %v2241 = vpop.f32.mrb[0].mxu0
      %2242 = vmatprep.mubr.bf16.mxu0 %v1953
      %2243 = vmatmul.mubr.bf16.gmra.mrb[0].mxu0 %v1952
      %v2244 = vpop.f32.mrb[0].mxu0
      %v2245 = vadd.f32 0.0, %v2244
      %v2246 = vpop.f32.mrb[0].mxu0
      %v2247 = vpop.f32.mrb[0].mxu0
      %v2248 = vadd.f32 0.0, %v2247
      %v2249 = vpop.f32.mrb[0].mxu0
      %2250 = vmatprep.mubr.bf16.mxu0 %v1960
      %2251 = vmatmul.mubr.bf16.gmra.mrb[0].mxu0 %v1959
      %v2252 = vpop.f32.mrb[0].mxu0
      %v2253 = vadd.f32 0.0, %v2252
      %v2254 = vpop.f32.mrb[0].mxu0
      %v2255 = vpop.f32.mrb[0].mxu0
      %v2256 = vadd.f32 0.0, %v2255
      %v2257 = vpop.f32.mrb[0].mxu0
      %2258 = vmatprep.mubr.bf16.mxu0 %v1967
      %2259 = vmatmul.mubr.bf16.gmra.mrb[0].mxu0 %v1966
      %v2260 = vpop.f32.mrb[0].mxu0
      %v2261 = vadd.f32 0.0, %v2260
      %v2262 = vpop.f32.mrb[0].mxu0
      %v2263 = vpop.f32.mrb[0].mxu0
      %v2264 = vadd.f32 0.0, %v2263
      %v2265 = vpop.f32.mrb[0].mxu0
      %2266 = vmatprep.mubr.bf16.mxu0 %v1974
      %2267 = vmatmul.mubr.bf16.gmra.mrb[0].mxu0 %v1973
      %v2268 = vpop.f32.mrb[0].mxu0
      %v2269 = vadd.f32 0.0, %v2268
      %v2270 = vpop.f32.mrb[0].mxu0
      %v2271 = vpop.f32.mrb[0].mxu0
      %v2272 = vadd.f32 0.0, %v2271
      %v2273 = vpop.f32.mrb[0].mxu0
      %2274 = vmatprep.mubr.bf16.mxu0 %v1981
      %2275 = vmatmul.mubr.bf16.gmra.mrb[0].mxu0 %v1980
      %v2276 = vpop.f32.mrb[0].mxu0
      %v2277 = vadd.f32 0.0, %v2276
      %v2278 = vpop.f32.mrb[0].mxu0
      %v2279 = vpop.f32.mrb[0].mxu0
      %v2280 = vadd.f32 0.0, %v2279
      %v2281 = vpop.f32.mrb[0].mxu0
      %2282 = vmatprep.mubr.bf16.mxu0 %v1988
      %2283 = vmatmul.mubr.bf16.gmra.mrb[0].mxu0 %v1987
      %v2284 = vpop.f32.mrb[0].mxu0
      %v2285 = vadd.f32 0.0, %v2284
      %v2286 = vpop.f32.mrb[0].mxu0
      %v2287 = vpop.f32.mrb[0].mxu0
      %v2288 = vadd.f32 0.0, %v2287
      %v2289 = vpop.f32.mrb[0].mxu0
      %2290 = vmatprep.mubr.bf16.mxu0 %v1995
      %2291 = vmatmul.mubr.bf16.gmra.mrb[0].mxu0 %v1994
      %v2292 = vpop.f32.mrb[0].mxu0
      %v2293 = vadd.f32 0.0, %v2292
      %v2294 = vpop.f32.mrb[0].mxu0
      %v2295 = vpop.f32.mrb[0].mxu0
      %v2296 = vadd.f32 0.0, %v2295
      %v2297 = vpop.f32.mrb[0].mxu0
      %2298 = vmatprep.mubr.bf16.mxu0 %v2002
      %2299 = vmatmul.mubr.bf16.gmra.mrb[0].mxu0 %v2001
      %v2300 = vpop.f32.mrb[0].mxu0
      %v2301 = vadd.f32 0.0, %v2300
      %v2302 = vpop.f32.mrb[0].mxu0
      %v2303 = vpop.f32.mrb[0].mxu0
      %v2304 = vadd.f32 0.0, %v2303
      %v2305 = vpop.f32.mrb[0].mxu0
      %2306 = vmatprep.mubr.bf16.mxu0 %v2009
      %2307 = vmatmul.mubr.bf16.gmra.mrb[0].mxu0 %v2008
      %v2308 = vpop.f32.mrb[0].mxu0
      %v2309 = vadd.f32 0.0, %v2308
      %v2310 = vpop.f32.mrb[0].mxu0
      %v2311 = vpop.f32.mrb[0].mxu0
      %v2312 = vadd.f32 0.0, %v2311
      %v2313 = vpop.f32.mrb[0].mxu0
      %2314 = vmatprep.mubr.bf16.mxu0 %v2016
      %2315 = vmatmul.mubr.bf16.gmra.mrb[0].mxu0 %v2015
      %v2316 = vpop.f32.mrb[0].mxu0
      %v2317 = vadd.f32 0.0, %v2316
      %v2318 = vpop.f32.mrb[0].mxu0
      %v2319 = vpop.f32.mrb[0].mxu0
      %v2320 = vadd.f32 0.0, %v2319
      %v2321 = vpop.f32.mrb[0].mxu0
      %2322 = vmatprep.mubr.bf16.mxu0 %v2023
      %2323 = vmatmul.mubr.bf16.gmra.mrb[0].mxu0 %v2022
      %v2324 = vpop.f32.mrb[0].mxu0
      %v2325 = vadd.f32 0.0, %v2324
      %v2326 = vpop.f32.mrb[0].mxu0
      %v2327 = vpop.f32.mrb[0].mxu0
      %v2328 = vadd.f32 0.0, %v2327
      %v2329 = vpop.f32.mrb[0].mxu0
      %2330 = vmatprep.mubr.bf16.mxu0 %v2030
      %2331 = vmatmul.mubr.bf16.gmra.mrb[0].mxu0 %v2029
      %v2332 = vpop.f32.mrb[0].mxu0
      %v2333 = vadd.f32 0.0, %v2332
      %v2334 = vpop.f32.mrb[0].mxu0
      %v2335 = vpop.f32.mrb[0].mxu0
      %v2336 = vadd.f32 0.0, %v2335
      %v2337 = vpop.f32.mrb[0].mxu0
      %2338 = vmatprep.mubr.bf16.mxu0 %v2037
      %2339 = vmatmul.mubr.bf16.gmra.mrb[0].mxu0 %v2036
      %v2340 = vpop.f32.mrb[0].mxu0
      %v2341 = vadd.f32 0.0, %v2340
      %v2342 = vpop.f32.mrb[0].mxu0
      %v2343 = vpop.f32.mrb[0].mxu0
      %v2344 = vadd.f32 0.0, %v2343
      %v2345 = vpop.f32.mrb[0].mxu0
      %2346 = vmatprep.mubr.bf16.mxu0 %v2044
      %2347 = vmatmul.mubr.bf16.gmra.mrb[0].mxu0 %v2043
      %v2348 = vpop.f32.mrb[0].mxu0
      %v2349 = vadd.f32 0.0, %v2348
      %v2350 = vpop.f32.mrb[0].mxu0
      %v2351 = vpop.f32.mrb[0].mxu0
      %v2352 = vadd.f32 0.0, %v2351
      %v2353 = vpop.f32.mrb[0].mxu0
      %2354 = vmatprep.mubr.bf16.mxu0 %v2051
      %2355 = vmatmul.mubr.bf16.gmra.mrb[0].mxu0 %v2050
      %v2356 = vpop.f32.mrb[0].mxu0
      %v2357 = vadd.f32 0.0, %v2356
      %v2358 = vpop.f32.mrb[0].mxu0
      %v2359 = vpop.f32.mrb[0].mxu0
      %v2360 = vadd.f32 0.0, %v2359
      %v2361 = vpop.f32.mrb[0].mxu0
      %2362 = vdwg.mxu0
      %2363 = vmatprep.subr.bf16.mxu0 0
      %2364 = vmatpush1.bf16.msra.mxu0 %v1560
      %2365 = vmatprep.subr.bf16.mxu0 0
      %2366 = vmatpush1.bf16.msra.mxu0 %v1561
      %2367 = vmatprep.subr.bf16.mxu0 0
      %2368 = vmatpush1.bf16.msra.mxu0 %v1562
      %2369 = vmatprep.subr.bf16.mxu0 0
      %2370 = vmatpush1.bf16.msra.mxu0 %v1563
      %2371 = vmatprep.subr.bf16.mxu0 0
      %2372 = vmatpush1.bf16.msra.mxu0 %v1564
      %2373 = vmatprep.subr.bf16.mxu0 0
      %2374 = vmatpush1.bf16.msra.mxu0 %v1565
      %2375 = vmatprep.subr.bf16.mxu0 0
      %2376 = vmatpush1.bf16.msra.mxu0 %v1566
      %2377 = vmatprep.subr.bf16.mxu0 0
      %2378 = vmatpush1.bf16.msra.mxu0 %v1567
      %2379 = vmatprep.subr.bf16.mxu0 0
      %2380 = vmatpush1.bf16.msra.mxu0 %v1568
      %2381 = vmatprep.subr.bf16.mxu0 0
      %2382 = vmatpush1.bf16.msra.mxu0 %v1569
      %2383 = vmatprep.subr.bf16.mxu0 0
      %2384 = vmatpush1.bf16.msra.mxu0 %v1570
      %2385 = vmatprep.subr.bf16.mxu0 0
      %2386 = vmatpush1.bf16.msra.mxu0 %v1571
      %2387 = vmatprep.subr.bf16.mxu0 0
      %2388 = vmatpush1.bf16.msra.mxu0 %v1572
      %2389 = vmatprep.subr.bf16.mxu0 0
      %2390 = vmatpush1.bf16.msra.mxu0 %v1573
      %2391 = vmatprep.subr.bf16.mxu0 0
      %2392 = vmatpush1.bf16.msra.mxu0 %v1574
      %2393 = vmatprep.subr.bf16.mxu0 0
      %2394 = vmatpush1.bf16.msra.mxu0 %v1575
      %2395 = vmatprep.mubr.bf16.mxu0 %v1948
      %2396 = vmatmul.mubr.bf16.gmra.mrb[0].mxu0 %v1947
      %v2397 = vpop.f32.mrb[0].mxu0
      %v2398 = vadd.f32 %v2237, %v2397
      %v2399 = vpop.f32.mrb[0].mxu0
      %v2400 = vpop.f32.mrb[0].mxu0
      %v2401 = vadd.f32 %v2240, %v2400
      %v2402 = vpop.f32.mrb[0].mxu0
      %2403 = vmatprep.mubr.bf16.mxu0 %v1955
      %2404 = vmatmul.mubr.bf16.gmra.mrb[0].mxu0 %v1954
      %v2405 = vpop.f32.mrb[0].mxu0
      %v2406 = vadd.f32 %v2245, %v2405
      %v2407 = vpop.f32.mrb[0].mxu0
      %v2408 = vpop.f32.mrb[0].mxu0
      %v2409 = vadd.f32 %v2248, %v2408
      %v2410 = vpop.f32.mrb[0].mxu0
      %2411 = vmatprep.mubr.bf16.mxu0 %v1962
      %2412 = vmatmul.mubr.bf16.gmra.mrb[0].mxu0 %v1961
      %v2413 = vpop.f32.mrb[0].mxu0
      %v2414 = vadd.f32 %v2253, %v2413
      %v2415 = vpop.f32.mrb[0].mxu0
      %v2416 = vpop.f32.mrb[0].mxu0
      %v2417 = vadd.f32 %v2256, %v2416
      %v2418 = vpop.f32.mrb[0].mxu0
      %2419 = vmatprep.mubr.bf16.mxu0 %v1969
      %2420 = vmatmul.mubr.bf16.gmra.mrb[0].mxu0 %v1968
      %v2421 = vpop.f32.mrb[0].mxu0
      %v2422 = vadd.f32 %v2261, %v2421
      %v2423 = vpop.f32.mrb[0].mxu0
      %v2424 = vpop.f32.mrb[0].mxu0
      %v2425 = vadd.f32 %v2264, %v2424
      %v2426 = vpop.f32.mrb[0].mxu0
      %2427 = vmatprep.mubr.bf16.mxu0 %v1976
      %2428 = vmatmul.mubr.bf16.gmra.mrb[0].mxu0 %v1975
      %v2429 = vpop.f32.mrb[0].mxu0
      %v2430 = vadd.f32 %v2269, %v2429
      %v2431 = vpop.f32.mrb[0].mxu0
      %v2432 = vpop.f32.mrb[0].mxu0
      %v2433 = vadd.f32 %v2272, %v2432
      %v2434 = vpop.f32.mrb[0].mxu0
      %2435 = vmatprep.mubr.bf16.mxu0 %v1983
      %2436 = vmatmul.mubr.bf16.gmra.mrb[0].mxu0 %v1982
      %v2437 = vpop.f32.mrb[0].mxu0
      %v2438 = vadd.f32 %v2277, %v2437
      %v2439 = vpop.f32.mrb[0].mxu0
      %v2440 = vpop.f32.mrb[0].mxu0
      %v2441 = vadd.f32 %v2280, %v2440
      %v2442 = vpop.f32.mrb[0].mxu0
      %2443 = vmatprep.mubr.bf16.mxu0 %v1990
      %2444 = vmatmul.mubr.bf16.gmra.mrb[0].mxu0 %v1989
      %v2445 = vpop.f32.mrb[0].mxu0
      %v2446 = vadd.f32 %v2285, %v2445
      %v2447 = vpop.f32.mrb[0].mxu0
      %v2448 = vpop.f32.mrb[0].mxu0
      %v2449 = vadd.f32 %v2288, %v2448
      %v2450 = vpop.f32.mrb[0].mxu0
      %2451 = vmatprep.mubr.bf16.mxu0 %v1997
      %2452 = vmatmul.mubr.bf16.gmra.mrb[0].mxu0 %v1996
      %v2453 = vpop.f32.mrb[0].mxu0
      %v2454 = vadd.f32 %v2293, %v2453
      %v2455 = vpop.f32.mrb[0].mxu0
      %v2456 = vpop.f32.mrb[0].mxu0
      %v2457 = vadd.f32 %v2296, %v2456
      %v2458 = vpop.f32.mrb[0].mxu0
      %2459 = vmatprep.mubr.bf16.mxu0 %v2004
      %2460 = vmatmul.mubr.bf16.gmra.mrb[0].mxu0 %v2003
      %v2461 = vpop.f32.mrb[0].mxu0
      %v2462 = vadd.f32 %v2301, %v2461
      %v2463 = vpop.f32.mrb[0].mxu0
      %v2464 = vpop.f32.mrb[0].mxu0
      %v2465 = vadd.f32 %v2304, %v2464
      %v2466 = vpop.f32.mrb[0].mxu0
      %2467 = vmatprep.mubr.bf16.mxu0 %v2011
      %2468 = vmatmul.mubr.bf16.gmra.mrb[0].mxu0 %v2010
      %v2469 = vpop.f32.mrb[0].mxu0
      %v2470 = vadd.f32 %v2309, %v2469
      %v2471 = vpop.f32.mrb[0].mxu0
      %v2472 = vpop.f32.mrb[0].mxu0
      %v2473 = vadd.f32 %v2312, %v2472
      %v2474 = vpop.f32.mrb[0].mxu0
      %2475 = vmatprep.mubr.bf16.mxu0 %v2018
      %2476 = vmatmul.mubr.bf16.gmra.mrb[0].mxu0 %v2017
      %v2477 = vpop.f32.mrb[0].mxu0
      %v2478 = vadd.f32 %v2317, %v2477
      %v2479 = vpop.f32.mrb[0].mxu0
      %v2480 = vpop.f32.mrb[0].mxu0
      %v2481 = vadd.f32 %v2320, %v2480
      %v2482 = vpop.f32.mrb[0].mxu0
      %2483 = vmatprep.mubr.bf16.mxu0 %v2025
      %2484 = vmatmul.mubr.bf16.gmra.mrb[0].mxu0 %v2024
      %v2485 = vpop.f32.mrb[0].mxu0
      %v2486 = vadd.f32 %v2325, %v2485
      %v2487 = vpop.f32.mrb[0].mxu0
      %v2488 = vpop.f32.mrb[0].mxu0
      %v2489 = vadd.f32 %v2328, %v2488
      %v2490 = vpop.f32.mrb[0].mxu0
      %2491 = vmatprep.mubr.bf16.mxu0 %v2032
      %2492 = vmatmul.mubr.bf16.gmra.mrb[0].mxu0 %v2031
      %v2493 = vpop.f32.mrb[0].mxu0
      %v2494 = vadd.f32 %v2333, %v2493
      %v2495 = vpop.f32.mrb[0].mxu0
      %v2496 = vpop.f32.mrb[0].mxu0
      %v2497 = vadd.f32 %v2336, %v2496
      %v2498 = vpop.f32.mrb[0].mxu0
      %2499 = vmatprep.mubr.bf16.mxu0 %v2039
      %2500 = vmatmul.mubr.bf16.gmra.mrb[0].mxu0 %v2038
      %v2501 = vpop.f32.mrb[0].mxu0
      %v2502 = vadd.f32 %v2341, %v2501
      %v2503 = vpop.f32.mrb[0].mxu0
      %v2504 = vpop.f32.mrb[0].mxu0
      %v2505 = vadd.f32 %v2344, %v2504
      %v2506 = vpop.f32.mrb[0].mxu0
      %2507 = vmatprep.mubr.bf16.mxu0 %v2046
      %2508 = vmatmul.mubr.bf16.gmra.mrb[0].mxu0 %v2045
      %v2509 = vpop.f32.mrb[0].mxu0
      %v2510 = vadd.f32 %v2349, %v2509
      %v2511 = vpop.f32.mrb[0].mxu0
      %v2512 = vpop.f32.mrb[0].mxu0
      %v2513 = vadd.f32 %v2352, %v2512
      %v2514 = vpop.f32.mrb[0].mxu0
      %2515 = vmatprep.mubr.bf16.mxu0 %v2053
      %2516 = vmatmul.mubr.bf16.gmra.mrb[0].mxu0 %v2052
      %v2517 = vpop.f32.mrb[0].mxu0
      %v2518 = vadd.f32 %v2357, %v2517
      %v2519 = vpop.f32.mrb[0].mxu0
      %v2520 = vpop.f32.mrb[0].mxu0
      %v2521 = vadd.f32 %v2360, %v2520
      %v2522 = vpop.f32.mrb[0].mxu0
      %2523 = vdwg.mxu0
      %2524 = vmatprep.subr.bf16.mxu0 0
      %2525 = vmatpush1.bf16.msra.mxu0 %v1576
      %2526 = vmatprep.subr.bf16.mxu0 0
      %2527 = vmatpush1.bf16.msra.mxu0 %v1577
      %2528 = vmatprep.subr.bf16.mxu0 0
      %2529 = vmatpush1.bf16.msra.mxu0 %v1578
      %2530 = vmatprep.subr.bf16.mxu0 0
      %2531 = vmatpush1.bf16.msra.mxu0 %v1579
      %2532 = vmatprep.subr.bf16.mxu0 0
      %2533 = vmatpush1.bf16.msra.mxu0 %v1580
      %2534 = vmatprep.subr.bf16.mxu0 0
      %2535 = vmatpush1.bf16.msra.mxu0 %v1581
      %2536 = vmatprep.subr.bf16.mxu0 0
      %2537 = vmatpush1.bf16.msra.mxu0 %v1582
      %2538 = vmatprep.subr.bf16.mxu0 0
      %2539 = vmatpush1.bf16.msra.mxu0 %v1583
      %2540 = vmatprep.subr.bf16.mxu0 0
      %2541 = vmatpush1.bf16.msra.mxu0 %v1584
      %2542 = vmatprep.subr.bf16.mxu0 0
      %2543 = vmatpush1.bf16.msra.mxu0 %v1585
      %2544 = vmatprep.subr.bf16.mxu0 0
      %2545 = vmatpush1.bf16.msra.mxu0 %v1586
      %2546 = vmatprep.subr.bf16.mxu0 0
      %2547 = vmatpush1.bf16.msra.mxu0 %v1587
      %2548 = vmatprep.subr.bf16.mxu0 0
      %2549 = vmatpush1.bf16.msra.mxu0 %v1588
      %2550 = vmatprep.subr.bf16.mxu0 0
      %2551 = vmatpush1.bf16.msra.mxu0 %v1589
      %2552 = vmatprep.subr.bf16.mxu0 0
      %2553 = vmatpush1.bf16.msra.mxu0 %v1590
      %2554 = vmatprep.subr.bf16.mxu0 0
      %2555 = vmatpush1.bf16.msra.mxu0 %v1591
      %2556 = vmatprep.mubr.bf16.mxu0 %v1950
      %2557 = vmatmul.mubr.bf16.gmra.mrb[0].mxu0 %v1949
      %v2558 = vpop.f32.mrb[0].mxu0
      %v2559 = vadd.f32 %v2398, %v2558
      %v2560 = vpop.f32.mrb[0].mxu0
      %v2561 = vpop.f32.mrb[0].mxu0
      %v2562 = vadd.f32 %v2401, %v2561
      %v2563 = vpop.f32.mrb[0].mxu0
      %2564 = vmatprep.mubr.bf16.mxu0 %v1957
      %2565 = vmatmul.mubr.bf16.gmra.mrb[0].mxu0 %v1956
      %v2566 = vpop.f32.mrb[0].mxu0
      %v2567 = vadd.f32 %v2406, %v2566
      %v2568 = vpop.f32.mrb[0].mxu0
      %v2569 = vpop.f32.mrb[0].mxu0
      %v2570 = vadd.f32 %v2409, %v2569
      %v2571 = vpop.f32.mrb[0].mxu0
      %2572 = vmatprep.mubr.bf16.mxu0 %v1964
      %2573 = vmatmul.mubr.bf16.gmra.mrb[0].mxu0 %v1963
      %v2574 = vpop.f32.mrb[0].mxu0
      %v2575 = vadd.f32 %v2414, %v2574
      %v2576 = vpop.f32.mrb[0].mxu0
      %v2577 = vpop.f32.mrb[0].mxu0
      %v2578 = vadd.f32 %v2417, %v2577
      %v2579 = vpop.f32.mrb[0].mxu0
      %2580 = vmatprep.mubr.bf16.mxu0 %v1971
      %2581 = vmatmul.mubr.bf16.gmra.mrb[0].mxu0 %v1970
      %v2582 = vpop.f32.mrb[0].mxu0
      %v2583 = vadd.f32 %v2422, %v2582
      %v2584 = vpop.f32.mrb[0].mxu0
      %v2585 = vpop.f32.mrb[0].mxu0
      %v2586 = vadd.f32 %v2425, %v2585
      %v2587 = vpop.f32.mrb[0].mxu0
      %2588 = vmatprep.mubr.bf16.mxu0 %v1978
      %2589 = vmatmul.mubr.bf16.gmra.mrb[0].mxu0 %v1977
      %v2590 = vpop.f32.mrb[0].mxu0
      %v2591 = vadd.f32 %v2430, %v2590
      %v2592 = vpop.f32.mrb[0].mxu0
      %v2593 = vpop.f32.mrb[0].mxu0
      %v2594 = vadd.f32 %v2433, %v2593
      %v2595 = vpop.f32.mrb[0].mxu0
      %2596 = vmatprep.mubr.bf16.mxu0 %v1985
      %2597 = vmatmul.mubr.bf16.gmra.mrb[0].mxu0 %v1984
      %v2598 = vpop.f32.mrb[0].mxu0
      %v2599 = vadd.f32 %v2438, %v2598
      %v2600 = vpop.f32.mrb[0].mxu0
      %v2601 = vpop.f32.mrb[0].mxu0
      %v2602 = vadd.f32 %v2441, %v2601
      %v2603 = vpop.f32.mrb[0].mxu0
      %2604 = vmatprep.mubr.bf16.mxu0 %v1992
      %2605 = vmatmul.mubr.bf16.gmra.mrb[0].mxu0 %v1991
      %v2606 = vpop.f32.mrb[0].mxu0
      %v2607 = vadd.f32 %v2446, %v2606
      %v2608 = vpop.f32.mrb[0].mxu0
      %v2609 = vpop.f32.mrb[0].mxu0
      %v2610 = vadd.f32 %v2449, %v2609
      %v2611 = vpop.f32.mrb[0].mxu0
      %2612 = vmatprep.mubr.bf16.mxu0 %v1999
      %2613 = vmatmul.mubr.bf16.gmra.mrb[0].mxu0 %v1998
      %v2614 = vpop.f32.mrb[0].mxu0
      %v2615 = vadd.f32 %v2454, %v2614
      %v2616 = vpop.f32.mrb[0].mxu0
      %v2617 = vpop.f32.mrb[0].mxu0
      %v2618 = vadd.f32 %v2457, %v2617
      %v2619 = vpop.f32.mrb[0].mxu0
      %2620 = vmatprep.mubr.bf16.mxu0 %v2006
      %2621 = vmatmul.mubr.bf16.gmra.mrb[0].mxu0 %v2005
      %v2622 = vpop.f32.mrb[0].mxu0
      %v2623 = vadd.f32 %v2462, %v2622
      %v2624 = vpop.f32.mrb[0].mxu0
      %v2625 = vpop.f32.mrb[0].mxu0
      %v2626 = vadd.f32 %v2465, %v2625
      %v2627 = vpop.f32.mrb[0].mxu0
      %2628 = vmatprep.mubr.bf16.mxu0 %v2013
      %2629 = vmatmul.mubr.bf16.gmra.mrb[0].mxu0 %v2012
      %v2630 = vpop.f32.mrb[0].mxu0
      %v2631 = vadd.f32 %v2470, %v2630
      %v2632 = vpop.f32.mrb[0].mxu0
      %v2633 = vpop.f32.mrb[0].mxu0
      %v2634 = vadd.f32 %v2473, %v2633
      %v2635 = vpop.f32.mrb[0].mxu0
      %2636 = vmatprep.mubr.bf16.mxu0 %v2020
      %2637 = vmatmul.mubr.bf16.gmra.mrb[0].mxu0 %v2019
      %v2638 = vpop.f32.mrb[0].mxu0
      %v2639 = vadd.f32 %v2478, %v2638
      %v2640 = vpop.f32.mrb[0].mxu0
      %v2641 = vpop.f32.mrb[0].mxu0
      %v2642 = vadd.f32 %v2481, %v2641
      %v2643 = vpop.f32.mrb[0].mxu0
      %2644 = vmatprep.mubr.bf16.mxu0 %v2027
      %2645 = vmatmul.mubr.bf16.gmra.mrb[0].mxu0 %v2026
      %v2646 = vpop.f32.mrb[0].mxu0
      %v2647 = vadd.f32 %v2486, %v2646
      %v2648 = vpop.f32.mrb[0].mxu0
      %v2649 = vpop.f32.mrb[0].mxu0
      %v2650 = vadd.f32 %v2489, %v2649
      %v2651 = vpop.f32.mrb[0].mxu0
      %2652 = vmatprep.mubr.bf16.mxu0 %v2034
      %2653 = vmatmul.mubr.bf16.gmra.mrb[0].mxu0 %v2033
      %v2654 = vpop.f32.mrb[0].mxu0
      %v2655 = vadd.f32 %v2494, %v2654
      %v2656 = vpop.f32.mrb[0].mxu0
      %v2657 = vpop.f32.mrb[0].mxu0
      %v2658 = vadd.f32 %v2497, %v2657
      %v2659 = vpop.f32.mrb[0].mxu0
      %2660 = vmatprep.mubr.bf16.mxu0 %v2041
      %2661 = vmatmul.mubr.bf16.gmra.mrb[0].mxu0 %v2040
      %v2662 = vpop.f32.mrb[0].mxu0
      %v2663 = vadd.f32 %v2502, %v2662
      %v2664 = vpop.f32.mrb[0].mxu0
      %v2665 = vpop.f32.mrb[0].mxu0
      %v2666 = vadd.f32 %v2505, %v2665
      %v2667 = vpop.f32.mrb[0].mxu0
      %2668 = vmatprep.mubr.bf16.mxu0 %v2048
      %2669 = vmatmul.mubr.bf16.gmra.mrb[0].mxu0 %v2047
      %v2670 = vpop.f32.mrb[0].mxu0
      %v2671 = vadd.f32 %v2510, %v2670
      %v2672 = vpop.f32.mrb[0].mxu0
      %v2673 = vpop.f32.mrb[0].mxu0
      %v2674 = vadd.f32 %v2513, %v2673
      %v2675 = vpop.f32.mrb[0].mxu0
      %2676 = vmatprep.mubr.bf16.mxu0 %v2055
      %2677 = vmatmul.mubr.bf16.gmra.mrb[0].mxu0 %v2054
      %v2678 = vpop.f32.mrb[0].mxu0
      %v2679 = vadd.f32 %v2518, %v2678
      %v2680 = vpop.f32.mrb[0].mxu0
      %v2681 = vpop.f32.mrb[0].mxu0
      %v2682 = vadd.f32 %v2521, %v2681
      %v2683 = vpop.f32.mrb[0].mxu0
      %2684 = vdwg.mxu0
      %2685 = vmatprep.subr.bf16.mxu0 0
      %2686 = vmatpush1.bf16.msra.mxu0 %v1592
      %2687 = vmatprep.subr.bf16.mxu0 0
      %2688 = vmatpush1.bf16.msra.mxu0 0
      %2689 = vmatprep.subr.bf16.mxu0 0
      %2690 = vmatpush1.bf16.msra.mxu0 0
      %2691 = vmatprep.subr.bf16.mxu0 0
      %2692 = vmatpush1.bf16.msra.mxu0 0
      %2693 = vmatprep.subr.bf16.mxu0 0
      %2694 = vmatpush1.bf16.msra.mxu0 0
      %2695 = vmatprep.subr.bf16.mxu0 0
      %2696 = vmatpush1.bf16.msra.mxu0 0
      %2697 = vmatprep.subr.bf16.mxu0 0
      %2698 = vmatpush1.bf16.msra.mxu0 0
      %2699 = vmatprep.subr.bf16.mxu0 0
      %2700 = vmatpush1.bf16.msra.mxu0 0
      %2701 = vmatprep.subr.bf16.mxu0 0
      %2702 = vmatpush1.bf16.msra.mxu0 0
      %2703 = vmatprep.subr.bf16.mxu0 0
      %2704 = vmatpush1.bf16.msra.mxu0 0
      %2705 = vmatprep.subr.bf16.mxu0 0
      %2706 = vmatpush1.bf16.msra.mxu0 0
      %2707 = vmatprep.subr.bf16.mxu0 0
      %2708 = vmatpush1.bf16.msra.mxu0 0
      %2709 = vmatprep.subr.bf16.mxu0 0
      %2710 = vmatpush1.bf16.msra.mxu0 0
      %2711 = vmatprep.subr.bf16.mxu0 0
      %2712 = vmatpush1.bf16.msra.mxu0 0
      %2713 = vmatprep.subr.bf16.mxu0 0
      %2714 = vmatpush1.bf16.msra.mxu0 0
      %2715 = vmatprep.subr.bf16.mxu0 0
      %2716 = vmatpush1.bf16.msra.mxu0 0
      %2717 = vmatprep.mubr.bf16.mxu0 0
      %2718 = vmatmul.mubr.bf16.gmra.mrb[0].mxu0 %v2155
      %v2719 = vpop.f32.mrb[0].mxu0
      %v2720 = vadd.f32 %v2559, %v2719
      %v2721 = vpop.f32.mrb[0].mxu0
      %v2722 = vpop.f32.mrb[0].mxu0
      %v2723 = vadd.f32 %v2562, %v2722
      %v2724 = vpop.f32.mrb[0].mxu0
      %2725 = vmatprep.mubr.bf16.mxu0 0
      %2726 = vmatmul.mubr.bf16.gmra.mrb[0].mxu0 %v2158
      %v2727 = vpop.f32.mrb[0].mxu0
      %v2728 = vadd.f32 %v2567, %v2727
      %v2729 = vpop.f32.mrb[0].mxu0
      %v2730 = vpop.f32.mrb[0].mxu0
      %v2731 = vadd.f32 %v2570, %v2730
      %v2732 = vpop.f32.mrb[0].mxu0
      %2733 = vmatprep.mubr.bf16.mxu0 0
      %2734 = vmatmul.mubr.bf16.gmra.mrb[0].mxu0 %v2161
      %v2735 = vpop.f32.mrb[0].mxu0
      %v2736 = vadd.f32 %v2575, %v2735
      %v2737 = vpop.f32.mrb[0].mxu0
      %v2738 = vpop.f32.mrb[0].mxu0
      %v2739 = vadd.f32 %v2578, %v2738
      %v2740 = vpop.f32.mrb[0].mxu0
      %2741 = vmatprep.mubr.bf16.mxu0 0
      %2742 = vmatmul.mubr.bf16.gmra.mrb[0].mxu0 %v2164
      %v2743 = vpop.f32.mrb[0].mxu0
      %v2744 = vadd.f32 %v2583, %v2743
      %v2745 = vpop.f32.mrb[0].mxu0
      %v2746 = vpop.f32.mrb[0].mxu0
      %v2747 = vadd.f32 %v2586, %v2746
      %v2748 = vpop.f32.mrb[0].mxu0
      %2749 = vmatprep.mubr.bf16.mxu0 0
      %2750 = vmatmul.mubr.bf16.gmra.mrb[0].mxu0 %v2167
      %v2751 = vpop.f32.mrb[0].mxu0
      %v2752 = vadd.f32 %v2591, %v2751
      %v2753 = vpop.f32.mrb[0].mxu0
      %v2754 = vpop.f32.mrb[0].mxu0
      %v2755 = vadd.f32 %v2594, %v2754
      %v2756 = vpop.f32.mrb[0].mxu0
      %2757 = vmatprep.mubr.bf16.mxu0 0
      %2758 = vmatmul.mubr.bf16.gmra.mrb[0].mxu0 %v2170
      %v2759 = vpop.f32.mrb[0].mxu0
      %v2760 = vadd.f32 %v2599, %v2759
      %v2761 = vpop.f32.mrb[0].mxu0
      %v2762 = vpop.f32.mrb[0].mxu0
      %v2763 = vadd.f32 %v2602, %v2762
      %v2764 = vpop.f32.mrb[0].mxu0
      %2765 = vmatprep.mubr.bf16.mxu0 0
      %2766 = vmatmul.mubr.bf16.gmra.mrb[0].mxu0 %v2173
      %v2767 = vpop.f32.mrb[0].mxu0
      %v2768 = vadd.f32 %v2607, %v2767
      %v2769 = vpop.f32.mrb[0].mxu0
      %v2770 = vpop.f32.mrb[0].mxu0
      %v2771 = vadd.f32 %v2610, %v2770
      %v2772 = vpop.f32.mrb[0].mxu0
      %2773 = vmatprep.mubr.bf16.mxu0 0
      %2774 = vmatmul.mubr.bf16.gmra.mrb[0].mxu0 %v2176
      %v2775 = vpop.f32.mrb[0].mxu0
      %v2776 = vadd.f32 %v2615, %v2775
      %v2777 = vpop.f32.mrb[0].mxu0
      %v2778 = vpop.f32.mrb[0].mxu0
      %v2779 = vadd.f32 %v2618, %v2778
      %v2780 = vpop.f32.mrb[0].mxu0
      %2781 = vmatprep.mubr.bf16.mxu0 0
      %2782 = vmatmul.mubr.bf16.gmra.mrb[0].mxu0 %v2179
      %v2783 = vpop.f32.mrb[0].mxu0
      %v2784 = vadd.f32 %v2623, %v2783
      %v2785 = vpop.f32.mrb[0].mxu0
      %v2786 = vpop.f32.mrb[0].mxu0
      %v2787 = vadd.f32 %v2626, %v2786
      %v2788 = vpop.f32.mrb[0].mxu0
      %2789 = vmatprep.mubr.bf16.mxu0 0
      %2790 = vmatmul.mubr.bf16.gmra.mrb[0].mxu0 %v2182
      %v2791 = vpop.f32.mrb[0].mxu0
      %v2792 = vadd.f32 %v2631, %v2791
      %v2793 = vpop.f32.mrb[0].mxu0
      %v2794 = vpop.f32.mrb[0].mxu0
      %v2795 = vadd.f32 %v2634, %v2794
      %v2796 = vpop.f32.mrb[0].mxu0
      %2797 = vmatprep.mubr.bf16.mxu0 0
      %2798 = vmatmul.mubr.bf16.gmra.mrb[0].mxu0 %v2185
      %v2799 = vpop.f32.mrb[0].mxu0
      %v2800 = vadd.f32 %v2639, %v2799
      %v2801 = vpop.f32.mrb[0].mxu0
      %v2802 = vpop.f32.mrb[0].mxu0
      %v2803 = vadd.f32 %v2642, %v2802
      %v2804 = vpop.f32.mrb[0].mxu0
      %2805 = vmatprep.mubr.bf16.mxu0 0
      %2806 = vmatmul.mubr.bf16.gmra.mrb[0].mxu0 %v2188
      %v2807 = vpop.f32.mrb[0].mxu0
      %v2808 = vadd.f32 %v2647, %v2807
      %v2809 = vpop.f32.mrb[0].mxu0
      %v2810 = vpop.f32.mrb[0].mxu0
      %v2811 = vadd.f32 %v2650, %v2810
      %v2812 = vpop.f32.mrb[0].mxu0
      %2813 = vmatprep.mubr.bf16.mxu0 0
      %2814 = vmatmul.mubr.bf16.gmra.mrb[0].mxu0 %v2191
      %v2815 = vpop.f32.mrb[0].mxu0
      %v2816 = vadd.f32 %v2655, %v2815
      %v2817 = vpop.f32.mrb[0].mxu0
      %v2818 = vpop.f32.mrb[0].mxu0
      %v2819 = vadd.f32 %v2658, %v2818
      %v2820 = vpop.f32.mrb[0].mxu0
      %2821 = vmatprep.mubr.bf16.mxu0 0
      %2822 = vmatmul.mubr.bf16.gmra.mrb[0].mxu0 %v2194
      %v2823 = vpop.f32.mrb[0].mxu0
      %v2824 = vadd.f32 %v2663, %v2823
      %v2825 = vpop.f32.mrb[0].mxu0
      %v2826 = vpop.f32.mrb[0].mxu0
      %v2827 = vadd.f32 %v2666, %v2826
      %v2828 = vpop.f32.mrb[0].mxu0
      %2829 = vmatprep.mubr.bf16.mxu0 0
      %2830 = vmatmul.mubr.bf16.gmra.mrb[0].mxu0 %v2197
      %v2831 = vpop.f32.mrb[0].mxu0
      %v2832 = vadd.f32 %v2671, %v2831
      %v2833 = vpop.f32.mrb[0].mxu0
      %v2834 = vpop.f32.mrb[0].mxu0
      %v2835 = vadd.f32 %v2674, %v2834
      %v2836 = vpop.f32.mrb[0].mxu0
      %2837 = vmatprep.mubr.bf16.mxu0 0
      %2838 = vmatmul.mubr.bf16.gmra.mrb[0].mxu0 %v2200
      %v2839 = vpop.f32.mrb[0].mxu0
      %v2840 = vadd.f32 %v2679, %v2839
      %v2841 = vpop.f32.mrb[0].mxu0
      %v2842 = vpop.f32.mrb[0].mxu0
      %v2843 = vadd.f32 %v2682, %v2842
      %v2844 = vpop.f32.mrb[0].mxu0
      %2845 = vdwg.mxu0
      %2846 = vst [vmem:[#allocation3] sm:$0xff] %v2720
      %2847 = vst [vmem:[#allocation3 + $0x8] sm:$0xff] %v2723
      %2848 = vst [vmem:[#allocation3 + $0x10] sm:$0xff] %v2728
      %2849 = vst [vmem:[#allocation3 + $0x18] sm:$0xff] %v2731
      %2850 = vst [vmem:[#allocation3 + $0x20] sm:$0xff] %v2736
      %2851 = vst [vmem:[#allocation3 + $0x28] sm:$0xff] %v2739
      %2852 = vst [vmem:[#allocation3 + $0x30] sm:$0xff] %v2744
      %2853 = vst [vmem:[#allocation3 + $0x38] sm:$0xff] %v2747
      %2854 = vst [vmem:[#allocation3 + $0x40] sm:$0xff] %v2752
      %2855 = vst [vmem:[#allocation3 + $0x48] sm:$0xff] %v2755
      %2856 = vst [vmem:[#allocation3 + $0x50] sm:$0xff] %v2760
      %2857 = vst [vmem:[#allocation3 + $0x58] sm:$0xff] %v2763
      %2858 = vst [vmem:[#allocation3 + $0x60] sm:$0xff] %v2768
      %2859 = vst [vmem:[#allocation3 + $0x68] sm:$0xff] %v2771
      %2860 = vst [vmem:[#allocation3 + $0x70] sm:$0xff] %v2776
      %2861 = vst [vmem:[#allocation3 + $0x78] sm:$0xff] %v2779
      %2862 = vst [vmem:[#allocation3 + $0x80] sm:$0xff] %v2784
      %2863 = vst [vmem:[#allocation3 + $0x88] sm:$0xff] %v2787
      %2864 = vst [vmem:[#allocation3 + $0x90] sm:$0xff] %v2792
      %2865 = vst [vmem:[#allocation3 + $0x98] sm:$0xff] %v2795
      %2866 = vst [vmem:[#allocation3 + $0xa0] sm:$0xff] %v2800
      %2867 = vst [vmem:[#allocation3 + $0xa8] sm:$0xff] %v2803
      %2868 = vst [vmem:[#allocation3 + $0xb0] sm:$0xff] %v2808
      %2869 = vst [vmem:[#allocation3 + $0xb8] sm:$0xff] %v2811
      %2870 = vst [vmem:[#allocation3 + $0xc0] sm:$0xff] %v2816
      %2871 = vst [vmem:[#allocation3 + $0xc8] sm:$0xff] %v2819
      %2872 = vst [vmem:[#allocation3 + $0xd0] sm:$0xff] %v2824
      %2873 = vst [vmem:[#allocation3 + $0xd8] sm:$0xff] %v2827
      %2874 = vst [vmem:[#allocation3 + $0xe0] sm:$0xff] %v2832
      %2875 = vst [vmem:[#allocation3 + $0xe8] sm:$0xff] %v2835
      %2876 = vst [vmem:[#allocation3 + $0xf0] sm:$0xff] %v2840
      %2877 = vst [vmem:[#allocation3 + $0xf8] sm:$0xff] %v2843
      %v2878 = vld [vmem:[#allocation3] sm:$0xff]
      %v2879 = vld [vmem:[#allocation3 + $0x8] sm:$0xff]
      %v2880 = vld [vmem:[#allocation3 + $0x10] sm:$0xff]
      %v2881 = vld [vmem:[#allocation3 + $0x18] sm:$0xff]
      %v2882 = vld [vmem:[#allocation3 + $0x20] sm:$0xff]
      %v2883 = vld [vmem:[#allocation3 + $0x28] sm:$0xff]
      %v2884 = vld [vmem:[#allocation3 + $0x30] sm:$0xff]
      %v2885 = vld [vmem:[#allocation3 + $0x38] sm:$0xff]
      %v2886 = vld [vmem:[#allocation3 + $0x40] sm:$0xff]
      %v2887 = vld [vmem:[#allocation3 + $0x48] sm:$0xff]
      %v2888 = vld [vmem:[#allocation3 + $0x50] sm:$0xff]
      %v2889 = vld [vmem:[#allocation3 + $0x58] sm:$0xff]
      %v2890 = vld [vmem:[#allocation3 + $0x60] sm:$0xff]
      %v2891 = vld [vmem:[#allocation3 + $0x68] sm:$0xff]
      %v2892 = vld [vmem:[#allocation3 + $0x70] sm:$0xff]
      %v2893 = vld [vmem:[#allocation3 + $0x78] sm:$0xff]
      %v2894 = vld [vmem:[#allocation3 + $0x80] sm:$0xff]
      %v2895 = vpack.c.bf16 %v2879, %v2878
      %v2896 = vpack.c.bf16 %v2881, %v2880
      %v2897 = vpack.c.bf16 %v2883, %v2882
      %v2898 = vpack.c.bf16 %v2885, %v2884
      %v2899 = vpack.c.bf16 %v2887, %v2886
      %v2900 = vpack.c.bf16 %v2889, %v2888
      %v2901 = vpack.c.bf16 %v2891, %v2890
      %v2902 = vpack.c.bf16 %v2893, %v2892
      %v2903 = vpack.c.bf16 %v2894, %v2894
      %v2913 = vunpack.c.l.b16 %v2895
      %v2914 = vunpack.c.h.b16 %v2895
      %v2915 = vunpack.c.l.b16 %v2896
      %v2916 = vunpack.c.h.b16 %v2896
      %v2917 = vunpack.c.l.b16 %v2897
      %v2918 = vunpack.c.h.b16 %v2897
      %v2919 = vunpack.c.l.b16 %v2898
      %v2920 = vunpack.c.h.b16 %v2898
      %v2921 = vunpack.c.l.b16 %v2899
      %v2922 = vunpack.c.h.b16 %v2899
      %v2923 = vunpack.c.l.b16 %v2900
      %v2924 = vunpack.c.h.b16 %v2900
      %v2925 = vunpack.c.l.b16 %v2901
      %v2926 = vunpack.c.h.b16 %v2901
      %v2927 = vunpack.c.l.b16 %v2902
      %v2928 = vunpack.c.h.b16 %v2902
      %v2929 = vunpack.c.l.b16 %v2903
      %v2930 = vpack.c.b16 %v2913, %v2913
      %v2931 = vpack.c.b16 %v2914, %v2914
      %v2932 = vpack.c.b16 %v2915, %v2915
      %v2933 = vpack.c.b16 %v2916, %v2916
      %v2934 = vpack.c.b16 %v2917, %v2917
      %v2935 = vpack.c.b16 %v2918, %v2918
      %v2936 = vpack.c.b16 %v2919, %v2919
      %v2937 = vpack.c.b16 %v2920, %v2920
      %v2938 = vpack.c.b16 %v2921, %v2921
      %v2939 = vpack.c.b16 %v2922, %v2922
      %v2940 = vpack.c.b16 %v2923, %v2923
      %v2941 = vpack.c.b16 %v2924, %v2924
      %v2942 = vpack.c.b16 %v2925, %v2925
      %v2943 = vpack.c.b16 %v2926, %v2926
      %v2944 = vpack.c.b16 %v2927, %v2927
      %v2945 = vpack.c.b16 %v2928, %v2928
      %v2946 = vpack.c.b16 %v2929, %v2929
      %2964 = vst [vmem:[#allocation4] sm:$0xf] %v2930
      %2965 = vst [vmem:[#allocation4 + $0x64] sm:$0xf] %v2931
      %2966 = vst [vmem:[#allocation4 + $0xc8] sm:$0xf] %v2932
      %2967 = vst [vmem:[#allocation4 + $0x12c] sm:$0xf] %v2933
      %2968 = vst [vmem:[#allocation4 + $0x190] sm:$0xf] %v2934
      %2969 = vst [vmem:[#allocation4 + $0x1f4] sm:$0xf] %v2935
      %2970 = vst [vmem:[#allocation4 + $0x258] sm:$0xf] %v2936
      %2971 = vst [vmem:[#allocation4 + $0x2bc] sm:$0xf] %v2937
      %2972 = vst [vmem:[#allocation4 + $0x320] sm:$0xf] %v2938
      %2973 = vst [vmem:[#allocation4 + $0x384] sm:$0xf] %v2939
      %2974 = vst [vmem:[#allocation4 + $0x3e8] sm:$0xf] %v2940
      %2975 = vst [vmem:[#allocation4 + $0x44c] sm:$0xf] %v2941
      %2976 = vst [vmem:[#allocation4 + $0x4b0] sm:$0xf] %v2942
      %2977 = vst [vmem:[#allocation4 + $0x514] sm:$0xf] %v2943
      %2978 = vst [vmem:[#allocation4 + $0x578] sm:$0xf] %v2944
      %2979 = vst [vmem:[#allocation4 + $0x5dc] sm:$0xf] %v2945
      %2980 = vst [vmem:[#allocation4 + $0x640] sm:$0xf] %v2946
      %v2981 = vld [vmem:[#allocation3 + $0x1] sm:$0xff]
      %v2982 = vld [vmem:[#allocation3 + $0x9] sm:$0xff]
      %v2983 = vld [vmem:[#allocation3 + $0x11] sm:$0xff]
      %v2984 = vld [vmem:[#allocation3 + $0x19] sm:$0xff]
      %v2985 = vld [vmem:[#allocation3 + $0x21] sm:$0xff]
      %v2986 = vld [vmem:[#allocation3 + $0x29] sm:$0xff]
      %v2987 = vld [vmem:[#allocation3 + $0x31] sm:$0xff]
      %v2988 = vld [vmem:[#allocation3 + $0x39] sm:$0xff]
      %v2989 = vld [vmem:[#allocation3 + $0x41] sm:$0xff]
      %v2990 = vld [vmem:[#allocation3 + $0x49] sm:$0xff]
      %v2991 = vld [vmem:[#allocation3 + $0x51] sm:$0xff]
      %v2992 = vld [vmem:[#allocation3 + $0x59] sm:$0xff]
      %v2993 = vld [vmem:[#allocation3 + $0x61] sm:$0xff]
      %v2994 = vld [vmem:[#allocation3 + $0x69] sm:$0xff]
      %v2995 = vld [vmem:[#allocation3 + $0x71] sm:$0xff]
      %v2996 = vld [vmem:[#allocation3 + $0x79] sm:$0xff]
      %v2997 = vld [vmem:[#allocation3 + $0x81] sm:$0xff]
      %v2998 = vpack.c.bf16 %v2982, %v2981
      %v2999 = vpack.c.bf16 %v2984, %v2983
      %v3000 = vpack.c.bf16 %v2986, %v2985
      %v3001 = vpack.c.bf16 %v2988, %v2987
      %v3002 = vpack.c.bf16 %v2990, %v2989
      %v3003 = vpack.c.bf16 %v2992, %v2991
      %v3004 = vpack.c.bf16 %v2994, %v2993
      %v3005 = vpack.c.bf16 %v2996, %v2995
      %v3006 = vpack.c.bf16 %v2997, %v2997
      %v3016 = vunpack.c.l.b16 %v2998
      %v3017 = vunpack.c.h.b16 %v2998
      %v3018 = vunpack.c.l.b16 %v2999
      %v3019 = vunpack.c.h.b16 %v2999
      %v3020 = vunpack.c.l.b16 %v3000
      %v3021 = vunpack.c.h.b16 %v3000
      %v3022 = vunpack.c.l.b16 %v3001
      %v3023 = vunpack.c.h.b16 %v3001
      %v3024 = vunpack.c.l.b16 %v3002
      %v3025 = vunpack.c.h.b16 %v3002
      %v3026 = vunpack.c.l.b16 %v3003
      %v3027 = vunpack.c.h.b16 %v3003
      %v3028 = vunpack.c.l.b16 %v3004
      %v3029 = vunpack.c.h.b16 %v3004
      %v3030 = vunpack.c.l.b16 %v3005
      %v3031 = vunpack.c.h.b16 %v3005
      %v3032 = vunpack.c.l.b16 %v3006
      %v3033 = vpack.c.b16 %v3016, %v3016
      %v3034 = vpack.c.b16 %v3017, %v3017
      %v3035 = vpack.c.b16 %v3018, %v3018
      %v3036 = vpack.c.b16 %v3019, %v3019
      %v3037 = vpack.c.b16 %v3020, %v3020
      %v3038 = vpack.c.b16 %v3021, %v3021
      %v3039 = vpack.c.b16 %v3022, %v3022
      %v3040 = vpack.c.b16 %v3023, %v3023
      %v3041 = vpack.c.b16 %v3024, %v3024
      %v3042 = vpack.c.b16 %v3025, %v3025
      %v3043 = vpack.c.b16 %v3026, %v3026
      %v3044 = vpack.c.b16 %v3027, %v3027
      %v3045 = vpack.c.b16 %v3028, %v3028
      %v3046 = vpack.c.b16 %v3029, %v3029
      %v3047 = vpack.c.b16 %v3030, %v3030
      %v3048 = vpack.c.b16 %v3031, %v3031
      %v3049 = vpack.c.b16 %v3032, %v3032
      %3067 = vst [vmem:[#allocation4 + $0x4] sm:$0xf] %v3033
      %3068 = vst [vmem:[#allocation4 + $0x68] sm:$0xf] %v3034
      %3069 = vst [vmem:[#allocation4 + $0xcc] sm:$0xf] %v3035
      %3070 = vst [vmem:[#allocation4 + $0x130] sm:$0xf] %v3036
      %3071 = vst [vmem:[#allocation4 + $0x194] sm:$0xf] %v3037
      %3072 = vst [vmem:[#allocation4 + $0x1f8] sm:$0xf] %v3038
      %3073 = vst [vmem:[#allocation4 + $0x25c] sm:$0xf] %v3039
      %3074 = vst [vmem:[#allocation4 + $0x2c0] sm:$0xf] %v3040
      %3075 = vst [vmem:[#allocation4 + $0x324] sm:$0xf] %v3041
      %3076 = vst [vmem:[#allocation4 + $0x388] sm:$0xf] %v3042
      %3077 = vst [vmem:[#allocation4 + $0x3ec] sm:$0xf] %v3043
      %3078 = vst [vmem:[#allocation4 + $0x450] sm:$0xf] %v3044
      %3079 = vst [vmem:[#allocation4 + $0x4b4] sm:$0xf] %v3045
      %3080 = vst [vmem:[#allocation4 + $0x518] sm:$0xf] %v3046
      %3081 = vst [vmem:[#allocation4 + $0x57c] sm:$0xf] %v3047
      %3082 = vst [vmem:[#allocation4 + $0x5e0] sm:$0xf] %v3048
      %3083 = vst [vmem:[#allocation4 + $0x644] sm:$0xf] %v3049
      %v3084 = vld [vmem:[#allocation3 + $0x2] sm:$0xff]
      %v3085 = vld [vmem:[#allocation3 + $0xa] sm:$0xff]
      %v3086 = vld [vmem:[#allocation3 + $0x12] sm:$0xff]
      %v3087 = vld [vmem:[#allocation3 + $0x1a] sm:$0xff]
      %v3088 = vld [vmem:[#allocation3 + $0x22] sm:$0xff]
      %v3089 = vld [vmem:[#allocation3 + $0x2a] sm:$0xff]
      %v3090 = vld [vmem:[#allocation3 + $0x32] sm:$0xff]
      %v3091 = vld [vmem:[#allocation3 + $0x3a] sm:$0xff]
      %v3092 = vld [vmem:[#allocation3 + $0x42] sm:$0xff]
      %v3093 = vld [vmem:[#allocation3 + $0x4a] sm:$0xff]
      %v3094 = vld [vmem:[#allocation3 + $0x52] sm:$0xff]
      %v3095 = vld [vmem:[#allocation3 + $0x5a] sm:$0xff]
      %v3096 = vld [vmem:[#allocation3 + $0x62] sm:$0xff]
      %v3097 = vld [vmem:[#allocation3 + $0x6a] sm:$0xff]
      %v3098 = vld [vmem:[#allocation3 + $0x72] sm:$0xff]
      %v3099 = vld [vmem:[#allocation3 + $0x7a] sm:$0xff]
      %v3100 = vld [vmem:[#allocation3 + $0x82] sm:$0xff]
      %v3101 = vpack.c.bf16 %v3085, %v3084
      %v3102 = vpack.c.bf16 %v3087, %v3086
      %v3103 = vpack.c.bf16 %v3089, %v3088
      %v3104 = vpack.c.bf16 %v3091, %v3090
      %v3105 = vpack.c.bf16 %v3093, %v3092
      %v3106 = vpack.c.bf16 %v3095, %v3094
      %v3107 = vpack.c.bf16 %v3097, %v3096
      %v3108 = vpack.c.bf16 %v3099, %v3098
      %v3109 = vpack.c.bf16 %v3100, %v3100
      %v3119 = vunpack.c.l.b16 %v3101
      %v3120 = vunpack.c.h.b16 %v3101
      %v3121 = vunpack.c.l.b16 %v3102
      %v3122 = vunpack.c.h.b16 %v3102
      %v3123 = vunpack.c.l.b16 %v3103
      %v3124 = vunpack.c.h.b16 %v3103
      %v3125 = vunpack.c.l.b16 %v3104
      %v3126 = vunpack.c.h.b16 %v3104
      %v3127 = vunpack.c.l.b16 %v3105
      %v3128 = vunpack.c.h.b16 %v3105
      %v3129 = vunpack.c.l.b16 %v3106
      %v3130 = vunpack.c.h.b16 %v3106
      %v3131 = vunpack.c.l.b16 %v3107
      %v3132 = vunpack.c.h.b16 %v3107
      %v3133 = vunpack.c.l.b16 %v3108
      %v3134 = vunpack.c.h.b16 %v3108
      %v3135 = vunpack.c.l.b16 %v3109
      %v3136 = vpack.c.b16 %v3119, %v3119
      %v3137 = vpack.c.b16 %v3120, %v3120
      %v3138 = vpack.c.b16 %v3121, %v3121
      %v3139 = vpack.c.b16 %v3122, %v3122
      %v3140 = vpack.c.b16 %v3123, %v3123
      %v3141 = vpack.c.b16 %v3124, %v3124
      %v3142 = vpack.c.b16 %v3125, %v3125
      %v3143 = vpack.c.b16 %v3126, %v3126
      %v3144 = vpack.c.b16 %v3127, %v3127
      %v3145 = vpack.c.b16 %v3128, %v3128
      %v3146 = vpack.c.b16 %v3129, %v3129
      %v3147 = vpack.c.b16 %v3130, %v3130
      %v3148 = vpack.c.b16 %v3131, %v3131
      %v3149 = vpack.c.b16 %v3132, %v3132
      %v3150 = vpack.c.b16 %v3133, %v3133
      %v3151 = vpack.c.b16 %v3134, %v3134
      %v3152 = vpack.c.b16 %v3135, %v3135
      %3170 = vst [vmem:[#allocation4 + $0x8] sm:$0xf] %v3136
      %3171 = vst [vmem:[#allocation4 + $0x6c] sm:$0xf] %v3137
      %3172 = vst [vmem:[#allocation4 + $0xd0] sm:$0xf] %v3138
      %3173 = vst [vmem:[#allocation4 + $0x134] sm:$0xf] %v3139
      %3174 = vst [vmem:[#allocation4 + $0x198] sm:$0xf] %v3140
      %3175 = vst [vmem:[#allocation4 + $0x1fc] sm:$0xf] %v3141
      %3176 = vst [vmem:[#allocation4 + $0x260] sm:$0xf] %v3142
      %3177 = vst [vmem:[#allocation4 + $0x2c4] sm:$0xf] %v3143
      %3178 = vst [vmem:[#allocation4 + $0x328] sm:$0xf] %v3144
      %3179 = vst [vmem:[#allocation4 + $0x38c] sm:$0xf] %v3145
      %3180 = vst [vmem:[#allocation4 + $0x3f0] sm:$0xf] %v3146
      %3181 = vst [vmem:[#allocation4 + $0x454] sm:$0xf] %v3147
      %3182 = vst [vmem:[#allocation4 + $0x4b8] sm:$0xf] %v3148
      %3183 = vst [vmem:[#allocation4 + $0x51c] sm:$0xf] %v3149
      %3184 = vst [vmem:[#allocation4 + $0x580] sm:$0xf] %v3150
      %3185 = vst [vmem:[#allocation4 + $0x5e4] sm:$0xf] %v3151
      %3186 = vst [vmem:[#allocation4 + $0x648] sm:$0xf] %v3152
      %v3187 = vld [vmem:[#allocation3 + $0x3] sm:$0xff]
      %v3188 = vld [vmem:[#allocation3 + $0xb] sm:$0xff]
      %v3189 = vld [vmem:[#allocation3 + $0x13] sm:$0xff]
      %v3190 = vld [vmem:[#allocation3 + $0x1b] sm:$0xff]
      %v3191 = vld [vmem:[#allocation3 + $0x23] sm:$0xff]
      %v3192 = vld [vmem:[#allocation3 + $0x2b] sm:$0xff]
      %v3193 = vld [vmem:[#allocation3 + $0x33] sm:$0xff]
      %v3194 = vld [vmem:[#allocation3 + $0x3b] sm:$0xff]
      %v3195 = vld [vmem:[#allocation3 + $0x43] sm:$0xff]
      %v3196 = vld [vmem:[#allocation3 + $0x4b] sm:$0xff]
      %v3197 = vld [vmem:[#allocation3 + $0x53] sm:$0xff]
      %v3198 = vld [vmem:[#allocation3 + $0x5b] sm:$0xff]
      %v3199 = vld [vmem:[#allocation3 + $0x63] sm:$0xff]
      %v3200 = vld [vmem:[#allocation3 + $0x6b] sm:$0xff]
      %v3201 = vld [vmem:[#allocation3 + $0x73] sm:$0xff]
      %v3202 = vld [vmem:[#allocation3 + $0x7b] sm:$0xff]
      %v3203 = vld [vmem:[#allocation3 + $0x83] sm:$0xff]
      %v3204 = vpack.c.bf16 %v3188, %v3187
      %v3205 = vpack.c.bf16 %v3190, %v3189
      %v3206 = vpack.c.bf16 %v3192, %v3191
      %v3207 = vpack.c.bf16 %v3194, %v3193
      %v3208 = vpack.c.bf16 %v3196, %v3195
      %v3209 = vpack.c.bf16 %v3198, %v3197
      %v3210 = vpack.c.bf16 %v3200, %v3199
      %v3211 = vpack.c.bf16 %v3202, %v3201
      %v3212 = vpack.c.bf16 %v3203, %v3203
      %v3222 = vunpack.c.l.b16 %v3204
      %v3223 = vunpack.c.h.b16 %v3204
      %v3224 = vunpack.c.l.b16 %v3205
      %v3225 = vunpack.c.h.b16 %v3205
      %v3226 = vunpack.c.l.b16 %v3206
      %v3227 = vunpack.c.h.b16 %v3206
      %v3228 = vunpack.c.l.b16 %v3207
      %v3229 = vunpack.c.h.b16 %v3207
      %v3230 = vunpack.c.l.b16 %v3208
      %v3231 = vunpack.c.h.b16 %v3208
      %v3232 = vunpack.c.l.b16 %v3209
      %v3233 = vunpack.c.h.b16 %v3209
      %v3234 = vunpack.c.l.b16 %v3210
      %v3235 = vunpack.c.h.b16 %v3210
      %v3236 = vunpack.c.l.b16 %v3211
      %v3237 = vunpack.c.h.b16 %v3211
      %v3238 = vunpack.c.l.b16 %v3212
      %v3239 = vpack.c.b16 %v3222, %v3222
      %v3240 = vpack.c.b16 %v3223, %v3223
      %v3241 = vpack.c.b16 %v3224, %v3224
      %v3242 = vpack.c.b16 %v3225, %v3225
      %v3243 = vpack.c.b16 %v3226, %v3226
      %v3244 = vpack.c.b16 %v3227, %v3227
      %v3245 = vpack.c.b16 %v3228, %v3228
      %v3246 = vpack.c.b16 %v3229, %v3229
      %v3247 = vpack.c.b16 %v3230, %v3230
      %v3248 = vpack.c.b16 %v3231, %v3231
      %v3249 = vpack.c.b16 %v3232, %v3232
      %v3250 = vpack.c.b16 %v3233, %v3233
      %v3251 = vpack.c.b16 %v3234, %v3234
      %v3252 = vpack.c.b16 %v3235, %v3235
      %v3253 = vpack.c.b16 %v3236, %v3236
      %v3254 = vpack.c.b16 %v3237, %v3237
      %v3255 = vpack.c.b16 %v3238, %v3238
      %3273 = vst [vmem:[#allocation4 + $0xc] sm:$0xf] %v3239
      %3274 = vst [vmem:[#allocation4 + $0x70] sm:$0xf] %v3240
      %3275 = vst [vmem:[#allocation4 + $0xd4] sm:$0xf] %v3241
      %3276 = vst [vmem:[#allocation4 + $0x138] sm:$0xf] %v3242
      %3277 = vst [vmem:[#allocation4 + $0x19c] sm:$0xf] %v3243
      %3278 = vst [vmem:[#allocation4 + $0x200] sm:$0xf] %v3244
      %3279 = vst [vmem:[#allocation4 + $0x264] sm:$0xf] %v3245
      %3280 = vst [vmem:[#allocation4 + $0x2c8] sm:$0xf] %v3246
      %3281 = vst [vmem:[#allocation4 + $0x32c] sm:$0xf] %v3247
      %3282 = vst [vmem:[#allocation4 + $0x390] sm:$0xf] %v3248
      %3283 = vst [vmem:[#allocation4 + $0x3f4] sm:$0xf] %v3249
      %3284 = vst [vmem:[#allocation4 + $0x458] sm:$0xf] %v3250
      %3285 = vst [vmem:[#allocation4 + $0x4bc] sm:$0xf] %v3251
      %3286 = vst [vmem:[#allocation4 + $0x520] sm:$0xf] %v3252
      %3287 = vst [vmem:[#allocation4 + $0x584] sm:$0xf] %v3253
      %3288 = vst [vmem:[#allocation4 + $0x5e8] sm:$0xf] %v3254
      %3289 = vst [vmem:[#allocation4 + $0x64c] sm:$0xf] %v3255
      %v3290 = vld [vmem:[#allocation3 + $0x4] sm:$0xff]
      %v3291 = vld [vmem:[#allocation3 + $0xc] sm:$0xff]
      %v3292 = vld [vmem:[#allocation3 + $0x14] sm:$0xff]
      %v3293 = vld [vmem:[#allocation3 + $0x1c] sm:$0xff]
      %v3294 = vld [vmem:[#allocation3 + $0x24] sm:$0xff]
      %v3295 = vld [vmem:[#allocation3 + $0x2c] sm:$0xff]
      %v3296 = vld [vmem:[#allocation3 + $0x34] sm:$0xff]
      %v3297 = vld [vmem:[#allocation3 + $0x3c] sm:$0xff]
      %v3298 = vld [vmem:[#allocation3 + $0x44] sm:$0xff]
      %v3299 = vld [vmem:[#allocation3 + $0x4c] sm:$0xff]
      %v3300 = vld [vmem:[#allocation3 + $0x54] sm:$0xff]
      %v3301 = vld [vmem:[#allocation3 + $0x5c] sm:$0xff]
      %v3302 = vld [vmem:[#allocation3 + $0x64] sm:$0xff]
      %v3303 = vld [vmem:[#allocation3 + $0x6c] sm:$0xff]
      %v3304 = vld [vmem:[#allocation3 + $0x74] sm:$0xff]
      %v3305 = vld [vmem:[#allocation3 + $0x7c] sm:$0xff]
      %v3306 = vld [vmem:[#allocation3 + $0x84] sm:$0xff]
      %v3307 = vpack.c.bf16 %v3291, %v3290
      %v3308 = vpack.c.bf16 %v3293, %v3292
      %v3309 = vpack.c.bf16 %v3295, %v3294
      %v3310 = vpack.c.bf16 %v3297, %v3296
      %v3311 = vpack.c.bf16 %v3299, %v3298
      %v3312 = vpack.c.bf16 %v3301, %v3300
      %v3313 = vpack.c.bf16 %v3303, %v3302
      %v3314 = vpack.c.bf16 %v3305, %v3304
      %v3315 = vpack.c.bf16 %v3306, %v3306
      %v3325 = vunpack.c.l.b16 %v3307
      %v3326 = vunpack.c.h.b16 %v3307
      %v3327 = vunpack.c.l.b16 %v3308
      %v3328 = vunpack.c.h.b16 %v3308
      %v3329 = vunpack.c.l.b16 %v3309
      %v3330 = vunpack.c.h.b16 %v3309
      %v3331 = vunpack.c.l.b16 %v3310
      %v3332 = vunpack.c.h.b16 %v3310
      %v3333 = vunpack.c.l.b16 %v3311
      %v3334 = vunpack.c.h.b16 %v3311
      %v3335 = vunpack.c.l.b16 %v3312
      %v3336 = vunpack.c.h.b16 %v3312
      %v3337 = vunpack.c.l.b16 %v3313
      %v3338 = vunpack.c.h.b16 %v3313
      %v3339 = vunpack.c.l.b16 %v3314
      %v3340 = vunpack.c.h.b16 %v3314
      %v3341 = vunpack.c.l.b16 %v3315
      %v3342 = vpack.c.b16 %v3325, %v3325
      %v3343 = vpack.c.b16 %v3326, %v3326
      %v3344 = vpack.c.b16 %v3327, %v3327
      %v3345 = vpack.c.b16 %v3328, %v3328
      %v3346 = vpack.c.b16 %v3329, %v3329
      %v3347 = vpack.c.b16 %v3330, %v3330
      %v3348 = vpack.c.b16 %v3331, %v3331
      %v3349 = vpack.c.b16 %v3332, %v3332
      %v3350 = vpack.c.b16 %v3333, %v3333
      %v3351 = vpack.c.b16 %v3334, %v3334
      %v3352 = vpack.c.b16 %v3335, %v3335
      %v3353 = vpack.c.b16 %v3336, %v3336
      %v3354 = vpack.c.b16 %v3337, %v3337
      %v3355 = vpack.c.b16 %v3338, %v3338
      %v3356 = vpack.c.b16 %v3339, %v3339
      %v3357 = vpack.c.b16 %v3340, %v3340
      %v3358 = vpack.c.b16 %v3341, %v3341
      %3376 = vst [vmem:[#allocation4 + $0x10] sm:$0xf] %v3342
      %3377 = vst [vmem:[#allocation4 + $0x74] sm:$0xf] %v3343
      %3378 = vst [vmem:[#allocation4 + $0xd8] sm:$0xf] %v3344
      %3379 = vst [vmem:[#allocation4 + $0x13c] sm:$0xf] %v3345
      %3380 = vst [vmem:[#allocation4 + $0x1a0] sm:$0xf] %v3346
      %3381 = vst [vmem:[#allocation4 + $0x204] sm:$0xf] %v3347
      %3382 = vst [vmem:[#allocation4 + $0x268] sm:$0xf] %v3348
      %3383 = vst [vmem:[#allocation4 + $0x2cc] sm:$0xf] %v3349
      %3384 = vst [vmem:[#allocation4 + $0x330] sm:$0xf] %v3350
      %3385 = vst [vmem:[#allocation4 + $0x394] sm:$0xf] %v3351
      %3386 = vst [vmem:[#allocation4 + $0x3f8] sm:$0xf] %v3352
      %3387 = vst [vmem:[#allocation4 + $0x45c] sm:$0xf] %v3353
      %3388 = vst [vmem:[#allocation4 + $0x4c0] sm:$0xf] %v3354
      %3389 = vst [vmem:[#allocation4 + $0x524] sm:$0xf] %v3355
      %3390 = vst [vmem:[#allocation4 + $0x588] sm:$0xf] %v3356
      %3391 = vst [vmem:[#allocation4 + $0x5ec] sm:$0xf] %v3357
      %3392 = vst [vmem:[#allocation4 + $0x650] sm:$0xf] %v3358
      %v3393 = vld [vmem:[#allocation3 + $0xe] sm:$0xff]
      %v3394 = vld [vmem:[#allocation3 + $0x16] sm:$0xff]
      %v3395 = vld [vmem:[#allocation3 + $0x1e] sm:$0xff]
      %v3396 = vld [vmem:[#allocation3 + $0x26] sm:$0xff]
      %v3397 = vld [vmem:[#allocation3 + $0x2e] sm:$0xff]
      %v3398 = vld [vmem:[#allocation3 + $0x36] sm:$0xff]
      %v3399 = vld [vmem:[#allocation3 + $0x3e] sm:$0xff]
      %v3400 = vld [vmem:[#allocation3 + $0x46] sm:$0xff]
      %v3401 = vld [vmem:[#allocation3 + $0x4e] sm:$0xff]
      %v3402 = vld [vmem:[#allocation3 + $0x56] sm:$0xff]
      %v3403 = vld [vmem:[#allocation3 + $0x5e] sm:$0xff]
      %v3404 = vld [vmem:[#allocation3 + $0x66] sm:$0xff]
      %v3405 = vld [vmem:[#allocation3 + $0x6e] sm:$0xff]
      %v3406 = vld [vmem:[#allocation3 + $0x76] sm:$0xff]
      %v3407 = vld [vmem:[#allocation3 + $0x7e] sm:$0xff]
      %v3408 = vld [vmem:[#allocation3 + $0x86] sm:$0xff]
      %v3409 = vld [vmem:[#allocation3 + $0x8e] sm:$0xff]
      %v3410 = vpack.c.bf16 %v3394, %v3393
      %v3411 = vpack.c.bf16 %v3396, %v3395
      %v3412 = vpack.c.bf16 %v3398, %v3397
      %v3413 = vpack.c.bf16 %v3400, %v3399
      %v3414 = vpack.c.bf16 %v3402, %v3401
      %v3415 = vpack.c.bf16 %v3404, %v3403
      %v3416 = vpack.c.bf16 %v3406, %v3405
      %v3417 = vpack.c.bf16 %v3408, %v3407
      %v3418 = vpack.c.bf16 %v3409, %v3409
      %v3428 = vunpack.c.l.b16 %v3410
      %v3429 = vunpack.c.h.b16 %v3410
      %v3430 = vunpack.c.l.b16 %v3411
      %v3431 = vunpack.c.h.b16 %v3411
      %v3432 = vunpack.c.l.b16 %v3412
      %v3433 = vunpack.c.h.b16 %v3412
      %v3434 = vunpack.c.l.b16 %v3413
      %v3435 = vunpack.c.h.b16 %v3413
      %v3436 = vunpack.c.l.b16 %v3414
      %v3437 = vunpack.c.h.b16 %v3414
      %v3438 = vunpack.c.l.b16 %v3415
      %v3439 = vunpack.c.h.b16 %v3415
      %v3440 = vunpack.c.l.b16 %v3416
      %v3441 = vunpack.c.h.b16 %v3416
      %v3442 = vunpack.c.l.b16 %v3417
      %v3443 = vunpack.c.h.b16 %v3417
      %v3444 = vunpack.c.l.b16 %v3418
      %v3445 = vpack.c.b16 %v3428, %v3428
      %v3446 = vpack.c.b16 %v3429, %v3429
      %v3447 = vpack.c.b16 %v3430, %v3430
      %v3448 = vpack.c.b16 %v3431, %v3431
      %v3449 = vpack.c.b16 %v3432, %v3432
      %v3450 = vpack.c.b16 %v3433, %v3433
      %v3451 = vpack.c.b16 %v3434, %v3434
      %v3452 = vpack.c.b16 %v3435, %v3435
      %v3453 = vpack.c.b16 %v3436, %v3436
      %v3454 = vpack.c.b16 %v3437, %v3437
      %v3455 = vpack.c.b16 %v3438, %v3438
      %v3456 = vpack.c.b16 %v3439, %v3439
      %v3457 = vpack.c.b16 %v3440, %v3440
      %v3458 = vpack.c.b16 %v3441, %v3441
      %v3459 = vpack.c.b16 %v3442, %v3442
      %v3460 = vpack.c.b16 %v3443, %v3443
      %v3461 = vpack.c.b16 %v3444, %v3444
      %3479 = vst [vmem:[#allocation4 + $0x14] sm:$0xf] %v3445
      %3480 = vst [vmem:[#allocation4 + $0x78] sm:$0xf] %v3446
      %3481 = vst [vmem:[#allocation4 + $0xdc] sm:$0xf] %v3447
      %3482 = vst [vmem:[#allocation4 + $0x140] sm:$0xf] %v3448
      %3483 = vst [vmem:[#allocation4 + $0x1a4] sm:$0xf] %v3449
      %3484 = vst [vmem:[#allocation4 + $0x208] sm:$0xf] %v3450
      %3485 = vst [vmem:[#allocation4 + $0x26c] sm:$0xf] %v3451
      %3486 = vst [vmem:[#allocation4 + $0x2d0] sm:$0xf] %v3452
      %3487 = vst [vmem:[#allocation4 + $0x334] sm:$0xf] %v3453
      %3488 = vst [vmem:[#allocation4 + $0x398] sm:$0xf] %v3454
      %3489 = vst [vmem:[#allocation4 + $0x3fc] sm:$0xf] %v3455
      %3490 = vst [vmem:[#allocation4 + $0x460] sm:$0xf] %v3456
      %3491 = vst [vmem:[#allocation4 + $0x4c4] sm:$0xf] %v3457
      %3492 = vst [vmem:[#allocation4 + $0x528] sm:$0xf] %v3458
      %3493 = vst [vmem:[#allocation4 + $0x58c] sm:$0xf] %v3459
      %3494 = vst [vmem:[#allocation4 + $0x5f0] sm:$0xf] %v3460
      %3495 = vst [vmem:[#allocation4 + $0x654] sm:$0xf] %v3461
      %v3496 = vld [vmem:[#allocation3 + $0xf] sm:$0xff]
      %v3497 = vld [vmem:[#allocation3 + $0x17] sm:$0xff]
      %v3498 = vld [vmem:[#allocation3 + $0x1f] sm:$0xff]
      %v3499 = vld [vmem:[#allocation3 + $0x27] sm:$0xff]
      %v3500 = vld [vmem:[#allocation3 + $0x2f] sm:$0xff]
      %v3501 = vld [vmem:[#allocation3 + $0x37] sm:$0xff]
      %v3502 = vld [vmem:[#allocation3 + $0x3f] sm:$0xff]
      %v3503 = vld [vmem:[#allocation3 + $0x47] sm:$0xff]
      %v3504 = vld [vmem:[#allocation3 + $0x4f] sm:$0xff]
      %v3505 = vld [vmem:[#allocation3 + $0x57] sm:$0xff]
      %v3506 = vld [vmem:[#allocation3 + $0x5f] sm:$0xff]
      %v3507 = vld [vmem:[#allocation3 + $0x67] sm:$0xff]
      %v3508 = vld [vmem:[#allocation3 + $0x6f] sm:$0xff]
      %v3509 = vld [vmem:[#allocation3 + $0x77] sm:$0xff]
      %v3510 = vld [vmem:[#allocation3 + $0x7f] sm:$0xff]
      %v3511 = vld [vmem:[#allocation3 + $0x87] sm:$0xff]
      %v3512 = vld [vmem:[#allocation3 + $0x8f] sm:$0xff]
      %v3513 = vpack.c.bf16 %v3497, %v3496
      %v3514 = vpack.c.bf16 %v3499, %v3498
      %v3515 = vpack.c.bf16 %v3501, %v3500
      %v3516 = vpack.c.bf16 %v3503, %v3502
      %v3517 = vpack.c.bf16 %v3505, %v3504
      %v3518 = vpack.c.bf16 %v3507, %v3506
      %v3519 = vpack.c.bf16 %v3509, %v3508
      %v3520 = vpack.c.bf16 %v3511, %v3510
      %v3521 = vpack.c.bf16 %v3512, %v3512
      %v3531 = vunpack.c.l.b16 %v3513
      %v3532 = vunpack.c.h.b16 %v3513
      %v3533 = vunpack.c.l.b16 %v3514
      %v3534 = vunpack.c.h.b16 %v3514
      %v3535 = vunpack.c.l.b16 %v3515
      %v3536 = vunpack.c.h.b16 %v3515
      %v3537 = vunpack.c.l.b16 %v3516
      %v3538 = vunpack.c.h.b16 %v3516
      %v3539 = vunpack.c.l.b16 %v3517
      %v3540 = vunpack.c.h.b16 %v3517
      %v3541 = vunpack.c.l.b16 %v3518
      %v3542 = vunpack.c.h.b16 %v3518
      %v3543 = vunpack.c.l.b16 %v3519
      %v3544 = vunpack.c.h.b16 %v3519
      %v3545 = vunpack.c.l.b16 %v3520
      %v3546 = vunpack.c.h.b16 %v3520
      %v3547 = vunpack.c.l.b16 %v3521
      %v3548 = vpack.c.b16 %v3531, %v3531
      %v3549 = vpack.c.b16 %v3532, %v3532
      %v3550 = vpack.c.b16 %v3533, %v3533
      %v3551 = vpack.c.b16 %v3534, %v3534
      %v3552 = vpack.c.b16 %v3535, %v3535
      %v3553 = vpack.c.b16 %v3536, %v3536
      %v3554 = vpack.c.b16 %v3537, %v3537
      %v3555 = vpack.c.b16 %v3538, %v3538
      %v3556 = vpack.c.b16 %v3539, %v3539
      %v3557 = vpack.c.b16 %v3540, %v3540
      %v3558 = vpack.c.b16 %v3541, %v3541
      %v3559 = vpack.c.b16 %v3542, %v3542
      %v3560 = vpack.c.b16 %v3543, %v3543
      %v3561 = vpack.c.b16 %v3544, %v3544
      %v3562 = vpack.c.b16 %v3545, %v3545
      %v3563 = vpack.c.b16 %v3546, %v3546
      %v3564 = vpack.c.b16 %v3547, %v3547
      %3582 = vst [vmem:[#allocation4 + $0x18] sm:$0xf] %v3548
      %3583 = vst [vmem:[#allocation4 + $0x7c] sm:$0xf] %v3549
      %3584 = vst [vmem:[#allocation4 + $0xe0] sm:$0xf] %v3550
      %3585 = vst [vmem:[#allocation4 + $0x144] sm:$0xf] %v3551
      %3586 = vst [vmem:[#allocation4 + $0x1a8] sm:$0xf] %v3552
      %3587 = vst [vmem:[#allocation4 + $0x20c] sm:$0xf] %v3553
      %3588 = vst [vmem:[#allocation4 + $0x270] sm:$0xf] %v3554
      %3589 = vst [vmem:[#allocation4 + $0x2d4] sm:$0xf] %v3555
      %3590 = vst [vmem:[#allocation4 + $0x338] sm:$0xf] %v3556
      %3591 = vst [vmem:[#allocation4 + $0x39c] sm:$0xf] %v3557
      %3592 = vst [vmem:[#allocation4 + $0x400] sm:$0xf] %v3558
      %3593 = vst [vmem:[#allocation4 + $0x464] sm:$0xf] %v3559
      %3594 = vst [vmem:[#allocation4 + $0x4c8] sm:$0xf] %v3560
      %3595 = vst [vmem:[#allocation4 + $0x52c] sm:$0xf] %v3561
      %3596 = vst [vmem:[#allocation4 + $0x590] sm:$0xf] %v3562
      %3597 = vst [vmem:[#allocation4 + $0x5f4] sm:$0xf] %v3563
      %3598 = vst [vmem:[#allocation4 + $0x658] sm:$0xf] %v3564
      %v3599 = vld [vmem:[#allocation3 + $0x10] sm:$0xff]
      %v3600 = vld [vmem:[#allocation3 + $0x18] sm:$0xff]
      %v3601 = vld [vmem:[#allocation3 + $0x20] sm:$0xff]
      %v3602 = vld [vmem:[#allocation3 + $0x28] sm:$0xff]
      %v3603 = vld [vmem:[#allocation3 + $0x30] sm:$0xff]
      %v3604 = vld [vmem:[#allocation3 + $0x38] sm:$0xff]
      %v3605 = vld [vmem:[#allocation3 + $0x40] sm:$0xff]
      %v3606 = vld [vmem:[#allocation3 + $0x48] sm:$0xff]
      %v3607 = vld [vmem:[#allocation3 + $0x50] sm:$0xff]
      %v3608 = vld [vmem:[#allocation3 + $0x58] sm:$0xff]
      %v3609 = vld [vmem:[#allocation3 + $0x60] sm:$0xff]
      %v3610 = vld [vmem:[#allocation3 + $0x68] sm:$0xff]
      %v3611 = vld [vmem:[#allocation3 + $0x70] sm:$0xff]
      %v3612 = vld [vmem:[#allocation3 + $0x78] sm:$0xff]
      %v3613 = vld [vmem:[#allocation3 + $0x80] sm:$0xff]
      %v3614 = vld [vmem:[#allocation3 + $0x88] sm:$0xff]
      %v3615 = vld [vmem:[#allocation3 + $0x90] sm:$0xff]
      %v3616 = vpack.c.bf16 %v3600, %v3599
      %v3617 = vpack.c.bf16 %v3602, %v3601
      %v3618 = vpack.c.bf16 %v3604, %v3603
      %v3619 = vpack.c.bf16 %v3606, %v3605
      %v3620 = vpack.c.bf16 %v3608, %v3607
      %v3621 = vpack.c.bf16 %v3610, %v3609
      %v3622 = vpack.c.bf16 %v3612, %v3611
      %v3623 = vpack.c.bf16 %v3614, %v3613
      %v3624 = vpack.c.bf16 %v3615, %v3615
      %v3634 = vunpack.c.l.b16 %v3616
      %v3635 = vunpack.c.h.b16 %v3616
      %v3636 = vunpack.c.l.b16 %v3617
      %v3637 = vunpack.c.h.b16 %v3617
      %v3638 = vunpack.c.l.b16 %v3618
      %v3639 = vunpack.c.h.b16 %v3618
      %v3640 = vunpack.c.l.b16 %v3619
      %v3641 = vunpack.c.h.b16 %v3619
      %v3642 = vunpack.c.l.b16 %v3620
      %v3643 = vunpack.c.h.b16 %v3620
      %v3644 = vunpack.c.l.b16 %v3621
      %v3645 = vunpack.c.h.b16 %v3621
      %v3646 = vunpack.c.l.b16 %v3622
      %v3647 = vunpack.c.h.b16 %v3622
      %v3648 = vunpack.c.l.b16 %v3623
      %v3649 = vunpack.c.h.b16 %v3623
      %v3650 = vunpack.c.l.b16 %v3624
      %v3651 = vpack.c.b16 %v3634, %v3634
      %v3652 = vpack.c.b16 %v3635, %v3635
      %v3653 = vpack.c.b16 %v3636, %v3636
      %v3654 = vpack.c.b16 %v3637, %v3637
      %v3655 = vpack.c.b16 %v3638, %v3638
      %v3656 = vpack.c.b16 %v3639, %v3639
      %v3657 = vpack.c.b16 %v3640, %v3640
      %v3658 = vpack.c.b16 %v3641, %v3641
      %v3659 = vpack.c.b16 %v3642, %v3642
      %v3660 = vpack.c.b16 %v3643, %v3643
      %v3661 = vpack.c.b16 %v3644, %v3644
      %v3662 = vpack.c.b16 %v3645, %v3645
      %v3663 = vpack.c.b16 %v3646, %v3646
      %v3664 = vpack.c.b16 %v3647, %v3647
      %v3665 = vpack.c.b16 %v3648, %v3648
      %v3666 = vpack.c.b16 %v3649, %v3649
      %v3667 = vpack.c.b16 %v3650, %v3650
      %3685 = vst [vmem:[#allocation4 + $0x1c] sm:$0xf] %v3651
      %3686 = vst [vmem:[#allocation4 + $0x80] sm:$0xf] %v3652
      %3687 = vst [vmem:[#allocation4 + $0xe4] sm:$0xf] %v3653
      %3688 = vst [vmem:[#allocation4 + $0x148] sm:$0xf] %v3654
      %3689 = vst [vmem:[#allocation4 + $0x1ac] sm:$0xf] %v3655
      %3690 = vst [vmem:[#allocation4 + $0x210] sm:$0xf] %v3656
      %3691 = vst [vmem:[#allocation4 + $0x274] sm:$0xf] %v3657
      %3692 = vst [vmem:[#allocation4 + $0x2d8] sm:$0xf] %v3658
      %3693 = vst [vmem:[#allocation4 + $0x33c] sm:$0xf] %v3659
      %3694 = vst [vmem:[#allocation4 + $0x3a0] sm:$0xf] %v3660
      %3695 = vst [vmem:[#allocation4 + $0x404] sm:$0xf] %v3661
      %3696 = vst [vmem:[#allocation4 + $0x468] sm:$0xf] %v3662
      %3697 = vst [vmem:[#allocation4 + $0x4cc] sm:$0xf] %v3663
      %3698 = vst [vmem:[#allocation4 + $0x530] sm:$0xf] %v3664
      %3699 = vst [vmem:[#allocation4 + $0x594] sm:$0xf] %v3665
      %3700 = vst [vmem:[#allocation4 + $0x5f8] sm:$0xf] %v3666
      %3701 = vst [vmem:[#allocation4 + $0x65c] sm:$0xf] %v3667
      %v3702 = vld [vmem:[#allocation3 + $0x11] sm:$0xff]
      %v3703 = vld [vmem:[#allocation3 + $0x19] sm:$0xff]
      %v3704 = vld [vmem:[#allocation3 + $0x21] sm:$0xff]
      %v3705 = vld [vmem:[#allocation3 + $0x29] sm:$0xff]
      %v3706 = vld [vmem:[#allocation3 + $0x31] sm:$0xff]
      %v3707 = vld [vmem:[#allocation3 + $0x39] sm:$0xff]
      %v3708 = vld [vmem:[#allocation3 + $0x41] sm:$0xff]
      %v3709 = vld [vmem:[#allocation3 + $0x49] sm:$0xff]
      %v3710 = vld [vmem:[#allocation3 + $0x51] sm:$0xff]
      %v3711 = vld [vmem:[#allocation3 + $0x59] sm:$0xff]
      %v3712 = vld [vmem:[#allocation3 + $0x61] sm:$0xff]
      %v3713 = vld [vmem:[#allocation3 + $0x69] sm:$0xff]
      %v3714 = vld [vmem:[#allocation3 + $0x71] sm:$0xff]
      %v3715 = vld [vmem:[#allocation3 + $0x79] sm:$0xff]
      %v3716 = vld [vmem:[#allocation3 + $0x81] sm:$0xff]
      %v3717 = vld [vmem:[#allocation3 + $0x89] sm:$0xff]
      %v3718 = vld [vmem:[#allocation3 + $0x91] sm:$0xff]
      %v3719 = vpack.c.bf16 %v3703, %v3702
      %v3720 = vpack.c.bf16 %v3705, %v3704
      %v3721 = vpack.c.bf16 %v3707, %v3706
      %v3722 = vpack.c.bf16 %v3709, %v3708
      %v3723 = vpack.c.bf16 %v3711, %v3710
      %v3724 = vpack.c.bf16 %v3713, %v3712
      %v3725 = vpack.c.bf16 %v3715, %v3714
      %v3726 = vpack.c.bf16 %v3717, %v3716
      %v3727 = vpack.c.bf16 %v3718, %v3718
      %v3737 = vunpack.c.l.b16 %v3719
      %v3738 = vunpack.c.h.b16 %v3719
      %v3739 = vunpack.c.l.b16 %v3720
      %v3740 = vunpack.c.h.b16 %v3720
      %v3741 = vunpack.c.l.b16 %v3721
      %v3742 = vunpack.c.h.b16 %v3721
      %v3743 = vunpack.c.l.b16 %v3722
      %v3744 = vunpack.c.h.b16 %v3722
      %v3745 = vunpack.c.l.b16 %v3723
      %v3746 = vunpack.c.h.b16 %v3723
      %v3747 = vunpack.c.l.b16 %v3724
      %v3748 = vunpack.c.h.b16 %v3724
      %v3749 = vunpack.c.l.b16 %v3725
      %v3750 = vunpack.c.h.b16 %v3725
      %v3751 = vunpack.c.l.b16 %v3726
      %v3752 = vunpack.c.h.b16 %v3726
      %v3753 = vunpack.c.l.b16 %v3727
      %v3754 = vpack.c.b16 %v3737, %v3737
      %v3755 = vpack.c.b16 %v3738, %v3738
      %v3756 = vpack.c.b16 %v3739, %v3739
      %v3757 = vpack.c.b16 %v3740, %v3740
      %v3758 = vpack.c.b16 %v3741, %v3741
      %v3759 = vpack.c.b16 %v3742, %v3742
      %v3760 = vpack.c.b16 %v3743, %v3743
      %v3761 = vpack.c.b16 %v3744, %v3744
      %v3762 = vpack.c.b16 %v3745, %v3745
      %v3763 = vpack.c.b16 %v3746, %v3746
      %v3764 = vpack.c.b16 %v3747, %v3747
      %v3765 = vpack.c.b16 %v3748, %v3748
      %v3766 = vpack.c.b16 %v3749, %v3749
      %v3767 = vpack.c.b16 %v3750, %v3750
      %v3768 = vpack.c.b16 %v3751, %v3751
      %v3769 = vpack.c.b16 %v3752, %v3752
      %v3770 = vpack.c.b16 %v3753, %v3753
      %3788 = vst [vmem:[#allocation4 + $0x20] sm:$0xf] %v3754
      %3789 = vst [vmem:[#allocation4 + $0x84] sm:$0xf] %v3755
      %3790 = vst [vmem:[#allocation4 + $0xe8] sm:$0xf] %v3756
      %3791 = vst [vmem:[#allocation4 + $0x14c] sm:$0xf] %v3757
      %3792 = vst [vmem:[#allocation4 + $0x1b0] sm:$0xf] %v3758
      %3793 = vst [vmem:[#allocation4 + $0x214] sm:$0xf] %v3759
      %3794 = vst [vmem:[#allocation4 + $0x278] sm:$0xf] %v3760
      %3795 = vst [vmem:[#allocation4 + $0x2dc] sm:$0xf] %v3761
      %3796 = vst [vmem:[#allocation4 + $0x340] sm:$0xf] %v3762
      %3797 = vst [vmem:[#allocation4 + $0x3a4] sm:$0xf] %v3763
      %3798 = vst [vmem:[#allocation4 + $0x408] sm:$0xf] %v3764
      %3799 = vst [vmem:[#allocation4 + $0x46c] sm:$0xf] %v3765
      %3800 = vst [vmem:[#allocation4 + $0x4d0] sm:$0xf] %v3766
      %3801 = vst [vmem:[#allocation4 + $0x534] sm:$0xf] %v3767
      %3802 = vst [vmem:[#allocation4 + $0x598] sm:$0xf] %v3768
      %3803 = vst [vmem:[#allocation4 + $0x5fc] sm:$0xf] %v3769
      %3804 = vst [vmem:[#allocation4 + $0x660] sm:$0xf] %v3770
      %v3805 = vld [vmem:[#allocation3 + $0x12] sm:$0xff]
      %v3806 = vld [vmem:[#allocation3 + $0x1a] sm:$0xff]
      %v3807 = vld [vmem:[#allocation3 + $0x22] sm:$0xff]
      %v3808 = vld [vmem:[#allocation3 + $0x2a] sm:$0xff]
      %v3809 = vld [vmem:[#allocation3 + $0x32] sm:$0xff]
      %v3810 = vld [vmem:[#allocation3 + $0x3a] sm:$0xff]
      %v3811 = vld [vmem:[#allocation3 + $0x42] sm:$0xff]
      %v3812 = vld [vmem:[#allocation3 + $0x4a] sm:$0xff]
      %v3813 = vld [vmem:[#allocation3 + $0x52] sm:$0xff]
      %v3814 = vld [vmem:[#allocation3 + $0x5a] sm:$0xff]
      %v3815 = vld [vmem:[#allocation3 + $0x62] sm:$0xff]
      %v3816 = vld [vmem:[#allocation3 + $0x6a] sm:$0xff]
      %v3817 = vld [vmem:[#allocation3 + $0x72] sm:$0xff]
      %v3818 = vld [vmem:[#allocation3 + $0x7a] sm:$0xff]
      %v3819 = vld [vmem:[#allocation3 + $0x82] sm:$0xff]
      %v3820 = vld [vmem:[#allocation3 + $0x8a] sm:$0xff]
      %v3821 = vld [vmem:[#allocation3 + $0x92] sm:$0xff]
      %v3822 = vpack.c.bf16 %v3806, %v3805
      %v3823 = vpack.c.bf16 %v3808, %v3807
      %v3824 = vpack.c.bf16 %v3810, %v3809
      %v3825 = vpack.c.bf16 %v3812, %v3811
      %v3826 = vpack.c.bf16 %v3814, %v3813
      %v3827 = vpack.c.bf16 %v3816, %v3815
      %v3828 = vpack.c.bf16 %v3818, %v3817
      %v3829 = vpack.c.bf16 %v3820, %v3819
      %v3830 = vpack.c.bf16 %v3821, %v3821
      %v3840 = vunpack.c.l.b16 %v3822
      %v3841 = vunpack.c.h.b16 %v3822
      %v3842 = vunpack.c.l.b16 %v3823
      %v3843 = vunpack.c.h.b16 %v3823
      %v3844 = vunpack.c.l.b16 %v3824
      %v3845 = vunpack.c.h.b16 %v3824
      %v3846 = vunpack.c.l.b16 %v3825
      %v3847 = vunpack.c.h.b16 %v3825
      %v3848 = vunpack.c.l.b16 %v3826
      %v3849 = vunpack.c.h.b16 %v3826
      %v3850 = vunpack.c.l.b16 %v3827
      %v3851 = vunpack.c.h.b16 %v3827
      %v3852 = vunpack.c.l.b16 %v3828
      %v3853 = vunpack.c.h.b16 %v3828
      %v3854 = vunpack.c.l.b16 %v3829
      %v3855 = vunpack.c.h.b16 %v3829
      %v3856 = vunpack.c.l.b16 %v3830
      %v3857 = vpack.c.b16 %v3840, %v3840
      %v3858 = vpack.c.b16 %v3841, %v3841
      %v3859 = vpack.c.b16 %v3842, %v3842
      %v3860 = vpack.c.b16 %v3843, %v3843
      %v3861 = vpack.c.b16 %v3844, %v3844
      %v3862 = vpack.c.b16 %v3845, %v3845
      %v3863 = vpack.c.b16 %v3846, %v3846
      %v3864 = vpack.c.b16 %v3847, %v3847
      %v3865 = vpack.c.b16 %v3848, %v3848
      %v3866 = vpack.c.b16 %v3849, %v3849
      %v3867 = vpack.c.b16 %v3850, %v3850
      %v3868 = vpack.c.b16 %v3851, %v3851
      %v3869 = vpack.c.b16 %v3852, %v3852
      %v3870 = vpack.c.b16 %v3853, %v3853
      %v3871 = vpack.c.b16 %v3854, %v3854
      %v3872 = vpack.c.b16 %v3855, %v3855
      %v3873 = vpack.c.b16 %v3856, %v3856
      %3891 = vst [vmem:[#allocation4 + $0x24] sm:$0xf] %v3857
      %3892 = vst [vmem:[#allocation4 + $0x88] sm:$0xf] %v3858
      %3893 = vst [vmem:[#allocation4 + $0xec] sm:$0xf] %v3859
      %3894 = vst [vmem:[#allocation4 + $0x150] sm:$0xf] %v3860
      %3895 = vst [vmem:[#allocation4 + $0x1b4] sm:$0xf] %v3861
      %3896 = vst [vmem:[#allocation4 + $0x218] sm:$0xf] %v3862
      %3897 = vst [vmem:[#allocation4 + $0x27c] sm:$0xf] %v3863
      %3898 = vst [vmem:[#allocation4 + $0x2e0] sm:$0xf] %v3864
      %3899 = vst [vmem:[#allocation4 + $0x344] sm:$0xf] %v3865
      %3900 = vst [vmem:[#allocation4 + $0x3a8] sm:$0xf] %v3866
      %3901 = vst [vmem:[#allocation4 + $0x40c] sm:$0xf] %v3867
      %3902 = vst [vmem:[#allocation4 + $0x470] sm:$0xf] %v3868
      %3903 = vst [vmem:[#allocation4 + $0x4d4] sm:$0xf] %v3869
      %3904 = vst [vmem:[#allocation4 + $0x538] sm:$0xf] %v3870
      %3905 = vst [vmem:[#allocation4 + $0x59c] sm:$0xf] %v3871
      %3906 = vst [vmem:[#allocation4 + $0x600] sm:$0xf] %v3872
      %3907 = vst [vmem:[#allocation4 + $0x664] sm:$0xf] %v3873
      %v3908 = vld [vmem:[#allocation3 + $0x1c] sm:$0xff]
      %v3909 = vld [vmem:[#allocation3 + $0x24] sm:$0xff]
      %v3910 = vld [vmem:[#allocation3 + $0x2c] sm:$0xff]
      %v3911 = vld [vmem:[#allocation3 + $0x34] sm:$0xff]
      %v3912 = vld [vmem:[#allocation3 + $0x3c] sm:$0xff]
      %v3913 = vld [vmem:[#allocation3 + $0x44] sm:$0xff]
      %v3914 = vld [vmem:[#allocation3 + $0x4c] sm:$0xff]
      %v3915 = vld [vmem:[#allocation3 + $0x54] sm:$0xff]
      %v3916 = vld [vmem:[#allocation3 + $0x5c] sm:$0xff]
      %v3917 = vld [vmem:[#allocation3 + $0x64] sm:$0xff]
      %v3918 = vld [vmem:[#allocation3 + $0x6c] sm:$0xff]
      %v3919 = vld [vmem:[#allocation3 + $0x74] sm:$0xff]
      %v3920 = vld [vmem:[#allocation3 + $0x7c] sm:$0xff]
      %v3921 = vld [vmem:[#allocation3 + $0x84] sm:$0xff]
      %v3922 = vld [vmem:[#allocation3 + $0x8c] sm:$0xff]
      %v3923 = vld [vmem:[#allocation3 + $0x94] sm:$0xff]
      %v3924 = vld [vmem:[#allocation3 + $0x9c] sm:$0xff]
      %v3925 = vpack.c.bf16 %v3909, %v3908
      %v3926 = vpack.c.bf16 %v3911, %v3910
      %v3927 = vpack.c.bf16 %v3913, %v3912
      %v3928 = vpack.c.bf16 %v3915, %v3914
      %v3929 = vpack.c.bf16 %v3917, %v3916
      %v3930 = vpack.c.bf16 %v3919, %v3918
      %v3931 = vpack.c.bf16 %v3921, %v3920
      %v3932 = vpack.c.bf16 %v3923, %v3922
      %v3933 = vpack.c.bf16 %v3924, %v3924
      %v3943 = vunpack.c.l.b16 %v3925
      %v3944 = vunpack.c.h.b16 %v3925
      %v3945 = vunpack.c.l.b16 %v3926
      %v3946 = vunpack.c.h.b16 %v3926
      %v3947 = vunpack.c.l.b16 %v3927
      %v3948 = vunpack.c.h.b16 %v3927
      %v3949 = vunpack.c.l.b16 %v3928
      %v3950 = vunpack.c.h.b16 %v3928
      %v3951 = vunpack.c.l.b16 %v3929
      %v3952 = vunpack.c.h.b16 %v3929
      %v3953 = vunpack.c.l.b16 %v3930
      %v3954 = vunpack.c.h.b16 %v3930
      %v3955 = vunpack.c.l.b16 %v3931
      %v3956 = vunpack.c.h.b16 %v3931
      %v3957 = vunpack.c.l.b16 %v3932
      %v3958 = vunpack.c.h.b16 %v3932
      %v3959 = vunpack.c.l.b16 %v3933
      %v3960 = vpack.c.b16 %v3943, %v3943
      %v3961 = vpack.c.b16 %v3944, %v3944
      %v3962 = vpack.c.b16 %v3945, %v3945
      %v3963 = vpack.c.b16 %v3946, %v3946
      %v3964 = vpack.c.b16 %v3947, %v3947
      %v3965 = vpack.c.b16 %v3948, %v3948
      %v3966 = vpack.c.b16 %v3949, %v3949
      %v3967 = vpack.c.b16 %v3950, %v3950
      %v3968 = vpack.c.b16 %v3951, %v3951
      %v3969 = vpack.c.b16 %v3952, %v3952
      %v3970 = vpack.c.b16 %v3953, %v3953
      %v3971 = vpack.c.b16 %v3954, %v3954
      %v3972 = vpack.c.b16 %v3955, %v3955
      %v3973 = vpack.c.b16 %v3956, %v3956
      %v3974 = vpack.c.b16 %v3957, %v3957
      %v3975 = vpack.c.b16 %v3958, %v3958
      %v3976 = vpack.c.b16 %v3959, %v3959
      %3994 = vst [vmem:[#allocation4 + $0x28] sm:$0xf] %v3960
      %3995 = vst [vmem:[#allocation4 + $0x8c] sm:$0xf] %v3961
      %3996 = vst [vmem:[#allocation4 + $0xf0] sm:$0xf] %v3962
      %3997 = vst [vmem:[#allocation4 + $0x154] sm:$0xf] %v3963
      %3998 = vst [vmem:[#allocation4 + $0x1b8] sm:$0xf] %v3964
      %3999 = vst [vmem:[#allocation4 + $0x21c] sm:$0xf] %v3965
      %4000 = vst [vmem:[#allocation4 + $0x280] sm:$0xf] %v3966
      %4001 = vst [vmem:[#allocation4 + $0x2e4] sm:$0xf] %v3967
      %4002 = vst [vmem:[#allocation4 + $0x348] sm:$0xf] %v3968
      %4003 = vst [vmem:[#allocation4 + $0x3ac] sm:$0xf] %v3969
      %4004 = vst [vmem:[#allocation4 + $0x410] sm:$0xf] %v3970
      %4005 = vst [vmem:[#allocation4 + $0x474] sm:$0xf] %v3971
      %4006 = vst [vmem:[#allocation4 + $0x4d8] sm:$0xf] %v3972
      %4007 = vst [vmem:[#allocation4 + $0x53c] sm:$0xf] %v3973
      %4008 = vst [vmem:[#allocation4 + $0x5a0] sm:$0xf] %v3974
      %4009 = vst [vmem:[#allocation4 + $0x604] sm:$0xf] %v3975
      %4010 = vst [vmem:[#allocation4 + $0x668] sm:$0xf] %v3976
      %v4011 = vld [vmem:[#allocation3 + $0x1d] sm:$0xff]
      %v4012 = vld [vmem:[#allocation3 + $0x25] sm:$0xff]
      %v4013 = vld [vmem:[#allocation3 + $0x2d] sm:$0xff]
      %v4014 = vld [vmem:[#allocation3 + $0x35] sm:$0xff]
      %v4015 = vld [vmem:[#allocation3 + $0x3d] sm:$0xff]
      %v4016 = vld [vmem:[#allocation3 + $0x45] sm:$0xff]
      %v4017 = vld [vmem:[#allocation3 + $0x4d] sm:$0xff]
      %v4018 = vld [vmem:[#allocation3 + $0x55] sm:$0xff]
      %v4019 = vld [vmem:[#allocation3 + $0x5d] sm:$0xff]
      %v4020 = vld [vmem:[#allocation3 + $0x65] sm:$0xff]
      %v4021 = vld [vmem:[#allocation3 + $0x6d] sm:$0xff]
      %v4022 = vld [vmem:[#allocation3 + $0x75] sm:$0xff]
      %v4023 = vld [vmem:[#allocation3 + $0x7d] sm:$0xff]
      %v4024 = vld [vmem:[#allocation3 + $0x85] sm:$0xff]
      %v4025 = vld [vmem:[#allocation3 + $0x8d] sm:$0xff]
      %v4026 = vld [vmem:[#allocation3 + $0x95] sm:$0xff]
      %v4027 = vld [vmem:[#allocation3 + $0x9d] sm:$0xff]
      %v4028 = vpack.c.bf16 %v4012, %v4011
      %v4029 = vpack.c.bf16 %v4014, %v4013
      %v4030 = vpack.c.bf16 %v4016, %v4015
      %v4031 = vpack.c.bf16 %v4018, %v4017
      %v4032 = vpack.c.bf16 %v4020, %v4019
      %v4033 = vpack.c.bf16 %v4022, %v4021
      %v4034 = vpack.c.bf16 %v4024, %v4023
      %v4035 = vpack.c.bf16 %v4026, %v4025
      %v4036 = vpack.c.bf16 %v4027, %v4027
      %v4046 = vunpack.c.l.b16 %v4028
      %v4047 = vunpack.c.h.b16 %v4028
      %v4048 = vunpack.c.l.b16 %v4029
      %v4049 = vunpack.c.h.b16 %v4029
      %v4050 = vunpack.c.l.b16 %v4030
      %v4051 = vunpack.c.h.b16 %v4030
      %v4052 = vunpack.c.l.b16 %v4031
      %v4053 = vunpack.c.h.b16 %v4031
      %v4054 = vunpack.c.l.b16 %v4032
      %v4055 = vunpack.c.h.b16 %v4032
      %v4056 = vunpack.c.l.b16 %v4033
      %v4057 = vunpack.c.h.b16 %v4033
      %v4058 = vunpack.c.l.b16 %v4034
      %v4059 = vunpack.c.h.b16 %v4034
      %v4060 = vunpack.c.l.b16 %v4035
      %v4061 = vunpack.c.h.b16 %v4035
      %v4062 = vunpack.c.l.b16 %v4036
      %v4063 = vpack.c.b16 %v4046, %v4046
      %v4064 = vpack.c.b16 %v4047, %v4047
      %v4065 = vpack.c.b16 %v4048, %v4048
      %v4066 = vpack.c.b16 %v4049, %v4049
      %v4067 = vpack.c.b16 %v4050, %v4050
      %v4068 = vpack.c.b16 %v4051, %v4051
      %v4069 = vpack.c.b16 %v4052, %v4052
      %v4070 = vpack.c.b16 %v4053, %v4053
      %v4071 = vpack.c.b16 %v4054, %v4054
      %v4072 = vpack.c.b16 %v4055, %v4055
      %v4073 = vpack.c.b16 %v4056, %v4056
      %v4074 = vpack.c.b16 %v4057, %v4057
      %v4075 = vpack.c.b16 %v4058, %v4058
      %v4076 = vpack.c.b16 %v4059, %v4059
      %v4077 = vpack.c.b16 %v4060, %v4060
      %v4078 = vpack.c.b16 %v4061, %v4061
      %v4079 = vpack.c.b16 %v4062, %v4062
      %4097 = vst [vmem:[#allocation4 + $0x2c] sm:$0xf] %v4063
      %4098 = vst [vmem:[#allocation4 + $0x90] sm:$0xf] %v4064
      %4099 = vst [vmem:[#allocation4 + $0xf4] sm:$0xf] %v4065
      %4100 = vst [vmem:[#allocation4 + $0x158] sm:$0xf] %v4066
      %4101 = vst [vmem:[#allocation4 + $0x1bc] sm:$0xf] %v4067
      %4102 = vst [vmem:[#allocation4 + $0x220] sm:$0xf] %v4068
      %4103 = vst [vmem:[#allocation4 + $0x284] sm:$0xf] %v4069
      %4104 = vst [vmem:[#allocation4 + $0x2e8] sm:$0xf] %v4070
      %4105 = vst [vmem:[#allocation4 + $0x34c] sm:$0xf] %v4071
      %4106 = vst [vmem:[#allocation4 + $0x3b0] sm:$0xf] %v4072
      %4107 = vst [vmem:[#allocation4 + $0x414] sm:$0xf] %v4073
      %4108 = vst [vmem:[#allocation4 + $0x478] sm:$0xf] %v4074
      %4109 = vst [vmem:[#allocation4 + $0x4dc] sm:$0xf] %v4075
      %4110 = vst [vmem:[#allocation4 + $0x540] sm:$0xf] %v4076
      %4111 = vst [vmem:[#allocation4 + $0x5a4] sm:$0xf] %v4077
      %4112 = vst [vmem:[#allocation4 + $0x608] sm:$0xf] %v4078
      %4113 = vst [vmem:[#allocation4 + $0x66c] sm:$0xf] %v4079
      %v4114 = vld [vmem:[#allocation3 + $0x1e] sm:$0xff]
      %v4115 = vld [vmem:[#allocation3 + $0x26] sm:$0xff]
      %v4116 = vld [vmem:[#allocation3 + $0x2e] sm:$0xff]
      %v4117 = vld [vmem:[#allocation3 + $0x36] sm:$0xff]
      %v4118 = vld [vmem:[#allocation3 + $0x3e] sm:$0xff]
      %v4119 = vld [vmem:[#allocation3 + $0x46] sm:$0xff]
      %v4120 = vld [vmem:[#allocation3 + $0x4e] sm:$0xff]
      %v4121 = vld [vmem:[#allocation3 + $0x56] sm:$0xff]
      %v4122 = vld [vmem:[#allocation3 + $0x5e] sm:$0xff]
      %v4123 = vld [vmem:[#allocation3 + $0x66] sm:$0xff]
      %v4124 = vld [vmem:[#allocation3 + $0x6e] sm:$0xff]
      %v4125 = vld [vmem:[#allocation3 + $0x76] sm:$0xff]
      %v4126 = vld [vmem:[#allocation3 + $0x7e] sm:$0xff]
      %v4127 = vld [vmem:[#allocation3 + $0x86] sm:$0xff]
      %v4128 = vld [vmem:[#allocation3 + $0x8e] sm:$0xff]
      %v4129 = vld [vmem:[#allocation3 + $0x96] sm:$0xff]
      %v4130 = vld [vmem:[#allocation3 + $0x9e] sm:$0xff]
      %v4131 = vpack.c.bf16 %v4115, %v4114
      %v4132 = vpack.c.bf16 %v4117, %v4116
      %v4133 = vpack.c.bf16 %v4119, %v4118
      %v4134 = vpack.c.bf16 %v4121, %v4120
      %v4135 = vpack.c.bf16 %v4123, %v4122
      %v4136 = vpack.c.bf16 %v4125, %v4124
      %v4137 = vpack.c.bf16 %v4127, %v4126
      %v4138 = vpack.c.bf16 %v4129, %v4128
      %v4139 = vpack.c.bf16 %v4130, %v4130
      %v4149 = vunpack.c.l.b16 %v4131
      %v4150 = vunpack.c.h.b16 %v4131
      %v4151 = vunpack.c.l.b16 %v4132
      %v4152 = vunpack.c.h.b16 %v4132
      %v4153 = vunpack.c.l.b16 %v4133
      %v4154 = vunpack.c.h.b16 %v4133
      %v4155 = vunpack.c.l.b16 %v4134
      %v4156 = vunpack.c.h.b16 %v4134
      %v4157 = vunpack.c.l.b16 %v4135
      %v4158 = vunpack.c.h.b16 %v4135
      %v4159 = vunpack.c.l.b16 %v4136
      %v4160 = vunpack.c.h.b16 %v4136
      %v4161 = vunpack.c.l.b16 %v4137
      %v4162 = vunpack.c.h.b16 %v4137
      %v4163 = vunpack.c.l.b16 %v4138
      %v4164 = vunpack.c.h.b16 %v4138
      %v4165 = vunpack.c.l.b16 %v4139
      %v4166 = vpack.c.b16 %v4149, %v4149
      %v4167 = vpack.c.b16 %v4150, %v4150
      %v4168 = vpack.c.b16 %v4151, %v4151
      %v4169 = vpack.c.b16 %v4152, %v4152
      %v4170 = vpack.c.b16 %v4153, %v4153
      %v4171 = vpack.c.b16 %v4154, %v4154
      %v4172 = vpack.c.b16 %v4155, %v4155
      %v4173 = vpack.c.b16 %v4156, %v4156
      %v4174 = vpack.c.b16 %v4157, %v4157
      %v4175 = vpack.c.b16 %v4158, %v4158
      %v4176 = vpack.c.b16 %v4159, %v4159
      %v4177 = vpack.c.b16 %v4160, %v4160
      %v4178 = vpack.c.b16 %v4161, %v4161
      %v4179 = vpack.c.b16 %v4162, %v4162
      %v4180 = vpack.c.b16 %v4163, %v4163
      %v4181 = vpack.c.b16 %v4164, %v4164
      %v4182 = vpack.c.b16 %v4165, %v4165
      %4200 = vst [vmem:[#allocation4 + $0x30] sm:$0xf] %v4166
      %4201 = vst [vmem:[#allocation4 + $0x94] sm:$0xf] %v4167
      %4202 = vst [vmem:[#allocation4 + $0xf8] sm:$0xf] %v4168
      %4203 = vst [vmem:[#allocation4 + $0x15c] sm:$0xf] %v4169
      %4204 = vst [vmem:[#allocation4 + $0x1c0] sm:$0xf] %v4170
      %4205 = vst [vmem:[#allocation4 + $0x224] sm:$0xf] %v4171
      %4206 = vst [vmem:[#allocation4 + $0x288] sm:$0xf] %v4172
      %4207 = vst [vmem:[#allocation4 + $0x2ec] sm:$0xf] %v4173
      %4208 = vst [vmem:[#allocation4 + $0x350] sm:$0xf] %v4174
      %4209 = vst [vmem:[#allocation4 + $0x3b4] sm:$0xf] %v4175
      %4210 = vst [vmem:[#allocation4 + $0x418] sm:$0xf] %v4176
      %4211 = vst [vmem:[#allocation4 + $0x47c] sm:$0xf] %v4177
      %4212 = vst [vmem:[#allocation4 + $0x4e0] sm:$0xf] %v4178
      %4213 = vst [vmem:[#allocation4 + $0x544] sm:$0xf] %v4179
      %4214 = vst [vmem:[#allocation4 + $0x5a8] sm:$0xf] %v4180
      %4215 = vst [vmem:[#allocation4 + $0x60c] sm:$0xf] %v4181
      %4216 = vst [vmem:[#allocation4 + $0x670] sm:$0xf] %v4182
      %v4217 = vld [vmem:[#allocation3 + $0x1f] sm:$0xff]
      %v4218 = vld [vmem:[#allocation3 + $0x27] sm:$0xff]
      %v4219 = vld [vmem:[#allocation3 + $0x2f] sm:$0xff]
      %v4220 = vld [vmem:[#allocation3 + $0x37] sm:$0xff]
      %v4221 = vld [vmem:[#allocation3 + $0x3f] sm:$0xff]
      %v4222 = vld [vmem:[#allocation3 + $0x47] sm:$0xff]
      %v4223 = vld [vmem:[#allocation3 + $0x4f] sm:$0xff]
      %v4224 = vld [vmem:[#allocation3 + $0x57] sm:$0xff]
      %v4225 = vld [vmem:[#allocation3 + $0x5f] sm:$0xff]
      %v4226 = vld [vmem:[#allocation3 + $0x67] sm:$0xff]
      %v4227 = vld [vmem:[#allocation3 + $0x6f] sm:$0xff]
      %v4228 = vld [vmem:[#allocation3 + $0x77] sm:$0xff]
      %v4229 = vld [vmem:[#allocation3 + $0x7f] sm:$0xff]
      %v4230 = vld [vmem:[#allocation3 + $0x87] sm:$0xff]
      %v4231 = vld [vmem:[#allocation3 + $0x8f] sm:$0xff]
      %v4232 = vld [vmem:[#allocation3 + $0x97] sm:$0xff]
      %v4233 = vld [vmem:[#allocation3 + $0x9f] sm:$0xff]
      %v4234 = vpack.c.bf16 %v4218, %v4217
      %v4235 = vpack.c.bf16 %v4220, %v4219
      %v4236 = vpack.c.bf16 %v4222, %v4221
      %v4237 = vpack.c.bf16 %v4224, %v4223
      %v4238 = vpack.c.bf16 %v4226, %v4225
      %v4239 = vpack.c.bf16 %v4228, %v4227
      %v4240 = vpack.c.bf16 %v4230, %v4229
      %v4241 = vpack.c.bf16 %v4232, %v4231
      %v4242 = vpack.c.bf16 %v4233, %v4233
      %v4252 = vunpack.c.l.b16 %v4234
      %v4253 = vunpack.c.h.b16 %v4234
      %v4254 = vunpack.c.l.b16 %v4235
      %v4255 = vunpack.c.h.b16 %v4235
      %v4256 = vunpack.c.l.b16 %v4236
      %v4257 = vunpack.c.h.b16 %v4236
      %v4258 = vunpack.c.l.b16 %v4237
      %v4259 = vunpack.c.h.b16 %v4237
      %v4260 = vunpack.c.l.b16 %v4238
      %v4261 = vunpack.c.h.b16 %v4238
      %v4262 = vunpack.c.l.b16 %v4239
      %v4263 = vunpack.c.h.b16 %v4239
      %v4264 = vunpack.c.l.b16 %v4240
      %v4265 = vunpack.c.h.b16 %v4240
      %v4266 = vunpack.c.l.b16 %v4241
      %v4267 = vunpack.c.h.b16 %v4241
      %v4268 = vunpack.c.l.b16 %v4242
      %v4269 = vpack.c.b16 %v4252, %v4252
      %v4270 = vpack.c.b16 %v4253, %v4253
      %v4271 = vpack.c.b16 %v4254, %v4254
      %v4272 = vpack.c.b16 %v4255, %v4255
      %v4273 = vpack.c.b16 %v4256, %v4256
      %v4274 = vpack.c.b16 %v4257, %v4257
      %v4275 = vpack.c.b16 %v4258, %v4258
      %v4276 = vpack.c.b16 %v4259, %v4259
      %v4277 = vpack.c.b16 %v4260, %v4260
      %v4278 = vpack.c.b16 %v4261, %v4261
      %v4279 = vpack.c.b16 %v4262, %v4262
      %v4280 = vpack.c.b16 %v4263, %v4263
      %v4281 = vpack.c.b16 %v4264, %v4264
      %v4282 = vpack.c.b16 %v4265, %v4265
      %v4283 = vpack.c.b16 %v4266, %v4266
      %v4284 = vpack.c.b16 %v4267, %v4267
      %v4285 = vpack.c.b16 %v4268, %v4268
      %4303 = vst [vmem:[#allocation4 + $0x34] sm:$0xf] %v4269
      %4304 = vst [vmem:[#allocation4 + $0x98] sm:$0xf] %v4270
      %4305 = vst [vmem:[#allocation4 + $0xfc] sm:$0xf] %v4271
      %4306 = vst [vmem:[#allocation4 + $0x160] sm:$0xf] %v4272
      %4307 = vst [vmem:[#allocation4 + $0x1c4] sm:$0xf] %v4273
      %4308 = vst [vmem:[#allocation4 + $0x228] sm:$0xf] %v4274
      %4309 = vst [vmem:[#allocation4 + $0x28c] sm:$0xf] %v4275
      %4310 = vst [vmem:[#allocation4 + $0x2f0] sm:$0xf] %v4276
      %4311 = vst [vmem:[#allocation4 + $0x354] sm:$0xf] %v4277
      %4312 = vst [vmem:[#allocation4 + $0x3b8] sm:$0xf] %v4278
      %4313 = vst [vmem:[#allocation4 + $0x41c] sm:$0xf] %v4279
      %4314 = vst [vmem:[#allocation4 + $0x480] sm:$0xf] %v4280
      %4315 = vst [vmem:[#allocation4 + $0x4e4] sm:$0xf] %v4281
      %4316 = vst [vmem:[#allocation4 + $0x548] sm:$0xf] %v4282
      %4317 = vst [vmem:[#allocation4 + $0x5ac] sm:$0xf] %v4283
      %4318 = vst [vmem:[#allocation4 + $0x610] sm:$0xf] %v4284
      %4319 = vst [vmem:[#allocation4 + $0x674] sm:$0xf] %v4285
      %v4320 = vld [vmem:[#allocation3 + $0x20] sm:$0xff]
      %v4321 = vld [vmem:[#allocation3 + $0x28] sm:$0xff]
      %v4322 = vld [vmem:[#allocation3 + $0x30] sm:$0xff]
      %v4323 = vld [vmem:[#allocation3 + $0x38] sm:$0xff]
      %v4324 = vld [vmem:[#allocation3 + $0x40] sm:$0xff]
      %v4325 = vld [vmem:[#allocation3 + $0x48] sm:$0xff]
      %v4326 = vld [vmem:[#allocation3 + $0x50] sm:$0xff]
      %v4327 = vld [vmem:[#allocation3 + $0x58] sm:$0xff]
      %v4328 = vld [vmem:[#allocation3 + $0x60] sm:$0xff]
      %v4329 = vld [vmem:[#allocation3 + $0x68] sm:$0xff]
      %v4330 = vld [vmem:[#allocation3 + $0x70] sm:$0xff]
      %v4331 = vld [vmem:[#allocation3 + $0x78] sm:$0xff]
      %v4332 = vld [vmem:[#allocation3 + $0x80] sm:$0xff]
      %v4333 = vld [vmem:[#allocation3 + $0x88] sm:$0xff]
      %v4334 = vld [vmem:[#allocation3 + $0x90] sm:$0xff]
      %v4335 = vld [vmem:[#allocation3 + $0x98] sm:$0xff]
      %v4336 = vld [vmem:[#allocation3 + $0xa0] sm:$0xff]
      %v4337 = vpack.c.bf16 %v4321, %v4320
      %v4338 = vpack.c.bf16 %v4323, %v4322
      %v4339 = vpack.c.bf16 %v4325, %v4324
      %v4340 = vpack.c.bf16 %v4327, %v4326
      %v4341 = vpack.c.bf16 %v4329, %v4328
      %v4342 = vpack.c.bf16 %v4331, %v4330
      %v4343 = vpack.c.bf16 %v4333, %v4332
      %v4344 = vpack.c.bf16 %v4335, %v4334
      %v4345 = vpack.c.bf16 %v4336, %v4336
      %v4355 = vunpack.c.l.b16 %v4337
      %v4356 = vunpack.c.h.b16 %v4337
      %v4357 = vunpack.c.l.b16 %v4338
      %v4358 = vunpack.c.h.b16 %v4338
      %v4359 = vunpack.c.l.b16 %v4339
      %v4360 = vunpack.c.h.b16 %v4339
      %v4361 = vunpack.c.l.b16 %v4340
      %v4362 = vunpack.c.h.b16 %v4340
      %v4363 = vunpack.c.l.b16 %v4341
      %v4364 = vunpack.c.h.b16 %v4341
      %v4365 = vunpack.c.l.b16 %v4342
      %v4366 = vunpack.c.h.b16 %v4342
      %v4367 = vunpack.c.l.b16 %v4343
      %v4368 = vunpack.c.h.b16 %v4343
      %v4369 = vunpack.c.l.b16 %v4344
      %v4370 = vunpack.c.h.b16 %v4344
      %v4371 = vunpack.c.l.b16 %v4345
      %v4372 = vpack.c.b16 %v4355, %v4355
      %v4373 = vpack.c.b16 %v4356, %v4356
      %v4374 = vpack.c.b16 %v4357, %v4357
      %v4375 = vpack.c.b16 %v4358, %v4358
      %v4376 = vpack.c.b16 %v4359, %v4359
      %v4377 = vpack.c.b16 %v4360, %v4360
      %v4378 = vpack.c.b16 %v4361, %v4361
      %v4379 = vpack.c.b16 %v4362, %v4362
      %v4380 = vpack.c.b16 %v4363, %v4363
      %v4381 = vpack.c.b16 %v4364, %v4364
      %v4382 = vpack.c.b16 %v4365, %v4365
      %v4383 = vpack.c.b16 %v4366, %v4366
      %v4384 = vpack.c.b16 %v4367, %v4367
      %v4385 = vpack.c.b16 %v4368, %v4368
      %v4386 = vpack.c.b16 %v4369, %v4369
      %v4387 = vpack.c.b16 %v4370, %v4370
      %v4388 = vpack.c.b16 %v4371, %v4371
      %4406 = vst [vmem:[#allocation4 + $0x38] sm:$0xf] %v4372
      %4407 = vst [vmem:[#allocation4 + $0x9c] sm:$0xf] %v4373
      %4408 = vst [vmem:[#allocation4 + $0x100] sm:$0xf] %v4374
      %4409 = vst [vmem:[#allocation4 + $0x164] sm:$0xf] %v4375
      %4410 = vst [vmem:[#allocation4 + $0x1c8] sm:$0xf] %v4376
      %4411 = vst [vmem:[#allocation4 + $0x22c] sm:$0xf] %v4377
      %4412 = vst [vmem:[#allocation4 + $0x290] sm:$0xf] %v4378
      %4413 = vst [vmem:[#allocation4 + $0x2f4] sm:$0xf] %v4379
      %4414 = vst [vmem:[#allocation4 + $0x358] sm:$0xf] %v4380
      %4415 = vst [vmem:[#allocation4 + $0x3bc] sm:$0xf] %v4381
      %4416 = vst [vmem:[#allocation4 + $0x420] sm:$0xf] %v4382
      %4417 = vst [vmem:[#allocation4 + $0x484] sm:$0xf] %v4383
      %4418 = vst [vmem:[#allocation4 + $0x4e8] sm:$0xf] %v4384
      %4419 = vst [vmem:[#allocation4 + $0x54c] sm:$0xf] %v4385
      %4420 = vst [vmem:[#allocation4 + $0x5b0] sm:$0xf] %v4386
      %4421 = vst [vmem:[#allocation4 + $0x614] sm:$0xf] %v4387
      %4422 = vst [vmem:[#allocation4 + $0x678] sm:$0xf] %v4388
      %v4423 = vld [vmem:[#allocation3 + $0x2a] sm:$0xff]
      %v4424 = vld [vmem:[#allocation3 + $0x32] sm:$0xff]
      %v4425 = vld [vmem:[#allocation3 + $0x3a] sm:$0xff]
      %v4426 = vld [vmem:[#allocation3 + $0x42] sm:$0xff]
      %v4427 = vld [vmem:[#allocation3 + $0x4a] sm:$0xff]
      %v4428 = vld [vmem:[#allocation3 + $0x52] sm:$0xff]
      %v4429 = vld [vmem:[#allocation3 + $0x5a] sm:$0xff]
      %v4430 = vld [vmem:[#allocation3 + $0x62] sm:$0xff]
      %v4431 = vld [vmem:[#allocation3 + $0x6a] sm:$0xff]
      %v4432 = vld [vmem:[#allocation3 + $0x72] sm:$0xff]
      %v4433 = vld [vmem:[#allocation3 + $0x7a] sm:$0xff]
      %v4434 = vld [vmem:[#allocation3 + $0x82] sm:$0xff]
      %v4435 = vld [vmem:[#allocation3 + $0x8a] sm:$0xff]
      %v4436 = vld [vmem:[#allocation3 + $0x92] sm:$0xff]
      %v4437 = vld [vmem:[#allocation3 + $0x9a] sm:$0xff]
      %v4438 = vld [vmem:[#allocation3 + $0xa2] sm:$0xff]
      %v4439 = vld [vmem:[#allocation3 + $0xaa] sm:$0xff]
      %v4440 = vpack.c.bf16 %v4424, %v4423
      %v4441 = vpack.c.bf16 %v4426, %v4425
      %v4442 = vpack.c.bf16 %v4428, %v4427
      %v4443 = vpack.c.bf16 %v4430, %v4429
      %v4444 = vpack.c.bf16 %v4432, %v4431
      %v4445 = vpack.c.bf16 %v4434, %v4433
      %v4446 = vpack.c.bf16 %v4436, %v4435
      %v4447 = vpack.c.bf16 %v4438, %v4437
      %v4448 = vpack.c.bf16 %v4439, %v4439
      %v4458 = vunpack.c.l.b16 %v4440
      %v4459 = vunpack.c.h.b16 %v4440
      %v4460 = vunpack.c.l.b16 %v4441
      %v4461 = vunpack.c.h.b16 %v4441
      %v4462 = vunpack.c.l.b16 %v4442
      %v4463 = vunpack.c.h.b16 %v4442
      %v4464 = vunpack.c.l.b16 %v4443
      %v4465 = vunpack.c.h.b16 %v4443
      %v4466 = vunpack.c.l.b16 %v4444
      %v4467 = vunpack.c.h.b16 %v4444
      %v4468 = vunpack.c.l.b16 %v4445
      %v4469 = vunpack.c.h.b16 %v4445
      %v4470 = vunpack.c.l.b16 %v4446
      %v4471 = vunpack.c.h.b16 %v4446
      %v4472 = vunpack.c.l.b16 %v4447
      %v4473 = vunpack.c.h.b16 %v4447
      %v4474 = vunpack.c.l.b16 %v4448
      %v4475 = vpack.c.b16 %v4458, %v4458
      %v4476 = vpack.c.b16 %v4459, %v4459
      %v4477 = vpack.c.b16 %v4460, %v4460
      %v4478 = vpack.c.b16 %v4461, %v4461
      %v4479 = vpack.c.b16 %v4462, %v4462
      %v4480 = vpack.c.b16 %v4463, %v4463
      %v4481 = vpack.c.b16 %v4464, %v4464
      %v4482 = vpack.c.b16 %v4465, %v4465
      %v4483 = vpack.c.b16 %v4466, %v4466
      %v4484 = vpack.c.b16 %v4467, %v4467
      %v4485 = vpack.c.b16 %v4468, %v4468
      %v4486 = vpack.c.b16 %v4469, %v4469
      %v4487 = vpack.c.b16 %v4470, %v4470
      %v4488 = vpack.c.b16 %v4471, %v4471
      %v4489 = vpack.c.b16 %v4472, %v4472
      %v4490 = vpack.c.b16 %v4473, %v4473
      %v4491 = vpack.c.b16 %v4474, %v4474
      %4509 = vst [vmem:[#allocation4 + $0x3c] sm:$0xf] %v4475
      %4510 = vst [vmem:[#allocation4 + $0xa0] sm:$0xf] %v4476
      %4511 = vst [vmem:[#allocation4 + $0x104] sm:$0xf] %v4477
      %4512 = vst [vmem:[#allocation4 + $0x168] sm:$0xf] %v4478
      %4513 = vst [vmem:[#allocation4 + $0x1cc] sm:$0xf] %v4479
      %4514 = vst [vmem:[#allocation4 + $0x230] sm:$0xf] %v4480
      %4515 = vst [vmem:[#allocation4 + $0x294] sm:$0xf] %v4481
      %4516 = vst [vmem:[#allocation4 + $0x2f8] sm:$0xf] %v4482
      %4517 = vst [vmem:[#allocation4 + $0x35c] sm:$0xf] %v4483
      %4518 = vst [vmem:[#allocation4 + $0x3c0] sm:$0xf] %v4484
      %4519 = vst [vmem:[#allocation4 + $0x424] sm:$0xf] %v4485
      %4520 = vst [vmem:[#allocation4 + $0x488] sm:$0xf] %v4486
      %4521 = vst [vmem:[#allocation4 + $0x4ec] sm:$0xf] %v4487
      %4522 = vst [vmem:[#allocation4 + $0x550] sm:$0xf] %v4488
      %4523 = vst [vmem:[#allocation4 + $0x5b4] sm:$0xf] %v4489
      %4524 = vst [vmem:[#allocation4 + $0x618] sm:$0xf] %v4490
      %4525 = vst [vmem:[#allocation4 + $0x67c] sm:$0xf] %v4491
      %v4526 = vld [vmem:[#allocation3 + $0x2b] sm:$0xff]
      %v4527 = vld [vmem:[#allocation3 + $0x33] sm:$0xff]
      %v4528 = vld [vmem:[#allocation3 + $0x3b] sm:$0xff]
      %v4529 = vld [vmem:[#allocation3 + $0x43] sm:$0xff]
      %v4530 = vld [vmem:[#allocation3 + $0x4b] sm:$0xff]
      %v4531 = vld [vmem:[#allocation3 + $0x53] sm:$0xff]
      %v4532 = vld [vmem:[#allocation3 + $0x5b] sm:$0xff]
      %v4533 = vld [vmem:[#allocation3 + $0x63] sm:$0xff]
      %v4534 = vld [vmem:[#allocation3 + $0x6b] sm:$0xff]
      %v4535 = vld [vmem:[#allocation3 + $0x73] sm:$0xff]
      %v4536 = vld [vmem:[#allocation3 + $0x7b] sm:$0xff]
      %v4537 = vld [vmem:[#allocation3 + $0x83] sm:$0xff]
      %v4538 = vld [vmem:[#allocation3 + $0x8b] sm:$0xff]
      %v4539 = vld [vmem:[#allocation3 + $0x93] sm:$0xff]
      %v4540 = vld [vmem:[#allocation3 + $0x9b] sm:$0xff]
      %v4541 = vld [vmem:[#allocation3 + $0xa3] sm:$0xff]
      %v4542 = vld [vmem:[#allocation3 + $0xab] sm:$0xff]
      %v4543 = vpack.c.bf16 %v4527, %v4526
      %v4544 = vpack.c.bf16 %v4529, %v4528
      %v4545 = vpack.c.bf16 %v4531, %v4530
      %v4546 = vpack.c.bf16 %v4533, %v4532
      %v4547 = vpack.c.bf16 %v4535, %v4534
      %v4548 = vpack.c.bf16 %v4537, %v4536
      %v4549 = vpack.c.bf16 %v4539, %v4538
      %v4550 = vpack.c.bf16 %v4541, %v4540
      %v4551 = vpack.c.bf16 %v4542, %v4542
      %v4561 = vunpack.c.l.b16 %v4543
      %v4562 = vunpack.c.h.b16 %v4543
      %v4563 = vunpack.c.l.b16 %v4544
      %v4564 = vunpack.c.h.b16 %v4544
      %v4565 = vunpack.c.l.b16 %v4545
      %v4566 = vunpack.c.h.b16 %v4545
      %v4567 = vunpack.c.l.b16 %v4546
      %v4568 = vunpack.c.h.b16 %v4546
      %v4569 = vunpack.c.l.b16 %v4547
      %v4570 = vunpack.c.h.b16 %v4547
      %v4571 = vunpack.c.l.b16 %v4548
      %v4572 = vunpack.c.h.b16 %v4548
      %v4573 = vunpack.c.l.b16 %v4549
      %v4574 = vunpack.c.h.b16 %v4549
      %v4575 = vunpack.c.l.b16 %v4550
      %v4576 = vunpack.c.h.b16 %v4550
      %v4577 = vunpack.c.l.b16 %v4551
      %v4578 = vpack.c.b16 %v4561, %v4561
      %v4579 = vpack.c.b16 %v4562, %v4562
      %v4580 = vpack.c.b16 %v4563, %v4563
      %v4581 = vpack.c.b16 %v4564, %v4564
      %v4582 = vpack.c.b16 %v4565, %v4565
      %v4583 = vpack.c.b16 %v4566, %v4566
      %v4584 = vpack.c.b16 %v4567, %v4567
      %v4585 = vpack.c.b16 %v4568, %v4568
      %v4586 = vpack.c.b16 %v4569, %v4569
      %v4587 = vpack.c.b16 %v4570, %v4570
      %v4588 = vpack.c.b16 %v4571, %v4571
      %v4589 = vpack.c.b16 %v4572, %v4572
      %v4590 = vpack.c.b16 %v4573, %v4573
      %v4591 = vpack.c.b16 %v4574, %v4574
      %v4592 = vpack.c.b16 %v4575, %v4575
      %v4593 = vpack.c.b16 %v4576, %v4576
      %v4594 = vpack.c.b16 %v4577, %v4577
      %4612 = vst [vmem:[#allocation4 + $0x40] sm:$0xf] %v4578
      %4613 = vst [vmem:[#allocation4 + $0xa4] sm:$0xf] %v4579
      %4614 = vst [vmem:[#allocation4 + $0x108] sm:$0xf] %v4580
      %4615 = vst [vmem:[#allocation4 + $0x16c] sm:$0xf] %v4581
      %4616 = vst [vmem:[#allocation4 + $0x1d0] sm:$0xf] %v4582
      %4617 = vst [vmem:[#allocation4 + $0x234] sm:$0xf] %v4583
      %4618 = vst [vmem:[#allocation4 + $0x298] sm:$0xf] %v4584
      %4619 = vst [vmem:[#allocation4 + $0x2fc] sm:$0xf] %v4585
      %4620 = vst [vmem:[#allocation4 + $0x360] sm:$0xf] %v4586
      %4621 = vst [vmem:[#allocation4 + $0x3c4] sm:$0xf] %v4587
      %4622 = vst [vmem:[#allocation4 + $0x428] sm:$0xf] %v4588
      %4623 = vst [vmem:[#allocation4 + $0x48c] sm:$0xf] %v4589
      %4624 = vst [vmem:[#allocation4 + $0x4f0] sm:$0xf] %v4590
      %4625 = vst [vmem:[#allocation4 + $0x554] sm:$0xf] %v4591
      %4626 = vst [vmem:[#allocation4 + $0x5b8] sm:$0xf] %v4592
      %4627 = vst [vmem:[#allocation4 + $0x61c] sm:$0xf] %v4593
      %4628 = vst [vmem:[#allocation4 + $0x680] sm:$0xf] %v4594
      %v4629 = vld [vmem:[#allocation3 + $0x2c] sm:$0xff]
      %v4630 = vld [vmem:[#allocation3 + $0x34] sm:$0xff]
      %v4631 = vld [vmem:[#allocation3 + $0x3c] sm:$0xff]
      %v4632 = vld [vmem:[#allocation3 + $0x44] sm:$0xff]
      %v4633 = vld [vmem:[#allocation3 + $0x4c] sm:$0xff]
      %v4634 = vld [vmem:[#allocation3 + $0x54] sm:$0xff]
      %v4635 = vld [vmem:[#allocation3 + $0x5c] sm:$0xff]
      %v4636 = vld [vmem:[#allocation3 + $0x64] sm:$0xff]
      %v4637 = vld [vmem:[#allocation3 + $0x6c] sm:$0xff]
      %v4638 = vld [vmem:[#allocation3 + $0x74] sm:$0xff]
      %v4639 = vld [vmem:[#allocation3 + $0x7c] sm:$0xff]
      %v4640 = vld [vmem:[#allocation3 + $0x84] sm:$0xff]
      %v4641 = vld [vmem:[#allocation3 + $0x8c] sm:$0xff]
      %v4642 = vld [vmem:[#allocation3 + $0x94] sm:$0xff]
      %v4643 = vld [vmem:[#allocation3 + $0x9c] sm:$0xff]
      %v4644 = vld [vmem:[#allocation3 + $0xa4] sm:$0xff]
      %v4645 = vld [vmem:[#allocation3 + $0xac] sm:$0xff]
      %v4646 = vpack.c.bf16 %v4630, %v4629
      %v4647 = vpack.c.bf16 %v4632, %v4631
      %v4648 = vpack.c.bf16 %v4634, %v4633
      %v4649 = vpack.c.bf16 %v4636, %v4635
      %v4650 = vpack.c.bf16 %v4638, %v4637
      %v4651 = vpack.c.bf16 %v4640, %v4639
      %v4652 = vpack.c.bf16 %v4642, %v4641
      %v4653 = vpack.c.bf16 %v4644, %v4643
      %v4654 = vpack.c.bf16 %v4645, %v4645
      %v4664 = vunpack.c.l.b16 %v4646
      %v4665 = vunpack.c.h.b16 %v4646
      %v4666 = vunpack.c.l.b16 %v4647
      %v4667 = vunpack.c.h.b16 %v4647
      %v4668 = vunpack.c.l.b16 %v4648
      %v4669 = vunpack.c.h.b16 %v4648
      %v4670 = vunpack.c.l.b16 %v4649
      %v4671 = vunpack.c.h.b16 %v4649
      %v4672 = vunpack.c.l.b16 %v4650
      %v4673 = vunpack.c.h.b16 %v4650
      %v4674 = vunpack.c.l.b16 %v4651
      %v4675 = vunpack.c.h.b16 %v4651
      %v4676 = vunpack.c.l.b16 %v4652
      %v4677 = vunpack.c.h.b16 %v4652
      %v4678 = vunpack.c.l.b16 %v4653
      %v4679 = vunpack.c.h.b16 %v4653
      %v4680 = vunpack.c.l.b16 %v4654
      %v4681 = vpack.c.b16 %v4664, %v4664
      %v4682 = vpack.c.b16 %v4665, %v4665
      %v4683 = vpack.c.b16 %v4666, %v4666
      %v4684 = vpack.c.b16 %v4667, %v4667
      %v4685 = vpack.c.b16 %v4668, %v4668
      %v4686 = vpack.c.b16 %v4669, %v4669
      %v4687 = vpack.c.b16 %v4670, %v4670
      %v4688 = vpack.c.b16 %v4671, %v4671
      %v4689 = vpack.c.b16 %v4672, %v4672
      %v4690 = vpack.c.b16 %v4673, %v4673
      %v4691 = vpack.c.b16 %v4674, %v4674
      %v4692 = vpack.c.b16 %v4675, %v4675
      %v4693 = vpack.c.b16 %v4676, %v4676
      %v4694 = vpack.c.b16 %v4677, %v4677
      %v4695 = vpack.c.b16 %v4678, %v4678
      %v4696 = vpack.c.b16 %v4679, %v4679
      %v4697 = vpack.c.b16 %v4680, %v4680
      %4715 = vst [vmem:[#allocation4 + $0x44] sm:$0xf] %v4681
      %4716 = vst [vmem:[#allocation4 + $0xa8] sm:$0xf] %v4682
      %4717 = vst [vmem:[#allocation4 + $0x10c] sm:$0xf] %v4683
      %4718 = vst [vmem:[#allocation4 + $0x170] sm:$0xf] %v4684
      %4719 = vst [vmem:[#allocation4 + $0x1d4] sm:$0xf] %v4685
      %4720 = vst [vmem:[#allocation4 + $0x238] sm:$0xf] %v4686
      %4721 = vst [vmem:[#allocation4 + $0x29c] sm:$0xf] %v4687
      %4722 = vst [vmem:[#allocation4 + $0x300] sm:$0xf] %v4688
      %4723 = vst [vmem:[#allocation4 + $0x364] sm:$0xf] %v4689
      %4724 = vst [vmem:[#allocation4 + $0x3c8] sm:$0xf] %v4690
      %4725 = vst [vmem:[#allocation4 + $0x42c] sm:$0xf] %v4691
      %4726 = vst [vmem:[#allocation4 + $0x490] sm:$0xf] %v4692
      %4727 = vst [vmem:[#allocation4 + $0x4f4] sm:$0xf] %v4693
      %4728 = vst [vmem:[#allocation4 + $0x558] sm:$0xf] %v4694
      %4729 = vst [vmem:[#allocation4 + $0x5bc] sm:$0xf] %v4695
      %4730 = vst [vmem:[#allocation4 + $0x620] sm:$0xf] %v4696
      %4731 = vst [vmem:[#allocation4 + $0x684] sm:$0xf] %v4697
      %v4732 = vld [vmem:[#allocation3 + $0x2d] sm:$0xff]
      %v4733 = vld [vmem:[#allocation3 + $0x35] sm:$0xff]
      %v4734 = vld [vmem:[#allocation3 + $0x3d] sm:$0xff]
      %v4735 = vld [vmem:[#allocation3 + $0x45] sm:$0xff]
      %v4736 = vld [vmem:[#allocation3 + $0x4d] sm:$0xff]
      %v4737 = vld [vmem:[#allocation3 + $0x55] sm:$0xff]
      %v4738 = vld [vmem:[#allocation3 + $0x5d] sm:$0xff]
      %v4739 = vld [vmem:[#allocation3 + $0x65] sm:$0xff]
      %v4740 = vld [vmem:[#allocation3 + $0x6d] sm:$0xff]
      %v4741 = vld [vmem:[#allocation3 + $0x75] sm:$0xff]
      %v4742 = vld [vmem:[#allocation3 + $0x7d] sm:$0xff]
      %v4743 = vld [vmem:[#allocation3 + $0x85] sm:$0xff]
      %v4744 = vld [vmem:[#allocation3 + $0x8d] sm:$0xff]
      %v4745 = vld [vmem:[#allocation3 + $0x95] sm:$0xff]
      %v4746 = vld [vmem:[#allocation3 + $0x9d] sm:$0xff]
      %v4747 = vld [vmem:[#allocation3 + $0xa5] sm:$0xff]
      %v4748 = vld [vmem:[#allocation3 + $0xad] sm:$0xff]
      %v4749 = vpack.c.bf16 %v4733, %v4732
      %v4750 = vpack.c.bf16 %v4735, %v4734
      %v4751 = vpack.c.bf16 %v4737, %v4736
      %v4752 = vpack.c.bf16 %v4739, %v4738
      %v4753 = vpack.c.bf16 %v4741, %v4740
      %v4754 = vpack.c.bf16 %v4743, %v4742
      %v4755 = vpack.c.bf16 %v4745, %v4744
      %v4756 = vpack.c.bf16 %v4747, %v4746
      %v4757 = vpack.c.bf16 %v4748, %v4748
      %v4767 = vunpack.c.l.b16 %v4749
      %v4768 = vunpack.c.h.b16 %v4749
      %v4769 = vunpack.c.l.b16 %v4750
      %v4770 = vunpack.c.h.b16 %v4750
      %v4771 = vunpack.c.l.b16 %v4751
      %v4772 = vunpack.c.h.b16 %v4751
      %v4773 = vunpack.c.l.b16 %v4752
      %v4774 = vunpack.c.h.b16 %v4752
      %v4775 = vunpack.c.l.b16 %v4753
      %v4776 = vunpack.c.h.b16 %v4753
      %v4777 = vunpack.c.l.b16 %v4754
      %v4778 = vunpack.c.h.b16 %v4754
      %v4779 = vunpack.c.l.b16 %v4755
      %v4780 = vunpack.c.h.b16 %v4755
      %v4781 = vunpack.c.l.b16 %v4756
      %v4782 = vunpack.c.h.b16 %v4756
      %v4783 = vunpack.c.l.b16 %v4757
      %v4784 = vpack.c.b16 %v4767, %v4767
      %v4785 = vpack.c.b16 %v4768, %v4768
      %v4786 = vpack.c.b16 %v4769, %v4769
      %v4787 = vpack.c.b16 %v4770, %v4770
      %v4788 = vpack.c.b16 %v4771, %v4771
      %v4789 = vpack.c.b16 %v4772, %v4772
      %v4790 = vpack.c.b16 %v4773, %v4773
      %v4791 = vpack.c.b16 %v4774, %v4774
      %v4792 = vpack.c.b16 %v4775, %v4775
      %v4793 = vpack.c.b16 %v4776, %v4776
      %v4794 = vpack.c.b16 %v4777, %v4777
      %v4795 = vpack.c.b16 %v4778, %v4778
      %v4796 = vpack.c.b16 %v4779, %v4779
      %v4797 = vpack.c.b16 %v4780, %v4780
      %v4798 = vpack.c.b16 %v4781, %v4781
      %v4799 = vpack.c.b16 %v4782, %v4782
      %v4800 = vpack.c.b16 %v4783, %v4783
      %4818 = vst [vmem:[#allocation4 + $0x48] sm:$0xf] %v4784
      %4819 = vst [vmem:[#allocation4 + $0xac] sm:$0xf] %v4785
      %4820 = vst [vmem:[#allocation4 + $0x110] sm:$0xf] %v4786
      %4821 = vst [vmem:[#allocation4 + $0x174] sm:$0xf] %v4787
      %4822 = vst [vmem:[#allocation4 + $0x1d8] sm:$0xf] %v4788
      %4823 = vst [vmem:[#allocation4 + $0x23c] sm:$0xf] %v4789
      %4824 = vst [vmem:[#allocation4 + $0x2a0] sm:$0xf] %v4790
      %4825 = vst [vmem:[#allocation4 + $0x304] sm:$0xf] %v4791
      %4826 = vst [vmem:[#allocation4 + $0x368] sm:$0xf] %v4792
      %4827 = vst [vmem:[#allocation4 + $0x3cc] sm:$0xf] %v4793
      %4828 = vst [vmem:[#allocation4 + $0x430] sm:$0xf] %v4794
      %4829 = vst [vmem:[#allocation4 + $0x494] sm:$0xf] %v4795
      %4830 = vst [vmem:[#allocation4 + $0x4f8] sm:$0xf] %v4796
      %4831 = vst [vmem:[#allocation4 + $0x55c] sm:$0xf] %v4797
      %4832 = vst [vmem:[#allocation4 + $0x5c0] sm:$0xf] %v4798
      %4833 = vst [vmem:[#allocation4 + $0x624] sm:$0xf] %v4799
      %4834 = vst [vmem:[#allocation4 + $0x688] sm:$0xf] %v4800
      %v4835 = vld [vmem:[#allocation3 + $0x2e] sm:$0xff]
      %v4836 = vld [vmem:[#allocation3 + $0x36] sm:$0xff]
      %v4837 = vld [vmem:[#allocation3 + $0x3e] sm:$0xff]
      %v4838 = vld [vmem:[#allocation3 + $0x46] sm:$0xff]
      %v4839 = vld [vmem:[#allocation3 + $0x4e] sm:$0xff]
      %v4840 = vld [vmem:[#allocation3 + $0x56] sm:$0xff]
      %v4841 = vld [vmem:[#allocation3 + $0x5e] sm:$0xff]
      %v4842 = vld [vmem:[#allocation3 + $0x66] sm:$0xff]
      %v4843 = vld [vmem:[#allocation3 + $0x6e] sm:$0xff]
      %v4844 = vld [vmem:[#allocation3 + $0x76] sm:$0xff]
      %v4845 = vld [vmem:[#allocation3 + $0x7e] sm:$0xff]
      %v4846 = vld [vmem:[#allocation3 + $0x86] sm:$0xff]
      %v4847 = vld [vmem:[#allocation3 + $0x8e] sm:$0xff]
      %v4848 = vld [vmem:[#allocation3 + $0x96] sm:$0xff]
      %v4849 = vld [vmem:[#allocation3 + $0x9e] sm:$0xff]
      %v4850 = vld [vmem:[#allocation3 + $0xa6] sm:$0xff]
      %v4851 = vld [vmem:[#allocation3 + $0xae] sm:$0xff]
      %v4852 = vpack.c.bf16 %v4836, %v4835
      %v4853 = vpack.c.bf16 %v4838, %v4837
      %v4854 = vpack.c.bf16 %v4840, %v4839
      %v4855 = vpack.c.bf16 %v4842, %v4841
      %v4856 = vpack.c.bf16 %v4844, %v4843
      %v4857 = vpack.c.bf16 %v4846, %v4845
      %v4858 = vpack.c.bf16 %v4848, %v4847
      %v4859 = vpack.c.bf16 %v4850, %v4849
      %v4860 = vpack.c.bf16 %v4851, %v4851
      %v4870 = vunpack.c.l.b16 %v4852
      %v4871 = vunpack.c.h.b16 %v4852
      %v4872 = vunpack.c.l.b16 %v4853
      %v4873 = vunpack.c.h.b16 %v4853
      %v4874 = vunpack.c.l.b16 %v4854
      %v4875 = vunpack.c.h.b16 %v4854
      %v4876 = vunpack.c.l.b16 %v4855
      %v4877 = vunpack.c.h.b16 %v4855
      %v4878 = vunpack.c.l.b16 %v4856
      %v4879 = vunpack.c.h.b16 %v4856
      %v4880 = vunpack.c.l.b16 %v4857
      %v4881 = vunpack.c.h.b16 %v4857
      %v4882 = vunpack.c.l.b16 %v4858
      %v4883 = vunpack.c.h.b16 %v4858
      %v4884 = vunpack.c.l.b16 %v4859
      %v4885 = vunpack.c.h.b16 %v4859
      %v4886 = vunpack.c.l.b16 %v4860
      %v4887 = vpack.c.b16 %v4870, %v4870
      %v4888 = vpack.c.b16 %v4871, %v4871
      %v4889 = vpack.c.b16 %v4872, %v4872
      %v4890 = vpack.c.b16 %v4873, %v4873
      %v4891 = vpack.c.b16 %v4874, %v4874
      %v4892 = vpack.c.b16 %v4875, %v4875
      %v4893 = vpack.c.b16 %v4876, %v4876
      %v4894 = vpack.c.b16 %v4877, %v4877
      %v4895 = vpack.c.b16 %v4878, %v4878
      %v4896 = vpack.c.b16 %v4879, %v4879
      %v4897 = vpack.c.b16 %v4880, %v4880
      %v4898 = vpack.c.b16 %v4881, %v4881
      %v4899 = vpack.c.b16 %v4882, %v4882
      %v4900 = vpack.c.b16 %v4883, %v4883
      %v4901 = vpack.c.b16 %v4884, %v4884
      %v4902 = vpack.c.b16 %v4885, %v4885
      %v4903 = vpack.c.b16 %v4886, %v4886
      %4921 = vst [vmem:[#allocation4 + $0x4c] sm:$0xf] %v4887
      %4922 = vst [vmem:[#allocation4 + $0xb0] sm:$0xf] %v4888
      %4923 = vst [vmem:[#allocation4 + $0x114] sm:$0xf] %v4889
      %4924 = vst [vmem:[#allocation4 + $0x178] sm:$0xf] %v4890
      %4925 = vst [vmem:[#allocation4 + $0x1dc] sm:$0xf] %v4891
      %4926 = vst [vmem:[#allocation4 + $0x240] sm:$0xf] %v4892
      %4927 = vst [vmem:[#allocation4 + $0x2a4] sm:$0xf] %v4893
      %4928 = vst [vmem:[#allocation4 + $0x308] sm:$0xf] %v4894
      %4929 = vst [vmem:[#allocation4 + $0x36c] sm:$0xf] %v4895
      %4930 = vst [vmem:[#allocation4 + $0x3d0] sm:$0xf] %v4896
      %4931 = vst [vmem:[#allocation4 + $0x434] sm:$0xf] %v4897
      %4932 = vst [vmem:[#allocation4 + $0x498] sm:$0xf] %v4898
      %4933 = vst [vmem:[#allocation4 + $0x4fc] sm:$0xf] %v4899
      %4934 = vst [vmem:[#allocation4 + $0x560] sm:$0xf] %v4900
      %4935 = vst [vmem:[#allocation4 + $0x5c4] sm:$0xf] %v4901
      %4936 = vst [vmem:[#allocation4 + $0x628] sm:$0xf] %v4902
      %4937 = vst [vmem:[#allocation4 + $0x68c] sm:$0xf] %v4903
      %v4938 = vld [vmem:[#allocation3 + $0x38] sm:$0xff]
      %v4939 = vld [vmem:[#allocation3 + $0x40] sm:$0xff]
      %v4940 = vld [vmem:[#allocation3 + $0x48] sm:$0xff]
      %v4941 = vld [vmem:[#allocation3 + $0x50] sm:$0xff]
      %v4942 = vld [vmem:[#allocation3 + $0x58] sm:$0xff]
      %v4943 = vld [vmem:[#allocation3 + $0x60] sm:$0xff]
      %v4944 = vld [vmem:[#allocation3 + $0x68] sm:$0xff]
      %v4945 = vld [vmem:[#allocation3 + $0x70] sm:$0xff]
      %v4946 = vld [vmem:[#allocation3 + $0x78] sm:$0xff]
      %v4947 = vld [vmem:[#allocation3 + $0x80] sm:$0xff]
      %v4948 = vld [vmem:[#allocation3 + $0x88] sm:$0xff]
      %v4949 = vld [vmem:[#allocation3 + $0x90] sm:$0xff]
      %v4950 = vld [vmem:[#allocation3 + $0x98] sm:$0xff]
      %v4951 = vld [vmem:[#allocation3 + $0xa0] sm:$0xff]
      %v4952 = vld [vmem:[#allocation3 + $0xa8] sm:$0xff]
      %v4953 = vld [vmem:[#allocation3 + $0xb0] sm:$0xff]
      %v4954 = vld [vmem:[#allocation3 + $0xb8] sm:$0xff]
      %v4955 = vpack.c.bf16 %v4939, %v4938
      %v4956 = vpack.c.bf16 %v4941, %v4940
      %v4957 = vpack.c.bf16 %v4943, %v4942
      %v4958 = vpack.c.bf16 %v4945, %v4944
      %v4959 = vpack.c.bf16 %v4947, %v4946
      %v4960 = vpack.c.bf16 %v4949, %v4948
      %v4961 = vpack.c.bf16 %v4951, %v4950
      %v4962 = vpack.c.bf16 %v4953, %v4952
      %v4963 = vpack.c.bf16 %v4954, %v4954
      %v4973 = vunpack.c.l.b16 %v4955
      %v4974 = vunpack.c.h.b16 %v4955
      %v4975 = vunpack.c.l.b16 %v4956
      %v4976 = vunpack.c.h.b16 %v4956
      %v4977 = vunpack.c.l.b16 %v4957
      %v4978 = vunpack.c.h.b16 %v4957
      %v4979 = vunpack.c.l.b16 %v4958
      %v4980 = vunpack.c.h.b16 %v4958
      %v4981 = vunpack.c.l.b16 %v4959
      %v4982 = vunpack.c.h.b16 %v4959
      %v4983 = vunpack.c.l.b16 %v4960
      %v4984 = vunpack.c.h.b16 %v4960
      %v4985 = vunpack.c.l.b16 %v4961
      %v4986 = vunpack.c.h.b16 %v4961
      %v4987 = vunpack.c.l.b16 %v4962
      %v4988 = vunpack.c.h.b16 %v4962
      %v4989 = vunpack.c.l.b16 %v4963
      %v4990 = vpack.c.b16 %v4973, %v4973
      %v4991 = vpack.c.b16 %v4974, %v4974
      %v4992 = vpack.c.b16 %v4975, %v4975
      %v4993 = vpack.c.b16 %v4976, %v4976
      %v4994 = vpack.c.b16 %v4977, %v4977
      %v4995 = vpack.c.b16 %v4978, %v4978
      %v4996 = vpack.c.b16 %v4979, %v4979
      %v4997 = vpack.c.b16 %v4980, %v4980
      %v4998 = vpack.c.b16 %v4981, %v4981
      %v4999 = vpack.c.b16 %v4982, %v4982
      %v5000 = vpack.c.b16 %v4983, %v4983
      %v5001 = vpack.c.b16 %v4984, %v4984
      %v5002 = vpack.c.b16 %v4985, %v4985
      %v5003 = vpack.c.b16 %v4986, %v4986
      %v5004 = vpack.c.b16 %v4987, %v4987
      %v5005 = vpack.c.b16 %v4988, %v4988
      %v5006 = vpack.c.b16 %v4989, %v4989
      %5024 = vst [vmem:[#allocation4 + $0x50] sm:$0xf] %v4990
      %5025 = vst [vmem:[#allocation4 + $0xb4] sm:$0xf] %v4991
      %5026 = vst [vmem:[#allocation4 + $0x118] sm:$0xf] %v4992
      %5027 = vst [vmem:[#allocation4 + $0x17c] sm:$0xf] %v4993
      %5028 = vst [vmem:[#allocation4 + $0x1e0] sm:$0xf] %v4994
      %5029 = vst [vmem:[#allocation4 + $0x244] sm:$0xf] %v4995
      %5030 = vst [vmem:[#allocation4 + $0x2a8] sm:$0xf] %v4996
      %5031 = vst [vmem:[#allocation4 + $0x30c] sm:$0xf] %v4997
      %5032 = vst [vmem:[#allocation4 + $0x370] sm:$0xf] %v4998
      %5033 = vst [vmem:[#allocation4 + $0x3d4] sm:$0xf] %v4999
      %5034 = vst [vmem:[#allocation4 + $0x438] sm:$0xf] %v5000
      %5035 = vst [vmem:[#allocation4 + $0x49c] sm:$0xf] %v5001
      %5036 = vst [vmem:[#allocation4 + $0x500] sm:$0xf] %v5002
      %5037 = vst [vmem:[#allocation4 + $0x564] sm:$0xf] %v5003
      %5038 = vst [vmem:[#allocation4 + $0x5c8] sm:$0xf] %v5004
      %5039 = vst [vmem:[#allocation4 + $0x62c] sm:$0xf] %v5005
      %5040 = vst [vmem:[#allocation4 + $0x690] sm:$0xf] %v5006
      %v5041 = vld [vmem:[#allocation3 + $0x39] sm:$0xff]
      %v5042 = vld [vmem:[#allocation3 + $0x41] sm:$0xff]
      %v5043 = vld [vmem:[#allocation3 + $0x49] sm:$0xff]
      %v5044 = vld [vmem:[#allocation3 + $0x51] sm:$0xff]
      %v5045 = vld [vmem:[#allocation3 + $0x59] sm:$0xff]
      %v5046 = vld [vmem:[#allocation3 + $0x61] sm:$0xff]
      %v5047 = vld [vmem:[#allocation3 + $0x69] sm:$0xff]
      %v5048 = vld [vmem:[#allocation3 + $0x71] sm:$0xff]
      %v5049 = vld [vmem:[#allocation3 + $0x79] sm:$0xff]
      %v5050 = vld [vmem:[#allocation3 + $0x81] sm:$0xff]
      %v5051 = vld [vmem:[#allocation3 + $0x89] sm:$0xff]
      %v5052 = vld [vmem:[#allocation3 + $0x91] sm:$0xff]
      %v5053 = vld [vmem:[#allocation3 + $0x99] sm:$0xff]
      %v5054 = vld [vmem:[#allocation3 + $0xa1] sm:$0xff]
      %v5055 = vld [vmem:[#allocation3 + $0xa9] sm:$0xff]
      %v5056 = vld [vmem:[#allocation3 + $0xb1] sm:$0xff]
      %v5057 = vld [vmem:[#allocation3 + $0xb9] sm:$0xff]
      %v5058 = vpack.c.bf16 %v5042, %v5041
      %v5059 = vpack.c.bf16 %v5044, %v5043
      %v5060 = vpack.c.bf16 %v5046, %v5045
      %v5061 = vpack.c.bf16 %v5048, %v5047
      %v5062 = vpack.c.bf16 %v5050, %v5049
      %v5063 = vpack.c.bf16 %v5052, %v5051
      %v5064 = vpack.c.bf16 %v5054, %v5053
      %v5065 = vpack.c.bf16 %v5056, %v5055
      %v5066 = vpack.c.bf16 %v5057, %v5057
      %v5076 = vunpack.c.l.b16 %v5058
      %v5077 = vunpack.c.h.b16 %v5058
      %v5078 = vunpack.c.l.b16 %v5059
      %v5079 = vunpack.c.h.b16 %v5059
      %v5080 = vunpack.c.l.b16 %v5060
      %v5081 = vunpack.c.h.b16 %v5060
      %v5082 = vunpack.c.l.b16 %v5061
      %v5083 = vunpack.c.h.b16 %v5061
      %v5084 = vunpack.c.l.b16 %v5062
      %v5085 = vunpack.c.h.b16 %v5062
      %v5086 = vunpack.c.l.b16 %v5063
      %v5087 = vunpack.c.h.b16 %v5063
      %v5088 = vunpack.c.l.b16 %v5064
      %v5089 = vunpack.c.h.b16 %v5064
      %v5090 = vunpack.c.l.b16 %v5065
      %v5091 = vunpack.c.h.b16 %v5065
      %v5092 = vunpack.c.l.b16 %v5066
      %v5093 = vpack.c.b16 %v5076, %v5076
      %v5094 = vpack.c.b16 %v5077, %v5077
      %v5095 = vpack.c.b16 %v5078, %v5078
      %v5096 = vpack.c.b16 %v5079, %v5079
      %v5097 = vpack.c.b16 %v5080, %v5080
      %v5098 = vpack.c.b16 %v5081, %v5081
      %v5099 = vpack.c.b16 %v5082, %v5082
      %v5100 = vpack.c.b16 %v5083, %v5083
      %v5101 = vpack.c.b16 %v5084, %v5084
      %v5102 = vpack.c.b16 %v5085, %v5085
      %v5103 = vpack.c.b16 %v5086, %v5086
      %v5104 = vpack.c.b16 %v5087, %v5087
      %v5105 = vpack.c.b16 %v5088, %v5088
      %v5106 = vpack.c.b16 %v5089, %v5089
      %v5107 = vpack.c.b16 %v5090, %v5090
      %v5108 = vpack.c.b16 %v5091, %v5091
      %v5109 = vpack.c.b16 %v5092, %v5092
      %5127 = vst [vmem:[#allocation4 + $0x54] sm:$0xf] %v5093
      %5128 = vst [vmem:[#allocation4 + $0xb8] sm:$0xf] %v5094
      %5129 = vst [vmem:[#allocation4 + $0x11c] sm:$0xf] %v5095
      %5130 = vst [vmem:[#allocation4 + $0x180] sm:$0xf] %v5096
      %5131 = vst [vmem:[#allocation4 + $0x1e4] sm:$0xf] %v5097
      %5132 = vst [vmem:[#allocation4 + $0x248] sm:$0xf] %v5098
      %5133 = vst [vmem:[#allocation4 + $0x2ac] sm:$0xf] %v5099
      %5134 = vst [vmem:[#allocation4 + $0x310] sm:$0xf] %v5100
      %5135 = vst [vmem:[#allocation4 + $0x374] sm:$0xf] %v5101
      %5136 = vst [vmem:[#allocation4 + $0x3d8] sm:$0xf] %v5102
      %5137 = vst [vmem:[#allocation4 + $0x43c] sm:$0xf] %v5103
      %5138 = vst [vmem:[#allocation4 + $0x4a0] sm:$0xf] %v5104
      %5139 = vst [vmem:[#allocation4 + $0x504] sm:$0xf] %v5105
      %5140 = vst [vmem:[#allocation4 + $0x568] sm:$0xf] %v5106
      %5141 = vst [vmem:[#allocation4 + $0x5cc] sm:$0xf] %v5107
      %5142 = vst [vmem:[#allocation4 + $0x630] sm:$0xf] %v5108
      %5143 = vst [vmem:[#allocation4 + $0x694] sm:$0xf] %v5109
      %v5144 = vld [vmem:[#allocation3 + $0x3a] sm:$0xff]
      %v5145 = vld [vmem:[#allocation3 + $0x42] sm:$0xff]
      %v5146 = vld [vmem:[#allocation3 + $0x4a] sm:$0xff]
      %v5147 = vld [vmem:[#allocation3 + $0x52] sm:$0xff]
      %v5148 = vld [vmem:[#allocation3 + $0x5a] sm:$0xff]
      %v5149 = vld [vmem:[#allocation3 + $0x62] sm:$0xff]
      %v5150 = vld [vmem:[#allocation3 + $0x6a] sm:$0xff]
      %v5151 = vld [vmem:[#allocation3 + $0x72] sm:$0xff]
      %v5152 = vld [vmem:[#allocation3 + $0x7a] sm:$0xff]
      %v5153 = vld [vmem:[#allocation3 + $0x82] sm:$0xff]
      %v5154 = vld [vmem:[#allocation3 + $0x8a] sm:$0xff]
      %v5155 = vld [vmem:[#allocation3 + $0x92] sm:$0xff]
      %v5156 = vld [vmem:[#allocation3 + $0x9a] sm:$0xff]
      %v5157 = vld [vmem:[#allocation3 + $0xa2] sm:$0xff]
      %v5158 = vld [vmem:[#allocation3 + $0xaa] sm:$0xff]
      %v5159 = vld [vmem:[#allocation3 + $0xb2] sm:$0xff]
      %v5160 = vld [vmem:[#allocation3 + $0xba] sm:$0xff]
      %v5161 = vpack.c.bf16 %v5145, %v5144
      %v5162 = vpack.c.bf16 %v5147, %v5146
      %v5163 = vpack.c.bf16 %v5149, %v5148
      %v5164 = vpack.c.bf16 %v5151, %v5150
      %v5165 = vpack.c.bf16 %v5153, %v5152
      %v5166 = vpack.c.bf16 %v5155, %v5154
      %v5167 = vpack.c.bf16 %v5157, %v5156
      %v5168 = vpack.c.bf16 %v5159, %v5158
      %v5169 = vpack.c.bf16 %v5160, %v5160
      %v5179 = vunpack.c.l.b16 %v5161
      %v5180 = vunpack.c.h.b16 %v5161
      %v5181 = vunpack.c.l.b16 %v5162
      %v5182 = vunpack.c.h.b16 %v5162
      %v5183 = vunpack.c.l.b16 %v5163
      %v5184 = vunpack.c.h.b16 %v5163
      %v5185 = vunpack.c.l.b16 %v5164
      %v5186 = vunpack.c.h.b16 %v5164
      %v5187 = vunpack.c.l.b16 %v5165
      %v5188 = vunpack.c.h.b16 %v5165
      %v5189 = vunpack.c.l.b16 %v5166
      %v5190 = vunpack.c.h.b16 %v5166
      %v5191 = vunpack.c.l.b16 %v5167
      %v5192 = vunpack.c.h.b16 %v5167
      %v5193 = vunpack.c.l.b16 %v5168
      %v5194 = vunpack.c.h.b16 %v5168
      %v5195 = vunpack.c.l.b16 %v5169
      %v5196 = vpack.c.b16 %v5179, %v5179
      %v5197 = vpack.c.b16 %v5180, %v5180
      %v5198 = vpack.c.b16 %v5181, %v5181
      %v5199 = vpack.c.b16 %v5182, %v5182
      %v5200 = vpack.c.b16 %v5183, %v5183
      %v5201 = vpack.c.b16 %v5184, %v5184
      %v5202 = vpack.c.b16 %v5185, %v5185
      %v5203 = vpack.c.b16 %v5186, %v5186
      %v5204 = vpack.c.b16 %v5187, %v5187
      %v5205 = vpack.c.b16 %v5188, %v5188
      %v5206 = vpack.c.b16 %v5189, %v5189
      %v5207 = vpack.c.b16 %v5190, %v5190
      %v5208 = vpack.c.b16 %v5191, %v5191
      %v5209 = vpack.c.b16 %v5192, %v5192
      %v5210 = vpack.c.b16 %v5193, %v5193
      %v5211 = vpack.c.b16 %v5194, %v5194
      %v5212 = vpack.c.b16 %v5195, %v5195
      %5230 = vst [vmem:[#allocation4 + $0x58] sm:$0xf] %v5196
      %5231 = vst [vmem:[#allocation4 + $0xbc] sm:$0xf] %v5197
      %5232 = vst [vmem:[#allocation4 + $0x120] sm:$0xf] %v5198
      %5233 = vst [vmem:[#allocation4 + $0x184] sm:$0xf] %v5199
      %5234 = vst [vmem:[#allocation4 + $0x1e8] sm:$0xf] %v5200
      %5235 = vst [vmem:[#allocation4 + $0x24c] sm:$0xf] %v5201
      %5236 = vst [vmem:[#allocation4 + $0x2b0] sm:$0xf] %v5202
      %5237 = vst [vmem:[#allocation4 + $0x314] sm:$0xf] %v5203
      %5238 = vst [vmem:[#allocation4 + $0x378] sm:$0xf] %v5204
      %5239 = vst [vmem:[#allocation4 + $0x3dc] sm:$0xf] %v5205
      %5240 = vst [vmem:[#allocation4 + $0x440] sm:$0xf] %v5206
      %5241 = vst [vmem:[#allocation4 + $0x4a4] sm:$0xf] %v5207
      %5242 = vst [vmem:[#allocation4 + $0x508] sm:$0xf] %v5208
      %5243 = vst [vmem:[#allocation4 + $0x56c] sm:$0xf] %v5209
      %5244 = vst [vmem:[#allocation4 + $0x5d0] sm:$0xf] %v5210
      %5245 = vst [vmem:[#allocation4 + $0x634] sm:$0xf] %v5211
      %5246 = vst [vmem:[#allocation4 + $0x698] sm:$0xf] %v5212
      %v5247 = vld [vmem:[#allocation3 + $0x3b] sm:$0xff]
      %v5248 = vld [vmem:[#allocation3 + $0x43] sm:$0xff]
      %v5249 = vld [vmem:[#allocation3 + $0x4b] sm:$0xff]
      %v5250 = vld [vmem:[#allocation3 + $0x53] sm:$0xff]
      %v5251 = vld [vmem:[#allocation3 + $0x5b] sm:$0xff]
      %v5252 = vld [vmem:[#allocation3 + $0x63] sm:$0xff]
      %v5253 = vld [vmem:[#allocation3 + $0x6b] sm:$0xff]
      %v5254 = vld [vmem:[#allocation3 + $0x73] sm:$0xff]
      %v5255 = vld [vmem:[#allocation3 + $0x7b] sm:$0xff]
      %v5256 = vld [vmem:[#allocation3 + $0x83] sm:$0xff]
      %v5257 = vld [vmem:[#allocation3 + $0x8b] sm:$0xff]
      %v5258 = vld [vmem:[#allocation3 + $0x93] sm:$0xff]
      %v5259 = vld [vmem:[#allocation3 + $0x9b] sm:$0xff]
      %v5260 = vld [vmem:[#allocation3 + $0xa3] sm:$0xff]
      %v5261 = vld [vmem:[#allocation3 + $0xab] sm:$0xff]
      %v5262 = vld [vmem:[#allocation3 + $0xb3] sm:$0xff]
      %v5263 = vld [vmem:[#allocation3 + $0xbb] sm:$0xff]
      %v5264 = vpack.c.bf16 %v5248, %v5247
      %v5265 = vpack.c.bf16 %v5250, %v5249
      %v5266 = vpack.c.bf16 %v5252, %v5251
      %v5267 = vpack.c.bf16 %v5254, %v5253
      %v5268 = vpack.c.bf16 %v5256, %v5255
      %v5269 = vpack.c.bf16 %v5258, %v5257
      %v5270 = vpack.c.bf16 %v5260, %v5259
      %v5271 = vpack.c.bf16 %v5262, %v5261
      %v5272 = vpack.c.bf16 %v5263, %v5263
      %v5282 = vunpack.c.l.b16 %v5264
      %v5283 = vunpack.c.h.b16 %v5264
      %v5284 = vunpack.c.l.b16 %v5265
      %v5285 = vunpack.c.h.b16 %v5265
      %v5286 = vunpack.c.l.b16 %v5266
      %v5287 = vunpack.c.h.b16 %v5266
      %v5288 = vunpack.c.l.b16 %v5267
      %v5289 = vunpack.c.h.b16 %v5267
      %v5290 = vunpack.c.l.b16 %v5268
      %v5291 = vunpack.c.h.b16 %v5268
      %v5292 = vunpack.c.l.b16 %v5269
      %v5293 = vunpack.c.h.b16 %v5269
      %v5294 = vunpack.c.l.b16 %v5270
      %v5295 = vunpack.c.h.b16 %v5270
      %v5296 = vunpack.c.l.b16 %v5271
      %v5297 = vunpack.c.h.b16 %v5271
      %v5298 = vunpack.c.l.b16 %v5272
      %v5299 = vpack.c.b16 %v5282, %v5282
      %v5300 = vpack.c.b16 %v5283, %v5283
      %v5301 = vpack.c.b16 %v5284, %v5284
      %v5302 = vpack.c.b16 %v5285, %v5285
      %v5303 = vpack.c.b16 %v5286, %v5286
      %v5304 = vpack.c.b16 %v5287, %v5287
      %v5305 = vpack.c.b16 %v5288, %v5288
      %v5306 = vpack.c.b16 %v5289, %v5289
      %v5307 = vpack.c.b16 %v5290, %v5290
      %v5308 = vpack.c.b16 %v5291, %v5291
      %v5309 = vpack.c.b16 %v5292, %v5292
      %v5310 = vpack.c.b16 %v5293, %v5293
      %v5311 = vpack.c.b16 %v5294, %v5294
      %v5312 = vpack.c.b16 %v5295, %v5295
      %v5313 = vpack.c.b16 %v5296, %v5296
      %v5314 = vpack.c.b16 %v5297, %v5297
      %v5315 = vpack.c.b16 %v5298, %v5298
      %5333 = vst [vmem:[#allocation4 + $0x5c] sm:$0xf] %v5299
      %5334 = vst [vmem:[#allocation4 + $0xc0] sm:$0xf] %v5300
      %5335 = vst [vmem:[#allocation4 + $0x124] sm:$0xf] %v5301
      %5336 = vst [vmem:[#allocation4 + $0x188] sm:$0xf] %v5302
      %5337 = vst [vmem:[#allocation4 + $0x1ec] sm:$0xf] %v5303
      %5338 = vst [vmem:[#allocation4 + $0x250] sm:$0xf] %v5304
      %5339 = vst [vmem:[#allocation4 + $0x2b4] sm:$0xf] %v5305
      %5340 = vst [vmem:[#allocation4 + $0x318] sm:$0xf] %v5306
      %5341 = vst [vmem:[#allocation4 + $0x37c] sm:$0xf] %v5307
      %5342 = vst [vmem:[#allocation4 + $0x3e0] sm:$0xf] %v5308
      %5343 = vst [vmem:[#allocation4 + $0x444] sm:$0xf] %v5309
      %5344 = vst [vmem:[#allocation4 + $0x4a8] sm:$0xf] %v5310
      %5345 = vst [vmem:[#allocation4 + $0x50c] sm:$0xf] %v5311
      %5346 = vst [vmem:[#allocation4 + $0x570] sm:$0xf] %v5312
      %5347 = vst [vmem:[#allocation4 + $0x5d4] sm:$0xf] %v5313
      %5348 = vst [vmem:[#allocation4 + $0x638] sm:$0xf] %v5314
      %5349 = vst [vmem:[#allocation4 + $0x69c] sm:$0xf] %v5315
      %v5350 = vld [vmem:[#allocation3 + $0x3c] sm:$0xff]
      %v5351 = vld [vmem:[#allocation3 + $0x44] sm:$0xff]
      %v5352 = vld [vmem:[#allocation3 + $0x4c] sm:$0xff]
      %v5353 = vld [vmem:[#allocation3 + $0x54] sm:$0xff]
      %v5354 = vld [vmem:[#allocation3 + $0x5c] sm:$0xff]
      %v5355 = vld [vmem:[#allocation3 + $0x64] sm:$0xff]
      %v5356 = vld [vmem:[#allocation3 + $0x6c] sm:$0xff]
      %v5357 = vld [vmem:[#allocation3 + $0x74] sm:$0xff]
      %v5358 = vld [vmem:[#allocation3 + $0x7c] sm:$0xff]
      %v5359 = vld [vmem:[#allocation3 + $0x84] sm:$0xff]
      %v5360 = vld [vmem:[#allocation3 + $0x8c] sm:$0xff]
      %v5361 = vld [vmem:[#allocation3 + $0x94] sm:$0xff]
      %v5362 = vld [vmem:[#allocation3 + $0x9c] sm:$0xff]
      %v5363 = vld [vmem:[#allocation3 + $0xa4] sm:$0xff]
      %v5364 = vld [vmem:[#allocation3 + $0xac] sm:$0xff]
      %v5365 = vld [vmem:[#allocation3 + $0xb4] sm:$0xff]
      %v5366 = vld [vmem:[#allocation3 + $0xbc] sm:$0xff]
      %v5367 = vpack.c.bf16 %v5351, %v5350
      %v5368 = vpack.c.bf16 %v5353, %v5352
      %v5369 = vpack.c.bf16 %v5355, %v5354
      %v5370 = vpack.c.bf16 %v5357, %v5356
      %v5371 = vpack.c.bf16 %v5359, %v5358
      %v5372 = vpack.c.bf16 %v5361, %v5360
      %v5373 = vpack.c.bf16 %v5363, %v5362
      %v5374 = vpack.c.bf16 %v5365, %v5364
      %v5375 = vpack.c.bf16 %v5366, %v5366
      %v5385 = vunpack.c.l.b16 %v5367
      %v5386 = vunpack.c.h.b16 %v5367
      %v5387 = vunpack.c.l.b16 %v5368
      %v5388 = vunpack.c.h.b16 %v5368
      %v5389 = vunpack.c.l.b16 %v5369
      %v5390 = vunpack.c.h.b16 %v5369
      %v5391 = vunpack.c.l.b16 %v5370
      %v5392 = vunpack.c.h.b16 %v5370
      %v5393 = vunpack.c.l.b16 %v5371
      %v5394 = vunpack.c.h.b16 %v5371
      %v5395 = vunpack.c.l.b16 %v5372
      %v5396 = vunpack.c.h.b16 %v5372
      %v5397 = vunpack.c.l.b16 %v5373
      %v5398 = vunpack.c.h.b16 %v5373
      %v5399 = vunpack.c.l.b16 %v5374
      %v5400 = vunpack.c.h.b16 %v5374
      %v5401 = vunpack.c.l.b16 %v5375
      %v5402 = vpack.c.b16 %v5385, %v5385
      %v5403 = vpack.c.b16 %v5386, %v5386
      %v5404 = vpack.c.b16 %v5387, %v5387
      %v5405 = vpack.c.b16 %v5388, %v5388
      %v5406 = vpack.c.b16 %v5389, %v5389
      %v5407 = vpack.c.b16 %v5390, %v5390
      %v5408 = vpack.c.b16 %v5391, %v5391
      %v5409 = vpack.c.b16 %v5392, %v5392
      %v5410 = vpack.c.b16 %v5393, %v5393
      %v5411 = vpack.c.b16 %v5394, %v5394
      %v5412 = vpack.c.b16 %v5395, %v5395
      %v5413 = vpack.c.b16 %v5396, %v5396
      %v5414 = vpack.c.b16 %v5397, %v5397
      %v5415 = vpack.c.b16 %v5398, %v5398
      %v5416 = vpack.c.b16 %v5399, %v5399
      %v5417 = vpack.c.b16 %v5400, %v5400
      %v5418 = vpack.c.b16 %v5401, %v5401
      %5436 = vst [vmem:[#allocation4 + $0x60] sm:$0xf] %v5402
      %5437 = vst [vmem:[#allocation4 + $0xc4] sm:$0xf] %v5403
      %5438 = vst [vmem:[#allocation4 + $0x128] sm:$0xf] %v5404
      %5439 = vst [vmem:[#allocation4 + $0x18c] sm:$0xf] %v5405
      %5440 = vst [vmem:[#allocation4 + $0x1f0] sm:$0xf] %v5406
      %5441 = vst [vmem:[#allocation4 + $0x254] sm:$0xf] %v5407
      %5442 = vst [vmem:[#allocation4 + $0x2b8] sm:$0xf] %v5408
      %5443 = vst [vmem:[#allocation4 + $0x31c] sm:$0xf] %v5409
      %5444 = vst [vmem:[#allocation4 + $0x380] sm:$0xf] %v5410
      %5445 = vst [vmem:[#allocation4 + $0x3e4] sm:$0xf] %v5411
      %5446 = vst [vmem:[#allocation4 + $0x448] sm:$0xf] %v5412
      %5447 = vst [vmem:[#allocation4 + $0x4ac] sm:$0xf] %v5413
      %5448 = vst [vmem:[#allocation4 + $0x510] sm:$0xf] %v5414
      %5449 = vst [vmem:[#allocation4 + $0x574] sm:$0xf] %v5415
      %5450 = vst [vmem:[#allocation4 + $0x5d8] sm:$0xf] %v5416
      %5451 = vst [vmem:[#allocation4 + $0x63c] sm:$0xf] %v5417
      %5452 = vst [vmem:[#allocation4 + $0x6a0] sm:$0xf] %v5418
      %v5453 = vld [vmem:[#allocation4] sm:$0xff]
      %v5454 = vld [vmem:[#allocation4 + $0x8] sm:$0xff]
      %v5455 = vld [vmem:[#allocation4 + $0x10] sm:$0xff]
      %v5456 = vld [vmem:[#allocation4 + $0x18] sm:$0xff]
      %v5457 = vld [vmem:[#allocation4 + $0x20] sm:$0xff]
      %v5458 = vld [vmem:[#allocation4 + $0x28] sm:$0xff]
      %v5459 = vld [vmem:[#allocation4 + $0x30] sm:$0xff]
      %v5460 = vld [vmem:[#allocation4 + $0x38] sm:$0xff]
      %v5461 = vld [vmem:[#allocation4 + $0x40] sm:$0xff]
      %v5462 = vld [vmem:[#allocation4 + $0x48] sm:$0xff]
      %v5463 = vld [vmem:[#allocation4 + $0x50] sm:$0xff]
      %v5464 = vld [vmem:[#allocation4 + $0x58] sm:$0xff]
      %v5465 = vld [vmem:[#allocation4 + $0x60] sm:$0xf]
      %v5466 = vld [vmem:[#allocation4 + $0x64] sm:$0xff]
      %v5467 = vld [vmem:[#allocation4 + $0x6c] sm:$0xff]
      %v5468 = vld [vmem:[#allocation4 + $0x74] sm:$0xff]
      %v5469 = vld [vmem:[#allocation4 + $0x7c] sm:$0xff]
      %v5470 = vld [vmem:[#allocation4 + $0x84] sm:$0xff]
      %v5471 = vld [vmem:[#allocation4 + $0x8c] sm:$0xff]
      %v5472 = vld [vmem:[#allocation4 + $0x94] sm:$0xff]
      %v5473 = vld [vmem:[#allocation4 + $0x9c] sm:$0xff]
      %v5474 = vld [vmem:[#allocation4 + $0xa4] sm:$0xff]
      %v5475 = vld [vmem:[#allocation4 + $0xac] sm:$0xff]
      %v5476 = vld [vmem:[#allocation4 + $0xb4] sm:$0xff]
      %v5477 = vld [vmem:[#allocation4 + $0xbc] sm:$0xff]
      %v5478 = vld [vmem:[#allocation4 + $0xc4] sm:$0xf]
      %v5479 = vld [vmem:[#allocation4 + $0xc8] sm:$0xff]
      %v5480 = vld [vmem:[#allocation4 + $0xd0] sm:$0xff]
      %v5481 = vld [vmem:[#allocation4 + $0xd8] sm:$0xff]
      %v5482 = vld [vmem:[#allocation4 + $0xe0] sm:$0xff]
      %v5483 = vld [vmem:[#allocation4 + $0xe8] sm:$0xff]
      %v5484 = vld [vmem:[#allocation4 + $0xf0] sm:$0xff]
      %v5485 = vld [vmem:[#allocation4 + $0xf8] sm:$0xff]
      %v5486 = vld [vmem:[#allocation4 + $0x100] sm:$0xff]
      %v5487 = vld [vmem:[#allocation4 + $0x108] sm:$0xff]
      %v5488 = vld [vmem:[#allocation4 + $0x110] sm:$0xff]
      %v5489 = vld [vmem:[#allocation4 + $0x118] sm:$0xff]
      %v5490 = vld [vmem:[#allocation4 + $0x120] sm:$0xff]
      %v5491 = vld [vmem:[#allocation4 + $0x128] sm:$0xf]
      %v5492 = vld [vmem:[#allocation4 + $0x12c] sm:$0xff]
      %v5493 = vld [vmem:[#allocation4 + $0x134] sm:$0xff]
      %v5494 = vld [vmem:[#allocation4 + $0x13c] sm:$0xff]
      %v5495 = vld [vmem:[#allocation4 + $0x144] sm:$0xff]
      %v5496 = vld [vmem:[#allocation4 + $0x14c] sm:$0xff]
      %v5497 = vld [vmem:[#allocation4 + $0x154] sm:$0xff]
      %v5498 = vld [vmem:[#allocation4 + $0x15c] sm:$0xff]
      %v5499 = vld [vmem:[#allocation4 + $0x164] sm:$0xff]
      %v5500 = vld [vmem:[#allocation4 + $0x16c] sm:$0xff]
      %v5501 = vld [vmem:[#allocation4 + $0x174] sm:$0xff]
      %v5502 = vld [vmem:[#allocation4 + $0x17c] sm:$0xff]
      %v5503 = vld [vmem:[#allocation4 + $0x184] sm:$0xff]
      %v5504 = vld [vmem:[#allocation4 + $0x18c] sm:$0xf]
      %v5505 = vld [vmem:[#allocation4 + $0x190] sm:$0xff]
      %v5506 = vld [vmem:[#allocation4 + $0x198] sm:$0xff]
      %v5507 = vld [vmem:[#allocation4 + $0x1a0] sm:$0xff]
      %v5508 = vld [vmem:[#allocation4 + $0x1a8] sm:$0xff]
      %v5509 = vld [vmem:[#allocation4 + $0x1b0] sm:$0xff]
      %v5510 = vld [vmem:[#allocation4 + $0x1b8] sm:$0xff]
      %v5511 = vld [vmem:[#allocation4 + $0x1c0] sm:$0xff]
      %v5512 = vld [vmem:[#allocation4 + $0x1c8] sm:$0xff]
      %v5513 = vld [vmem:[#allocation4 + $0x1d0] sm:$0xff]
      %v5514 = vld [vmem:[#allocation4 + $0x1d8] sm:$0xff]
      %v5515 = vld [vmem:[#allocation4 + $0x1e0] sm:$0xff]
      %v5516 = vld [vmem:[#allocation4 + $0x1e8] sm:$0xff]
      %v5517 = vld [vmem:[#allocation4 + $0x1f0] sm:$0xf]
      %v5518 = vld [vmem:[#allocation4 + $0x1f4] sm:$0xff]
      %v5519 = vld [vmem:[#allocation4 + $0x1fc] sm:$0xff]
      %v5520 = vld [vmem:[#allocation4 + $0x204] sm:$0xff]
      %v5521 = vld [vmem:[#allocation4 + $0x20c] sm:$0xff]
      %v5522 = vld [vmem:[#allocation4 + $0x214] sm:$0xff]
      %v5523 = vld [vmem:[#allocation4 + $0x21c] sm:$0xff]
      %v5524 = vld [vmem:[#allocation4 + $0x224] sm:$0xff]
      %v5525 = vld [vmem:[#allocation4 + $0x22c] sm:$0xff]
      %v5526 = vld [vmem:[#allocation4 + $0x234] sm:$0xff]
      %v5527 = vld [vmem:[#allocation4 + $0x23c] sm:$0xff]
      %v5528 = vld [vmem:[#allocation4 + $0x244] sm:$0xff]
      %v5529 = vld [vmem:[#allocation4 + $0x24c] sm:$0xff]
      %v5530 = vld [vmem:[#allocation4 + $0x254] sm:$0xf]
      %v5531 = vld [vmem:[#allocation4 + $0x258] sm:$0xff]
      %v5532 = vld [vmem:[#allocation4 + $0x260] sm:$0xff]
      %v5533 = vld [vmem:[#allocation4 + $0x268] sm:$0xff]
      %v5534 = vld [vmem:[#allocation4 + $0x270] sm:$0xff]
      %v5535 = vld [vmem:[#allocation4 + $0x278] sm:$0xff]
      %v5536 = vld [vmem:[#allocation4 + $0x280] sm:$0xff]
      %v5537 = vld [vmem:[#allocation4 + $0x288] sm:$0xff]
      %v5538 = vld [vmem:[#allocation4 + $0x290] sm:$0xff]
      %v5539 = vld [vmem:[#allocation4 + $0x298] sm:$0xff]
      %v5540 = vld [vmem:[#allocation4 + $0x2a0] sm:$0xff]
      %v5541 = vld [vmem:[#allocation4 + $0x2a8] sm:$0xff]
      %v5542 = vld [vmem:[#allocation4 + $0x2b0] sm:$0xff]
      %v5543 = vld [vmem:[#allocation4 + $0x2b8] sm:$0xf]
      %v5544 = vld [vmem:[#allocation4 + $0x2bc] sm:$0xff]
      %v5545 = vld [vmem:[#allocation4 + $0x2c4] sm:$0xff]
      %v5546 = vld [vmem:[#allocation4 + $0x2cc] sm:$0xff]
      %v5547 = vld [vmem:[#allocation4 + $0x2d4] sm:$0xff]
      %v5548 = vld [vmem:[#allocation4 + $0x2dc] sm:$0xff]
      %v5549 = vld [vmem:[#allocation4 + $0x2e4] sm:$0xff]
      %v5550 = vld [vmem:[#allocation4 + $0x2ec] sm:$0xff]
      %v5551 = vld [vmem:[#allocation4 + $0x2f4] sm:$0xff]
      %v5552 = vld [vmem:[#allocation4 + $0x2fc] sm:$0xff]
      %v5553 = vld [vmem:[#allocation4 + $0x304] sm:$0xff]
      %v5554 = vld [vmem:[#allocation4 + $0x30c] sm:$0xff]
      %v5555 = vld [vmem:[#allocation4 + $0x314] sm:$0xff]
      %v5556 = vld [vmem:[#allocation4 + $0x31c] sm:$0xf]
      %v5557 = vld [vmem:[#allocation4 + $0x320] sm:$0xff]
      %v5558 = vld [vmem:[#allocation4 + $0x328] sm:$0xff]
      %v5559 = vld [vmem:[#allocation4 + $0x330] sm:$0xff]
      %v5560 = vld [vmem:[#allocation4 + $0x338] sm:$0xff]
      %v5561 = vld [vmem:[#allocation4 + $0x340] sm:$0xff]
      %v5562 = vld [vmem:[#allocation4 + $0x348] sm:$0xff]
      %v5563 = vld [vmem:[#allocation4 + $0x350] sm:$0xff]
      %v5564 = vld [vmem:[#allocation4 + $0x358] sm:$0xff]
      %v5565 = vld [vmem:[#allocation4 + $0x360] sm:$0xff]
      %v5566 = vld [vmem:[#allocation4 + $0x368] sm:$0xff]
      %v5567 = vld [vmem:[#allocation4 + $0x370] sm:$0xff]
      %v5568 = vld [vmem:[#allocation4 + $0x378] sm:$0xff]
      %v5569 = vld [vmem:[#allocation4 + $0x380] sm:$0xf]
      %v5570 = vld [vmem:[#allocation4 + $0x384] sm:$0xff]
      %v5571 = vld [vmem:[#allocation4 + $0x38c] sm:$0xff]
      %v5572 = vld [vmem:[#allocation4 + $0x394] sm:$0xff]
      %v5573 = vld [vmem:[#allocation4 + $0x39c] sm:$0xff]
      %v5574 = vld [vmem:[#allocation4 + $0x3a4] sm:$0xff]
      %v5575 = vld [vmem:[#allocation4 + $0x3ac] sm:$0xff]
      %v5576 = vld [vmem:[#allocation4 + $0x3b4] sm:$0xff]
      %v5577 = vld [vmem:[#allocation4 + $0x3bc] sm:$0xff]
      %v5578 = vld [vmem:[#allocation4 + $0x3c4] sm:$0xff]
      %v5579 = vld [vmem:[#allocation4 + $0x3cc] sm:$0xff]
      %v5580 = vld [vmem:[#allocation4 + $0x3d4] sm:$0xff]
      %v5581 = vld [vmem:[#allocation4 + $0x3dc] sm:$0xff]
      %v5582 = vld [vmem:[#allocation4 + $0x3e4] sm:$0xf]
      %v5583 = vld [vmem:[#allocation4 + $0x3e8] sm:$0xff]
      %v5584 = vld [vmem:[#allocation4 + $0x3f0] sm:$0xff]
      %v5585 = vld [vmem:[#allocation4 + $0x3f8] sm:$0xff]
      %v5586 = vld [vmem:[#allocation4 + $0x400] sm:$0xff]
      %v5587 = vld [vmem:[#allocation4 + $0x408] sm:$0xff]
      %v5588 = vld [vmem:[#allocation4 + $0x410] sm:$0xff]
      %v5589 = vld [vmem:[#allocation4 + $0x418] sm:$0xff]
      %v5590 = vld [vmem:[#allocation4 + $0x420] sm:$0xff]
      %v5591 = vld [vmem:[#allocation4 + $0x428] sm:$0xff]
      %v5592 = vld [vmem:[#allocation4 + $0x430] sm:$0xff]
      %v5593 = vld [vmem:[#allocation4 + $0x438] sm:$0xff]
      %v5594 = vld [vmem:[#allocation4 + $0x440] sm:$0xff]
      %v5595 = vld [vmem:[#allocation4 + $0x448] sm:$0xf]
      %v5596 = vld [vmem:[#allocation4 + $0x44c] sm:$0xff]
      %v5597 = vld [vmem:[#allocation4 + $0x454] sm:$0xff]
      %v5598 = vld [vmem:[#allocation4 + $0x45c] sm:$0xff]
      %v5599 = vld [vmem:[#allocation4 + $0x464] sm:$0xff]
      %v5600 = vld [vmem:[#allocation4 + $0x46c] sm:$0xff]
      %v5601 = vld [vmem:[#allocation4 + $0x474] sm:$0xff]
      %v5602 = vld [vmem:[#allocation4 + $0x47c] sm:$0xff]
      %v5603 = vld [vmem:[#allocation4 + $0x484] sm:$0xff]
      %v5604 = vld [vmem:[#allocation4 + $0x48c] sm:$0xff]
      %v5605 = vld [vmem:[#allocation4 + $0x494] sm:$0xff]
      %v5606 = vld [vmem:[#allocation4 + $0x49c] sm:$0xff]
      %v5607 = vld [vmem:[#allocation4 + $0x4a4] sm:$0xff]
      %v5608 = vld [vmem:[#allocation4 + $0x4ac] sm:$0xf]
      %v5609 = vld [vmem:[#allocation4 + $0x4b0] sm:$0xff]
      %v5610 = vld [vmem:[#allocation4 + $0x4b8] sm:$0xff]
      %v5611 = vld [vmem:[#allocation4 + $0x4c0] sm:$0xff]
      %v5612 = vld [vmem:[#allocation4 + $0x4c8] sm:$0xff]
      %v5613 = vld [vmem:[#allocation4 + $0x4d0] sm:$0xff]
      %v5614 = vld [vmem:[#allocation4 + $0x4d8] sm:$0xff]
      %v5615 = vld [vmem:[#allocation4 + $0x4e0] sm:$0xff]
      %v5616 = vld [vmem:[#allocation4 + $0x4e8] sm:$0xff]
      %v5617 = vld [vmem:[#allocation4 + $0x4f0] sm:$0xff]
      %v5618 = vld [vmem:[#allocation4 + $0x4f8] sm:$0xff]
      %v5619 = vld [vmem:[#allocation4 + $0x500] sm:$0xff]
      %v5620 = vld [vmem:[#allocation4 + $0x508] sm:$0xff]
      %v5621 = vld [vmem:[#allocation4 + $0x510] sm:$0xf]
      %v5622 = vld [vmem:[#allocation4 + $0x514] sm:$0xff]
      %v5623 = vld [vmem:[#allocation4 + $0x51c] sm:$0xff]
      %v5624 = vld [vmem:[#allocation4 + $0x524] sm:$0xff]
      %v5625 = vld [vmem:[#allocation4 + $0x52c] sm:$0xff]
      %v5626 = vld [vmem:[#allocation4 + $0x534] sm:$0xff]
      %v5627 = vld [vmem:[#allocation4 + $0x53c] sm:$0xff]
      %v5628 = vld [vmem:[#allocation4 + $0x544] sm:$0xff]
      %v5629 = vld [vmem:[#allocation4 + $0x54c] sm:$0xff]
      %v5630 = vld [vmem:[#allocation4 + $0x554] sm:$0xff]
      %v5631 = vld [vmem:[#allocation4 + $0x55c] sm:$0xff]
      %v5632 = vld [vmem:[#allocation4 + $0x564] sm:$0xff]
      %v5633 = vld [vmem:[#allocation4 + $0x56c] sm:$0xff]
      %v5634 = vld [vmem:[#allocation4 + $0x574] sm:$0xf]
      %v5635 = vld [vmem:[#allocation4 + $0x578] sm:$0xff]
      %v5636 = vld [vmem:[#allocation4 + $0x580] sm:$0xff]
      %v5637 = vld [vmem:[#allocation4 + $0x588] sm:$0xff]
      %v5638 = vld [vmem:[#allocation4 + $0x590] sm:$0xff]
      %v5639 = vld [vmem:[#allocation4 + $0x598] sm:$0xff]
      %v5640 = vld [vmem:[#allocation4 + $0x5a0] sm:$0xff]
      %v5641 = vld [vmem:[#allocation4 + $0x5a8] sm:$0xff]
      %v5642 = vld [vmem:[#allocation4 + $0x5b0] sm:$0xff]
      %v5643 = vld [vmem:[#allocation4 + $0x5b8] sm:$0xff]
      %v5644 = vld [vmem:[#allocation4 + $0x5c0] sm:$0xff]
      %v5645 = vld [vmem:[#allocation4 + $0x5c8] sm:$0xff]
      %v5646 = vld [vmem:[#allocation4 + $0x5d0] sm:$0xff]
      %v5647 = vld [vmem:[#allocation4 + $0x5d8] sm:$0xf]
      %v5648 = vld [vmem:[#allocation4 + $0x5dc] sm:$0xff]
      %v5649 = vld [vmem:[#allocation4 + $0x5e4] sm:$0xff]
      %v5650 = vld [vmem:[#allocation4 + $0x5ec] sm:$0xff]
      %v5651 = vld [vmem:[#allocation4 + $0x5f4] sm:$0xff]
      %v5652 = vld [vmem:[#allocation4 + $0x5fc] sm:$0xff]
      %v5653 = vld [vmem:[#allocation4 + $0x604] sm:$0xff]
      %v5654 = vld [vmem:[#allocation4 + $0x60c] sm:$0xff]
      %v5655 = vld [vmem:[#allocation4 + $0x614] sm:$0xff]
      %v5656 = vld [vmem:[#allocation4 + $0x61c] sm:$0xff]
      %v5657 = vld [vmem:[#allocation4 + $0x624] sm:$0xff]
      %v5658 = vld [vmem:[#allocation4 + $0x62c] sm:$0xff]
      %v5659 = vld [vmem:[#allocation4 + $0x634] sm:$0xff]
      %v5660 = vld [vmem:[#allocation4 + $0x63c] sm:$0xf]
      %v5661 = vld [vmem:[#allocation4 + $0x640] sm:$0xff]
      %v5662 = vld [vmem:[#allocation4 + $0x648] sm:$0xff]
      %v5663 = vld [vmem:[#allocation4 + $0x650] sm:$0xff]
      %v5664 = vld [vmem:[#allocation4 + $0x658] sm:$0xff]
      %v5665 = vld [vmem:[#allocation4 + $0x660] sm:$0xff]
      %v5666 = vld [vmem:[#allocation4 + $0x668] sm:$0xff]
      %v5667 = vld [vmem:[#allocation4 + $0x670] sm:$0xff]
      %v5668 = vld [vmem:[#allocation4 + $0x678] sm:$0xff]
      %v5669 = vld [vmem:[#allocation4 + $0x680] sm:$0xff]
      %v5670 = vld [vmem:[#allocation4 + $0x688] sm:$0xff]
      %v5671 = vld [vmem:[#allocation4 + $0x690] sm:$0xff]
      %v5672 = vld [vmem:[#allocation4 + $0x698] sm:$0xff]
      %v5673 = vld [vmem:[#allocation4 + $0x6a0] sm:$0xf]
      %v5674 = vld [vmem:[%s4] sm:$0xf]
      %v5675 = vld [vmem:[%s4 + $0x4] sm:$0xf]
      %v5676 = vld [vmem:[%s4 + $0x8] sm:$0xf]
      %v5677 = vld [vmem:[%s4 + $0xc] sm:$0xf]
      %v5678 = vld [vmem:[%s4 + $0x10] sm:$0xf]
      %v5679 = vld [vmem:[%s4 + $0x14] sm:$0xf]
      %v5680 = vld [vmem:[%s4 + $0x18] sm:$0xf]
      %v5681 = vld [vmem:[%s4 + $0x1c] sm:$0xf]
      %v5682 = vld [vmem:[%s4 + $0x20] sm:$0xf]
      %v5683 = vld [vmem:[%s4 + $0x24] sm:$0xf]
      %v5684 = vld [vmem:[%s4 + $0x28] sm:$0xf]
      %v5685 = vld [vmem:[%s4 + $0x2c] sm:$0xf]
      %v5686 = vld [vmem:[%s4 + $0x30] sm:$0xf]
      %v5687 = vld [vmem:[%s4 + $0x34] sm:$0xf]
      %v5688 = vld [vmem:[%s4 + $0x38] sm:$0xf]
      %v5689 = vld [vmem:[%s4 + $0x3c] sm:$0xf]
      %v5690 = vld [vmem:[%s4 + $0x40] sm:$0xf]
      %v5691 = vld [vmem:[%s4 + $0x44] sm:$0xf]
      %v5692 = vld [vmem:[%s4 + $0x48] sm:$0xf]
      %v5693 = vld [vmem:[%s4 + $0x4c] sm:$0xf]
      %v5694 = vld [vmem:[%s4 + $0x50] sm:$0xf]
      %v5695 = vld [vmem:[%s4 + $0x54] sm:$0xf]
      %v5696 = vld [vmem:[%s4 + $0x58] sm:$0xf]
      %v5697 = vld [vmem:[%s4 + $0x5c] sm:$0xf]
      %v5698 = vld [vmem:[%s4 + $0x60] sm:$0xf]
      %v5699 = vld [vmem:[%s4 + $0x64] sm:$0xf]
      %v5700 = vld [vmem:[%s4 + $0x68] sm:$0xf]
      %v5701 = vld [vmem:[%s4 + $0x6c] sm:$0xf]
      %v5702 = vld [vmem:[%s4 + $0x70] sm:$0xf]
      %v5703 = vld [vmem:[%s4 + $0x74] sm:$0xf]
      %v5704 = vld [vmem:[%s4 + $0x78] sm:$0xf]
      %v5705 = vld [vmem:[%s4 + $0x7c] sm:$0xf]
      %v5706 = vld [vmem:[%s4 + $0x80] sm:$0xf]
      %v5707 = vld [vmem:[%s4 + $0x84] sm:$0xf]
      %v5708 = vld [vmem:[%s4 + $0x88] sm:$0xf]
      %v5709 = vld [vmem:[%s4 + $0x8c] sm:$0xf]
      %v5710 = vld [vmem:[%s4 + $0x90] sm:$0xf]
      %v5711 = vld [vmem:[%s4 + $0x94] sm:$0xf]
      %v5712 = vld [vmem:[%s4 + $0x98] sm:$0xf]
      %v5713 = vld [vmem:[%s4 + $0x9c] sm:$0xf]
      %v5714 = vld [vmem:[%s4 + $0xa0] sm:$0xf]
      %v5715 = vld [vmem:[%s4 + $0xa4] sm:$0xf]
      %v5716 = vld [vmem:[%s4 + $0xa8] sm:$0xf]
      %v5717 = vld [vmem:[%s4 + $0xac] sm:$0xf]
      %v5718 = vld [vmem:[%s4 + $0xb0] sm:$0xf]
      %v5719 = vld [vmem:[%s4 + $0xb4] sm:$0xf]
      %v5720 = vld [vmem:[%s4 + $0xb8] sm:$0xf]
      %v5721 = vld [vmem:[%s4 + $0xbc] sm:$0xf]
      %v5722 = vld [vmem:[%s4 + $0xc0] sm:$0xf]
      %v5723 = vld [vmem:[%s4 + $0xc4] sm:$0xf]
      %v5724 = vld [vmem:[%s4 + $0xc8] sm:$0xf]
      %v5725 = vld [vmem:[%s4 + $0xcc] sm:$0xf]
      %v5726 = vld [vmem:[%s4 + $0xd0] sm:$0xf]
      %v5727 = vld [vmem:[%s4 + $0xd4] sm:$0xf]
      %v5728 = vld [vmem:[%s4 + $0xd8] sm:$0xf]
      %v5729 = vld [vmem:[%s4 + $0xdc] sm:$0xf]
      %v5730 = vld [vmem:[%s4 + $0xe0] sm:$0xf]
      %v5731 = vld [vmem:[%s4 + $0xe4] sm:$0xf]
      %v5732 = vld [vmem:[%s4 + $0xe8] sm:$0xf]
      %v5733 = vld [vmem:[%s4 + $0xec] sm:$0xf]
      %v5734 = vld [vmem:[%s4 + $0xf0] sm:$0xf]
      %v5735 = vld [vmem:[%s4 + $0xf4] sm:$0xf]
      %v5736 = vld [vmem:[%s4 + $0xf8] sm:$0xf]
      %v5737 = vld [vmem:[%s4 + $0xfc] sm:$0xf]
      %v5738 = vld [vmem:[%s4 + $0x100] sm:$0xf]
      %v5739 = vld [vmem:[%s4 + $0x104] sm:$0xf]
      %v5740 = vld [vmem:[%s4 + $0x108] sm:$0xf]
      %v5741 = vld [vmem:[%s4 + $0x10c] sm:$0xf]
      %v5742 = vld [vmem:[%s4 + $0x110] sm:$0xf]
      %v5743 = vld [vmem:[%s4 + $0x114] sm:$0xf]
      %v5744 = vld [vmem:[%s4 + $0x118] sm:$0xf]
      %v5745 = vld [vmem:[%s4 + $0x11c] sm:$0xf]
      %v5746 = vld [vmem:[%s4 + $0x120] sm:$0xf]
      %v5747 = vld [vmem:[%s4 + $0x124] sm:$0xf]
      %v5748 = vld [vmem:[%s4 + $0x128] sm:$0xf]
      %v5749 = vld [vmem:[%s4 + $0x12c] sm:$0xf]
      %v5750 = vld [vmem:[%s4 + $0x130] sm:$0xf]
      %v5751 = vld [vmem:[%s4 + $0x134] sm:$0xf]
      %v5752 = vld [vmem:[%s4 + $0x138] sm:$0xf]
      %v5753 = vld [vmem:[%s4 + $0x13c] sm:$0xf]
      %v5754 = vld [vmem:[%s4 + $0x140] sm:$0xf]
      %v5755 = vld [vmem:[%s4 + $0x144] sm:$0xf]
      %v5756 = vld [vmem:[%s4 + $0x148] sm:$0xf]
      %v5757 = vld [vmem:[%s4 + $0x14c] sm:$0xf]
      %v5758 = vld [vmem:[%s4 + $0x150] sm:$0xf]
      %v5759 = vld [vmem:[%s4 + $0x154] sm:$0xf]
      %v5760 = vld [vmem:[%s4 + $0x158] sm:$0xf]
      %v5761 = vld [vmem:[%s4 + $0x15c] sm:$0xf]
      %v5762 = vld [vmem:[%s4 + $0x160] sm:$0xf]
      %v5763 = vld [vmem:[%s4 + $0x164] sm:$0xf]
      %v5764 = vld [vmem:[%s4 + $0x168] sm:$0xf]
      %v5765 = vld [vmem:[%s4 + $0x16c] sm:$0xf]
      %v5766 = vld [vmem:[%s4 + $0x170] sm:$0xf]
      %v5767 = vld [vmem:[%s4 + $0x174] sm:$0xf]
      %v5768 = vld [vmem:[%s4 + $0x178] sm:$0xf]
      %v5769 = vld [vmem:[%s4 + $0x17c] sm:$0xf]
      %v5770 = vld [vmem:[%s4 + $0x180] sm:$0xf]
      %v5771 = vld [vmem:[%s4 + $0x184] sm:$0xf]
      %v5772 = vld [vmem:[%s4 + $0x188] sm:$0xf]
      %v5773 = vld [vmem:[%s4 + $0x18c] sm:$0xf]
      %v5774 = vld [vmem:[%s4 + $0x190] sm:$0xf]
      %v5775 = vld [vmem:[%s4 + $0x194] sm:$0xf]
      %v5776 = vld [vmem:[%s4 + $0x198] sm:$0xf]
      %v5777 = vld [vmem:[%s4 + $0x19c] sm:$0xf]
      %v5778 = vld [vmem:[%s4 + $0x1a0] sm:$0xf]
      %v5779 = vld [vmem:[%s4 + $0x1a4] sm:$0xf]
      %v5780 = vld [vmem:[%s4 + $0x1a8] sm:$0xf]
      %v5781 = vld [vmem:[%s4 + $0x1ac] sm:$0xf]
      %v5782 = vld [vmem:[%s4 + $0x1b0] sm:$0xf]
      %v5783 = vld [vmem:[%s4 + $0x1b4] sm:$0xf]
      %v5784 = vld [vmem:[%s4 + $0x1b8] sm:$0xf]
      %v5785 = vld [vmem:[%s4 + $0x1bc] sm:$0xf]
      %v5786 = vld [vmem:[%s4 + $0x1c0] sm:$0xf]
      %v5787 = vld [vmem:[%s4 + $0x1c4] sm:$0xf]
      %v5788 = vld [vmem:[%s4 + $0x1c8] sm:$0xf]
      %v5789 = vld [vmem:[%s4 + $0x1cc] sm:$0xf]
      %v5790 = vld [vmem:[%s4 + $0x1d0] sm:$0xf]
      %v5791 = vld [vmem:[%s4 + $0x1d4] sm:$0xf]
      %v5792 = vld [vmem:[%s4 + $0x1d8] sm:$0xf]
      %v5793 = vld [vmem:[%s4 + $0x1dc] sm:$0xf]
      %v5794 = vld [vmem:[%s4 + $0x1e0] sm:$0xf]
      %v5795 = vld [vmem:[%s4 + $0x1e4] sm:$0xf]
      %v5796 = vld [vmem:[%s4 + $0x1e8] sm:$0xf]
      %v5797 = vld [vmem:[%s4 + $0x1ec] sm:$0xf]
      %v5798 = vld [vmem:[%s4 + $0x1f0] sm:$0xf]
      %v5799 = vld [vmem:[%s4 + $0x1f4] sm:$0xf]
      %v5800 = vld [vmem:[%s4 + $0x1f8] sm:$0xf]
      %v5801 = vld [vmem:[%s4 + $0x1fc] sm:$0xf]
      %v5802 = vld [vmem:[%s4 + $0x200] sm:$0xf]
      %v5803 = vld [vmem:[%s4 + $0x204] sm:$0xf]
      %v5804 = vld [vmem:[%s4 + $0x208] sm:$0xf]
      %v5805 = vld [vmem:[%s4 + $0x20c] sm:$0xf]
      %v5806 = vld [vmem:[%s4 + $0x210] sm:$0xf]
      %v5807 = vld [vmem:[%s4 + $0x214] sm:$0xf]
      %v5808 = vld [vmem:[%s4 + $0x218] sm:$0xf]
      %v5809 = vld [vmem:[%s4 + $0x21c] sm:$0xf]
      %v5810 = vld [vmem:[%s4 + $0x220] sm:$0xf]
      %v5811 = vld [vmem:[%s4 + $0x224] sm:$0xf]
      %v5812 = vld [vmem:[%s4 + $0x228] sm:$0xf]
      %v5813 = vld [vmem:[%s4 + $0x22c] sm:$0xf]
      %v5814 = vld [vmem:[%s4 + $0x230] sm:$0xf]
      %v5815 = vld [vmem:[%s4 + $0x234] sm:$0xf]
      %v5816 = vld [vmem:[%s4 + $0x238] sm:$0xf]
      %v5817 = vld [vmem:[%s4 + $0x23c] sm:$0xf]
      %v5818 = vld [vmem:[%s4 + $0x240] sm:$0xf]
      %v5819 = vld [vmem:[%s4 + $0x244] sm:$0xf]
      %v5820 = vld [vmem:[%s4 + $0x248] sm:$0xf]
      %v5821 = vld [vmem:[%s4 + $0x24c] sm:$0xf]
      %v5822 = vld [vmem:[%s4 + $0x250] sm:$0xf]
      %v5823 = vld [vmem:[%s4 + $0x254] sm:$0xf]
      %v5824 = vld [vmem:[%s4 + $0x258] sm:$0xf]
      %v5825 = vld [vmem:[%s4 + $0x25c] sm:$0xf]
      %v5826 = vld [vmem:[%s4 + $0x260] sm:$0xf]
      %v5827 = vld [vmem:[%s4 + $0x264] sm:$0xf]
      %v5828 = vld [vmem:[%s4 + $0x268] sm:$0xf]
      %v5829 = vld [vmem:[%s4 + $0x26c] sm:$0xf]
      %v5830 = vld [vmem:[%s4 + $0x270] sm:$0xf]
      %v5831 = vld [vmem:[%s4 + $0x274] sm:$0xf]
      %v5832 = vld [vmem:[%s4 + $0x278] sm:$0xf]
      %v5833 = vld [vmem:[%s4 + $0x27c] sm:$0xf]
      %v5834 = vld [vmem:[%s4 + $0x280] sm:$0xf]
      %v5835 = vld [vmem:[%s4 + $0x284] sm:$0xf]
      %v5836 = vld [vmem:[%s4 + $0x288] sm:$0xf]
      %v5837 = vld [vmem:[%s4 + $0x28c] sm:$0xf]
      %v5838 = vld [vmem:[%s4 + $0x290] sm:$0xf]
      %v5839 = vld [vmem:[%s4 + $0x294] sm:$0xf]
      %v5840 = vld [vmem:[%s4 + $0x298] sm:$0xf]
      %v5841 = vld [vmem:[%s4 + $0x29c] sm:$0xf]
      %v5842 = vld [vmem:[%s4 + $0x2a0] sm:$0xf]
      %v5843 = vld [vmem:[%s4 + $0x2a4] sm:$0xf]
      %v5844 = vld [vmem:[%s4 + $0x2a8] sm:$0xf]
      %v5845 = vld [vmem:[%s4 + $0x2ac] sm:$0xf]
      %v5846 = vld [vmem:[%s4 + $0x2b0] sm:$0xf]
      %v5847 = vld [vmem:[%s4 + $0x2b4] sm:$0xf]
      %v5848 = vld [vmem:[%s4 + $0x2b8] sm:$0xf]
      %v5849 = vld [vmem:[%s4 + $0x2bc] sm:$0xf]
      %v5850 = vld [vmem:[%s4 + $0x2c0] sm:$0xf]
      %v5851 = vld [vmem:[%s4 + $0x2c4] sm:$0xf]
      %v5852 = vld [vmem:[%s4 + $0x2c8] sm:$0xf]
      %v5853 = vld [vmem:[%s4 + $0x2cc] sm:$0xf]
      %v5854 = vld [vmem:[%s4 + $0x2d0] sm:$0xf]
      %v5855 = vld [vmem:[%s4 + $0x2d4] sm:$0xf]
      %v5856 = vld [vmem:[%s4 + $0x2d8] sm:$0xf]
      %v5857 = vld [vmem:[%s4 + $0x2dc] sm:$0xf]
      %v5858 = vld [vmem:[%s4 + $0x2e0] sm:$0xf]
      %v5859 = vld [vmem:[%s4 + $0x2e4] sm:$0xf]
      %v5860 = vld [vmem:[%s4 + $0x2e8] sm:$0xf]
      %v5861 = vld [vmem:[%s4 + $0x2ec] sm:$0xf]
      %v5862 = vld [vmem:[%s4 + $0x2f0] sm:$0xf]
      %v5863 = vld [vmem:[%s4 + $0x2f4] sm:$0xf]
      %v5864 = vld [vmem:[%s4 + $0x2f8] sm:$0xf]
      %v5865 = vld [vmem:[%s4 + $0x2fc] sm:$0xf]
      %v5866 = vld [vmem:[%s4 + $0x300] sm:$0xf]
      %v5867 = vld [vmem:[%s4 + $0x304] sm:$0xf]
      %v5868 = vld [vmem:[%s4 + $0x308] sm:$0xf]
      %v5869 = vld [vmem:[%s4 + $0x30c] sm:$0xf]
      %v5870 = vld [vmem:[%s4 + $0x310] sm:$0xf]
      %v5871 = vld [vmem:[%s4 + $0x314] sm:$0xf]
      %v5872 = vld [vmem:[%s4 + $0x318] sm:$0xf]
      %v5873 = vld [vmem:[%s4 + $0x31c] sm:$0xf]
      %v5874 = vld [vmem:[%s4 + $0x320] sm:$0xf]
      %v5875 = vld [vmem:[%s4 + $0x324] sm:$0xf]
      %v5876 = vld [vmem:[%s4 + $0x328] sm:$0xf]
      %v5877 = vld [vmem:[%s4 + $0x32c] sm:$0xf]
      %v5878 = vld [vmem:[%s4 + $0x330] sm:$0xf]
      %v5879 = vld [vmem:[%s4 + $0x334] sm:$0xf]
      %v5880 = vld [vmem:[%s4 + $0x338] sm:$0xf]
      %v5881 = vld [vmem:[%s4 + $0x33c] sm:$0xf]
      %v5882 = vld [vmem:[%s4 + $0x340] sm:$0xf]
      %v5883 = vld [vmem:[%s4 + $0x344] sm:$0xf]
      %v5884 = vld [vmem:[%s4 + $0x348] sm:$0xf]
      %v5885 = vld [vmem:[%s4 + $0x34c] sm:$0xf]
      %v5886 = vld [vmem:[%s4 + $0x350] sm:$0xf]
      %v5887 = vld [vmem:[%s4 + $0x354] sm:$0xf]
      %v5888 = vld [vmem:[%s4 + $0x358] sm:$0xf]
      %v5889 = vld [vmem:[%s4 + $0x35c] sm:$0xf]
      %v5890 = vld [vmem:[%s4 + $0x360] sm:$0xf]
      %v5891 = vld [vmem:[%s4 + $0x364] sm:$0xf]
      %v5892 = vld [vmem:[%s4 + $0x368] sm:$0xf]
      %v5893 = vld [vmem:[%s4 + $0x36c] sm:$0xf]
      %v5894 = vld [vmem:[%s4 + $0x370] sm:$0xf]
      %v5895 = vld [vmem:[%s4 + $0x374] sm:$0xf]
      %v5896 = vld [vmem:[%s4 + $0x378] sm:$0xf]
      %v5897 = vld [vmem:[%s4 + $0x37c] sm:$0xf]
      %v5898 = vld [vmem:[%s4 + $0x380] sm:$0xf]
      %v5899 = vld [vmem:[%s4 + $0x384] sm:$0xf]
      %v5900 = vld [vmem:[%s4 + $0x388] sm:$0xf]
      %v5901 = vld [vmem:[%s4 + $0x38c] sm:$0xf]
      %v5902 = vld [vmem:[%s4 + $0x390] sm:$0xf]
      %v5903 = vld [vmem:[%s4 + $0x394] sm:$0xf]
      %v5904 = vld [vmem:[%s4 + $0x398] sm:$0xf]
      %v5905 = vld [vmem:[%s4 + $0x39c] sm:$0xf]
      %v5906 = vld [vmem:[%s4 + $0x3a0] sm:$0xf]
      %v5907 = vld [vmem:[%s4 + $0x3a4] sm:$0xf]
      %v5908 = vld [vmem:[%s4 + $0x3a8] sm:$0xf]
      %v5909 = vld [vmem:[%s4 + $0x3ac] sm:$0xf]
      %v5910 = vld [vmem:[%s4 + $0x3b0] sm:$0xf]
      %v5911 = vld [vmem:[%s4 + $0x3b4] sm:$0xf]
      %v5912 = vld [vmem:[%s4 + $0x3b8] sm:$0xf]
      %v5913 = vld [vmem:[%s4 + $0x3bc] sm:$0xf]
      %v5914 = vld [vmem:[%s4 + $0x3c0] sm:$0xf]
      %v5915 = vld [vmem:[%s4 + $0x3c4] sm:$0xf]
      %v5916 = vld [vmem:[%s4 + $0x3c8] sm:$0xf]
      %v5917 = vld [vmem:[%s4 + $0x3cc] sm:$0xf]
      %v5918 = vld [vmem:[%s4 + $0x3d0] sm:$0xf]
      %v5919 = vld [vmem:[%s4 + $0x3d4] sm:$0xf]
      %v5920 = vld [vmem:[%s4 + $0x3d8] sm:$0xf]
      %v5921 = vld [vmem:[%s4 + $0x3dc] sm:$0xf]
      %v5922 = vld [vmem:[%s4 + $0x3e0] sm:$0xf]
      %v5923 = vld [vmem:[%s4 + $0x3e4] sm:$0xf]
      %v5924 = vld [vmem:[%s4 + $0x3e8] sm:$0xf]
      %v5925 = vld [vmem:[%s4 + $0x3ec] sm:$0xf]
      %v5926 = vld [vmem:[%s4 + $0x3f0] sm:$0xf]
      %v5927 = vld [vmem:[%s4 + $0x3f4] sm:$0xf]
      %v5928 = vld [vmem:[%s4 + $0x3f8] sm:$0xf]
      %v5929 = vld [vmem:[%s4 + $0x3fc] sm:$0xf]
      %v5930 = vld [vmem:[%s4 + $0x400] sm:$0xf]
      %v5931 = vld [vmem:[%s4 + $0x404] sm:$0xf]
      %v5932 = vld [vmem:[%s4 + $0x408] sm:$0xf]
      %v5933 = vld [vmem:[%s4 + $0x40c] sm:$0xf]
      %v5934 = vld [vmem:[%s4 + $0x410] sm:$0xf]
      %v5935 = vld [vmem:[%s4 + $0x414] sm:$0xf]
      %v5936 = vld [vmem:[%s4 + $0x418] sm:$0xf]
      %v5937 = vld [vmem:[%s4 + $0x41c] sm:$0xf]
      %v5938 = vld [vmem:[%s4 + $0x420] sm:$0xf]
      %v5939 = vld [vmem:[%s4 + $0x424] sm:$0xf]
      %v5940 = vld [vmem:[%s4 + $0x428] sm:$0xf]
      %v5941 = vld [vmem:[%s4 + $0x42c] sm:$0xf]
      %v5942 = vld [vmem:[%s4 + $0x430] sm:$0xf]
      %v5943 = vld [vmem:[%s4 + $0x434] sm:$0xf]
      %v5944 = vld [vmem:[%s4 + $0x438] sm:$0xf]
      %v5945 = vld [vmem:[%s4 + $0x43c] sm:$0xf]
      %v5946 = vld [vmem:[%s4 + $0x440] sm:$0xf]
      %v5947 = vld [vmem:[%s4 + $0x444] sm:$0xf]
      %v5948 = vld [vmem:[%s4 + $0x448] sm:$0xf]
      %v5949 = vld [vmem:[%s4 + $0x44c] sm:$0xf]
      %v5950 = vld [vmem:[%s4 + $0x450] sm:$0xf]
      %v5951 = vld [vmem:[%s4 + $0x454] sm:$0xf]
      %v5952 = vld [vmem:[%s4 + $0x458] sm:$0xf]
      %v5953 = vld [vmem:[%s4 + $0x45c] sm:$0xf]
      %v5954 = vld [vmem:[%s4 + $0x460] sm:$0xf]
      %v5955 = vld [vmem:[%s4 + $0x464] sm:$0xf]
      %v5956 = vld [vmem:[%s4 + $0x468] sm:$0xf]
      %v5957 = vld [vmem:[%s4 + $0x46c] sm:$0xf]
      %v5958 = vld [vmem:[%s4 + $0x470] sm:$0xf]
      %v5959 = vld [vmem:[%s4 + $0x474] sm:$0xf]
      %v5960 = vld [vmem:[%s4 + $0x478] sm:$0xf]
      %v5961 = vld [vmem:[%s4 + $0x47c] sm:$0xf]
      %v5962 = vld [vmem:[%s4 + $0x480] sm:$0xf]
      %v5963 = vld [vmem:[%s4 + $0x484] sm:$0xf]
      %v5964 = vld [vmem:[%s4 + $0x488] sm:$0xf]
      %v5965 = vld [vmem:[%s4 + $0x48c] sm:$0xf]
      %v5966 = vld [vmem:[%s4 + $0x490] sm:$0xf]
      %v5967 = vld [vmem:[%s4 + $0x494] sm:$0xf]
      %v5968 = vld [vmem:[%s4 + $0x498] sm:$0xf]
      %v5969 = vld [vmem:[%s4 + $0x49c] sm:$0xf]
      %v5970 = vld [vmem:[%s4 + $0x4a0] sm:$0xf]
      %v5971 = vld [vmem:[%s4 + $0x4a4] sm:$0xf]
      %v5972 = vld [vmem:[%s4 + $0x4a8] sm:$0xf]
      %v5973 = vld [vmem:[%s4 + $0x4ac] sm:$0xf]
      %v5974 = vld [vmem:[%s4 + $0x4b0] sm:$0xf]
      %v5975 = vld [vmem:[%s4 + $0x4b4] sm:$0xf]
      %v5976 = vld [vmem:[%s4 + $0x4b8] sm:$0xf]
      %v5977 = vld [vmem:[%s4 + $0x4bc] sm:$0xf]
      %v5978 = vld [vmem:[%s4 + $0x4c0] sm:$0xf]
      %v5979 = vld [vmem:[%s4 + $0x4c4] sm:$0xf]
      %v5980 = vld [vmem:[%s4 + $0x4c8] sm:$0xf]
      %v5981 = vld [vmem:[%s4 + $0x4cc] sm:$0xf]
      %v5982 = vld [vmem:[%s4 + $0x4d0] sm:$0xf]
      %v5983 = vld [vmem:[%s4 + $0x4d4] sm:$0xf]
      %v5984 = vld [vmem:[%s4 + $0x4d8] sm:$0xf]
      %v5985 = vld [vmem:[%s4 + $0x4dc] sm:$0xf]
      %v5986 = vld [vmem:[%s4 + $0x4e0] sm:$0xf]
      %v5987 = vld [vmem:[%s4 + $0x4e4] sm:$0xf]
      %v5988 = vld [vmem:[%s4 + $0x4e8] sm:$0xf]
      %v5989 = vld [vmem:[%s4 + $0x4ec] sm:$0xf]
      %v5990 = vld [vmem:[%s4 + $0x4f0] sm:$0xf]
      %v5991 = vld [vmem:[%s4 + $0x4f4] sm:$0xf]
      %v5992 = vld [vmem:[%s4 + $0x4f8] sm:$0xf]
      %v5993 = vld [vmem:[%s4 + $0x4fc] sm:$0xf]
      %v5994 = vld [vmem:[%s4 + $0x500] sm:$0xf]
      %v5995 = vld [vmem:[%s4 + $0x504] sm:$0xf]
      %v5996 = vld [vmem:[%s4 + $0x508] sm:$0xf]
      %v5997 = vld [vmem:[%s4 + $0x50c] sm:$0xf]
      %v5998 = vld [vmem:[%s4 + $0x510] sm:$0xf]
      %v5999 = vld [vmem:[%s4 + $0x514] sm:$0xf]
      %v6000 = vld [vmem:[%s4 + $0x518] sm:$0xf]
      %v6001 = vld [vmem:[%s4 + $0x51c] sm:$0xf]
      %v6002 = vld [vmem:[%s4 + $0x520] sm:$0xf]
      %v6003 = vld [vmem:[%s4 + $0x524] sm:$0xf]
      %v6004 = vld [vmem:[%s4 + $0x528] sm:$0xf]
      %v6005 = vld [vmem:[%s4 + $0x52c] sm:$0xf]
      %v6006 = vld [vmem:[%s4 + $0x530] sm:$0xf]
      %v6007 = vld [vmem:[%s4 + $0x534] sm:$0xf]
      %v6008 = vld [vmem:[%s4 + $0x538] sm:$0xf]
      %v6009 = vld [vmem:[%s4 + $0x53c] sm:$0xf]
      %v6010 = vld [vmem:[%s4 + $0x540] sm:$0xf]
      %v6011 = vld [vmem:[%s4 + $0x544] sm:$0xf]
      %v6012 = vld [vmem:[%s4 + $0x548] sm:$0xf]
      %v6013 = vld [vmem:[%s4 + $0x54c] sm:$0xf]
      %v6014 = vld [vmem:[%s4 + $0x550] sm:$0xf]
      %v6015 = vld [vmem:[%s4 + $0x554] sm:$0xf]
      %v6016 = vld [vmem:[%s4 + $0x558] sm:$0xf]
      %v6017 = vld [vmem:[%s4 + $0x55c] sm:$0xf]
      %v6018 = vld [vmem:[%s4 + $0x560] sm:$0xf]
      %v6019 = vld [vmem:[%s4 + $0x564] sm:$0xf]
      %v6020 = vld [vmem:[%s4 + $0x568] sm:$0xf]
      %v6021 = vld [vmem:[%s4 + $0x56c] sm:$0xf]
      %v6022 = vld [vmem:[%s4 + $0x570] sm:$0xf]
      %v6023 = vld [vmem:[%s4 + $0x574] sm:$0xf]
      %v6024 = vld [vmem:[%s4 + $0x578] sm:$0xf]
      %v6025 = vld [vmem:[%s4 + $0x57c] sm:$0xf]
      %v6026 = vld [vmem:[%s4 + $0x580] sm:$0xf]
      %v6027 = vld [vmem:[%s4 + $0x584] sm:$0xf]
      %v6028 = vld [vmem:[%s4 + $0x588] sm:$0xf]
      %v6029 = vld [vmem:[%s4 + $0x58c] sm:$0xf]
      %v6030 = vld [vmem:[%s4 + $0x590] sm:$0xf]
      %v6031 = vld [vmem:[%s4 + $0x594] sm:$0xf]
      %v6032 = vld [vmem:[%s4 + $0x598] sm:$0xf]
      %v6033 = vld [vmem:[%s4 + $0x59c] sm:$0xf]
      %v6034 = vld [vmem:[%s4 + $0x5a0] sm:$0xf]
      %v6035 = vld [vmem:[%s4 + $0x5a4] sm:$0xf]
      %v6036 = vld [vmem:[%s4 + $0x5a8] sm:$0xf]
      %v6037 = vld [vmem:[%s4 + $0x5ac] sm:$0xf]
      %v6038 = vld [vmem:[%s4 + $0x5b0] sm:$0xf]
      %v6039 = vld [vmem:[%s4 + $0x5b4] sm:$0xf]
      %v6040 = vld [vmem:[%s4 + $0x5b8] sm:$0xf]
      %v6041 = vld [vmem:[%s4 + $0x5bc] sm:$0xf]
      %v6042 = vld [vmem:[%s4 + $0x5c0] sm:$0xf]
      %v6043 = vld [vmem:[%s4 + $0x5c4] sm:$0xf]
      %v6044 = vld [vmem:[%s4 + $0x5c8] sm:$0xf]
      %v6045 = vld [vmem:[%s4 + $0x5cc] sm:$0xf]
      %v6046 = vld [vmem:[%s4 + $0x5d0] sm:$0xf]
      %v6047 = vld [vmem:[%s4 + $0x5d4] sm:$0xf]
      %v6048 = vld [vmem:[%s4 + $0x5d8] sm:$0xf]
      %v6049 = vld [vmem:[%s4 + $0x5dc] sm:$0xf]
      %v6050 = vld [vmem:[%s4 + $0x5e0] sm:$0xf]
      %v6051 = vld [vmem:[%s4 + $0x5e4] sm:$0xf]
      %v6052 = vld [vmem:[%s4 + $0x5e8] sm:$0xf]
      %v6053 = vld [vmem:[%s4 + $0x5ec] sm:$0xf]
      %v6054 = vld [vmem:[%s4 + $0x5f0] sm:$0xf]
      %v6055 = vld [vmem:[%s4 + $0x5f4] sm:$0xf]
      %v6056 = vld [vmem:[%s4 + $0x5f8] sm:$0xf]
      %v6057 = vld [vmem:[%s4 + $0x5fc] sm:$0xf]
      %v6058 = vld [vmem:[%s4 + $0x600] sm:$0xf]
      %v6059 = vld [vmem:[%s4 + $0x604] sm:$0xf]
      %v6060 = vld [vmem:[%s4 + $0x608] sm:$0xf]
      %v6061 = vld [vmem:[%s4 + $0x60c] sm:$0xf]
      %v6062 = vld [vmem:[%s4 + $0x610] sm:$0xf]
      %v6063 = vld [vmem:[%s4 + $0x614] sm:$0xf]
      %v6064 = vld [vmem:[%s4 + $0x618] sm:$0xf]
      %v6065 = vld [vmem:[%s4 + $0x61c] sm:$0xf]
      %v6066 = vld [vmem:[%s4 + $0x620] sm:$0xf]
      %v6067 = vld [vmem:[%s4 + $0x624] sm:$0xf]
      %v6068 = vld [vmem:[%s4 + $0x628] sm:$0xf]
      %v6069 = vld [vmem:[%s4 + $0x62c] sm:$0xf]
      %v6070 = vld [vmem:[%s4 + $0x630] sm:$0xf]
      %v6071 = vld [vmem:[%s4 + $0x634] sm:$0xf]
      %v6072 = vld [vmem:[%s4 + $0x638] sm:$0xf]
      %v6073 = vld [vmem:[%s4 + $0x63c] sm:$0xf]
      %v6075 = vlaneseq
      %v6076 = vshrl.u32 %v6075, 7
      %v6077 = vsub.s32 0, %v6076
      %v6078 = vrot.slane %v281, %v6077
      %v6301 = vunpack.c.l.b16 %v5453
      %v6302 = vunpack.c.h.b16 %v5453
      %v6303 = vunpack.c.l.b16 %v5454
      %v6304 = vunpack.c.h.b16 %v5454
      %v6305 = vunpack.c.l.b16 %v5455
      %v6306 = vunpack.c.h.b16 %v5455
      %v6307 = vunpack.c.l.b16 %v5456
      %v6308 = vunpack.c.h.b16 %v5456
      %v6309 = vunpack.c.l.b16 %v5457
      %v6310 = vunpack.c.h.b16 %v5457
      %v6311 = vunpack.c.l.b16 %v5458
      %v6312 = vunpack.c.h.b16 %v5458
      %v6313 = vunpack.c.l.b16 %v5459
      %v6314 = vunpack.c.h.b16 %v5459
      %v6315 = vunpack.c.l.b16 %v5460
      %v6316 = vunpack.c.h.b16 %v5460
      %v6317 = vunpack.c.l.b16 %v5461
      %v6318 = vunpack.c.h.b16 %v5461
      %v6319 = vunpack.c.l.b16 %v5462
      %v6320 = vunpack.c.h.b16 %v5462
      %v6321 = vunpack.c.l.b16 %v5463
      %v6322 = vunpack.c.h.b16 %v5463
      %v6323 = vunpack.c.l.b16 %v5464
      %v6324 = vunpack.c.h.b16 %v5464
      %v6325 = vunpack.c.l.b16 %v5465
      %v6326 = vunpack.c.l.b16 %v5466
      %v6327 = vunpack.c.h.b16 %v5466
      %v6328 = vunpack.c.l.b16 %v5467
      %v6329 = vunpack.c.h.b16 %v5467
      %v6330 = vunpack.c.l.b16 %v5468
      %v6331 = vunpack.c.h.b16 %v5468
      %v6332 = vunpack.c.l.b16 %v5469
      %v6333 = vunpack.c.h.b16 %v5469
      %v6334 = vunpack.c.l.b16 %v5470
      %v6335 = vunpack.c.h.b16 %v5470
      %v6336 = vunpack.c.l.b16 %v5471
      %v6337 = vunpack.c.h.b16 %v5471
      %v6338 = vunpack.c.l.b16 %v5472
      %v6339 = vunpack.c.h.b16 %v5472
      %v6340 = vunpack.c.l.b16 %v5473
      %v6341 = vunpack.c.h.b16 %v5473
      %v6342 = vunpack.c.l.b16 %v5474
      %v6343 = vunpack.c.h.b16 %v5474
      %v6344 = vunpack.c.l.b16 %v5475
      %v6345 = vunpack.c.h.b16 %v5475
      %v6346 = vunpack.c.l.b16 %v5476
      %v6347 = vunpack.c.h.b16 %v5476
      %v6348 = vunpack.c.l.b16 %v5477
      %v6349 = vunpack.c.h.b16 %v5477
      %v6350 = vunpack.c.l.b16 %v5478
      %v6351 = vunpack.c.l.b16 %v5479
      %v6352 = vunpack.c.h.b16 %v5479
      %v6353 = vunpack.c.l.b16 %v5480
      %v6354 = vunpack.c.h.b16 %v5480
      %v6355 = vunpack.c.l.b16 %v5481
      %v6356 = vunpack.c.h.b16 %v5481
      %v6357 = vunpack.c.l.b16 %v5482
      %v6358 = vunpack.c.h.b16 %v5482
      %v6359 = vunpack.c.l.b16 %v5483
      %v6360 = vunpack.c.h.b16 %v5483
      %v6361 = vunpack.c.l.b16 %v5484
      %v6362 = vunpack.c.h.b16 %v5484
      %v6363 = vunpack.c.l.b16 %v5485
      %v6364 = vunpack.c.h.b16 %v5485
      %v6365 = vunpack.c.l.b16 %v5486
      %v6366 = vunpack.c.h.b16 %v5486
      %v6367 = vunpack.c.l.b16 %v5487
      %v6368 = vunpack.c.h.b16 %v5487
      %v6369 = vunpack.c.l.b16 %v5488
      %v6370 = vunpack.c.h.b16 %v5488
      %v6371 = vunpack.c.l.b16 %v5489
      %v6372 = vunpack.c.h.b16 %v5489
      %v6373 = vunpack.c.l.b16 %v5490
      %v6374 = vunpack.c.h.b16 %v5490
      %v6375 = vunpack.c.l.b16 %v5491
      %v6376 = vunpack.c.l.b16 %v5492
      %v6377 = vunpack.c.h.b16 %v5492
      %v6378 = vunpack.c.l.b16 %v5493
      %v6379 = vunpack.c.h.b16 %v5493
      %v6380 = vunpack.c.l.b16 %v5494
      %v6381 = vunpack.c.h.b16 %v5494
      %v6382 = vunpack.c.l.b16 %v5495
      %v6383 = vunpack.c.h.b16 %v5495
      %v6384 = vunpack.c.l.b16 %v5496
      %v6385 = vunpack.c.h.b16 %v5496
      %v6386 = vunpack.c.l.b16 %v5497
      %v6387 = vunpack.c.h.b16 %v5497
      %v6388 = vunpack.c.l.b16 %v5498
      %v6389 = vunpack.c.h.b16 %v5498
      %v6390 = vunpack.c.l.b16 %v5499
      %v6391 = vunpack.c.h.b16 %v5499
      %v6392 = vunpack.c.l.b16 %v5500
      %v6393 = vunpack.c.h.b16 %v5500
      %v6394 = vunpack.c.l.b16 %v5501
      %v6395 = vunpack.c.h.b16 %v5501
      %v6396 = vunpack.c.l.b16 %v5502
      %v6397 = vunpack.c.h.b16 %v5502
      %v6398 = vunpack.c.l.b16 %v5503
      %v6399 = vunpack.c.h.b16 %v5503
      %v6400 = vunpack.c.l.b16 %v5504
      %v6401 = vunpack.c.l.b16 %v5505
      %v6402 = vunpack.c.h.b16 %v5505
      %v6403 = vunpack.c.l.b16 %v5506
      %v6404 = vunpack.c.h.b16 %v5506
      %v6405 = vunpack.c.l.b16 %v5507
      %v6406 = vunpack.c.h.b16 %v5507
      %v6407 = vunpack.c.l.b16 %v5508
      %v6408 = vunpack.c.h.b16 %v5508
      %v6409 = vunpack.c.l.b16 %v5509
      %v6410 = vunpack.c.h.b16 %v5509
      %v6411 = vunpack.c.l.b16 %v5510
      %v6412 = vunpack.c.h.b16 %v5510
      %v6413 = vunpack.c.l.b16 %v5511
      %v6414 = vunpack.c.h.b16 %v5511
      %v6415 = vunpack.c.l.b16 %v5512
      %v6416 = vunpack.c.h.b16 %v5512
      %v6417 = vunpack.c.l.b16 %v5513
      %v6418 = vunpack.c.h.b16 %v5513
      %v6419 = vunpack.c.l.b16 %v5514
      %v6420 = vunpack.c.h.b16 %v5514
      %v6421 = vunpack.c.l.b16 %v5515
      %v6422 = vunpack.c.h.b16 %v5515
      %v6423 = vunpack.c.l.b16 %v5516
      %v6424 = vunpack.c.h.b16 %v5516
      %v6425 = vunpack.c.l.b16 %v5517
      %v6426 = vunpack.c.l.b16 %v5518
      %v6427 = vunpack.c.h.b16 %v5518
      %v6428 = vunpack.c.l.b16 %v5519
      %v6429 = vunpack.c.h.b16 %v5519
      %v6430 = vunpack.c.l.b16 %v5520
      %v6431 = vunpack.c.h.b16 %v5520
      %v6432 = vunpack.c.l.b16 %v5521
      %v6433 = vunpack.c.h.b16 %v5521
      %v6434 = vunpack.c.l.b16 %v5522
      %v6435 = vunpack.c.h.b16 %v5522
      %v6436 = vunpack.c.l.b16 %v5523
      %v6437 = vunpack.c.h.b16 %v5523
      %v6438 = vunpack.c.l.b16 %v5524
      %v6439 = vunpack.c.h.b16 %v5524
      %v6440 = vunpack.c.l.b16 %v5525
      %v6441 = vunpack.c.h.b16 %v5525
      %v6442 = vunpack.c.l.b16 %v5526
      %v6443 = vunpack.c.h.b16 %v5526
      %v6444 = vunpack.c.l.b16 %v5527
      %v6445 = vunpack.c.h.b16 %v5527
      %v6446 = vunpack.c.l.b16 %v5528
      %v6447 = vunpack.c.h.b16 %v5528
      %v6448 = vunpack.c.l.b16 %v5529
      %v6449 = vunpack.c.h.b16 %v5529
      %v6450 = vunpack.c.l.b16 %v5530
      %v6451 = vunpack.c.l.b16 %v5531
      %v6452 = vunpack.c.h.b16 %v5531
      %v6453 = vunpack.c.l.b16 %v5532
      %v6454 = vunpack.c.h.b16 %v5532
      %v6455 = vunpack.c.l.b16 %v5533
      %v6456 = vunpack.c.h.b16 %v5533
      %v6457 = vunpack.c.l.b16 %v5534
      %v6458 = vunpack.c.h.b16 %v5534
      %v6459 = vunpack.c.l.b16 %v5535
      %v6460 = vunpack.c.h.b16 %v5535
      %v6461 = vunpack.c.l.b16 %v5536
      %v6462 = vunpack.c.h.b16 %v5536
      %v6463 = vunpack.c.l.b16 %v5537
      %v6464 = vunpack.c.h.b16 %v5537
      %v6465 = vunpack.c.l.b16 %v5538
      %v6466 = vunpack.c.h.b16 %v5538
      %v6467 = vunpack.c.l.b16 %v5539
      %v6468 = vunpack.c.h.b16 %v5539
      %v6469 = vunpack.c.l.b16 %v5540
      %v6470 = vunpack.c.h.b16 %v5540
      %v6471 = vunpack.c.l.b16 %v5541
      %v6472 = vunpack.c.h.b16 %v5541
      %v6473 = vunpack.c.l.b16 %v5542
      %v6474 = vunpack.c.h.b16 %v5542
      %v6475 = vunpack.c.l.b16 %v5543
      %v6476 = vunpack.c.l.b16 %v5544
      %v6477 = vunpack.c.h.b16 %v5544
      %v6478 = vunpack.c.l.b16 %v5545
      %v6479 = vunpack.c.h.b16 %v5545
      %v6480 = vunpack.c.l.b16 %v5546
      %v6481 = vunpack.c.h.b16 %v5546
      %v6482 = vunpack.c.l.b16 %v5547
      %v6483 = vunpack.c.h.b16 %v5547
      %v6484 = vunpack.c.l.b16 %v5548
      %v6485 = vunpack.c.h.b16 %v5548
      %v6486 = vunpack.c.l.b16 %v5549
      %v6487 = vunpack.c.h.b16 %v5549
      %v6488 = vunpack.c.l.b16 %v5550
      %v6489 = vunpack.c.h.b16 %v5550
      %v6490 = vunpack.c.l.b16 %v5551
      %v6491 = vunpack.c.h.b16 %v5551
      %v6492 = vunpack.c.l.b16 %v5552
      %v6493 = vunpack.c.h.b16 %v5552
      %v6494 = vunpack.c.l.b16 %v5553
      %v6495 = vunpack.c.h.b16 %v5553
      %v6496 = vunpack.c.l.b16 %v5554
      %v6497 = vunpack.c.h.b16 %v5554
      %v6498 = vunpack.c.l.b16 %v5555
      %v6499 = vunpack.c.h.b16 %v5555
      %v6500 = vunpack.c.l.b16 %v5556
      %v6501 = vunpack.c.l.b16 %v5557
      %v6502 = vunpack.c.h.b16 %v5557
      %v6503 = vunpack.c.l.b16 %v5558
      %v6504 = vunpack.c.h.b16 %v5558
      %v6505 = vunpack.c.l.b16 %v5559
      %v6506 = vunpack.c.h.b16 %v5559
      %v6507 = vunpack.c.l.b16 %v5560
      %v6508 = vunpack.c.h.b16 %v5560
      %v6509 = vunpack.c.l.b16 %v5561
      %v6510 = vunpack.c.h.b16 %v5561
      %v6511 = vunpack.c.l.b16 %v5562
      %v6512 = vunpack.c.h.b16 %v5562
      %v6513 = vunpack.c.l.b16 %v5563
      %v6514 = vunpack.c.h.b16 %v5563
      %v6515 = vunpack.c.l.b16 %v5564
      %v6516 = vunpack.c.h.b16 %v5564
      %v6517 = vunpack.c.l.b16 %v5565
      %v6518 = vunpack.c.h.b16 %v5565
      %v6519 = vunpack.c.l.b16 %v5566
      %v6520 = vunpack.c.h.b16 %v5566
      %v6521 = vunpack.c.l.b16 %v5567
      %v6522 = vunpack.c.h.b16 %v5567
      %v6523 = vunpack.c.l.b16 %v5568
      %v6524 = vunpack.c.h.b16 %v5568
      %v6525 = vunpack.c.l.b16 %v5569
      %v6526 = vunpack.c.l.b16 %v5570
      %v6527 = vunpack.c.h.b16 %v5570
      %v6528 = vunpack.c.l.b16 %v5571
      %v6529 = vunpack.c.h.b16 %v5571
      %v6530 = vunpack.c.l.b16 %v5572
      %v6531 = vunpack.c.h.b16 %v5572
      %v6532 = vunpack.c.l.b16 %v5573
      %v6533 = vunpack.c.h.b16 %v5573
      %v6534 = vunpack.c.l.b16 %v5574
      %v6535 = vunpack.c.h.b16 %v5574
      %v6536 = vunpack.c.l.b16 %v5575
      %v6537 = vunpack.c.h.b16 %v5575
      %v6538 = vunpack.c.l.b16 %v5576
      %v6539 = vunpack.c.h.b16 %v5576
      %v6540 = vunpack.c.l.b16 %v5577
      %v6541 = vunpack.c.h.b16 %v5577
      %v6542 = vunpack.c.l.b16 %v5578
      %v6543 = vunpack.c.h.b16 %v5578
      %v6544 = vunpack.c.l.b16 %v5579
      %v6545 = vunpack.c.h.b16 %v5579
      %v6546 = vunpack.c.l.b16 %v5580
      %v6547 = vunpack.c.h.b16 %v5580
      %v6548 = vunpack.c.l.b16 %v5581
      %v6549 = vunpack.c.h.b16 %v5581
      %v6550 = vunpack.c.l.b16 %v5582
      %v6551 = vunpack.c.l.b16 %v5583
      %v6552 = vunpack.c.h.b16 %v5583
      %v6553 = vunpack.c.l.b16 %v5584
      %v6554 = vunpack.c.h.b16 %v5584
      %v6555 = vunpack.c.l.b16 %v5585
      %v6556 = vunpack.c.h.b16 %v5585
      %v6557 = vunpack.c.l.b16 %v5586
      %v6558 = vunpack.c.h.b16 %v5586
      %v6559 = vunpack.c.l.b16 %v5587
      %v6560 = vunpack.c.h.b16 %v5587
      %v6561 = vunpack.c.l.b16 %v5588
      %v6562 = vunpack.c.h.b16 %v5588
      %v6563 = vunpack.c.l.b16 %v5589
      %v6564 = vunpack.c.h.b16 %v5589
      %v6565 = vunpack.c.l.b16 %v5590
      %v6566 = vunpack.c.h.b16 %v5590
      %v6567 = vunpack.c.l.b16 %v5591
      %v6568 = vunpack.c.h.b16 %v5591
      %v6569 = vunpack.c.l.b16 %v5592
      %v6570 = vunpack.c.h.b16 %v5592
      %v6571 = vunpack.c.l.b16 %v5593
      %v6572 = vunpack.c.h.b16 %v5593
      %v6573 = vunpack.c.l.b16 %v5594
      %v6574 = vunpack.c.h.b16 %v5594
      %v6575 = vunpack.c.l.b16 %v5595
      %v6576 = vunpack.c.l.b16 %v5596
      %v6577 = vunpack.c.h.b16 %v5596
      %v6578 = vunpack.c.l.b16 %v5597
      %v6579 = vunpack.c.h.b16 %v5597
      %v6580 = vunpack.c.l.b16 %v5598
      %v6581 = vunpack.c.h.b16 %v5598
      %v6582 = vunpack.c.l.b16 %v5599
      %v6583 = vunpack.c.h.b16 %v5599
      %v6584 = vunpack.c.l.b16 %v5600
      %v6585 = vunpack.c.h.b16 %v5600
      %v6586 = vunpack.c.l.b16 %v5601
      %v6587 = vunpack.c.h.b16 %v5601
      %v6588 = vunpack.c.l.b16 %v5602
      %v6589 = vunpack.c.h.b16 %v5602
      %v6590 = vunpack.c.l.b16 %v5603
      %v6591 = vunpack.c.h.b16 %v5603
      %v6592 = vunpack.c.l.b16 %v5604
      %v6593 = vunpack.c.h.b16 %v5604
      %v6594 = vunpack.c.l.b16 %v5605
      %v6595 = vunpack.c.h.b16 %v5605
      %v6596 = vunpack.c.l.b16 %v5606
      %v6597 = vunpack.c.h.b16 %v5606
      %v6598 = vunpack.c.l.b16 %v5607
      %v6599 = vunpack.c.h.b16 %v5607
      %v6600 = vunpack.c.l.b16 %v5608
      %v6601 = vunpack.c.l.b16 %v5609
      %v6602 = vunpack.c.h.b16 %v5609
      %v6603 = vunpack.c.l.b16 %v5610
      %v6604 = vunpack.c.h.b16 %v5610
      %v6605 = vunpack.c.l.b16 %v5611
      %v6606 = vunpack.c.h.b16 %v5611
      %v6607 = vunpack.c.l.b16 %v5612
      %v6608 = vunpack.c.h.b16 %v5612
      %v6609 = vunpack.c.l.b16 %v5613
      %v6610 = vunpack.c.h.b16 %v5613
      %v6611 = vunpack.c.l.b16 %v5614
      %v6612 = vunpack.c.h.b16 %v5614
      %v6613 = vunpack.c.l.b16 %v5615
      %v6614 = vunpack.c.h.b16 %v5615
      %v6615 = vunpack.c.l.b16 %v5616
      %v6616 = vunpack.c.h.b16 %v5616
      %v6617 = vunpack.c.l.b16 %v5617
      %v6618 = vunpack.c.h.b16 %v5617
      %v6619 = vunpack.c.l.b16 %v5618
      %v6620 = vunpack.c.h.b16 %v5618
      %v6621 = vunpack.c.l.b16 %v5619
      %v6622 = vunpack.c.h.b16 %v5619
      %v6623 = vunpack.c.l.b16 %v5620
      %v6624 = vunpack.c.h.b16 %v5620
      %v6625 = vunpack.c.l.b16 %v5621
      %v6626 = vunpack.c.l.b16 %v5622
      %v6627 = vunpack.c.h.b16 %v5622
      %v6628 = vunpack.c.l.b16 %v5623
      %v6629 = vunpack.c.h.b16 %v5623
      %v6630 = vunpack.c.l.b16 %v5624
      %v6631 = vunpack.c.h.b16 %v5624
      %v6632 = vunpack.c.l.b16 %v5625
      %v6633 = vunpack.c.h.b16 %v5625
      %v6634 = vunpack.c.l.b16 %v5626
      %v6635 = vunpack.c.h.b16 %v5626
      %v6636 = vunpack.c.l.b16 %v5627
      %v6637 = vunpack.c.h.b16 %v5627
      %v6638 = vunpack.c.l.b16 %v5628
      %v6639 = vunpack.c.h.b16 %v5628
      %v6640 = vunpack.c.l.b16 %v5629
      %v6641 = vunpack.c.h.b16 %v5629
      %v6642 = vunpack.c.l.b16 %v5630
      %v6643 = vunpack.c.h.b16 %v5630
      %v6644 = vunpack.c.l.b16 %v5631
      %v6645 = vunpack.c.h.b16 %v5631
      %v6646 = vunpack.c.l.b16 %v5632
      %v6647 = vunpack.c.h.b16 %v5632
      %v6648 = vunpack.c.l.b16 %v5633
      %v6649 = vunpack.c.h.b16 %v5633
      %v6650 = vunpack.c.l.b16 %v5634
      %v6651 = vunpack.c.l.b16 %v5635
      %v6652 = vunpack.c.h.b16 %v5635
      %v6653 = vunpack.c.l.b16 %v5636
      %v6654 = vunpack.c.h.b16 %v5636
      %v6655 = vunpack.c.l.b16 %v5637
      %v6656 = vunpack.c.h.b16 %v5637
      %v6657 = vunpack.c.l.b16 %v5638
      %v6658 = vunpack.c.h.b16 %v5638
      %v6659 = vunpack.c.l.b16 %v5639
      %v6660 = vunpack.c.h.b16 %v5639
      %v6661 = vunpack.c.l.b16 %v5640
      %v6662 = vunpack.c.h.b16 %v5640
      %v6663 = vunpack.c.l.b16 %v5641
      %v6664 = vunpack.c.h.b16 %v5641
      %v6665 = vunpack.c.l.b16 %v5642
      %v6666 = vunpack.c.h.b16 %v5642
      %v6667 = vunpack.c.l.b16 %v5643
      %v6668 = vunpack.c.h.b16 %v5643
      %v6669 = vunpack.c.l.b16 %v5644
      %v6670 = vunpack.c.h.b16 %v5644
      %v6671 = vunpack.c.l.b16 %v5645
      %v6672 = vunpack.c.h.b16 %v5645
      %v6673 = vunpack.c.l.b16 %v5646
      %v6674 = vunpack.c.h.b16 %v5646
      %v6675 = vunpack.c.l.b16 %v5647
      %v6676 = vunpack.c.l.b16 %v5648
      %v6677 = vunpack.c.h.b16 %v5648
      %v6678 = vunpack.c.l.b16 %v5649
      %v6679 = vunpack.c.h.b16 %v5649
      %v6680 = vunpack.c.l.b16 %v5650
      %v6681 = vunpack.c.h.b16 %v5650
      %v6682 = vunpack.c.l.b16 %v5651
      %v6683 = vunpack.c.h.b16 %v5651
      %v6684 = vunpack.c.l.b16 %v5652
      %v6685 = vunpack.c.h.b16 %v5652
      %v6686 = vunpack.c.l.b16 %v5653
      %v6687 = vunpack.c.h.b16 %v5653
      %v6688 = vunpack.c.l.b16 %v5654
      %v6689 = vunpack.c.h.b16 %v5654
      %v6690 = vunpack.c.l.b16 %v5655
      %v6691 = vunpack.c.h.b16 %v5655
      %v6692 = vunpack.c.l.b16 %v5656
      %v6693 = vunpack.c.h.b16 %v5656
      %v6694 = vunpack.c.l.b16 %v5657
      %v6695 = vunpack.c.h.b16 %v5657
      %v6696 = vunpack.c.l.b16 %v5658
      %v6697 = vunpack.c.h.b16 %v5658
      %v6698 = vunpack.c.l.b16 %v5659
      %v6699 = vunpack.c.h.b16 %v5659
      %v6700 = vunpack.c.l.b16 %v5660
      %v6701 = vunpack.c.l.b16 %v5661
      %v6702 = vunpack.c.h.b16 %v5661
      %v6703 = vunpack.c.l.b16 %v5662
      %v6704 = vunpack.c.h.b16 %v5662
      %v6705 = vunpack.c.l.b16 %v5663
      %v6706 = vunpack.c.h.b16 %v5663
      %v6707 = vunpack.c.l.b16 %v5664
      %v6708 = vunpack.c.h.b16 %v5664
      %v6709 = vunpack.c.l.b16 %v5665
      %v6710 = vunpack.c.h.b16 %v5665
      %v6711 = vunpack.c.l.b16 %v5666
      %v6712 = vunpack.c.h.b16 %v5666
      %v6713 = vunpack.c.l.b16 %v5667
      %v6714 = vunpack.c.h.b16 %v5667
      %v6715 = vunpack.c.l.b16 %v5668
      %v6716 = vunpack.c.h.b16 %v5668
      %v6717 = vunpack.c.l.b16 %v5669
      %v6718 = vunpack.c.h.b16 %v5669
      %v6719 = vunpack.c.l.b16 %v5670
      %v6720 = vunpack.c.h.b16 %v5670
      %v6721 = vunpack.c.l.b16 %v5671
      %v6722 = vunpack.c.h.b16 %v5671
      %v6723 = vunpack.c.l.b16 %v5672
      %v6724 = vunpack.c.h.b16 %v5672
      %v6725 = vunpack.c.l.b16 %v5673
      %v6726 = vpack.c.b16 %v6326, %v6301
      %v6727 = vpack.c.b16 %v6327, %v6302
      %v6728 = vpack.c.b16 %v6328, %v6303
      %v6729 = vpack.c.b16 %v6329, %v6304
      %v6730 = vpack.c.b16 %v6330, %v6305
      %v6731 = vpack.c.b16 %v6331, %v6306
      %v6732 = vpack.c.b16 %v6332, %v6307
      %v6733 = vpack.c.b16 %v6333, %v6308
      %v6734 = vpack.c.b16 %v6334, %v6309
      %v6735 = vpack.c.b16 %v6335, %v6310
      %v6736 = vpack.c.b16 %v6336, %v6311
      %v6737 = vpack.c.b16 %v6337, %v6312
      %v6738 = vpack.c.b16 %v6338, %v6313
      %v6739 = vpack.c.b16 %v6339, %v6314
      %v6740 = vpack.c.b16 %v6340, %v6315
      %v6741 = vpack.c.b16 %v6341, %v6316
      %v6742 = vpack.c.b16 %v6342, %v6317
      %v6743 = vpack.c.b16 %v6343, %v6318
      %v6744 = vpack.c.b16 %v6344, %v6319
      %v6745 = vpack.c.b16 %v6345, %v6320
      %v6746 = vpack.c.b16 %v6346, %v6321
      %v6747 = vpack.c.b16 %v6347, %v6322
      %v6748 = vpack.c.b16 %v6348, %v6323
      %v6749 = vpack.c.b16 %v6349, %v6324
      %v6750 = vpack.c.b16 %v6350, %v6325
      %v6751 = vpack.c.b16 %v6376, %v6351
      %v6752 = vpack.c.b16 %v6377, %v6352
      %v6753 = vpack.c.b16 %v6378, %v6353
      %v6754 = vpack.c.b16 %v6379, %v6354
      %v6755 = vpack.c.b16 %v6380, %v6355
      %v6756 = vpack.c.b16 %v6381, %v6356
      %v6757 = vpack.c.b16 %v6382, %v6357
      %v6758 = vpack.c.b16 %v6383, %v6358
      %v6759 = vpack.c.b16 %v6384, %v6359
      %v6760 = vpack.c.b16 %v6385, %v6360
      %v6761 = vpack.c.b16 %v6386, %v6361
      %v6762 = vpack.c.b16 %v6387, %v6362
      %v6763 = vpack.c.b16 %v6388, %v6363
      %v6764 = vpack.c.b16 %v6389, %v6364
      %v6765 = vpack.c.b16 %v6390, %v6365
      %v6766 = vpack.c.b16 %v6391, %v6366
      %v6767 = vpack.c.b16 %v6392, %v6367
      %v6768 = vpack.c.b16 %v6393, %v6368
      %v6769 = vpack.c.b16 %v6394, %v6369
      %v6770 = vpack.c.b16 %v6395, %v6370
      %v6771 = vpack.c.b16 %v6396, %v6371
      %v6772 = vpack.c.b16 %v6397, %v6372
      %v6773 = vpack.c.b16 %v6398, %v6373
      %v6774 = vpack.c.b16 %v6399, %v6374
      %v6775 = vpack.c.b16 %v6400, %v6375
      %v6776 = vpack.c.b16 %v6426, %v6401
      %v6777 = vpack.c.b16 %v6427, %v6402
      %v6778 = vpack.c.b16 %v6428, %v6403
      %v6779 = vpack.c.b16 %v6429, %v6404
      %v6780 = vpack.c.b16 %v6430, %v6405
      %v6781 = vpack.c.b16 %v6431, %v6406
      %v6782 = vpack.c.b16 %v6432, %v6407
      %v6783 = vpack.c.b16 %v6433, %v6408
      %v6784 = vpack.c.b16 %v6434, %v6409
      %v6785 = vpack.c.b16 %v6435, %v6410
      %v6786 = vpack.c.b16 %v6436, %v6411
      %v6787 = vpack.c.b16 %v6437, %v6412
      %v6788 = vpack.c.b16 %v6438, %v6413
      %v6789 = vpack.c.b16 %v6439, %v6414
      %v6790 = vpack.c.b16 %v6440, %v6415
      %v6791 = vpack.c.b16 %v6441, %v6416
      %v6792 = vpack.c.b16 %v6442, %v6417
      %v6793 = vpack.c.b16 %v6443, %v6418
      %v6794 = vpack.c.b16 %v6444, %v6419
      %v6795 = vpack.c.b16 %v6445, %v6420
      %v6796 = vpack.c.b16 %v6446, %v6421
      %v6797 = vpack.c.b16 %v6447, %v6422
      %v6798 = vpack.c.b16 %v6448, %v6423
      %v6799 = vpack.c.b16 %v6449, %v6424
      %v6800 = vpack.c.b16 %v6450, %v6425
      %v6801 = vpack.c.b16 %v6476, %v6451
      %v6802 = vpack.c.b16 %v6477, %v6452
      %v6803 = vpack.c.b16 %v6478, %v6453
      %v6804 = vpack.c.b16 %v6479, %v6454
      %v6805 = vpack.c.b16 %v6480, %v6455
      %v6806 = vpack.c.b16 %v6481, %v6456
      %v6807 = vpack.c.b16 %v6482, %v6457
      %v6808 = vpack.c.b16 %v6483, %v6458
      %v6809 = vpack.c.b16 %v6484, %v6459
      %v6810 = vpack.c.b16 %v6485, %v6460
      %v6811 = vpack.c.b16 %v6486, %v6461
      %v6812 = vpack.c.b16 %v6487, %v6462
      %v6813 = vpack.c.b16 %v6488, %v6463
      %v6814 = vpack.c.b16 %v6489, %v6464
      %v6815 = vpack.c.b16 %v6490, %v6465
      %v6816 = vpack.c.b16 %v6491, %v6466
      %v6817 = vpack.c.b16 %v6492, %v6467
      %v6818 = vpack.c.b16 %v6493, %v6468
      %v6819 = vpack.c.b16 %v6494, %v6469
      %v6820 = vpack.c.b16 %v6495, %v6470
      %v6821 = vpack.c.b16 %v6496, %v6471
      %v6822 = vpack.c.b16 %v6497, %v6472
      %v6823 = vpack.c.b16 %v6498, %v6473
      %v6824 = vpack.c.b16 %v6499, %v6474
      %v6825 = vpack.c.b16 %v6500, %v6475
      %v6826 = vpack.c.b16 %v6526, %v6501
      %v6827 = vpack.c.b16 %v6527, %v6502
      %v6828 = vpack.c.b16 %v6528, %v6503
      %v6829 = vpack.c.b16 %v6529, %v6504
      %v6830 = vpack.c.b16 %v6530, %v6505
      %v6831 = vpack.c.b16 %v6531, %v6506
      %v6832 = vpack.c.b16 %v6532, %v6507
      %v6833 = vpack.c.b16 %v6533, %v6508
      %v6834 = vpack.c.b16 %v6534, %v6509
      %v6835 = vpack.c.b16 %v6535, %v6510
      %v6836 = vpack.c.b16 %v6536, %v6511
      %v6837 = vpack.c.b16 %v6537, %v6512
      %v6838 = vpack.c.b16 %v6538, %v6513
      %v6839 = vpack.c.b16 %v6539, %v6514
      %v6840 = vpack.c.b16 %v6540, %v6515
      %v6841 = vpack.c.b16 %v6541, %v6516
      %v6842 = vpack.c.b16 %v6542, %v6517
      %v6843 = vpack.c.b16 %v6543, %v6518
      %v6844 = vpack.c.b16 %v6544, %v6519
      %v6845 = vpack.c.b16 %v6545, %v6520
      %v6846 = vpack.c.b16 %v6546, %v6521
      %v6847 = vpack.c.b16 %v6547, %v6522
      %v6848 = vpack.c.b16 %v6548, %v6523
      %v6849 = vpack.c.b16 %v6549, %v6524
      %v6850 = vpack.c.b16 %v6550, %v6525
      %v6851 = vpack.c.b16 %v6576, %v6551
      %v6852 = vpack.c.b16 %v6577, %v6552
      %v6853 = vpack.c.b16 %v6578, %v6553
      %v6854 = vpack.c.b16 %v6579, %v6554
      %v6855 = vpack.c.b16 %v6580, %v6555
      %v6856 = vpack.c.b16 %v6581, %v6556
      %v6857 = vpack.c.b16 %v6582, %v6557
      %v6858 = vpack.c.b16 %v6583, %v6558
      %v6859 = vpack.c.b16 %v6584, %v6559
      %v6860 = vpack.c.b16 %v6585, %v6560
      %v6861 = vpack.c.b16 %v6586, %v6561
      %v6862 = vpack.c.b16 %v6587, %v6562
      %v6863 = vpack.c.b16 %v6588, %v6563
      %v6864 = vpack.c.b16 %v6589, %v6564
      %v6865 = vpack.c.b16 %v6590, %v6565
      %v6866 = vpack.c.b16 %v6591, %v6566
      %v6867 = vpack.c.b16 %v6592, %v6567
      %v6868 = vpack.c.b16 %v6593, %v6568
      %v6869 = vpack.c.b16 %v6594, %v6569
      %v6870 = vpack.c.b16 %v6595, %v6570
      %v6871 = vpack.c.b16 %v6596, %v6571
      %v6872 = vpack.c.b16 %v6597, %v6572
      %v6873 = vpack.c.b16 %v6598, %v6573
      %v6874 = vpack.c.b16 %v6599, %v6574
      %v6875 = vpack.c.b16 %v6600, %v6575
      %v6876 = vpack.c.b16 %v6626, %v6601
      %v6877 = vpack.c.b16 %v6627, %v6602
      %v6878 = vpack.c.b16 %v6628, %v6603
      %v6879 = vpack.c.b16 %v6629, %v6604
      %v6880 = vpack.c.b16 %v6630, %v6605
      %v6881 = vpack.c.b16 %v6631, %v6606
      %v6882 = vpack.c.b16 %v6632, %v6607
      %v6883 = vpack.c.b16 %v6633, %v6608
      %v6884 = vpack.c.b16 %v6634, %v6609
      %v6885 = vpack.c.b16 %v6635, %v6610
      %v6886 = vpack.c.b16 %v6636, %v6611
      %v6887 = vpack.c.b16 %v6637, %v6612
      %v6888 = vpack.c.b16 %v6638, %v6613
      %v6889 = vpack.c.b16 %v6639, %v6614
      %v6890 = vpack.c.b16 %v6640, %v6615
      %v6891 = vpack.c.b16 %v6641, %v6616
      %v6892 = vpack.c.b16 %v6642, %v6617
      %v6893 = vpack.c.b16 %v6643, %v6618
      %v6894 = vpack.c.b16 %v6644, %v6619
      %v6895 = vpack.c.b16 %v6645, %v6620
      %v6896 = vpack.c.b16 %v6646, %v6621
      %v6897 = vpack.c.b16 %v6647, %v6622
      %v6898 = vpack.c.b16 %v6648, %v6623
      %v6899 = vpack.c.b16 %v6649, %v6624
      %v6900 = vpack.c.b16 %v6650, %v6625
      %v6901 = vpack.c.b16 %v6676, %v6651
      %v6902 = vpack.c.b16 %v6677, %v6652
      %v6903 = vpack.c.b16 %v6678, %v6653
      %v6904 = vpack.c.b16 %v6679, %v6654
      %v6905 = vpack.c.b16 %v6680, %v6655
      %v6906 = vpack.c.b16 %v6681, %v6656
      %v6907 = vpack.c.b16 %v6682, %v6657
      %v6908 = vpack.c.b16 %v6683, %v6658
      %v6909 = vpack.c.b16 %v6684, %v6659
      %v6910 = vpack.c.b16 %v6685, %v6660
      %v6911 = vpack.c.b16 %v6686, %v6661
      %v6912 = vpack.c.b16 %v6687, %v6662
      %v6913 = vpack.c.b16 %v6688, %v6663
      %v6914 = vpack.c.b16 %v6689, %v6664
      %v6915 = vpack.c.b16 %v6690, %v6665
      %v6916 = vpack.c.b16 %v6691, %v6666
      %v6917 = vpack.c.b16 %v6692, %v6667
      %v6918 = vpack.c.b16 %v6693, %v6668
      %v6919 = vpack.c.b16 %v6694, %v6669
      %v6920 = vpack.c.b16 %v6695, %v6670
      %v6921 = vpack.c.b16 %v6696, %v6671
      %v6922 = vpack.c.b16 %v6697, %v6672
      %v6923 = vpack.c.b16 %v6698, %v6673
      %v6924 = vpack.c.b16 %v6699, %v6674
      %v6925 = vpack.c.b16 %v6700, %v6675
      %v6926 = vpack.c.b16 %v6701, %v6701
      %v6927 = vpack.c.b16 %v6702, %v6702
      %v6928 = vpack.c.b16 %v6703, %v6703
      %v6929 = vpack.c.b16 %v6704, %v6704
      %v6930 = vpack.c.b16 %v6705, %v6705
      %v6931 = vpack.c.b16 %v6706, %v6706
      %v6932 = vpack.c.b16 %v6707, %v6707
      %v6933 = vpack.c.b16 %v6708, %v6708
      %v6934 = vpack.c.b16 %v6709, %v6709
      %v6935 = vpack.c.b16 %v6710, %v6710
      %v6936 = vpack.c.b16 %v6711, %v6711
      %v6937 = vpack.c.b16 %v6712, %v6712
      %v6938 = vpack.c.b16 %v6713, %v6713
      %v6939 = vpack.c.b16 %v6714, %v6714
      %v6940 = vpack.c.b16 %v6715, %v6715
      %v6941 = vpack.c.b16 %v6716, %v6716
      %v6942 = vpack.c.b16 %v6717, %v6717
      %v6943 = vpack.c.b16 %v6718, %v6718
      %v6944 = vpack.c.b16 %v6719, %v6719
      %v6945 = vpack.c.b16 %v6720, %v6720
      %v6946 = vpack.c.b16 %v6721, %v6721
      %v6947 = vpack.c.b16 %v6722, %v6722
      %v6948 = vpack.c.b16 %v6723, %v6723
      %v6949 = vpack.c.b16 %v6724, %v6724
      %v6950 = vpack.c.b16 %v6725, %v6725
      %v7576 = vunpack.c.l.b16 %v5674
      %v7577 = vunpack.c.l.b16 %v5675
      %v7578 = vunpack.c.l.b16 %v5676
      %v7579 = vunpack.c.l.b16 %v5677
      %v7580 = vunpack.c.l.b16 %v5678
      %v7581 = vunpack.c.l.b16 %v5679
      %v7582 = vunpack.c.l.b16 %v5680
      %v7583 = vunpack.c.l.b16 %v5681
      %v7584 = vunpack.c.l.b16 %v5682
      %v7585 = vunpack.c.l.b16 %v5683
      %v7586 = vunpack.c.l.b16 %v5684
      %v7587 = vunpack.c.l.b16 %v5685
      %v7588 = vunpack.c.l.b16 %v5686
      %v7589 = vunpack.c.l.b16 %v5687
      %v7590 = vunpack.c.l.b16 %v5688
      %v7591 = vunpack.c.l.b16 %v5689
      %v7592 = vunpack.c.l.b16 %v5690
      %v7593 = vunpack.c.l.b16 %v5691
      %v7594 = vunpack.c.l.b16 %v5692
      %v7595 = vunpack.c.l.b16 %v5693
      %v7596 = vunpack.c.l.b16 %v5694
      %v7597 = vunpack.c.l.b16 %v5695
      %v7598 = vunpack.c.l.b16 %v5696
      %v7599 = vunpack.c.l.b16 %v5697
      %v7600 = vunpack.c.l.b16 %v5698
      %v7601 = vunpack.c.l.b16 %v5699
      %v7602 = vunpack.c.l.b16 %v5700
      %v7603 = vunpack.c.l.b16 %v5701
      %v7604 = vunpack.c.l.b16 %v5702
      %v7605 = vunpack.c.l.b16 %v5703
      %v7606 = vunpack.c.l.b16 %v5704
      %v7607 = vunpack.c.l.b16 %v5705
      %v7608 = vunpack.c.l.b16 %v5706
      %v7609 = vunpack.c.l.b16 %v5707
      %v7610 = vunpack.c.l.b16 %v5708
      %v7611 = vunpack.c.l.b16 %v5709
      %v7612 = vunpack.c.l.b16 %v5710
      %v7613 = vunpack.c.l.b16 %v5711
      %v7614 = vunpack.c.l.b16 %v5712
      %v7615 = vunpack.c.l.b16 %v5713
      %v7616 = vunpack.c.l.b16 %v5714
      %v7617 = vunpack.c.l.b16 %v5715
      %v7618 = vunpack.c.l.b16 %v5716
      %v7619 = vunpack.c.l.b16 %v5717
      %v7620 = vunpack.c.l.b16 %v5718
      %v7621 = vunpack.c.l.b16 %v5719
      %v7622 = vunpack.c.l.b16 %v5720
      %v7623 = vunpack.c.l.b16 %v5721
      %v7624 = vunpack.c.l.b16 %v5722
      %v7625 = vunpack.c.l.b16 %v5723
      %v7626 = vunpack.c.l.b16 %v5724
      %v7627 = vunpack.c.l.b16 %v5725
      %v7628 = vunpack.c.l.b16 %v5726
      %v7629 = vunpack.c.l.b16 %v5727
      %v7630 = vunpack.c.l.b16 %v5728
      %v7631 = vunpack.c.l.b16 %v5729
      %v7632 = vunpack.c.l.b16 %v5730
      %v7633 = vunpack.c.l.b16 %v5731
      %v7634 = vunpack.c.l.b16 %v5732
      %v7635 = vunpack.c.l.b16 %v5733
      %v7636 = vunpack.c.l.b16 %v5734
      %v7637 = vunpack.c.l.b16 %v5735
      %v7638 = vunpack.c.l.b16 %v5736
      %v7639 = vunpack.c.l.b16 %v5737
      %v7640 = vunpack.c.l.b16 %v5738
      %v7641 = vunpack.c.l.b16 %v5739
      %v7642 = vunpack.c.l.b16 %v5740
      %v7643 = vunpack.c.l.b16 %v5741
      %v7644 = vunpack.c.l.b16 %v5742
      %v7645 = vunpack.c.l.b16 %v5743
      %v7646 = vunpack.c.l.b16 %v5744
      %v7647 = vunpack.c.l.b16 %v5745
      %v7648 = vunpack.c.l.b16 %v5746
      %v7649 = vunpack.c.l.b16 %v5747
      %v7650 = vunpack.c.l.b16 %v5748
      %v7651 = vunpack.c.l.b16 %v5749
      %v7652 = vunpack.c.l.b16 %v5750
      %v7653 = vunpack.c.l.b16 %v5751
      %v7654 = vunpack.c.l.b16 %v5752
      %v7655 = vunpack.c.l.b16 %v5753
      %v7656 = vunpack.c.l.b16 %v5754
      %v7657 = vunpack.c.l.b16 %v5755
      %v7658 = vunpack.c.l.b16 %v5756
      %v7659 = vunpack.c.l.b16 %v5757
      %v7660 = vunpack.c.l.b16 %v5758
      %v7661 = vunpack.c.l.b16 %v5759
      %v7662 = vunpack.c.l.b16 %v5760
      %v7663 = vunpack.c.l.b16 %v5761
      %v7664 = vunpack.c.l.b16 %v5762
      %v7665 = vunpack.c.l.b16 %v5763
      %v7666 = vunpack.c.l.b16 %v5764
      %v7667 = vunpack.c.l.b16 %v5765
      %v7668 = vunpack.c.l.b16 %v5766
      %v7669 = vunpack.c.l.b16 %v5767
      %v7670 = vunpack.c.l.b16 %v5768
      %v7671 = vunpack.c.l.b16 %v5769
      %v7672 = vunpack.c.l.b16 %v5770
      %v7673 = vunpack.c.l.b16 %v5771
      %v7674 = vunpack.c.l.b16 %v5772
      %v7675 = vunpack.c.l.b16 %v5773
      %v7676 = vunpack.c.l.b16 %v5774
      %v7677 = vunpack.c.l.b16 %v5775
      %v7678 = vunpack.c.l.b16 %v5776
      %v7679 = vunpack.c.l.b16 %v5777
      %v7680 = vunpack.c.l.b16 %v5778
      %v7681 = vunpack.c.l.b16 %v5779
      %v7682 = vunpack.c.l.b16 %v5780
      %v7683 = vunpack.c.l.b16 %v5781
      %v7684 = vunpack.c.l.b16 %v5782
      %v7685 = vunpack.c.l.b16 %v5783
      %v7686 = vunpack.c.l.b16 %v5784
      %v7687 = vunpack.c.l.b16 %v5785
      %v7688 = vunpack.c.l.b16 %v5786
      %v7689 = vunpack.c.l.b16 %v5787
      %v7690 = vunpack.c.l.b16 %v5788
      %v7691 = vunpack.c.l.b16 %v5789
      %v7692 = vunpack.c.l.b16 %v5790
      %v7693 = vunpack.c.l.b16 %v5791
      %v7694 = vunpack.c.l.b16 %v5792
      %v7695 = vunpack.c.l.b16 %v5793
      %v7696 = vunpack.c.l.b16 %v5794
      %v7697 = vunpack.c.l.b16 %v5795
      %v7698 = vunpack.c.l.b16 %v5796
      %v7699 = vunpack.c.l.b16 %v5797
      %v7700 = vunpack.c.l.b16 %v5798
      %v7701 = vunpack.c.l.b16 %v5799
      %v7702 = vunpack.c.l.b16 %v5800
      %v7703 = vunpack.c.l.b16 %v5801
      %v7704 = vunpack.c.l.b16 %v5802
      %v7705 = vunpack.c.l.b16 %v5803
      %v7706 = vunpack.c.l.b16 %v5804
      %v7707 = vunpack.c.l.b16 %v5805
      %v7708 = vunpack.c.l.b16 %v5806
      %v7709 = vunpack.c.l.b16 %v5807
      %v7710 = vunpack.c.l.b16 %v5808
      %v7711 = vunpack.c.l.b16 %v5809
      %v7712 = vunpack.c.l.b16 %v5810
      %v7713 = vunpack.c.l.b16 %v5811
      %v7714 = vunpack.c.l.b16 %v5812
      %v7715 = vunpack.c.l.b16 %v5813
      %v7716 = vunpack.c.l.b16 %v5814
      %v7717 = vunpack.c.l.b16 %v5815
      %v7718 = vunpack.c.l.b16 %v5816
      %v7719 = vunpack.c.l.b16 %v5817
      %v7720 = vunpack.c.l.b16 %v5818
      %v7721 = vunpack.c.l.b16 %v5819
      %v7722 = vunpack.c.l.b16 %v5820
      %v7723 = vunpack.c.l.b16 %v5821
      %v7724 = vunpack.c.l.b16 %v5822
      %v7725 = vunpack.c.l.b16 %v5823
      %v7726 = vunpack.c.l.b16 %v5824
      %v7727 = vunpack.c.l.b16 %v5825
      %v7728 = vunpack.c.l.b16 %v5826
      %v7729 = vunpack.c.l.b16 %v5827
      %v7730 = vunpack.c.l.b16 %v5828
      %v7731 = vunpack.c.l.b16 %v5829
      %v7732 = vunpack.c.l.b16 %v5830
      %v7733 = vunpack.c.l.b16 %v5831
      %v7734 = vunpack.c.l.b16 %v5832
      %v7735 = vunpack.c.l.b16 %v5833
      %v7736 = vunpack.c.l.b16 %v5834
      %v7737 = vunpack.c.l.b16 %v5835
      %v7738 = vunpack.c.l.b16 %v5836
      %v7739 = vunpack.c.l.b16 %v5837
      %v7740 = vunpack.c.l.b16 %v5838
      %v7741 = vunpack.c.l.b16 %v5839
      %v7742 = vunpack.c.l.b16 %v5840
      %v7743 = vunpack.c.l.b16 %v5841
      %v7744 = vunpack.c.l.b16 %v5842
      %v7745 = vunpack.c.l.b16 %v5843
      %v7746 = vunpack.c.l.b16 %v5844
      %v7747 = vunpack.c.l.b16 %v5845
      %v7748 = vunpack.c.l.b16 %v5846
      %v7749 = vunpack.c.l.b16 %v5847
      %v7750 = vunpack.c.l.b16 %v5848
      %v7751 = vunpack.c.l.b16 %v5849
      %v7752 = vunpack.c.l.b16 %v5850
      %v7753 = vunpack.c.l.b16 %v5851
      %v7754 = vunpack.c.l.b16 %v5852
      %v7755 = vunpack.c.l.b16 %v5853
      %v7756 = vunpack.c.l.b16 %v5854
      %v7757 = vunpack.c.l.b16 %v5855
      %v7758 = vunpack.c.l.b16 %v5856
      %v7759 = vunpack.c.l.b16 %v5857
      %v7760 = vunpack.c.l.b16 %v5858
      %v7761 = vunpack.c.l.b16 %v5859
      %v7762 = vunpack.c.l.b16 %v5860
      %v7763 = vunpack.c.l.b16 %v5861
      %v7764 = vunpack.c.l.b16 %v5862
      %v7765 = vunpack.c.l.b16 %v5863
      %v7766 = vunpack.c.l.b16 %v5864
      %v7767 = vunpack.c.l.b16 %v5865
      %v7768 = vunpack.c.l.b16 %v5866
      %v7769 = vunpack.c.l.b16 %v5867
      %v7770 = vunpack.c.l.b16 %v5868
      %v7771 = vunpack.c.l.b16 %v5869
      %v7772 = vunpack.c.l.b16 %v5870
      %v7773 = vunpack.c.l.b16 %v5871
      %v7774 = vunpack.c.l.b16 %v5872
      %v7775 = vunpack.c.l.b16 %v5873
      %v7776 = vunpack.c.l.b16 %v5874
      %v7777 = vunpack.c.l.b16 %v5875
      %v7778 = vunpack.c.l.b16 %v5876
      %v7779 = vunpack.c.l.b16 %v5877
      %v7780 = vunpack.c.l.b16 %v5878
      %v7781 = vunpack.c.l.b16 %v5879
      %v7782 = vunpack.c.l.b16 %v5880
      %v7783 = vunpack.c.l.b16 %v5881
      %v7784 = vunpack.c.l.b16 %v5882
      %v7785 = vunpack.c.l.b16 %v5883
      %v7786 = vunpack.c.l.b16 %v5884
      %v7787 = vunpack.c.l.b16 %v5885
      %v7788 = vunpack.c.l.b16 %v5886
      %v7789 = vunpack.c.l.b16 %v5887
      %v7790 = vunpack.c.l.b16 %v5888
      %v7791 = vunpack.c.l.b16 %v5889
      %v7792 = vunpack.c.l.b16 %v5890
      %v7793 = vunpack.c.l.b16 %v5891
      %v7794 = vunpack.c.l.b16 %v5892
      %v7795 = vunpack.c.l.b16 %v5893
      %v7796 = vunpack.c.l.b16 %v5894
      %v7797 = vunpack.c.l.b16 %v5895
      %v7798 = vunpack.c.l.b16 %v5896
      %v7799 = vunpack.c.l.b16 %v5897
      %v7800 = vunpack.c.l.b16 %v5898
      %v7801 = vunpack.c.l.b16 %v5899
      %v7802 = vunpack.c.l.b16 %v5900
      %v7803 = vunpack.c.l.b16 %v5901
      %v7804 = vunpack.c.l.b16 %v5902
      %v7805 = vunpack.c.l.b16 %v5903
      %v7806 = vunpack.c.l.b16 %v5904
      %v7807 = vunpack.c.l.b16 %v5905
      %v7808 = vunpack.c.l.b16 %v5906
      %v7809 = vunpack.c.l.b16 %v5907
      %v7810 = vunpack.c.l.b16 %v5908
      %v7811 = vunpack.c.l.b16 %v5909
      %v7812 = vunpack.c.l.b16 %v5910
      %v7813 = vunpack.c.l.b16 %v5911
      %v7814 = vunpack.c.l.b16 %v5912
      %v7815 = vunpack.c.l.b16 %v5913
      %v7816 = vunpack.c.l.b16 %v5914
      %v7817 = vunpack.c.l.b16 %v5915
      %v7818 = vunpack.c.l.b16 %v5916
      %v7819 = vunpack.c.l.b16 %v5917
      %v7820 = vunpack.c.l.b16 %v5918
      %v7821 = vunpack.c.l.b16 %v5919
      %v7822 = vunpack.c.l.b16 %v5920
      %v7823 = vunpack.c.l.b16 %v5921
      %v7824 = vunpack.c.l.b16 %v5922
      %v7825 = vunpack.c.l.b16 %v5923
      %v7826 = vunpack.c.l.b16 %v5924
      %v7827 = vunpack.c.l.b16 %v5925
      %v7828 = vunpack.c.l.b16 %v5926
      %v7829 = vunpack.c.l.b16 %v5927
      %v7830 = vunpack.c.l.b16 %v5928
      %v7831 = vunpack.c.l.b16 %v5929
      %v7832 = vunpack.c.l.b16 %v5930
      %v7833 = vunpack.c.l.b16 %v5931
      %v7834 = vunpack.c.l.b16 %v5932
      %v7835 = vunpack.c.l.b16 %v5933
      %v7836 = vunpack.c.l.b16 %v5934
      %v7837 = vunpack.c.l.b16 %v5935
      %v7838 = vunpack.c.l.b16 %v5936
      %v7839 = vunpack.c.l.b16 %v5937
      %v7840 = vunpack.c.l.b16 %v5938
      %v7841 = vunpack.c.l.b16 %v5939
      %v7842 = vunpack.c.l.b16 %v5940
      %v7843 = vunpack.c.l.b16 %v5941
      %v7844 = vunpack.c.l.b16 %v5942
      %v7845 = vunpack.c.l.b16 %v5943
      %v7846 = vunpack.c.l.b16 %v5944
      %v7847 = vunpack.c.l.b16 %v5945
      %v7848 = vunpack.c.l.b16 %v5946
      %v7849 = vunpack.c.l.b16 %v5947
      %v7850 = vunpack.c.l.b16 %v5948
      %v7851 = vunpack.c.l.b16 %v5949
      %v7852 = vunpack.c.l.b16 %v5950
      %v7853 = vunpack.c.l.b16 %v5951
      %v7854 = vunpack.c.l.b16 %v5952
      %v7855 = vunpack.c.l.b16 %v5953
      %v7856 = vunpack.c.l.b16 %v5954
      %v7857 = vunpack.c.l.b16 %v5955
      %v7858 = vunpack.c.l.b16 %v5956
      %v7859 = vunpack.c.l.b16 %v5957
      %v7860 = vunpack.c.l.b16 %v5958
      %v7861 = vunpack.c.l.b16 %v5959
      %v7862 = vunpack.c.l.b16 %v5960
      %v7863 = vunpack.c.l.b16 %v5961
      %v7864 = vunpack.c.l.b16 %v5962
      %v7865 = vunpack.c.l.b16 %v5963
      %v7866 = vunpack.c.l.b16 %v5964
      %v7867 = vunpack.c.l.b16 %v5965
      %v7868 = vunpack.c.l.b16 %v5966
      %v7869 = vunpack.c.l.b16 %v5967
      %v7870 = vunpack.c.l.b16 %v5968
      %v7871 = vunpack.c.l.b16 %v5969
      %v7872 = vunpack.c.l.b16 %v5970
      %v7873 = vunpack.c.l.b16 %v5971
      %v7874 = vunpack.c.l.b16 %v5972
      %v7875 = vunpack.c.l.b16 %v5973
      %v7876 = vunpack.c.l.b16 %v5974
      %v7877 = vunpack.c.l.b16 %v5975
      %v7878 = vunpack.c.l.b16 %v5976
      %v7879 = vunpack.c.l.b16 %v5977
      %v7880 = vunpack.c.l.b16 %v5978
      %v7881 = vunpack.c.l.b16 %v5979
      %v7882 = vunpack.c.l.b16 %v5980
      %v7883 = vunpack.c.l.b16 %v5981
      %v7884 = vunpack.c.l.b16 %v5982
      %v7885 = vunpack.c.l.b16 %v5983
      %v7886 = vunpack.c.l.b16 %v5984
      %v7887 = vunpack.c.l.b16 %v5985
      %v7888 = vunpack.c.l.b16 %v5986
      %v7889 = vunpack.c.l.b16 %v5987
      %v7890 = vunpack.c.l.b16 %v5988
      %v7891 = vunpack.c.l.b16 %v5989
      %v7892 = vunpack.c.l.b16 %v5990
      %v7893 = vunpack.c.l.b16 %v5991
      %v7894 = vunpack.c.l.b16 %v5992
      %v7895 = vunpack.c.l.b16 %v5993
      %v7896 = vunpack.c.l.b16 %v5994
      %v7897 = vunpack.c.l.b16 %v5995
      %v7898 = vunpack.c.l.b16 %v5996
      %v7899 = vunpack.c.l.b16 %v5997
      %v7900 = vunpack.c.l.b16 %v5998
      %v7901 = vunpack.c.l.b16 %v5999
      %v7902 = vunpack.c.l.b16 %v6000
      %v7903 = vunpack.c.l.b16 %v6001
      %v7904 = vunpack.c.l.b16 %v6002
      %v7905 = vunpack.c.l.b16 %v6003
      %v7906 = vunpack.c.l.b16 %v6004
      %v7907 = vunpack.c.l.b16 %v6005
      %v7908 = vunpack.c.l.b16 %v6006
      %v7909 = vunpack.c.l.b16 %v6007
      %v7910 = vunpack.c.l.b16 %v6008
      %v7911 = vunpack.c.l.b16 %v6009
      %v7912 = vunpack.c.l.b16 %v6010
      %v7913 = vunpack.c.l.b16 %v6011
      %v7914 = vunpack.c.l.b16 %v6012
      %v7915 = vunpack.c.l.b16 %v6013
      %v7916 = vunpack.c.l.b16 %v6014
      %v7917 = vunpack.c.l.b16 %v6015
      %v7918 = vunpack.c.l.b16 %v6016
      %v7919 = vunpack.c.l.b16 %v6017
      %v7920 = vunpack.c.l.b16 %v6018
      %v7921 = vunpack.c.l.b16 %v6019
      %v7922 = vunpack.c.l.b16 %v6020
      %v7923 = vunpack.c.l.b16 %v6021
      %v7924 = vunpack.c.l.b16 %v6022
      %v7925 = vunpack.c.l.b16 %v6023
      %v7926 = vunpack.c.l.b16 %v6024
      %v7927 = vunpack.c.l.b16 %v6025
      %v7928 = vunpack.c.l.b16 %v6026
      %v7929 = vunpack.c.l.b16 %v6027
      %v7930 = vunpack.c.l.b16 %v6028
      %v7931 = vunpack.c.l.b16 %v6029
      %v7932 = vunpack.c.l.b16 %v6030
      %v7933 = vunpack.c.l.b16 %v6031
      %v7934 = vunpack.c.l.b16 %v6032
      %v7935 = vunpack.c.l.b16 %v6033
      %v7936 = vunpack.c.l.b16 %v6034
      %v7937 = vunpack.c.l.b16 %v6035
      %v7938 = vunpack.c.l.b16 %v6036
      %v7939 = vunpack.c.l.b16 %v6037
      %v7940 = vunpack.c.l.b16 %v6038
      %v7941 = vunpack.c.l.b16 %v6039
      %v7942 = vunpack.c.l.b16 %v6040
      %v7943 = vunpack.c.l.b16 %v6041
      %v7944 = vunpack.c.l.b16 %v6042
      %v7945 = vunpack.c.l.b16 %v6043
      %v7946 = vunpack.c.l.b16 %v6044
      %v7947 = vunpack.c.l.b16 %v6045
      %v7948 = vunpack.c.l.b16 %v6046
      %v7949 = vunpack.c.l.b16 %v6047
      %v7950 = vunpack.c.l.b16 %v6048
      %v7951 = vunpack.c.l.b16 %v6049
      %v7952 = vunpack.c.l.b16 %v6050
      %v7953 = vunpack.c.l.b16 %v6051
      %v7954 = vunpack.c.l.b16 %v6052
      %v7955 = vunpack.c.l.b16 %v6053
      %v7956 = vunpack.c.l.b16 %v6054
      %v7957 = vunpack.c.l.b16 %v6055
      %v7958 = vunpack.c.l.b16 %v6056
      %v7959 = vunpack.c.l.b16 %v6057
      %v7960 = vunpack.c.l.b16 %v6058
      %v7961 = vunpack.c.l.b16 %v6059
      %v7962 = vunpack.c.l.b16 %v6060
      %v7963 = vunpack.c.l.b16 %v6061
      %v7964 = vunpack.c.l.b16 %v6062
      %v7965 = vunpack.c.l.b16 %v6063
      %v7966 = vunpack.c.l.b16 %v6064
      %v7967 = vunpack.c.l.b16 %v6065
      %v7968 = vunpack.c.l.b16 %v6066
      %v7969 = vunpack.c.l.b16 %v6067
      %v7970 = vunpack.c.l.b16 %v6068
      %v7971 = vunpack.c.l.b16 %v6069
      %v7972 = vunpack.c.l.b16 %v6070
      %v7973 = vunpack.c.l.b16 %v6071
      %v7974 = vunpack.c.l.b16 %v6072
      %v7975 = vunpack.c.l.b16 %v6073
      %v7976 = vpack.c.b16 %v7577, %v7576
      %v7977 = vpack.c.b16 %v7579, %v7578
      %v7978 = vpack.c.b16 %v7581, %v7580
      %v7979 = vpack.c.b16 %v7583, %v7582
      %v7980 = vpack.c.b16 %v7585, %v7584
      %v7981 = vpack.c.b16 %v7587, %v7586
      %v7982 = vpack.c.b16 %v7589, %v7588
      %v7983 = vpack.c.b16 %v7591, %v7590
      %v7984 = vpack.c.b16 %v7593, %v7592
      %v7985 = vpack.c.b16 %v7595, %v7594
      %v7986 = vpack.c.b16 %v7597, %v7596
      %v7987 = vpack.c.b16 %v7599, %v7598
      %v7988 = vpack.c.b16 %v7601, %v7600
      %v7989 = vpack.c.b16 %v7603, %v7602
      %v7990 = vpack.c.b16 %v7605, %v7604
      %v7991 = vpack.c.b16 %v7607, %v7606
      %v7992 = vpack.c.b16 %v7609, %v7608
      %v7993 = vpack.c.b16 %v7611, %v7610
      %v7994 = vpack.c.b16 %v7613, %v7612
      %v7995 = vpack.c.b16 %v7615, %v7614
      %v7996 = vpack.c.b16 %v7617, %v7616
      %v7997 = vpack.c.b16 %v7619, %v7618
      %v7998 = vpack.c.b16 %v7621, %v7620
      %v7999 = vpack.c.b16 %v7623, %v7622
      %v8000 = vpack.c.b16 %v7625, %v7624
      %v8001 = vpack.c.b16 %v7627, %v7626
      %v8002 = vpack.c.b16 %v7629, %v7628
      %v8003 = vpack.c.b16 %v7631, %v7630
      %v8004 = vpack.c.b16 %v7633, %v7632
      %v8005 = vpack.c.b16 %v7635, %v7634
      %v8006 = vpack.c.b16 %v7637, %v7636
      %v8007 = vpack.c.b16 %v7639, %v7638
      %v8008 = vpack.c.b16 %v7641, %v7640
      %v8009 = vpack.c.b16 %v7643, %v7642
      %v8010 = vpack.c.b16 %v7645, %v7644
      %v8011 = vpack.c.b16 %v7647, %v7646
      %v8012 = vpack.c.b16 %v7649, %v7648
      %v8013 = vpack.c.b16 %v7651, %v7650
      %v8014 = vpack.c.b16 %v7653, %v7652
      %v8015 = vpack.c.b16 %v7655, %v7654
      %v8016 = vpack.c.b16 %v7657, %v7656
      %v8017 = vpack.c.b16 %v7659, %v7658
      %v8018 = vpack.c.b16 %v7661, %v7660
      %v8019 = vpack.c.b16 %v7663, %v7662
      %v8020 = vpack.c.b16 %v7665, %v7664
      %v8021 = vpack.c.b16 %v7667, %v7666
      %v8022 = vpack.c.b16 %v7669, %v7668
      %v8023 = vpack.c.b16 %v7671, %v7670
      %v8024 = vpack.c.b16 %v7673, %v7672
      %v8025 = vpack.c.b16 %v7675, %v7674
      %v8026 = vpack.c.b16 %v7677, %v7676
      %v8027 = vpack.c.b16 %v7679, %v7678
      %v8028 = vpack.c.b16 %v7681, %v7680
      %v8029 = vpack.c.b16 %v7683, %v7682
      %v8030 = vpack.c.b16 %v7685, %v7684
      %v8031 = vpack.c.b16 %v7687, %v7686
      %v8032 = vpack.c.b16 %v7689, %v7688
      %v8033 = vpack.c.b16 %v7691, %v7690
      %v8034 = vpack.c.b16 %v7693, %v7692
      %v8035 = vpack.c.b16 %v7695, %v7694
      %v8036 = vpack.c.b16 %v7697, %v7696
      %v8037 = vpack.c.b16 %v7699, %v7698
      %v8038 = vpack.c.b16 %v7701, %v7700
      %v8039 = vpack.c.b16 %v7703, %v7702
      %v8040 = vpack.c.b16 %v7705, %v7704
      %v8041 = vpack.c.b16 %v7707, %v7706
      %v8042 = vpack.c.b16 %v7709, %v7708
      %v8043 = vpack.c.b16 %v7711, %v7710
      %v8044 = vpack.c.b16 %v7713, %v7712
      %v8045 = vpack.c.b16 %v7715, %v7714
      %v8046 = vpack.c.b16 %v7717, %v7716
      %v8047 = vpack.c.b16 %v7719, %v7718
      %v8048 = vpack.c.b16 %v7721, %v7720
      %v8049 = vpack.c.b16 %v7723, %v7722
      %v8050 = vpack.c.b16 %v7725, %v7724
      %v8051 = vpack.c.b16 %v7727, %v7726
      %v8052 = vpack.c.b16 %v7729, %v7728
      %v8053 = vpack.c.b16 %v7731, %v7730
      %v8054 = vpack.c.b16 %v7733, %v7732
      %v8055 = vpack.c.b16 %v7735, %v7734
      %v8056 = vpack.c.b16 %v7737, %v7736
      %v8057 = vpack.c.b16 %v7739, %v7738
      %v8058 = vpack.c.b16 %v7741, %v7740
      %v8059 = vpack.c.b16 %v7743, %v7742
      %v8060 = vpack.c.b16 %v7745, %v7744
      %v8061 = vpack.c.b16 %v7747, %v7746
      %v8062 = vpack.c.b16 %v7749, %v7748
      %v8063 = vpack.c.b16 %v7751, %v7750
      %v8064 = vpack.c.b16 %v7753, %v7752
      %v8065 = vpack.c.b16 %v7755, %v7754
      %v8066 = vpack.c.b16 %v7757, %v7756
      %v8067 = vpack.c.b16 %v7759, %v7758
      %v8068 = vpack.c.b16 %v7761, %v7760
      %v8069 = vpack.c.b16 %v7763, %v7762
      %v8070 = vpack.c.b16 %v7765, %v7764
      %v8071 = vpack.c.b16 %v7767, %v7766
      %v8072 = vpack.c.b16 %v7769, %v7768
      %v8073 = vpack.c.b16 %v7771, %v7770
      %v8074 = vpack.c.b16 %v7773, %v7772
      %v8075 = vpack.c.b16 %v7775, %v7774
      %v8076 = vpack.c.b16 %v7777, %v7776
      %v8077 = vpack.c.b16 %v7779, %v7778
      %v8078 = vpack.c.b16 %v7781, %v7780
      %v8079 = vpack.c.b16 %v7783, %v7782
      %v8080 = vpack.c.b16 %v7785, %v7784
      %v8081 = vpack.c.b16 %v7787, %v7786
      %v8082 = vpack.c.b16 %v7789, %v7788
      %v8083 = vpack.c.b16 %v7791, %v7790
      %v8084 = vpack.c.b16 %v7793, %v7792
      %v8085 = vpack.c.b16 %v7795, %v7794
      %v8086 = vpack.c.b16 %v7797, %v7796
      %v8087 = vpack.c.b16 %v7799, %v7798
      %v8088 = vpack.c.b16 %v7801, %v7800
      %v8089 = vpack.c.b16 %v7803, %v7802
      %v8090 = vpack.c.b16 %v7805, %v7804
      %v8091 = vpack.c.b16 %v7807, %v7806
      %v8092 = vpack.c.b16 %v7809, %v7808
      %v8093 = vpack.c.b16 %v7811, %v7810
      %v8094 = vpack.c.b16 %v7813, %v7812
      %v8095 = vpack.c.b16 %v7815, %v7814
      %v8096 = vpack.c.b16 %v7817, %v7816
      %v8097 = vpack.c.b16 %v7819, %v7818
      %v8098 = vpack.c.b16 %v7821, %v7820
      %v8099 = vpack.c.b16 %v7823, %v7822
      %v8100 = vpack.c.b16 %v7825, %v7824
      %v8101 = vpack.c.b16 %v7827, %v7826
      %v8102 = vpack.c.b16 %v7829, %v7828
      %v8103 = vpack.c.b16 %v7831, %v7830
      %v8104 = vpack.c.b16 %v7833, %v7832
      %v8105 = vpack.c.b16 %v7835, %v7834
      %v8106 = vpack.c.b16 %v7837, %v7836
      %v8107 = vpack.c.b16 %v7839, %v7838
      %v8108 = vpack.c.b16 %v7841, %v7840
      %v8109 = vpack.c.b16 %v7843, %v7842
      %v8110 = vpack.c.b16 %v7845, %v7844
      %v8111 = vpack.c.b16 %v7847, %v7846
      %v8112 = vpack.c.b16 %v7849, %v7848
      %v8113 = vpack.c.b16 %v7851, %v7850
      %v8114 = vpack.c.b16 %v7853, %v7852
      %v8115 = vpack.c.b16 %v7855, %v7854
      %v8116 = vpack.c.b16 %v7857, %v7856
      %v8117 = vpack.c.b16 %v7859, %v7858
      %v8118 = vpack.c.b16 %v7861, %v7860
      %v8119 = vpack.c.b16 %v7863, %v7862
      %v8120 = vpack.c.b16 %v7865, %v7864
      %v8121 = vpack.c.b16 %v7867, %v7866
      %v8122 = vpack.c.b16 %v7869, %v7868
      %v8123 = vpack.c.b16 %v7871, %v7870
      %v8124 = vpack.c.b16 %v7873, %v7872
      %v8125 = vpack.c.b16 %v7875, %v7874
      %v8126 = vpack.c.b16 %v7877, %v7876
      %v8127 = vpack.c.b16 %v7879, %v7878
      %v8128 = vpack.c.b16 %v7881, %v7880
      %v8129 = vpack.c.b16 %v7883, %v7882
      %v8130 = vpack.c.b16 %v7885, %v7884
      %v8131 = vpack.c.b16 %v7887, %v7886
      %v8132 = vpack.c.b16 %v7889, %v7888
      %v8133 = vpack.c.b16 %v7891, %v7890
      %v8134 = vpack.c.b16 %v7893, %v7892
      %v8135 = vpack.c.b16 %v7895, %v7894
      %v8136 = vpack.c.b16 %v7897, %v7896
      %v8137 = vpack.c.b16 %v7899, %v7898
      %v8138 = vpack.c.b16 %v7901, %v7900
      %v8139 = vpack.c.b16 %v7903, %v7902
      %v8140 = vpack.c.b16 %v7905, %v7904
      %v8141 = vpack.c.b16 %v7907, %v7906
      %v8142 = vpack.c.b16 %v7909, %v7908
      %v8143 = vpack.c.b16 %v7911, %v7910
      %v8144 = vpack.c.b16 %v7913, %v7912
      %v8145 = vpack.c.b16 %v7915, %v7914
      %v8146 = vpack.c.b16 %v7917, %v7916
      %v8147 = vpack.c.b16 %v7919, %v7918
      %v8148 = vpack.c.b16 %v7921, %v7920
      %v8149 = vpack.c.b16 %v7923, %v7922
      %v8150 = vpack.c.b16 %v7925, %v7924
      %v8151 = vpack.c.b16 %v7927, %v7926
      %v8152 = vpack.c.b16 %v7929, %v7928
      %v8153 = vpack.c.b16 %v7931, %v7930
      %v8154 = vpack.c.b16 %v7933, %v7932
      %v8155 = vpack.c.b16 %v7935, %v7934
      %v8156 = vpack.c.b16 %v7937, %v7936
      %v8157 = vpack.c.b16 %v7939, %v7938
      %v8158 = vpack.c.b16 %v7941, %v7940
      %v8159 = vpack.c.b16 %v7943, %v7942
      %v8160 = vpack.c.b16 %v7945, %v7944
      %v8161 = vpack.c.b16 %v7947, %v7946
      %v8162 = vpack.c.b16 %v7949, %v7948
      %v8163 = vpack.c.b16 %v7951, %v7950
      %v8164 = vpack.c.b16 %v7953, %v7952
      %v8165 = vpack.c.b16 %v7955, %v7954
      %v8166 = vpack.c.b16 %v7957, %v7956
      %v8167 = vpack.c.b16 %v7959, %v7958
      %v8168 = vpack.c.b16 %v7961, %v7960
      %v8169 = vpack.c.b16 %v7963, %v7962
      %v8170 = vpack.c.b16 %v7965, %v7964
      %v8171 = vpack.c.b16 %v7967, %v7966
      %v8172 = vpack.c.b16 %v7969, %v7968
      %v8173 = vpack.c.b16 %v7971, %v7970
      %v8174 = vpack.c.b16 %v7973, %v7972
      %v8175 = vpack.c.b16 %v7975, %v7974
      %8376 = vmatprep.subr.bf16.mxu0 0
      %8377 = vmatpush1.bf16.msra.mxu0 %v7976
      %8378 = vmatprep.subr.bf16.mxu0 0
      %8379 = vmatpush1.bf16.msra.mxu0 %v7977
      %8380 = vmatprep.subr.bf16.mxu0 0
      %8381 = vmatpush1.bf16.msra.mxu0 %v7978
      %8382 = vmatprep.subr.bf16.mxu0 0
      %8383 = vmatpush1.bf16.msra.mxu0 %v7979
      %8384 = vmatprep.subr.bf16.mxu0 0
      %8385 = vmatpush1.bf16.msra.mxu0 %v7980
      %8386 = vmatprep.subr.bf16.mxu0 0
      %8387 = vmatpush1.bf16.msra.mxu0 %v7981
      %8388 = vmatprep.subr.bf16.mxu0 0
      %8389 = vmatpush1.bf16.msra.mxu0 %v7982
      %8390 = vmatprep.subr.bf16.mxu0 0
      %8391 = vmatpush1.bf16.msra.mxu0 %v7983
      %8392 = vmatprep.subr.bf16.mxu0 0
      %8393 = vmatpush1.bf16.msra.mxu0 %v7984
      %8394 = vmatprep.subr.bf16.mxu0 0
      %8395 = vmatpush1.bf16.msra.mxu0 %v7985
      %8396 = vmatprep.subr.bf16.mxu0 0
      %8397 = vmatpush1.bf16.msra.mxu0 %v7986
      %8398 = vmatprep.subr.bf16.mxu0 0
      %8399 = vmatpush1.bf16.msra.mxu0 %v7987
      %8400 = vmatprep.subr.bf16.mxu0 0
      %8401 = vmatpush1.bf16.msra.mxu0 %v7988
      %8402 = vmatprep.subr.bf16.mxu0 0
      %8403 = vmatpush1.bf16.msra.mxu0 %v7989
      %8404 = vmatprep.subr.bf16.mxu0 0
      %8405 = vmatpush1.bf16.msra.mxu0 %v7990
      %8406 = vmatprep.subr.bf16.mxu0 0
      %8407 = vmatpush1.bf16.msra.mxu0 %v7991
      %8408 = vmatprep.mubr.bf16.mxu0 %v6727
      %8409 = vmatmul.mubr.bf16.gmra.mrb[0].mxu0 %v6726
      %v8410 = vpop.f32.mrb[0].mxu0
      %v8411 = vadd.f32 %v6078, %v8410
      %v8412 = vpop.f32.mrb[0].mxu0
      %v8413 = vpop.f32.mrb[0].mxu0
      %v8414 = vadd.f32 %v6078, %v8413
      %v8415 = vpop.f32.mrb[0].mxu0
      %8416 = vmatprep.mubr.bf16.mxu0 %v6752
      %8417 = vmatmul.mubr.bf16.gmra.mrb[0].mxu0 %v6751
      %v8418 = vpop.f32.mrb[0].mxu0
      %v8419 = vadd.f32 %v6078, %v8418
      %v8420 = vpop.f32.mrb[0].mxu0
      %v8421 = vpop.f32.mrb[0].mxu0
      %v8422 = vadd.f32 %v6078, %v8421
      %v8423 = vpop.f32.mrb[0].mxu0
      %8424 = vmatprep.mubr.bf16.mxu0 %v6777
      %8425 = vmatmul.mubr.bf16.gmra.mrb[0].mxu0 %v6776
      %v8426 = vpop.f32.mrb[0].mxu0
      %v8427 = vadd.f32 %v6078, %v8426
      %v8428 = vpop.f32.mrb[0].mxu0
      %v8429 = vpop.f32.mrb[0].mxu0
      %v8430 = vadd.f32 %v6078, %v8429
      %v8431 = vpop.f32.mrb[0].mxu0
      %8432 = vmatprep.mubr.bf16.mxu0 %v6802
      %8433 = vmatmul.mubr.bf16.gmra.mrb[0].mxu0 %v6801
      %v8434 = vpop.f32.mrb[0].mxu0
      %v8435 = vadd.f32 %v6078, %v8434
      %v8436 = vpop.f32.mrb[0].mxu0
      %v8437 = vpop.f32.mrb[0].mxu0
      %v8438 = vadd.f32 %v6078, %v8437
      %v8439 = vpop.f32.mrb[0].mxu0
      %8440 = vmatprep.mubr.bf16.mxu0 %v6827
      %8441 = vmatmul.mubr.bf16.gmra.mrb[0].mxu0 %v6826
      %v8442 = vpop.f32.mrb[0].mxu0
      %v8443 = vadd.f32 %v6078, %v8442
      %v8444 = vpop.f32.mrb[0].mxu0
      %v8445 = vpop.f32.mrb[0].mxu0
      %v8446 = vadd.f32 %v6078, %v8445
      %v8447 = vpop.f32.mrb[0].mxu0
      %8448 = vmatprep.mubr.bf16.mxu0 %v6852
      %8449 = vmatmul.mubr.bf16.gmra.mrb[0].mxu0 %v6851
      %v8450 = vpop.f32.mrb[0].mxu0
      %v8451 = vadd.f32 %v6078, %v8450
      %v8452 = vpop.f32.mrb[0].mxu0
      %v8453 = vpop.f32.mrb[0].mxu0
      %v8454 = vadd.f32 %v6078, %v8453
      %v8455 = vpop.f32.mrb[0].mxu0
      %8456 = vmatprep.mubr.bf16.mxu0 %v6877
      %8457 = vmatmul.mubr.bf16.gmra.mrb[0].mxu0 %v6876
      %v8458 = vpop.f32.mrb[0].mxu0
      %v8459 = vadd.f32 %v6078, %v8458
      %v8460 = vpop.f32.mrb[0].mxu0
      %v8461 = vpop.f32.mrb[0].mxu0
      %v8462 = vadd.f32 %v6078, %v8461
      %v8463 = vpop.f32.mrb[0].mxu0
      %8464 = vmatprep.mubr.bf16.mxu0 %v6902
      %8465 = vmatmul.mubr.bf16.gmra.mrb[0].mxu0 %v6901
      %v8466 = vpop.f32.mrb[0].mxu0
      %v8467 = vadd.f32 %v6078, %v8466
      %v8468 = vpop.f32.mrb[0].mxu0
      %v8469 = vpop.f32.mrb[0].mxu0
      %v8470 = vadd.f32 %v6078, %v8469
      %v8471 = vpop.f32.mrb[0].mxu0
      %8472 = vmatprep.mubr.bf16.mxu0 %v6927
      %8473 = vmatmul.mubr.bf16.gmra.mrb[0].mxu0 %v6926
      %v8474 = vpop.f32.mrb[0].mxu0
      %v8475 = vadd.f32 %v6078, %v8474
      %v8476 = vpop.f32.mrb[0].mxu0
      %v8477 = vpop.f32.mrb[0].mxu0
      %v8478 = vpop.f32.mrb[0].mxu0
      %8479 = vdwg.mxu0
      %8480 = vmatprep.subr.bf16.mxu0 0
      %8481 = vmatpush1.bf16.msra.mxu0 %v7992
      %8482 = vmatprep.subr.bf16.mxu0 0
      %8483 = vmatpush1.bf16.msra.mxu0 %v7993
      %8484 = vmatprep.subr.bf16.mxu0 0
      %8485 = vmatpush1.bf16.msra.mxu0 %v7994
      %8486 = vmatprep.subr.bf16.mxu0 0
      %8487 = vmatpush1.bf16.msra.mxu0 %v7995
      %8488 = vmatprep.subr.bf16.mxu0 0
      %8489 = vmatpush1.bf16.msra.mxu0 %v7996
      %8490 = vmatprep.subr.bf16.mxu0 0
      %8491 = vmatpush1.bf16.msra.mxu0 %v7997
      %8492 = vmatprep.subr.bf16.mxu0 0
      %8493 = vmatpush1.bf16.msra.mxu0 %v7998
      %8494 = vmatprep.subr.bf16.mxu0 0
      %8495 = vmatpush1.bf16.msra.mxu0 %v7999
      %8496 = vmatprep.subr.bf16.mxu0 0
      %8497 = vmatpush1.bf16.msra.mxu0 %v8000
      %8498 = vmatprep.subr.bf16.mxu0 0
      %8499 = vmatpush1.bf16.msra.mxu0 %v8001
      %8500 = vmatprep.subr.bf16.mxu0 0
      %8501 = vmatpush1.bf16.msra.mxu0 %v8002
      %8502 = vmatprep.subr.bf16.mxu0 0
      %8503 = vmatpush1.bf16.msra.mxu0 %v8003
      %8504 = vmatprep.subr.bf16.mxu0 0
      %8505 = vmatpush1.bf16.msra.mxu0 %v8004
      %8506 = vmatprep.subr.bf16.mxu0 0
      %8507 = vmatpush1.bf16.msra.mxu0 %v8005
      %8508 = vmatprep.subr.bf16.mxu0 0
      %8509 = vmatpush1.bf16.msra.mxu0 %v8006
      %8510 = vmatprep.subr.bf16.mxu0 0
      %8511 = vmatpush1.bf16.msra.mxu0 %v8007
      %8512 = vmatprep.mubr.bf16.mxu0 %v6729
      %8513 = vmatmul.mubr.bf16.gmra.mrb[0].mxu0 %v6728
      %v8514 = vpop.f32.mrb[0].mxu0
      %v8515 = vadd.f32 %v8411, %v8514
      %v8516 = vpop.f32.mrb[0].mxu0
      %v8517 = vpop.f32.mrb[0].mxu0
      %v8518 = vadd.f32 %v8414, %v8517
      %v8519 = vpop.f32.mrb[0].mxu0
      %8520 = vmatprep.mubr.bf16.mxu0 %v6754
      %8521 = vmatmul.mubr.bf16.gmra.mrb[0].mxu0 %v6753
      %v8522 = vpop.f32.mrb[0].mxu0
      %v8523 = vadd.f32 %v8419, %v8522
      %v8524 = vpop.f32.mrb[0].mxu0
      %v8525 = vpop.f32.mrb[0].mxu0
      %v8526 = vadd.f32 %v8422, %v8525
      %v8527 = vpop.f32.mrb[0].mxu0
      %8528 = vmatprep.mubr.bf16.mxu0 %v6779
      %8529 = vmatmul.mubr.bf16.gmra.mrb[0].mxu0 %v6778
      %v8530 = vpop.f32.mrb[0].mxu0
      %v8531 = vadd.f32 %v8427, %v8530
      %v8532 = vpop.f32.mrb[0].mxu0
      %v8533 = vpop.f32.mrb[0].mxu0
      %v8534 = vadd.f32 %v8430, %v8533
      %v8535 = vpop.f32.mrb[0].mxu0
      %8536 = vmatprep.mubr.bf16.mxu0 %v6804
      %8537 = vmatmul.mubr.bf16.gmra.mrb[0].mxu0 %v6803
      %v8538 = vpop.f32.mrb[0].mxu0
      %v8539 = vadd.f32 %v8435, %v8538
      %v8540 = vpop.f32.mrb[0].mxu0
      %v8541 = vpop.f32.mrb[0].mxu0
      %v8542 = vadd.f32 %v8438, %v8541
      %v8543 = vpop.f32.mrb[0].mxu0
      %8544 = vmatprep.mubr.bf16.mxu0 %v6829
      %8545 = vmatmul.mubr.bf16.gmra.mrb[0].mxu0 %v6828
      %v8546 = vpop.f32.mrb[0].mxu0
      %v8547 = vadd.f32 %v8443, %v8546
      %v8548 = vpop.f32.mrb[0].mxu0
      %v8549 = vpop.f32.mrb[0].mxu0
      %v8550 = vadd.f32 %v8446, %v8549
      %v8551 = vpop.f32.mrb[0].mxu0
      %8552 = vmatprep.mubr.bf16.mxu0 %v6854
      %8553 = vmatmul.mubr.bf16.gmra.mrb[0].mxu0 %v6853
      %v8554 = vpop.f32.mrb[0].mxu0
      %v8555 = vadd.f32 %v8451, %v8554
      %v8556 = vpop.f32.mrb[0].mxu0
      %v8557 = vpop.f32.mrb[0].mxu0
      %v8558 = vadd.f32 %v8454, %v8557
      %v8559 = vpop.f32.mrb[0].mxu0
      %8560 = vmatprep.mubr.bf16.mxu0 %v6879
      %8561 = vmatmul.mubr.bf16.gmra.mrb[0].mxu0 %v6878
      %v8562 = vpop.f32.mrb[0].mxu0
      %v8563 = vadd.f32 %v8459, %v8562
      %v8564 = vpop.f32.mrb[0].mxu0
      %v8565 = vpop.f32.mrb[0].mxu0
      %v8566 = vadd.f32 %v8462, %v8565
      %v8567 = vpop.f32.mrb[0].mxu0
      %8568 = vmatprep.mubr.bf16.mxu0 %v6904
      %8569 = vmatmul.mubr.bf16.gmra.mrb[0].mxu0 %v6903
      %v8570 = vpop.f32.mrb[0].mxu0
      %v8571 = vadd.f32 %v8467, %v8570
      %v8572 = vpop.f32.mrb[0].mxu0
      %v8573 = vpop.f32.mrb[0].mxu0
      %v8574 = vadd.f32 %v8470, %v8573
      %v8575 = vpop.f32.mrb[0].mxu0
      %8576 = vmatprep.mubr.bf16.mxu0 %v6929
      %8577 = vmatmul.mubr.bf16.gmra.mrb[0].mxu0 %v6928
      %v8578 = vpop.f32.mrb[0].mxu0
      %v8579 = vadd.f32 %v8475, %v8578
      %v8580 = vpop.f32.mrb[0].mxu0
      %v8581 = vpop.f32.mrb[0].mxu0
      %v8582 = vpop.f32.mrb[0].mxu0
      %8583 = vdwg.mxu0
      %8584 = vmatprep.subr.bf16.mxu0 0
      %8585 = vmatpush1.bf16.msra.mxu0 %v8008
      %8586 = vmatprep.subr.bf16.mxu0 0
      %8587 = vmatpush1.bf16.msra.mxu0 %v8009
      %8588 = vmatprep.subr.bf16.mxu0 0
      %8589 = vmatpush1.bf16.msra.mxu0 %v8010
      %8590 = vmatprep.subr.bf16.mxu0 0
      %8591 = vmatpush1.bf16.msra.mxu0 %v8011
      %8592 = vmatprep.subr.bf16.mxu0 0
      %8593 = vmatpush1.bf16.msra.mxu0 %v8012
      %8594 = vmatprep.subr.bf16.mxu0 0
      %8595 = vmatpush1.bf16.msra.mxu0 %v8013
      %8596 = vmatprep.subr.bf16.mxu0 0
      %8597 = vmatpush1.bf16.msra.mxu0 %v8014
      %8598 = vmatprep.subr.bf16.mxu0 0
      %8599 = vmatpush1.bf16.msra.mxu0 %v8015
      %8600 = vmatprep.subr.bf16.mxu0 0
      %8601 = vmatpush1.bf16.msra.mxu0 %v8016
      %8602 = vmatprep.subr.bf16.mxu0 0
      %8603 = vmatpush1.bf16.msra.mxu0 %v8017
      %8604 = vmatprep.subr.bf16.mxu0 0
      %8605 = vmatpush1.bf16.msra.mxu0 %v8018
      %8606 = vmatprep.subr.bf16.mxu0 0
      %8607 = vmatpush1.bf16.msra.mxu0 %v8019
      %8608 = vmatprep.subr.bf16.mxu0 0
      %8609 = vmatpush1.bf16.msra.mxu0 %v8020
      %8610 = vmatprep.subr.bf16.mxu0 0
      %8611 = vmatpush1.bf16.msra.mxu0 %v8021
      %8612 = vmatprep.subr.bf16.mxu0 0
      %8613 = vmatpush1.bf16.msra.mxu0 %v8022
      %8614 = vmatprep.subr.bf16.mxu0 0
      %8615 = vmatpush1.bf16.msra.mxu0 %v8023
      %8616 = vmatprep.mubr.bf16.mxu0 %v6731
      %8617 = vmatmul.mubr.bf16.gmra.mrb[0].mxu0 %v6730
      %v8618 = vpop.f32.mrb[0].mxu0
      %v8619 = vadd.f32 %v8515, %v8618
      %v8620 = vpop.f32.mrb[0].mxu0
      %v8621 = vpop.f32.mrb[0].mxu0
      %v8622 = vadd.f32 %v8518, %v8621
      %v8623 = vpop.f32.mrb[0].mxu0
      %8624 = vmatprep.mubr.bf16.mxu0 %v6756
      %8625 = vmatmul.mubr.bf16.gmra.mrb[0].mxu0 %v6755
      %v8626 = vpop.f32.mrb[0].mxu0
      %v8627 = vadd.f32 %v8523, %v8626
      %v8628 = vpop.f32.mrb[0].mxu0
      %v8629 = vpop.f32.mrb[0].mxu0
      %v8630 = vadd.f32 %v8526, %v8629
      %v8631 = vpop.f32.mrb[0].mxu0
      %8632 = vmatprep.mubr.bf16.mxu0 %v6781
      %8633 = vmatmul.mubr.bf16.gmra.mrb[0].mxu0 %v6780
      %v8634 = vpop.f32.mrb[0].mxu0
      %v8635 = vadd.f32 %v8531, %v8634
      %v8636 = vpop.f32.mrb[0].mxu0
      %v8637 = vpop.f32.mrb[0].mxu0
      %v8638 = vadd.f32 %v8534, %v8637
      %v8639 = vpop.f32.mrb[0].mxu0
      %8640 = vmatprep.mubr.bf16.mxu0 %v6806
      %8641 = vmatmul.mubr.bf16.gmra.mrb[0].mxu0 %v6805
      %v8642 = vpop.f32.mrb[0].mxu0
      %v8643 = vadd.f32 %v8539, %v8642
      %v8644 = vpop.f32.mrb[0].mxu0
      %v8645 = vpop.f32.mrb[0].mxu0
      %v8646 = vadd.f32 %v8542, %v8645
      %v8647 = vpop.f32.mrb[0].mxu0
      %8648 = vmatprep.mubr.bf16.mxu0 %v6831
      %8649 = vmatmul.mubr.bf16.gmra.mrb[0].mxu0 %v6830
      %v8650 = vpop.f32.mrb[0].mxu0
      %v8651 = vadd.f32 %v8547, %v8650
      %v8652 = vpop.f32.mrb[0].mxu0
      %v8653 = vpop.f32.mrb[0].mxu0
      %v8654 = vadd.f32 %v8550, %v8653
      %v8655 = vpop.f32.mrb[0].mxu0
      %8656 = vmatprep.mubr.bf16.mxu0 %v6856
      %8657 = vmatmul.mubr.bf16.gmra.mrb[0].mxu0 %v6855
      %v8658 = vpop.f32.mrb[0].mxu0
      %v8659 = vadd.f32 %v8555, %v8658
      %v8660 = vpop.f32.mrb[0].mxu0
      %v8661 = vpop.f32.mrb[0].mxu0
      %v8662 = vadd.f32 %v8558, %v8661
      %v8663 = vpop.f32.mrb[0].mxu0
      %8664 = vmatprep.mubr.bf16.mxu0 %v6881
      %8665 = vmatmul.mubr.bf16.gmra.mrb[0].mxu0 %v6880
      %v8666 = vpop.f32.mrb[0].mxu0
      %v8667 = vadd.f32 %v8563, %v8666
      %v8668 = vpop.f32.mrb[0].mxu0
      %v8669 = vpop.f32.mrb[0].mxu0
      %v8670 = vadd.f32 %v8566, %v8669
      %v8671 = vpop.f32.mrb[0].mxu0
      %8672 = vmatprep.mubr.bf16.mxu0 %v6906
      %8673 = vmatmul.mubr.bf16.gmra.mrb[0].mxu0 %v6905
      %v8674 = vpop.f32.mrb[0].mxu0
      %v8675 = vadd.f32 %v8571, %v8674
      %v8676 = vpop.f32.mrb[0].mxu0
      %v8677 = vpop.f32.mrb[0].mxu0
      %v8678 = vadd.f32 %v8574, %v8677
      %v8679 = vpop.f32.mrb[0].mxu0
      %8680 = vmatprep.mubr.bf16.mxu0 %v6931
      %8681 = vmatmul.mubr.bf16.gmra.mrb[0].mxu0 %v6930
      %v8682 = vpop.f32.mrb[0].mxu0
      %v8683 = vadd.f32 %v8579, %v8682
      %v8684 = vpop.f32.mrb[0].mxu0
      %v8685 = vpop.f32.mrb[0].mxu0
      %v8686 = vpop.f32.mrb[0].mxu0
      %8687 = vdwg.mxu0
      %8688 = vmatprep.subr.bf16.mxu0 0
      %8689 = vmatpush1.bf16.msra.mxu0 %v8024
      %8690 = vmatprep.subr.bf16.mxu0 0
      %8691 = vmatpush1.bf16.msra.mxu0 %v8025
      %8692 = vmatprep.subr.bf16.mxu0 0
      %8693 = vmatpush1.bf16.msra.mxu0 %v8026
      %8694 = vmatprep.subr.bf16.mxu0 0
      %8695 = vmatpush1.bf16.msra.mxu0 %v8027
      %8696 = vmatprep.subr.bf16.mxu0 0
      %8697 = vmatpush1.bf16.msra.mxu0 %v8028
      %8698 = vmatprep.subr.bf16.mxu0 0
      %8699 = vmatpush1.bf16.msra.mxu0 %v8029
      %8700 = vmatprep.subr.bf16.mxu0 0
      %8701 = vmatpush1.bf16.msra.mxu0 %v8030
      %8702 = vmatprep.subr.bf16.mxu0 0
      %8703 = vmatpush1.bf16.msra.mxu0 %v8031
      %8704 = vmatprep.subr.bf16.mxu0 0
      %8705 = vmatpush1.bf16.msra.mxu0 %v8032
      %8706 = vmatprep.subr.bf16.mxu0 0
      %8707 = vmatpush1.bf16.msra.mxu0 %v8033
      %8708 = vmatprep.subr.bf16.mxu0 0
      %8709 = vmatpush1.bf16.msra.mxu0 %v8034
      %8710 = vmatprep.subr.bf16.mxu0 0
      %8711 = vmatpush1.bf16.msra.mxu0 %v8035
      %8712 = vmatprep.subr.bf16.mxu0 0
      %8713 = vmatpush1.bf16.msra.mxu0 %v8036
      %8714 = vmatprep.subr.bf16.mxu0 0
      %8715 = vmatpush1.bf16.msra.mxu0 %v8037
      %8716 = vmatprep.subr.bf16.mxu0 0
      %8717 = vmatpush1.bf16.msra.mxu0 %v8038
      %8718 = vmatprep.subr.bf16.mxu0 0
      %8719 = vmatpush1.bf16.msra.mxu0 %v8039
      %8720 = vmatprep.mubr.bf16.mxu0 %v6733
      %8721 = vmatmul.mubr.bf16.gmra.mrb[0].mxu0 %v6732
      %v8722 = vpop.f32.mrb[0].mxu0
      %v8723 = vadd.f32 %v8619, %v8722
      %v8724 = vpop.f32.mrb[0].mxu0
      %v8725 = vpop.f32.mrb[0].mxu0
      %v8726 = vadd.f32 %v8622, %v8725
      %v8727 = vpop.f32.mrb[0].mxu0
      %8728 = vmatprep.mubr.bf16.mxu0 %v6758
      %8729 = vmatmul.mubr.bf16.gmra.mrb[0].mxu0 %v6757
      %v8730 = vpop.f32.mrb[0].mxu0
      %v8731 = vadd.f32 %v8627, %v8730
      %v8732 = vpop.f32.mrb[0].mxu0
      %v8733 = vpop.f32.mrb[0].mxu0
      %v8734 = vadd.f32 %v8630, %v8733
      %v8735 = vpop.f32.mrb[0].mxu0
      %8736 = vmatprep.mubr.bf16.mxu0 %v6783
      %8737 = vmatmul.mubr.bf16.gmra.mrb[0].mxu0 %v6782
      %v8738 = vpop.f32.mrb[0].mxu0
      %v8739 = vadd.f32 %v8635, %v8738
      %v8740 = vpop.f32.mrb[0].mxu0
      %v8741 = vpop.f32.mrb[0].mxu0
      %v8742 = vadd.f32 %v8638, %v8741
      %v8743 = vpop.f32.mrb[0].mxu0
      %8744 = vmatprep.mubr.bf16.mxu0 %v6808
      %8745 = vmatmul.mubr.bf16.gmra.mrb[0].mxu0 %v6807
      %v8746 = vpop.f32.mrb[0].mxu0
      %v8747 = vadd.f32 %v8643, %v8746
      %v8748 = vpop.f32.mrb[0].mxu0
      %v8749 = vpop.f32.mrb[0].mxu0
      %v8750 = vadd.f32 %v8646, %v8749
      %v8751 = vpop.f32.mrb[0].mxu0
      %8752 = vmatprep.mubr.bf16.mxu0 %v6833
      %8753 = vmatmul.mubr.bf16.gmra.mrb[0].mxu0 %v6832
      %v8754 = vpop.f32.mrb[0].mxu0
      %v8755 = vadd.f32 %v8651, %v8754
      %v8756 = vpop.f32.mrb[0].mxu0
      %v8757 = vpop.f32.mrb[0].mxu0
      %v8758 = vadd.f32 %v8654, %v8757
      %v8759 = vpop.f32.mrb[0].mxu0
      %8760 = vmatprep.mubr.bf16.mxu0 %v6858
      %8761 = vmatmul.mubr.bf16.gmra.mrb[0].mxu0 %v6857
      %v8762 = vpop.f32.mrb[0].mxu0
      %v8763 = vadd.f32 %v8659, %v8762
      %v8764 = vpop.f32.mrb[0].mxu0
      %v8765 = vpop.f32.mrb[0].mxu0
      %v8766 = vadd.f32 %v8662, %v8765
      %v8767 = vpop.f32.mrb[0].mxu0
      %8768 = vmatprep.mubr.bf16.mxu0 %v6883
      %8769 = vmatmul.mubr.bf16.gmra.mrb[0].mxu0 %v6882
      %v8770 = vpop.f32.mrb[0].mxu0
      %v8771 = vadd.f32 %v8667, %v8770
      %v8772 = vpop.f32.mrb[0].mxu0
      %v8773 = vpop.f32.mrb[0].mxu0
      %v8774 = vadd.f32 %v8670, %v8773
      %v8775 = vpop.f32.mrb[0].mxu0
      %8776 = vmatprep.mubr.bf16.mxu0 %v6908
      %8777 = vmatmul.mubr.bf16.gmra.mrb[0].mxu0 %v6907
      %v8778 = vpop.f32.mrb[0].mxu0
      %v8779 = vadd.f32 %v8675, %v8778
      %v8780 = vpop.f32.mrb[0].mxu0
      %v8781 = vpop.f32.mrb[0].mxu0
      %v8782 = vadd.f32 %v8678, %v8781
      %v8783 = vpop.f32.mrb[0].mxu0
      %8784 = vmatprep.mubr.bf16.mxu0 %v6933
      %8785 = vmatmul.mubr.bf16.gmra.mrb[0].mxu0 %v6932
      %v8786 = vpop.f32.mrb[0].mxu0
      %v8787 = vadd.f32 %v8683, %v8786
      %v8788 = vpop.f32.mrb[0].mxu0
      %v8789 = vpop.f32.mrb[0].mxu0
      %v8790 = vpop.f32.mrb[0].mxu0
      %8791 = vdwg.mxu0
      %8792 = vmatprep.subr.bf16.mxu0 0
      %8793 = vmatpush1.bf16.msra.mxu0 %v8040
      %8794 = vmatprep.subr.bf16.mxu0 0
      %8795 = vmatpush1.bf16.msra.mxu0 %v8041
      %8796 = vmatprep.subr.bf16.mxu0 0
      %8797 = vmatpush1.bf16.msra.mxu0 %v8042
      %8798 = vmatprep.subr.bf16.mxu0 0
      %8799 = vmatpush1.bf16.msra.mxu0 %v8043
      %8800 = vmatprep.subr.bf16.mxu0 0
      %8801 = vmatpush1.bf16.msra.mxu0 %v8044
      %8802 = vmatprep.subr.bf16.mxu0 0
      %8803 = vmatpush1.bf16.msra.mxu0 %v8045
      %8804 = vmatprep.subr.bf16.mxu0 0
      %8805 = vmatpush1.bf16.msra.mxu0 %v8046
      %8806 = vmatprep.subr.bf16.mxu0 0
      %8807 = vmatpush1.bf16.msra.mxu0 %v8047
      %8808 = vmatprep.subr.bf16.mxu0 0
      %8809 = vmatpush1.bf16.msra.mxu0 %v8048
      %8810 = vmatprep.subr.bf16.mxu0 0
      %8811 = vmatpush1.bf16.msra.mxu0 %v8049
      %8812 = vmatprep.subr.bf16.mxu0 0
      %8813 = vmatpush1.bf16.msra.mxu0 %v8050
      %8814 = vmatprep.subr.bf16.mxu0 0
      %8815 = vmatpush1.bf16.msra.mxu0 %v8051
      %8816 = vmatprep.subr.bf16.mxu0 0
      %8817 = vmatpush1.bf16.msra.mxu0 %v8052
      %8818 = vmatprep.subr.bf16.mxu0 0
      %8819 = vmatpush1.bf16.msra.mxu0 %v8053
      %8820 = vmatprep.subr.bf16.mxu0 0
      %8821 = vmatpush1.bf16.msra.mxu0 %v8054
      %8822 = vmatprep.subr.bf16.mxu0 0
      %8823 = vmatpush1.bf16.msra.mxu0 %v8055
      %8824 = vmatprep.mubr.bf16.mxu0 %v6735
      %8825 = vmatmul.mubr.bf16.gmra.mrb[0].mxu0 %v6734
      %v8826 = vpop.f32.mrb[0].mxu0
      %v8827 = vadd.f32 %v8723, %v8826
      %v8828 = vpop.f32.mrb[0].mxu0
      %v8829 = vpop.f32.mrb[0].mxu0
      %v8830 = vadd.f32 %v8726, %v8829
      %v8831 = vpop.f32.mrb[0].mxu0
      %8832 = vmatprep.mubr.bf16.mxu0 %v6760
      %8833 = vmatmul.mubr.bf16.gmra.mrb[0].mxu0 %v6759
      %v8834 = vpop.f32.mrb[0].mxu0
      %v8835 = vadd.f32 %v8731, %v8834
      %v8836 = vpop.f32.mrb[0].mxu0
      %v8837 = vpop.f32.mrb[0].mxu0
      %v8838 = vadd.f32 %v8734, %v8837
      %v8839 = vpop.f32.mrb[0].mxu0
      %8840 = vmatprep.mubr.bf16.mxu0 %v6785
      %8841 = vmatmul.mubr.bf16.gmra.mrb[0].mxu0 %v6784
      %v8842 = vpop.f32.mrb[0].mxu0
      %v8843 = vadd.f32 %v8739, %v8842
      %v8844 = vpop.f32.mrb[0].mxu0
      %v8845 = vpop.f32.mrb[0].mxu0
      %v8846 = vadd.f32 %v8742, %v8845
      %v8847 = vpop.f32.mrb[0].mxu0
      %8848 = vmatprep.mubr.bf16.mxu0 %v6810
      %8849 = vmatmul.mubr.bf16.gmra.mrb[0].mxu0 %v6809
      %v8850 = vpop.f32.mrb[0].mxu0
      %v8851 = vadd.f32 %v8747, %v8850
      %v8852 = vpop.f32.mrb[0].mxu0
      %v8853 = vpop.f32.mrb[0].mxu0
      %v8854 = vadd.f32 %v8750, %v8853
      %v8855 = vpop.f32.mrb[0].mxu0
      %8856 = vmatprep.mubr.bf16.mxu0 %v6835
      %8857 = vmatmul.mubr.bf16.gmra.mrb[0].mxu0 %v6834
      %v8858 = vpop.f32.mrb[0].mxu0
      %v8859 = vadd.f32 %v8755, %v8858
      %v8860 = vpop.f32.mrb[0].mxu0
      %v8861 = vpop.f32.mrb[0].mxu0
      %v8862 = vadd.f32 %v8758, %v8861
      %v8863 = vpop.f32.mrb[0].mxu0
      %8864 = vmatprep.mubr.bf16.mxu0 %v6860
      %8865 = vmatmul.mubr.bf16.gmra.mrb[0].mxu0 %v6859
      %v8866 = vpop.f32.mrb[0].mxu0
      %v8867 = vadd.f32 %v8763, %v8866
      %v8868 = vpop.f32.mrb[0].mxu0
      %v8869 = vpop.f32.mrb[0].mxu0
      %v8870 = vadd.f32 %v8766, %v8869
      %v8871 = vpop.f32.mrb[0].mxu0
      %8872 = vmatprep.mubr.bf16.mxu0 %v6885
      %8873 = vmatmul.mubr.bf16.gmra.mrb[0].mxu0 %v6884
      %v8874 = vpop.f32.mrb[0].mxu0
      %v8875 = vadd.f32 %v8771, %v8874
      %v8876 = vpop.f32.mrb[0].mxu0
      %v8877 = vpop.f32.mrb[0].mxu0
      %v8878 = vadd.f32 %v8774, %v8877
      %v8879 = vpop.f32.mrb[0].mxu0
      %8880 = vmatprep.mubr.bf16.mxu0 %v6910
      %8881 = vmatmul.mubr.bf16.gmra.mrb[0].mxu0 %v6909
      %v8882 = vpop.f32.mrb[0].mxu0
      %v8883 = vadd.f32 %v8779, %v8882
      %v8884 = vpop.f32.mrb[0].mxu0
      %v8885 = vpop.f32.mrb[0].mxu0
      %v8886 = vadd.f32 %v8782, %v8885
      %v8887 = vpop.f32.mrb[0].mxu0
      %8888 = vmatprep.mubr.bf16.mxu0 %v6935
      %8889 = vmatmul.mubr.bf16.gmra.mrb[0].mxu0 %v6934
      %v8890 = vpop.f32.mrb[0].mxu0
      %v8891 = vadd.f32 %v8787, %v8890
      %v8892 = vpop.f32.mrb[0].mxu0
      %v8893 = vpop.f32.mrb[0].mxu0
      %v8894 = vpop.f32.mrb[0].mxu0
      %8895 = vdwg.mxu0
      %8896 = vmatprep.subr.bf16.mxu0 0
      %8897 = vmatpush1.bf16.msra.mxu0 %v8056
      %8898 = vmatprep.subr.bf16.mxu0 0
      %8899 = vmatpush1.bf16.msra.mxu0 %v8057
      %8900 = vmatprep.subr.bf16.mxu0 0
      %8901 = vmatpush1.bf16.msra.mxu0 %v8058
      %8902 = vmatprep.subr.bf16.mxu0 0
      %8903 = vmatpush1.bf16.msra.mxu0 %v8059
      %8904 = vmatprep.subr.bf16.mxu0 0
      %8905 = vmatpush1.bf16.msra.mxu0 %v8060
      %8906 = vmatprep.subr.bf16.mxu0 0
      %8907 = vmatpush1.bf16.msra.mxu0 %v8061
      %8908 = vmatprep.subr.bf16.mxu0 0
      %8909 = vmatpush1.bf16.msra.mxu0 %v8062
      %8910 = vmatprep.subr.bf16.mxu0 0
      %8911 = vmatpush1.bf16.msra.mxu0 %v8063
      %8912 = vmatprep.subr.bf16.mxu0 0
      %8913 = vmatpush1.bf16.msra.mxu0 %v8064
      %8914 = vmatprep.subr.bf16.mxu0 0
      %8915 = vmatpush1.bf16.msra.mxu0 %v8065
      %8916 = vmatprep.subr.bf16.mxu0 0
      %8917 = vmatpush1.bf16.msra.mxu0 %v8066
      %8918 = vmatprep.subr.bf16.mxu0 0
      %8919 = vmatpush1.bf16.msra.mxu0 %v8067
      %8920 = vmatprep.subr.bf16.mxu0 0
      %8921 = vmatpush1.bf16.msra.mxu0 %v8068
      %8922 = vmatprep.subr.bf16.mxu0 0
      %8923 = vmatpush1.bf16.msra.mxu0 %v8069
      %8924 = vmatprep.subr.bf16.mxu0 0
      %8925 = vmatpush1.bf16.msra.mxu0 %v8070
      %8926 = vmatprep.subr.bf16.mxu0 0
      %8927 = vmatpush1.bf16.msra.mxu0 %v8071
      %8928 = vmatprep.mubr.bf16.mxu0 %v6737
      %8929 = vmatmul.mubr.bf16.gmra.mrb[0].mxu0 %v6736
      %v8930 = vpop.f32.mrb[0].mxu0
      %v8931 = vadd.f32 %v8827, %v8930
      %v8932 = vpop.f32.mrb[0].mxu0
      %v8933 = vpop.f32.mrb[0].mxu0
      %v8934 = vadd.f32 %v8830, %v8933
      %v8935 = vpop.f32.mrb[0].mxu0
      %8936 = vmatprep.mubr.bf16.mxu0 %v6762
      %8937 = vmatmul.mubr.bf16.gmra.mrb[0].mxu0 %v6761
      %v8938 = vpop.f32.mrb[0].mxu0
      %v8939 = vadd.f32 %v8835, %v8938
      %v8940 = vpop.f32.mrb[0].mxu0
      %v8941 = vpop.f32.mrb[0].mxu0
      %v8942 = vadd.f32 %v8838, %v8941
      %v8943 = vpop.f32.mrb[0].mxu0
      %8944 = vmatprep.mubr.bf16.mxu0 %v6787
      %8945 = vmatmul.mubr.bf16.gmra.mrb[0].mxu0 %v6786
      %v8946 = vpop.f32.mrb[0].mxu0
      %v8947 = vadd.f32 %v8843, %v8946
      %v8948 = vpop.f32.mrb[0].mxu0
      %v8949 = vpop.f32.mrb[0].mxu0
      %v8950 = vadd.f32 %v8846, %v8949
      %v8951 = vpop.f32.mrb[0].mxu0
      %8952 = vmatprep.mubr.bf16.mxu0 %v6812
      %8953 = vmatmul.mubr.bf16.gmra.mrb[0].mxu0 %v6811
      %v8954 = vpop.f32.mrb[0].mxu0
      %v8955 = vadd.f32 %v8851, %v8954
      %v8956 = vpop.f32.mrb[0].mxu0
      %v8957 = vpop.f32.mrb[0].mxu0
      %v8958 = vadd.f32 %v8854, %v8957
      %v8959 = vpop.f32.mrb[0].mxu0
      %8960 = vmatprep.mubr.bf16.mxu0 %v6837
      %8961 = vmatmul.mubr.bf16.gmra.mrb[0].mxu0 %v6836
      %v8962 = vpop.f32.mrb[0].mxu0
      %v8963 = vadd.f32 %v8859, %v8962
      %v8964 = vpop.f32.mrb[0].mxu0
      %v8965 = vpop.f32.mrb[0].mxu0
      %v8966 = vadd.f32 %v8862, %v8965
      %v8967 = vpop.f32.mrb[0].mxu0
      %8968 = vmatprep.mubr.bf16.mxu0 %v6862
      %8969 = vmatmul.mubr.bf16.gmra.mrb[0].mxu0 %v6861
      %v8970 = vpop.f32.mrb[0].mxu0
      %v8971 = vadd.f32 %v8867, %v8970
      %v8972 = vpop.f32.mrb[0].mxu0
      %v8973 = vpop.f32.mrb[0].mxu0
      %v8974 = vadd.f32 %v8870, %v8973
      %v8975 = vpop.f32.mrb[0].mxu0
      %8976 = vmatprep.mubr.bf16.mxu0 %v6887
      %8977 = vmatmul.mubr.bf16.gmra.mrb[0].mxu0 %v6886
      %v8978 = vpop.f32.mrb[0].mxu0
      %v8979 = vadd.f32 %v8875, %v8978
      %v8980 = vpop.f32.mrb[0].mxu0
      %v8981 = vpop.f32.mrb[0].mxu0
      %v8982 = vadd.f32 %v8878, %v8981
      %v8983 = vpop.f32.mrb[0].mxu0
      %8984 = vmatprep.mubr.bf16.mxu0 %v6912
      %8985 = vmatmul.mubr.bf16.gmra.mrb[0].mxu0 %v6911
      %v8986 = vpop.f32.mrb[0].mxu0
      %v8987 = vadd.f32 %v8883, %v8986
      %v8988 = vpop.f32.mrb[0].mxu0
      %v8989 = vpop.f32.mrb[0].mxu0
      %v8990 = vadd.f32 %v8886, %v8989
      %v8991 = vpop.f32.mrb[0].mxu0
      %8992 = vmatprep.mubr.bf16.mxu0 %v6937
      %8993 = vmatmul.mubr.bf16.gmra.mrb[0].mxu0 %v6936
      %v8994 = vpop.f32.mrb[0].mxu0
      %v8995 = vadd.f32 %v8891, %v8994
      %v8996 = vpop.f32.mrb[0].mxu0
      %v8997 = vpop.f32.mrb[0].mxu0
      %v8998 = vpop.f32.mrb[0].mxu0
      %8999 = vdwg.mxu0
      %9000 = vmatprep.subr.bf16.mxu0 0
      %9001 = vmatpush1.bf16.msra.mxu0 %v8072
      %9002 = vmatprep.subr.bf16.mxu0 0
      %9003 = vmatpush1.bf16.msra.mxu0 %v8073
      %9004 = vmatprep.subr.bf16.mxu0 0
      %9005 = vmatpush1.bf16.msra.mxu0 %v8074
      %9006 = vmatprep.subr.bf16.mxu0 0
      %9007 = vmatpush1.bf16.msra.mxu0 %v8075
      %9008 = vmatprep.subr.bf16.mxu0 0
      %9009 = vmatpush1.bf16.msra.mxu0 %v8076
      %9010 = vmatprep.subr.bf16.mxu0 0
      %9011 = vmatpush1.bf16.msra.mxu0 %v8077
      %9012 = vmatprep.subr.bf16.mxu0 0
      %9013 = vmatpush1.bf16.msra.mxu0 %v8078
      %9014 = vmatprep.subr.bf16.mxu0 0
      %9015 = vmatpush1.bf16.msra.mxu0 %v8079
      %9016 = vmatprep.subr.bf16.mxu0 0
      %9017 = vmatpush1.bf16.msra.mxu0 %v8080
      %9018 = vmatprep.subr.bf16.mxu0 0
      %9019 = vmatpush1.bf16.msra.mxu0 %v8081
      %9020 = vmatprep.subr.bf16.mxu0 0
      %9021 = vmatpush1.bf16.msra.mxu0 %v8082
      %9022 = vmatprep.subr.bf16.mxu0 0
      %9023 = vmatpush1.bf16.msra.mxu0 %v8083
      %9024 = vmatprep.subr.bf16.mxu0 0
      %9025 = vmatpush1.bf16.msra.mxu0 %v8084
      %9026 = vmatprep.subr.bf16.mxu0 0
      %9027 = vmatpush1.bf16.msra.mxu0 %v8085
      %9028 = vmatprep.subr.bf16.mxu0 0
      %9029 = vmatpush1.bf16.msra.mxu0 %v8086
      %9030 = vmatprep.subr.bf16.mxu0 0
      %9031 = vmatpush1.bf16.msra.mxu0 %v8087
      %9032 = vmatprep.mubr.bf16.mxu0 %v6739
      %9033 = vmatmul.mubr.bf16.gmra.mrb[0].mxu0 %v6738
      %v9034 = vpop.f32.mrb[0].mxu0
      %v9035 = vadd.f32 %v8931, %v9034
      %v9036 = vpop.f32.mrb[0].mxu0
      %v9037 = vpop.f32.mrb[0].mxu0
      %v9038 = vadd.f32 %v8934, %v9037
      %v9039 = vpop.f32.mrb[0].mxu0
      %9040 = vmatprep.mubr.bf16.mxu0 %v6764
      %9041 = vmatmul.mubr.bf16.gmra.mrb[0].mxu0 %v6763
      %v9042 = vpop.f32.mrb[0].mxu0
      %v9043 = vadd.f32 %v8939, %v9042
      %v9044 = vpop.f32.mrb[0].mxu0
      %v9045 = vpop.f32.mrb[0].mxu0
      %v9046 = vadd.f32 %v8942, %v9045
      %v9047 = vpop.f32.mrb[0].mxu0
      %9048 = vmatprep.mubr.bf16.mxu0 %v6789
      %9049 = vmatmul.mubr.bf16.gmra.mrb[0].mxu0 %v6788
      %v9050 = vpop.f32.mrb[0].mxu0
      %v9051 = vadd.f32 %v8947, %v9050
      %v9052 = vpop.f32.mrb[0].mxu0
      %v9053 = vpop.f32.mrb[0].mxu0
      %v9054 = vadd.f32 %v8950, %v9053
      %v9055 = vpop.f32.mrb[0].mxu0
      %9056 = vmatprep.mubr.bf16.mxu0 %v6814
      %9057 = vmatmul.mubr.bf16.gmra.mrb[0].mxu0 %v6813
      %v9058 = vpop.f32.mrb[0].mxu0
      %v9059 = vadd.f32 %v8955, %v9058
      %v9060 = vpop.f32.mrb[0].mxu0
      %v9061 = vpop.f32.mrb[0].mxu0
      %v9062 = vadd.f32 %v8958, %v9061
      %v9063 = vpop.f32.mrb[0].mxu0
      %9064 = vmatprep.mubr.bf16.mxu0 %v6839
      %9065 = vmatmul.mubr.bf16.gmra.mrb[0].mxu0 %v6838
      %v9066 = vpop.f32.mrb[0].mxu0
      %v9067 = vadd.f32 %v8963, %v9066
      %v9068 = vpop.f32.mrb[0].mxu0
      %v9069 = vpop.f32.mrb[0].mxu0
      %v9070 = vadd.f32 %v8966, %v9069
      %v9071 = vpop.f32.mrb[0].mxu0
      %9072 = vmatprep.mubr.bf16.mxu0 %v6864
      %9073 = vmatmul.mubr.bf16.gmra.mrb[0].mxu0 %v6863
      %v9074 = vpop.f32.mrb[0].mxu0
      %v9075 = vadd.f32 %v8971, %v9074
      %v9076 = vpop.f32.mrb[0].mxu0
      %v9077 = vpop.f32.mrb[0].mxu0
      %v9078 = vadd.f32 %v8974, %v9077
      %v9079 = vpop.f32.mrb[0].mxu0
      %9080 = vmatprep.mubr.bf16.mxu0 %v6889
      %9081 = vmatmul.mubr.bf16.gmra.mrb[0].mxu0 %v6888
      %v9082 = vpop.f32.mrb[0].mxu0
      %v9083 = vadd.f32 %v8979, %v9082
      %v9084 = vpop.f32.mrb[0].mxu0
      %v9085 = vpop.f32.mrb[0].mxu0
      %v9086 = vadd.f32 %v8982, %v9085
      %v9087 = vpop.f32.mrb[0].mxu0
      %9088 = vmatprep.mubr.bf16.mxu0 %v6914
      %9089 = vmatmul.mubr.bf16.gmra.mrb[0].mxu0 %v6913
      %v9090 = vpop.f32.mrb[0].mxu0
      %v9091 = vadd.f32 %v8987, %v9090
      %v9092 = vpop.f32.mrb[0].mxu0
      %v9093 = vpop.f32.mrb[0].mxu0
      %v9094 = vadd.f32 %v8990, %v9093
      %v9095 = vpop.f32.mrb[0].mxu0
      %9096 = vmatprep.mubr.bf16.mxu0 %v6939
      %9097 = vmatmul.mubr.bf16.gmra.mrb[0].mxu0 %v6938
      %v9098 = vpop.f32.mrb[0].mxu0
      %v9099 = vadd.f32 %v8995, %v9098
      %v9100 = vpop.f32.mrb[0].mxu0
      %v9101 = vpop.f32.mrb[0].mxu0
      %v9102 = vpop.f32.mrb[0].mxu0
      %9103 = vdwg.mxu0
      %9104 = vmatprep.subr.bf16.mxu0 0
      %9105 = vmatpush1.bf16.msra.mxu0 %v8088
      %9106 = vmatprep.subr.bf16.mxu0 0
      %9107 = vmatpush1.bf16.msra.mxu0 %v8089
      %9108 = vmatprep.subr.bf16.mxu0 0
      %9109 = vmatpush1.bf16.msra.mxu0 %v8090
      %9110 = vmatprep.subr.bf16.mxu0 0
      %9111 = vmatpush1.bf16.msra.mxu0 %v8091
      %9112 = vmatprep.subr.bf16.mxu0 0
      %9113 = vmatpush1.bf16.msra.mxu0 %v8092
      %9114 = vmatprep.subr.bf16.mxu0 0
      %9115 = vmatpush1.bf16.msra.mxu0 %v8093
      %9116 = vmatprep.subr.bf16.mxu0 0
      %9117 = vmatpush1.bf16.msra.mxu0 %v8094
      %9118 = vmatprep.subr.bf16.mxu0 0
      %9119 = vmatpush1.bf16.msra.mxu0 %v8095
      %9120 = vmatprep.subr.bf16.mxu0 0
      %9121 = vmatpush1.bf16.msra.mxu0 %v8096
      %9122 = vmatprep.subr.bf16.mxu0 0
      %9123 = vmatpush1.bf16.msra.mxu0 %v8097
      %9124 = vmatprep.subr.bf16.mxu0 0
      %9125 = vmatpush1.bf16.msra.mxu0 %v8098
      %9126 = vmatprep.subr.bf16.mxu0 0
      %9127 = vmatpush1.bf16.msra.mxu0 %v8099
      %9128 = vmatprep.subr.bf16.mxu0 0
      %9129 = vmatpush1.bf16.msra.mxu0 %v8100
      %9130 = vmatprep.subr.bf16.mxu0 0
      %9131 = vmatpush1.bf16.msra.mxu0 %v8101
      %9132 = vmatprep.subr.bf16.mxu0 0
      %9133 = vmatpush1.bf16.msra.mxu0 %v8102
      %9134 = vmatprep.subr.bf16.mxu0 0
      %9135 = vmatpush1.bf16.msra.mxu0 %v8103
      %9136 = vmatprep.mubr.bf16.mxu0 %v6741
      %9137 = vmatmul.mubr.bf16.gmra.mrb[0].mxu0 %v6740
      %v9138 = vpop.f32.mrb[0].mxu0
      %v9139 = vadd.f32 %v9035, %v9138
      %v9140 = vpop.f32.mrb[0].mxu0
      %v9141 = vpop.f32.mrb[0].mxu0
      %v9142 = vadd.f32 %v9038, %v9141
      %v9143 = vpop.f32.mrb[0].mxu0
      %9144 = vmatprep.mubr.bf16.mxu0 %v6766
      %9145 = vmatmul.mubr.bf16.gmra.mrb[0].mxu0 %v6765
      %v9146 = vpop.f32.mrb[0].mxu0
      %v9147 = vadd.f32 %v9043, %v9146
      %v9148 = vpop.f32.mrb[0].mxu0
      %v9149 = vpop.f32.mrb[0].mxu0
      %v9150 = vadd.f32 %v9046, %v9149
      %v9151 = vpop.f32.mrb[0].mxu0
      %9152 = vmatprep.mubr.bf16.mxu0 %v6791
      %9153 = vmatmul.mubr.bf16.gmra.mrb[0].mxu0 %v6790
      %v9154 = vpop.f32.mrb[0].mxu0
      %v9155 = vadd.f32 %v9051, %v9154
      %v9156 = vpop.f32.mrb[0].mxu0
      %v9157 = vpop.f32.mrb[0].mxu0
      %v9158 = vadd.f32 %v9054, %v9157
      %v9159 = vpop.f32.mrb[0].mxu0
      %9160 = vmatprep.mubr.bf16.mxu0 %v6816
      %9161 = vmatmul.mubr.bf16.gmra.mrb[0].mxu0 %v6815
      %v9162 = vpop.f32.mrb[0].mxu0
      %v9163 = vadd.f32 %v9059, %v9162
      %v9164 = vpop.f32.mrb[0].mxu0
      %v9165 = vpop.f32.mrb[0].mxu0
      %v9166 = vadd.f32 %v9062, %v9165
      %v9167 = vpop.f32.mrb[0].mxu0
      %9168 = vmatprep.mubr.bf16.mxu0 %v6841
      %9169 = vmatmul.mubr.bf16.gmra.mrb[0].mxu0 %v6840
      %v9170 = vpop.f32.mrb[0].mxu0
      %v9171 = vadd.f32 %v9067, %v9170
      %v9172 = vpop.f32.mrb[0].mxu0
      %v9173 = vpop.f32.mrb[0].mxu0
      %v9174 = vadd.f32 %v9070, %v9173
      %v9175 = vpop.f32.mrb[0].mxu0
      %9176 = vmatprep.mubr.bf16.mxu0 %v6866
      %9177 = vmatmul.mubr.bf16.gmra.mrb[0].mxu0 %v6865
      %v9178 = vpop.f32.mrb[0].mxu0
      %v9179 = vadd.f32 %v9075, %v9178
      %v9180 = vpop.f32.mrb[0].mxu0
      %v9181 = vpop.f32.mrb[0].mxu0
      %v9182 = vadd.f32 %v9078, %v9181
      %v9183 = vpop.f32.mrb[0].mxu0
      %9184 = vmatprep.mubr.bf16.mxu0 %v6891
      %9185 = vmatmul.mubr.bf16.gmra.mrb[0].mxu0 %v6890
      %v9186 = vpop.f32.mrb[0].mxu0
      %v9187 = vadd.f32 %v9083, %v9186
      %v9188 = vpop.f32.mrb[0].mxu0
      %v9189 = vpop.f32.mrb[0].mxu0
      %v9190 = vadd.f32 %v9086, %v9189
      %v9191 = vpop.f32.mrb[0].mxu0
      %9192 = vmatprep.mubr.bf16.mxu0 %v6916
      %9193 = vmatmul.mubr.bf16.gmra.mrb[0].mxu0 %v6915
      %v9194 = vpop.f32.mrb[0].mxu0
      %v9195 = vadd.f32 %v9091, %v9194
      %v9196 = vpop.f32.mrb[0].mxu0
      %v9197 = vpop.f32.mrb[0].mxu0
      %v9198 = vadd.f32 %v9094, %v9197
      %v9199 = vpop.f32.mrb[0].mxu0
      %9200 = vmatprep.mubr.bf16.mxu0 %v6941
      %9201 = vmatmul.mubr.bf16.gmra.mrb[0].mxu0 %v6940
      %v9202 = vpop.f32.mrb[0].mxu0
      %v9203 = vadd.f32 %v9099, %v9202
      %v9204 = vpop.f32.mrb[0].mxu0
      %v9205 = vpop.f32.mrb[0].mxu0
      %v9206 = vpop.f32.mrb[0].mxu0
      %9207 = vdwg.mxu0
      %9208 = vmatprep.subr.bf16.mxu0 0
      %9209 = vmatpush1.bf16.msra.mxu0 %v8104
      %9210 = vmatprep.subr.bf16.mxu0 0
      %9211 = vmatpush1.bf16.msra.mxu0 %v8105
      %9212 = vmatprep.subr.bf16.mxu0 0
      %9213 = vmatpush1.bf16.msra.mxu0 %v8106
      %9214 = vmatprep.subr.bf16.mxu0 0
      %9215 = vmatpush1.bf16.msra.mxu0 %v8107
      %9216 = vmatprep.subr.bf16.mxu0 0
      %9217 = vmatpush1.bf16.msra.mxu0 %v8108
      %9218 = vmatprep.subr.bf16.mxu0 0
      %9219 = vmatpush1.bf16.msra.mxu0 %v8109
      %9220 = vmatprep.subr.bf16.mxu0 0
      %9221 = vmatpush1.bf16.msra.mxu0 %v8110
      %9222 = vmatprep.subr.bf16.mxu0 0
      %9223 = vmatpush1.bf16.msra.mxu0 %v8111
      %9224 = vmatprep.subr.bf16.mxu0 0
      %9225 = vmatpush1.bf16.msra.mxu0 %v8112
      %9226 = vmatprep.subr.bf16.mxu0 0
      %9227 = vmatpush1.bf16.msra.mxu0 %v8113
      %9228 = vmatprep.subr.bf16.mxu0 0
      %9229 = vmatpush1.bf16.msra.mxu0 %v8114
      %9230 = vmatprep.subr.bf16.mxu0 0
      %9231 = vmatpush1.bf16.msra.mxu0 %v8115
      %9232 = vmatprep.subr.bf16.mxu0 0
      %9233 = vmatpush1.bf16.msra.mxu0 %v8116
      %9234 = vmatprep.subr.bf16.mxu0 0
      %9235 = vmatpush1.bf16.msra.mxu0 %v8117
      %9236 = vmatprep.subr.bf16.mxu0 0
      %9237 = vmatpush1.bf16.msra.mxu0 %v8118
      %9238 = vmatprep.subr.bf16.mxu0 0
      %9239 = vmatpush1.bf16.msra.mxu0 %v8119
      %9240 = vmatprep.mubr.bf16.mxu0 %v6743
      %9241 = vmatmul.mubr.bf16.gmra.mrb[0].mxu0 %v6742
      %v9242 = vpop.f32.mrb[0].mxu0
      %v9243 = vadd.f32 %v9139, %v9242
      %v9244 = vpop.f32.mrb[0].mxu0
      %v9245 = vpop.f32.mrb[0].mxu0
      %v9246 = vadd.f32 %v9142, %v9245
      %v9247 = vpop.f32.mrb[0].mxu0
      %9248 = vmatprep.mubr.bf16.mxu0 %v6768
      %9249 = vmatmul.mubr.bf16.gmra.mrb[0].mxu0 %v6767
      %v9250 = vpop.f32.mrb[0].mxu0
      %v9251 = vadd.f32 %v9147, %v9250
      %v9252 = vpop.f32.mrb[0].mxu0
      %v9253 = vpop.f32.mrb[0].mxu0
      %v9254 = vadd.f32 %v9150, %v9253
      %v9255 = vpop.f32.mrb[0].mxu0
      %9256 = vmatprep.mubr.bf16.mxu0 %v6793
      %9257 = vmatmul.mubr.bf16.gmra.mrb[0].mxu0 %v6792
      %v9258 = vpop.f32.mrb[0].mxu0
      %v9259 = vadd.f32 %v9155, %v9258
      %v9260 = vpop.f32.mrb[0].mxu0
      %v9261 = vpop.f32.mrb[0].mxu0
      %v9262 = vadd.f32 %v9158, %v9261
      %v9263 = vpop.f32.mrb[0].mxu0
      %9264 = vmatprep.mubr.bf16.mxu0 %v6818
      %9265 = vmatmul.mubr.bf16.gmra.mrb[0].mxu0 %v6817
      %v9266 = vpop.f32.mrb[0].mxu0
      %v9267 = vadd.f32 %v9163, %v9266
      %v9268 = vpop.f32.mrb[0].mxu0
      %v9269 = vpop.f32.mrb[0].mxu0
      %v9270 = vadd.f32 %v9166, %v9269
      %v9271 = vpop.f32.mrb[0].mxu0
      %9272 = vmatprep.mubr.bf16.mxu0 %v6843
      %9273 = vmatmul.mubr.bf16.gmra.mrb[0].mxu0 %v6842
      %v9274 = vpop.f32.mrb[0].mxu0
      %v9275 = vadd.f32 %v9171, %v9274
      %v9276 = vpop.f32.mrb[0].mxu0
      %v9277 = vpop.f32.mrb[0].mxu0
      %v9278 = vadd.f32 %v9174, %v9277
      %v9279 = vpop.f32.mrb[0].mxu0
      %9280 = vmatprep.mubr.bf16.mxu0 %v6868
      %9281 = vmatmul.mubr.bf16.gmra.mrb[0].mxu0 %v6867
      %v9282 = vpop.f32.mrb[0].mxu0
      %v9283 = vadd.f32 %v9179, %v9282
      %v9284 = vpop.f32.mrb[0].mxu0
      %v9285 = vpop.f32.mrb[0].mxu0
      %v9286 = vadd.f32 %v9182, %v9285
      %v9287 = vpop.f32.mrb[0].mxu0
      %9288 = vmatprep.mubr.bf16.mxu0 %v6893
      %9289 = vmatmul.mubr.bf16.gmra.mrb[0].mxu0 %v6892
      %v9290 = vpop.f32.mrb[0].mxu0
      %v9291 = vadd.f32 %v9187, %v9290
      %v9292 = vpop.f32.mrb[0].mxu0
      %v9293 = vpop.f32.mrb[0].mxu0
      %v9294 = vadd.f32 %v9190, %v9293
      %v9295 = vpop.f32.mrb[0].mxu0
      %9296 = vmatprep.mubr.bf16.mxu0 %v6918
      %9297 = vmatmul.mubr.bf16.gmra.mrb[0].mxu0 %v6917
      %v9298 = vpop.f32.mrb[0].mxu0
      %v9299 = vadd.f32 %v9195, %v9298
      %v9300 = vpop.f32.mrb[0].mxu0
      %v9301 = vpop.f32.mrb[0].mxu0
      %v9302 = vadd.f32 %v9198, %v9301
      %v9303 = vpop.f32.mrb[0].mxu0
      %9304 = vmatprep.mubr.bf16.mxu0 %v6943
      %9305 = vmatmul.mubr.bf16.gmra.mrb[0].mxu0 %v6942
      %v9306 = vpop.f32.mrb[0].mxu0
      %v9307 = vadd.f32 %v9203, %v9306
      %v9308 = vpop.f32.mrb[0].mxu0
      %v9309 = vpop.f32.mrb[0].mxu0
      %v9310 = vpop.f32.mrb[0].mxu0
      %9311 = vdwg.mxu0
      %9312 = vmatprep.subr.bf16.mxu0 0
      %9313 = vmatpush1.bf16.msra.mxu0 %v8120
      %9314 = vmatprep.subr.bf16.mxu0 0
      %9315 = vmatpush1.bf16.msra.mxu0 %v8121
      %9316 = vmatprep.subr.bf16.mxu0 0
      %9317 = vmatpush1.bf16.msra.mxu0 %v8122
      %9318 = vmatprep.subr.bf16.mxu0 0
      %9319 = vmatpush1.bf16.msra.mxu0 %v8123
      %9320 = vmatprep.subr.bf16.mxu0 0
      %9321 = vmatpush1.bf16.msra.mxu0 %v8124
      %9322 = vmatprep.subr.bf16.mxu0 0
      %9323 = vmatpush1.bf16.msra.mxu0 %v8125
      %9324 = vmatprep.subr.bf16.mxu0 0
      %9325 = vmatpush1.bf16.msra.mxu0 %v8126
      %9326 = vmatprep.subr.bf16.mxu0 0
      %9327 = vmatpush1.bf16.msra.mxu0 %v8127
      %9328 = vmatprep.subr.bf16.mxu0 0
      %9329 = vmatpush1.bf16.msra.mxu0 %v8128
      %9330 = vmatprep.subr.bf16.mxu0 0
      %9331 = vmatpush1.bf16.msra.mxu0 %v8129
      %9332 = vmatprep.subr.bf16.mxu0 0
      %9333 = vmatpush1.bf16.msra.mxu0 %v8130
      %9334 = vmatprep.subr.bf16.mxu0 0
      %9335 = vmatpush1.bf16.msra.mxu0 %v8131
      %9336 = vmatprep.subr.bf16.mxu0 0
      %9337 = vmatpush1.bf16.msra.mxu0 %v8132
      %9338 = vmatprep.subr.bf16.mxu0 0
      %9339 = vmatpush1.bf16.msra.mxu0 %v8133
      %9340 = vmatprep.subr.bf16.mxu0 0
      %9341 = vmatpush1.bf16.msra.mxu0 %v8134
      %9342 = vmatprep.subr.bf16.mxu0 0
      %9343 = vmatpush1.bf16.msra.mxu0 %v8135
      %9344 = vmatprep.mubr.bf16.mxu0 %v6745
      %9345 = vmatmul.mubr.bf16.gmra.mrb[0].mxu0 %v6744
      %v9346 = vpop.f32.mrb[0].mxu0
      %v9347 = vadd.f32 %v9243, %v9346
      %v9348 = vpop.f32.mrb[0].mxu0
      %v9349 = vpop.f32.mrb[0].mxu0
      %v9350 = vadd.f32 %v9246, %v9349
      %v9351 = vpop.f32.mrb[0].mxu0
      %9352 = vmatprep.mubr.bf16.mxu0 %v6770
      %9353 = vmatmul.mubr.bf16.gmra.mrb[0].mxu0 %v6769
      %v9354 = vpop.f32.mrb[0].mxu0
      %v9355 = vadd.f32 %v9251, %v9354
      %v9356 = vpop.f32.mrb[0].mxu0
      %v9357 = vpop.f32.mrb[0].mxu0
      %v9358 = vadd.f32 %v9254, %v9357
      %v9359 = vpop.f32.mrb[0].mxu0
      %9360 = vmatprep.mubr.bf16.mxu0 %v6795
      %9361 = vmatmul.mubr.bf16.gmra.mrb[0].mxu0 %v6794
      %v9362 = vpop.f32.mrb[0].mxu0
      %v9363 = vadd.f32 %v9259, %v9362
      %v9364 = vpop.f32.mrb[0].mxu0
      %v9365 = vpop.f32.mrb[0].mxu0
      %v9366 = vadd.f32 %v9262, %v9365
      %v9367 = vpop.f32.mrb[0].mxu0
      %9368 = vmatprep.mubr.bf16.mxu0 %v6820
      %9369 = vmatmul.mubr.bf16.gmra.mrb[0].mxu0 %v6819
      %v9370 = vpop.f32.mrb[0].mxu0
      %v9371 = vadd.f32 %v9267, %v9370
      %v9372 = vpop.f32.mrb[0].mxu0
      %v9373 = vpop.f32.mrb[0].mxu0
      %v9374 = vadd.f32 %v9270, %v9373
      %v9375 = vpop.f32.mrb[0].mxu0
      %9376 = vmatprep.mubr.bf16.mxu0 %v6845
      %9377 = vmatmul.mubr.bf16.gmra.mrb[0].mxu0 %v6844
      %v9378 = vpop.f32.mrb[0].mxu0
      %v9379 = vadd.f32 %v9275, %v9378
      %v9380 = vpop.f32.mrb[0].mxu0
      %v9381 = vpop.f32.mrb[0].mxu0
      %v9382 = vadd.f32 %v9278, %v9381
      %v9383 = vpop.f32.mrb[0].mxu0
      %9384 = vmatprep.mubr.bf16.mxu0 %v6870
      %9385 = vmatmul.mubr.bf16.gmra.mrb[0].mxu0 %v6869
      %v9386 = vpop.f32.mrb[0].mxu0
      %v9387 = vadd.f32 %v9283, %v9386
      %v9388 = vpop.f32.mrb[0].mxu0
      %v9389 = vpop.f32.mrb[0].mxu0
      %v9390 = vadd.f32 %v9286, %v9389
      %v9391 = vpop.f32.mrb[0].mxu0
      %9392 = vmatprep.mubr.bf16.mxu0 %v6895
      %9393 = vmatmul.mubr.bf16.gmra.mrb[0].mxu0 %v6894
      %v9394 = vpop.f32.mrb[0].mxu0
      %v9395 = vadd.f32 %v9291, %v9394
      %v9396 = vpop.f32.mrb[0].mxu0
      %v9397 = vpop.f32.mrb[0].mxu0
      %v9398 = vadd.f32 %v9294, %v9397
      %v9399 = vpop.f32.mrb[0].mxu0
      %9400 = vmatprep.mubr.bf16.mxu0 %v6920
      %9401 = vmatmul.mubr.bf16.gmra.mrb[0].mxu0 %v6919
      %v9402 = vpop.f32.mrb[0].mxu0
      %v9403 = vadd.f32 %v9299, %v9402
      %v9404 = vpop.f32.mrb[0].mxu0
      %v9405 = vpop.f32.mrb[0].mxu0
      %v9406 = vadd.f32 %v9302, %v9405
      %v9407 = vpop.f32.mrb[0].mxu0
      %9408 = vmatprep.mubr.bf16.mxu0 %v6945
      %9409 = vmatmul.mubr.bf16.gmra.mrb[0].mxu0 %v6944
      %v9410 = vpop.f32.mrb[0].mxu0
      %v9411 = vadd.f32 %v9307, %v9410
      %v9412 = vpop.f32.mrb[0].mxu0
      %v9413 = vpop.f32.mrb[0].mxu0
      %v9414 = vpop.f32.mrb[0].mxu0
      %9415 = vdwg.mxu0
      %9416 = vmatprep.subr.bf16.mxu0 0
      %9417 = vmatpush1.bf16.msra.mxu0 %v8136
      %9418 = vmatprep.subr.bf16.mxu0 0
      %9419 = vmatpush1.bf16.msra.mxu0 %v8137
      %9420 = vmatprep.subr.bf16.mxu0 0
      %9421 = vmatpush1.bf16.msra.mxu0 %v8138
      %9422 = vmatprep.subr.bf16.mxu0 0
      %9423 = vmatpush1.bf16.msra.mxu0 %v8139
      %9424 = vmatprep.subr.bf16.mxu0 0
      %9425 = vmatpush1.bf16.msra.mxu0 %v8140
      %9426 = vmatprep.subr.bf16.mxu0 0
      %9427 = vmatpush1.bf16.msra.mxu0 %v8141
      %9428 = vmatprep.subr.bf16.mxu0 0
      %9429 = vmatpush1.bf16.msra.mxu0 %v8142
      %9430 = vmatprep.subr.bf16.mxu0 0
      %9431 = vmatpush1.bf16.msra.mxu0 %v8143
      %9432 = vmatprep.subr.bf16.mxu0 0
      %9433 = vmatpush1.bf16.msra.mxu0 %v8144
      %9434 = vmatprep.subr.bf16.mxu0 0
      %9435 = vmatpush1.bf16.msra.mxu0 %v8145
      %9436 = vmatprep.subr.bf16.mxu0 0
      %9437 = vmatpush1.bf16.msra.mxu0 %v8146
      %9438 = vmatprep.subr.bf16.mxu0 0
      %9439 = vmatpush1.bf16.msra.mxu0 %v8147
      %9440 = vmatprep.subr.bf16.mxu0 0
      %9441 = vmatpush1.bf16.msra.mxu0 %v8148
      %9442 = vmatprep.subr.bf16.mxu0 0
      %9443 = vmatpush1.bf16.msra.mxu0 %v8149
      %9444 = vmatprep.subr.bf16.mxu0 0
      %9445 = vmatpush1.bf16.msra.mxu0 %v8150
      %9446 = vmatprep.subr.bf16.mxu0 0
      %9447 = vmatpush1.bf16.msra.mxu0 %v8151
      %9448 = vmatprep.mubr.bf16.mxu0 %v6747
      %9449 = vmatmul.mubr.bf16.gmra.mrb[0].mxu0 %v6746
      %v9450 = vpop.f32.mrb[0].mxu0
      %v9451 = vadd.f32 %v9347, %v9450
      %v9452 = vpop.f32.mrb[0].mxu0
      %v9453 = vpop.f32.mrb[0].mxu0
      %v9454 = vadd.f32 %v9350, %v9453
      %v9455 = vpop.f32.mrb[0].mxu0
      %9456 = vmatprep.mubr.bf16.mxu0 %v6772
      %9457 = vmatmul.mubr.bf16.gmra.mrb[0].mxu0 %v6771
      %v9458 = vpop.f32.mrb[0].mxu0
      %v9459 = vadd.f32 %v9355, %v9458
      %v9460 = vpop.f32.mrb[0].mxu0
      %v9461 = vpop.f32.mrb[0].mxu0
      %v9462 = vadd.f32 %v9358, %v9461
      %v9463 = vpop.f32.mrb[0].mxu0
      %9464 = vmatprep.mubr.bf16.mxu0 %v6797
      %9465 = vmatmul.mubr.bf16.gmra.mrb[0].mxu0 %v6796
      %v9466 = vpop.f32.mrb[0].mxu0
      %v9467 = vadd.f32 %v9363, %v9466
      %v9468 = vpop.f32.mrb[0].mxu0
      %v9469 = vpop.f32.mrb[0].mxu0
      %v9470 = vadd.f32 %v9366, %v9469
      %v9471 = vpop.f32.mrb[0].mxu0
      %9472 = vmatprep.mubr.bf16.mxu0 %v6822
      %9473 = vmatmul.mubr.bf16.gmra.mrb[0].mxu0 %v6821
      %v9474 = vpop.f32.mrb[0].mxu0
      %v9475 = vadd.f32 %v9371, %v9474
      %v9476 = vpop.f32.mrb[0].mxu0
      %v9477 = vpop.f32.mrb[0].mxu0
      %v9478 = vadd.f32 %v9374, %v9477
      %v9479 = vpop.f32.mrb[0].mxu0
      %9480 = vmatprep.mubr.bf16.mxu0 %v6847
      %9481 = vmatmul.mubr.bf16.gmra.mrb[0].mxu0 %v6846
      %v9482 = vpop.f32.mrb[0].mxu0
      %v9483 = vadd.f32 %v9379, %v9482
      %v9484 = vpop.f32.mrb[0].mxu0
      %v9485 = vpop.f32.mrb[0].mxu0
      %v9486 = vadd.f32 %v9382, %v9485
      %v9487 = vpop.f32.mrb[0].mxu0
      %9488 = vmatprep.mubr.bf16.mxu0 %v6872
      %9489 = vmatmul.mubr.bf16.gmra.mrb[0].mxu0 %v6871
      %v9490 = vpop.f32.mrb[0].mxu0
      %v9491 = vadd.f32 %v9387, %v9490
      %v9492 = vpop.f32.mrb[0].mxu0
      %v9493 = vpop.f32.mrb[0].mxu0
      %v9494 = vadd.f32 %v9390, %v9493
      %v9495 = vpop.f32.mrb[0].mxu0
      %9496 = vmatprep.mubr.bf16.mxu0 %v6897
      %9497 = vmatmul.mubr.bf16.gmra.mrb[0].mxu0 %v6896
      %v9498 = vpop.f32.mrb[0].mxu0
      %v9499 = vadd.f32 %v9395, %v9498
      %v9500 = vpop.f32.mrb[0].mxu0
      %v9501 = vpop.f32.mrb[0].mxu0
      %v9502 = vadd.f32 %v9398, %v9501
      %v9503 = vpop.f32.mrb[0].mxu0
      %9504 = vmatprep.mubr.bf16.mxu0 %v6922
      %9505 = vmatmul.mubr.bf16.gmra.mrb[0].mxu0 %v6921
      %v9506 = vpop.f32.mrb[0].mxu0
      %v9507 = vadd.f32 %v9403, %v9506
      %v9508 = vpop.f32.mrb[0].mxu0
      %v9509 = vpop.f32.mrb[0].mxu0
      %v9510 = vadd.f32 %v9406, %v9509
      %v9511 = vpop.f32.mrb[0].mxu0
      %9512 = vmatprep.mubr.bf16.mxu0 %v6947
      %9513 = vmatmul.mubr.bf16.gmra.mrb[0].mxu0 %v6946
      %v9514 = vpop.f32.mrb[0].mxu0
      %v9515 = vadd.f32 %v9411, %v9514
      %v9516 = vpop.f32.mrb[0].mxu0
      %v9517 = vpop.f32.mrb[0].mxu0
      %v9518 = vpop.f32.mrb[0].mxu0
      %9519 = vdwg.mxu0
      %9520 = vmatprep.subr.bf16.mxu0 0
      %9521 = vmatpush1.bf16.msra.mxu0 %v8152
      %9522 = vmatprep.subr.bf16.mxu0 0
      %9523 = vmatpush1.bf16.msra.mxu0 %v8153
      %9524 = vmatprep.subr.bf16.mxu0 0
      %9525 = vmatpush1.bf16.msra.mxu0 %v8154
      %9526 = vmatprep.subr.bf16.mxu0 0
      %9527 = vmatpush1.bf16.msra.mxu0 %v8155
      %9528 = vmatprep.subr.bf16.mxu0 0
      %9529 = vmatpush1.bf16.msra.mxu0 %v8156
      %9530 = vmatprep.subr.bf16.mxu0 0
      %9531 = vmatpush1.bf16.msra.mxu0 %v8157
      %9532 = vmatprep.subr.bf16.mxu0 0
      %9533 = vmatpush1.bf16.msra.mxu0 %v8158
      %9534 = vmatprep.subr.bf16.mxu0 0
      %9535 = vmatpush1.bf16.msra.mxu0 %v8159
      %9536 = vmatprep.subr.bf16.mxu0 0
      %9537 = vmatpush1.bf16.msra.mxu0 %v8160
      %9538 = vmatprep.subr.bf16.mxu0 0
      %9539 = vmatpush1.bf16.msra.mxu0 %v8161
      %9540 = vmatprep.subr.bf16.mxu0 0
      %9541 = vmatpush1.bf16.msra.mxu0 %v8162
      %9542 = vmatprep.subr.bf16.mxu0 0
      %9543 = vmatpush1.bf16.msra.mxu0 %v8163
      %9544 = vmatprep.subr.bf16.mxu0 0
      %9545 = vmatpush1.bf16.msra.mxu0 %v8164
      %9546 = vmatprep.subr.bf16.mxu0 0
      %9547 = vmatpush1.bf16.msra.mxu0 %v8165
      %9548 = vmatprep.subr.bf16.mxu0 0
      %9549 = vmatpush1.bf16.msra.mxu0 %v8166
      %9550 = vmatprep.subr.bf16.mxu0 0
      %9551 = vmatpush1.bf16.msra.mxu0 %v8167
      %9552 = vmatprep.mubr.bf16.mxu0 %v6749
      %9553 = vmatmul.mubr.bf16.gmra.mrb[0].mxu0 %v6748
      %v9554 = vpop.f32.mrb[0].mxu0
      %v9555 = vadd.f32 %v9451, %v9554
      %v9556 = vpop.f32.mrb[0].mxu0
      %v9557 = vpop.f32.mrb[0].mxu0
      %v9558 = vadd.f32 %v9454, %v9557
      %v9559 = vpop.f32.mrb[0].mxu0
      %9560 = vmatprep.mubr.bf16.mxu0 %v6774
      %9561 = vmatmul.mubr.bf16.gmra.mrb[0].mxu0 %v6773
      %v9562 = vpop.f32.mrb[0].mxu0
      %v9563 = vadd.f32 %v9459, %v9562
      %v9564 = vpop.f32.mrb[0].mxu0
      %v9565 = vpop.f32.mrb[0].mxu0
      %v9566 = vadd.f32 %v9462, %v9565
      %v9567 = vpop.f32.mrb[0].mxu0
      %9568 = vmatprep.mubr.bf16.mxu0 %v6799
      %9569 = vmatmul.mubr.bf16.gmra.mrb[0].mxu0 %v6798
      %v9570 = vpop.f32.mrb[0].mxu0
      %v9571 = vadd.f32 %v9467, %v9570
      %v9572 = vpop.f32.mrb[0].mxu0
      %v9573 = vpop.f32.mrb[0].mxu0
      %v9574 = vadd.f32 %v9470, %v9573
      %v9575 = vpop.f32.mrb[0].mxu0
      %9576 = vmatprep.mubr.bf16.mxu0 %v6824
      %9577 = vmatmul.mubr.bf16.gmra.mrb[0].mxu0 %v6823
      %v9578 = vpop.f32.mrb[0].mxu0
      %v9579 = vadd.f32 %v9475, %v9578
      %v9580 = vpop.f32.mrb[0].mxu0
      %v9581 = vpop.f32.mrb[0].mxu0
      %v9582 = vadd.f32 %v9478, %v9581
      %v9583 = vpop.f32.mrb[0].mxu0
      %9584 = vmatprep.mubr.bf16.mxu0 %v6849
      %9585 = vmatmul.mubr.bf16.gmra.mrb[0].mxu0 %v6848
      %v9586 = vpop.f32.mrb[0].mxu0
      %v9587 = vadd.f32 %v9483, %v9586
      %v9588 = vpop.f32.mrb[0].mxu0
      %v9589 = vpop.f32.mrb[0].mxu0
      %v9590 = vadd.f32 %v9486, %v9589
      %v9591 = vpop.f32.mrb[0].mxu0
      %9592 = vmatprep.mubr.bf16.mxu0 %v6874
      %9593 = vmatmul.mubr.bf16.gmra.mrb[0].mxu0 %v6873
      %v9594 = vpop.f32.mrb[0].mxu0
      %v9595 = vadd.f32 %v9491, %v9594
      %v9596 = vpop.f32.mrb[0].mxu0
      %v9597 = vpop.f32.mrb[0].mxu0
      %v9598 = vadd.f32 %v9494, %v9597
      %v9599 = vpop.f32.mrb[0].mxu0
      %9600 = vmatprep.mubr.bf16.mxu0 %v6899
      %9601 = vmatmul.mubr.bf16.gmra.mrb[0].mxu0 %v6898
      %v9602 = vpop.f32.mrb[0].mxu0
      %v9603 = vadd.f32 %v9499, %v9602
      %v9604 = vpop.f32.mrb[0].mxu0
      %v9605 = vpop.f32.mrb[0].mxu0
      %v9606 = vadd.f32 %v9502, %v9605
      %v9607 = vpop.f32.mrb[0].mxu0
      %9608 = vmatprep.mubr.bf16.mxu0 %v6924
      %9609 = vmatmul.mubr.bf16.gmra.mrb[0].mxu0 %v6923
      %v9610 = vpop.f32.mrb[0].mxu0
      %v9611 = vadd.f32 %v9507, %v9610
      %v9612 = vpop.f32.mrb[0].mxu0
      %v9613 = vpop.f32.mrb[0].mxu0
      %v9614 = vadd.f32 %v9510, %v9613
      %v9615 = vpop.f32.mrb[0].mxu0
      %9616 = vmatprep.mubr.bf16.mxu0 %v6949
      %9617 = vmatmul.mubr.bf16.gmra.mrb[0].mxu0 %v6948
      %v9618 = vpop.f32.mrb[0].mxu0
      %v9619 = vadd.f32 %v9515, %v9618
      %v9620 = vpop.f32.mrb[0].mxu0
      %v9621 = vpop.f32.mrb[0].mxu0
      %v9622 = vpop.f32.mrb[0].mxu0
      %9623 = vdwg.mxu0
      %9624 = vmatprep.subr.bf16.mxu0 0
      %9625 = vmatpush1.bf16.msra.mxu0 %v8168
      %9626 = vmatprep.subr.bf16.mxu0 0
      %9627 = vmatpush1.bf16.msra.mxu0 %v8169
      %9628 = vmatprep.subr.bf16.mxu0 0
      %9629 = vmatpush1.bf16.msra.mxu0 %v8170
      %9630 = vmatprep.subr.bf16.mxu0 0
      %9631 = vmatpush1.bf16.msra.mxu0 %v8171
      %9632 = vmatprep.subr.bf16.mxu0 0
      %9633 = vmatpush1.bf16.msra.mxu0 %v8172
      %9634 = vmatprep.subr.bf16.mxu0 0
      %9635 = vmatpush1.bf16.msra.mxu0 %v8173
      %9636 = vmatprep.subr.bf16.mxu0 0
      %9637 = vmatpush1.bf16.msra.mxu0 %v8174
      %9638 = vmatprep.subr.bf16.mxu0 0
      %9639 = vmatpush1.bf16.msra.mxu0 %v8175
      %9640 = vmatprep.subr.bf16.mxu0 0
      %9641 = vmatpush1.bf16.msra.mxu0 0
      %9642 = vmatprep.subr.bf16.mxu0 0
      %9643 = vmatpush1.bf16.msra.mxu0 0
      %9644 = vmatprep.subr.bf16.mxu0 0
      %9645 = vmatpush1.bf16.msra.mxu0 0
      %9646 = vmatprep.subr.bf16.mxu0 0
      %9647 = vmatpush1.bf16.msra.mxu0 0
      %9648 = vmatprep.subr.bf16.mxu0 0
      %9649 = vmatpush1.bf16.msra.mxu0 0
      %9650 = vmatprep.subr.bf16.mxu0 0
      %9651 = vmatpush1.bf16.msra.mxu0 0
      %9652 = vmatprep.subr.bf16.mxu0 0
      %9653 = vmatpush1.bf16.msra.mxu0 0
      %9654 = vmatprep.subr.bf16.mxu0 0
      %9655 = vmatpush1.bf16.msra.mxu0 0
      %9656 = vmatprep.mubr.bf16.mxu0 0
      %9657 = vmatmul.mubr.bf16.gmra.mrb[0].mxu0 %v6750
      %v9658 = vpop.f32.mrb[0].mxu0
      %v9659 = vadd.f32 %v9555, %v9658
      %v9660 = vpop.f32.mrb[0].mxu0
      %v9661 = vpop.f32.mrb[0].mxu0
      %v9662 = vadd.f32 %v9558, %v9661
      %v9663 = vpop.f32.mrb[0].mxu0
      %9664 = vmatprep.mubr.bf16.mxu0 0
      %9665 = vmatmul.mubr.bf16.gmra.mrb[0].mxu0 %v6775
      %v9666 = vpop.f32.mrb[0].mxu0
      %v9667 = vadd.f32 %v9563, %v9666
      %v9668 = vpop.f32.mrb[0].mxu0
      %v9669 = vpop.f32.mrb[0].mxu0
      %v9670 = vadd.f32 %v9566, %v9669
      %v9671 = vpop.f32.mrb[0].mxu0
      %9672 = vmatprep.mubr.bf16.mxu0 0
      %9673 = vmatmul.mubr.bf16.gmra.mrb[0].mxu0 %v6800
      %v9674 = vpop.f32.mrb[0].mxu0
      %v9675 = vadd.f32 %v9571, %v9674
      %v9676 = vpop.f32.mrb[0].mxu0
      %v9677 = vpop.f32.mrb[0].mxu0
      %v9678 = vadd.f32 %v9574, %v9677
      %v9679 = vpop.f32.mrb[0].mxu0
      %9680 = vmatprep.mubr.bf16.mxu0 0
      %9681 = vmatmul.mubr.bf16.gmra.mrb[0].mxu0 %v6825
      %v9682 = vpop.f32.mrb[0].mxu0
      %v9683 = vadd.f32 %v9579, %v9682
      %v9684 = vpop.f32.mrb[0].mxu0
      %v9685 = vpop.f32.mrb[0].mxu0
      %v9686 = vadd.f32 %v9582, %v9685
      %v9687 = vpop.f32.mrb[0].mxu0
      %9688 = vmatprep.mubr.bf16.mxu0 0
      %9689 = vmatmul.mubr.bf16.gmra.mrb[0].mxu0 %v6850
      %v9690 = vpop.f32.mrb[0].mxu0
      %v9691 = vadd.f32 %v9587, %v9690
      %v9692 = vpop.f32.mrb[0].mxu0
      %v9693 = vpop.f32.mrb[0].mxu0
      %v9694 = vadd.f32 %v9590, %v9693
      %v9695 = vpop.f32.mrb[0].mxu0
      %9696 = vmatprep.mubr.bf16.mxu0 0
      %9697 = vmatmul.mubr.bf16.gmra.mrb[0].mxu0 %v6875
      %v9698 = vpop.f32.mrb[0].mxu0
      %v9699 = vadd.f32 %v9595, %v9698
      %v9700 = vpop.f32.mrb[0].mxu0
      %v9701 = vpop.f32.mrb[0].mxu0
      %v9702 = vadd.f32 %v9598, %v9701
      %v9703 = vpop.f32.mrb[0].mxu0
      %9704 = vmatprep.mubr.bf16.mxu0 0
      %9705 = vmatmul.mubr.bf16.gmra.mrb[0].mxu0 %v6900
      %v9706 = vpop.f32.mrb[0].mxu0
      %v9707 = vadd.f32 %v9603, %v9706
      %v9708 = vpop.f32.mrb[0].mxu0
      %v9709 = vpop.f32.mrb[0].mxu0
      %v9710 = vadd.f32 %v9606, %v9709
      %v9711 = vpop.f32.mrb[0].mxu0
      %9712 = vmatprep.mubr.bf16.mxu0 0
      %9713 = vmatmul.mubr.bf16.gmra.mrb[0].mxu0 %v6925
      %v9714 = vpop.f32.mrb[0].mxu0
      %v9715 = vadd.f32 %v9611, %v9714
      %v9716 = vpop.f32.mrb[0].mxu0
      %v9717 = vpop.f32.mrb[0].mxu0
      %v9718 = vadd.f32 %v9614, %v9717
      %v9719 = vpop.f32.mrb[0].mxu0
      %9720 = vmatprep.mubr.bf16.mxu0 0
      %9721 = vmatmul.mubr.bf16.gmra.mrb[0].mxu0 %v6950
      %v9722 = vpop.f32.mrb[0].mxu0
      %v9723 = vadd.f32 %v9619, %v9722
      %v9724 = vpop.f32.mrb[0].mxu0
      %v9725 = vpop.f32.mrb[0].mxu0
      %v9726 = vpop.f32.mrb[0].mxu0
      %9727 = vdwg.mxu0
      %v9728 = vmax.f32 %v9659, 0.0
      %v9729 = vmax.f32 %v9662, 0.0
      %v9730 = vmax.f32 %v9667, 0.0
      %v9731 = vmax.f32 %v9670, 0.0
      %v9732 = vmax.f32 %v9675, 0.0
      %v9733 = vmax.f32 %v9678, 0.0
      %v9734 = vmax.f32 %v9683, 0.0
      %v9735 = vmax.f32 %v9686, 0.0
      %v9736 = vmax.f32 %v9691, 0.0
      %v9737 = vmax.f32 %v9694, 0.0
      %v9738 = vmax.f32 %v9699, 0.0
      %v9739 = vmax.f32 %v9702, 0.0
      %v9740 = vmax.f32 %v9707, 0.0
      %v9741 = vmax.f32 %v9710, 0.0
      %v9742 = vmax.f32 %v9715, 0.0
      %v9743 = vmax.f32 %v9718, 0.0
      %v9744 = vmax.f32 %v9723, 0.0
      %v9745 = vpack.c.bf16 %v9729, %v9728
      %v9746 = vpack.c.bf16 %v9731, %v9730
      %v9747 = vpack.c.bf16 %v9733, %v9732
      %v9748 = vpack.c.bf16 %v9735, %v9734
      %v9749 = vpack.c.bf16 %v9737, %v9736
      %v9750 = vpack.c.bf16 %v9739, %v9738
      %v9751 = vpack.c.bf16 %v9741, %v9740
      %v9752 = vpack.c.bf16 %v9743, %v9742
      %v9753 = vpack.c.bf16 %v9744, %v9744
      %v9754 = vld [vmem:[%s6] sm:$0xff]
      %v9755 = vld [vmem:[%s6 + $0x8] sm:$0xff]
      %v9756 = vld [vmem:[%s6 + $0x10] sm:$0xff]
      %v9757 = vld [vmem:[%s6 + $0x18] sm:$0xff]
      %v9762 = vunpack.c.l.b16 %v9754
      %v9763 = vunpack.c.h.b16 %v9754
      %v9764 = vunpack.c.l.b16 %v9755
      %v9765 = vunpack.c.h.b16 %v9755
      %v9766 = vunpack.c.l.b16 %v9756
      %v9767 = vunpack.c.h.b16 %v9756
      %v9768 = vunpack.c.l.b16 %v9757
      %v9769 = vunpack.c.h.b16 %v9757
      %v9770 = vpack.c.b16 %v9764, %v9762
      %v9771 = vpack.c.b16 %v9765, %v9763
      %v9772 = vpack.c.b16 %v9768, %v9766
      %v9773 = vpack.c.b16 %v9769, %v9767
      %vm9776 = vcmask 64512
      %v9778 = vsel %vm9776, %v9771, 0
      %v9781 = vsel %vm9776, %v9773, 0
      %vm9783 = vcmask 1043456
      %v9785 = vsel %vm9783, %v9753, 0
      %9787 = vmatprep.subr.bf16.mxu0 0
      %9788 = vmatpush1.bf16.msra.mxu0 %v9745
      %9789 = vmatprep.subr.bf16.mxu0 0
      %9790 = vmatpush1.bf16.msra.mxu0 %v9746
      %9791 = vmatprep.subr.bf16.mxu0 0
      %9792 = vmatpush1.bf16.msra.mxu0 %v9747
      %9793 = vmatprep.subr.bf16.mxu0 0
      %9794 = vmatpush1.bf16.msra.mxu0 %v9748
      %9795 = vmatprep.subr.bf16.mxu0 0
      %9796 = vmatpush1.bf16.msra.mxu0 %v9749
      %9797 = vmatprep.subr.bf16.mxu0 0
      %9798 = vmatpush1.bf16.msra.mxu0 %v9750
      %9799 = vmatprep.subr.bf16.mxu0 0
      %9800 = vmatpush1.bf16.msra.mxu0 %v9751
      %9801 = vmatprep.subr.bf16.mxu0 0
      %9802 = vmatpush1.bf16.msra.mxu0 %v9752
      %9803 = vmatprep.subr.bf16.mxu0 0
      %9804 = vmatpush1.bf16.msra.mxu0 %v9785
      %9805 = vmatprep.subr.bf16.mxu0 0
      %9806 = vmatpush1.bf16.msra.mxu0 0
      %9807 = vmatprep.subr.bf16.mxu0 0
      %9808 = vmatpush1.bf16.msra.mxu0 0
      %9809 = vmatprep.subr.bf16.mxu0 0
      %9810 = vmatpush1.bf16.msra.mxu0 0
      %9811 = vmatprep.subr.bf16.mxu0 0
      %9812 = vmatpush1.bf16.msra.mxu0 0
      %9813 = vmatprep.subr.bf16.mxu0 0
      %9814 = vmatpush1.bf16.msra.mxu0 0
      %9815 = vmatprep.subr.bf16.mxu0 0
      %9816 = vmatpush1.bf16.msra.mxu0 0
      %9817 = vmatprep.subr.bf16.mxu0 0
      %9818 = vmatpush1.bf16.msra.mxu0 0
      %9819 = vmatprep.mubr.bf16.mxu0 %v9778
      %9820 = vmatmul.mubr.bf16.gmra.mrb[0].mxu0 %v9770
      %v9821 = vpop.f32.mrb[0].mxu0
      %v9822 = vadd.f32 0.0, %v9821
      %v9823 = vpop.f32.mrb[0].mxu0
      %v9824 = vpop.f32.mrb[0].mxu0
      %v9825 = vadd.f32 0.0, %v9824
      %v9826 = vpop.f32.mrb[0].mxu0
      %9827 = vmatprep.mubr.bf16.mxu0 %v9781
      %9828 = vmatmul.mubr.bf16.gmra.mrb[0].mxu0 %v9772
      %v9829 = vpop.f32.mrb[0].mxu0
      %v9830 = vadd.f32 0.0, %v9829
      %v9831 = vpop.f32.mrb[0].mxu0
      %v9832 = vpop.f32.mrb[0].mxu0
      %v9833 = vadd.f32 0.0, %v9832
      %v9834 = vpop.f32.mrb[0].mxu0
      %9835 = vdwg.mxu0
      %9836 = vst [vmem:[%s278] sm:$0xff] %v9822
      %9837 = vst [vmem:[%s278 + $0x8] sm:$0xff] %v9825
      %9838 = vst [vmem:[%s278 + $0x10] sm:$0xff] %v9830
      %9839 = vst [vmem:[%s278 + $0x18] sm:$0xff] %v9833
      %p9840 = scmp.lt.s32.totalorder %s18, 1
      %s9841 = scalar_select %p9840, %s18, 1
      %s9842 = smul.addr %s9841, 4
      %s9843 = smul.addr %s9842, 8
      %s9844 = scalar_lea.vmem %s7, %s9843
      // Predicated region
      $region49: #{lenet_forward.2} parent=47 // pred_check
        %p9845 = pneg %p188
      $region50: #{lenet_forward.2} parent=47 // pred_check_branch
        %9847 = sbr.rel (%p9845) target = $region52
      $region51: #{lenet_forward.2} parent=47 // pred_region
        _
      $region52: #{lenet_forward.2} parent=47 // pred_fallthru
        _
    $region48: #{lenet_forward.2} parent=5 // pred_fallthru
      _
    %p9848 = scmp.le.s32.totalorder 2, %s13
    // Predicated region
    $region53: #{lenet_forward.2} parent=5 // pred_check
      %p9849 = pneg %p9848
    $region54: #{lenet_forward.2} parent=5 // pred_check_branch
      %9851 = sbr.rel (%p9849) target = $region56
    $region55: #{lenet_forward.2} parent=5 // pred_region
      %s9852 = ssub.s32 %s13, 2
      // Predicated region
      $region57: #{lenet_forward.2} parent=55 // pred_check
        %p9853 = pneg %p194
      $region58: #{lenet_forward.2} parent=55 // pred_check_branch
        %9855 = sbr.rel (%p9853) target = $region60
      $region59: #{lenet_forward.2} parent=55 // pred_region
        %p9856 = scmp.lt.s32.totalorder %s19, 1
        %s9857 = scalar_select %p9856, %s19, 1
        %s9858 = smul.addr %s9857, 4
        %s9859 = smul.addr %s9858, 8
        %s9860 = scalar_lea.vmem %s7, %s9859
      $region60: #{lenet_forward.2} parent=55 // pred_fallthru
        _
    $region56: #{lenet_forward.2} parent=5 // pred_fallthru
      _
  $region6: #{lenet_forward.2} parent=0 // loop_footer
    %s17 = sadd.s32 1, %s13
  $region7: #{lenet_forward.2} parent=0 // loop_footer_branch
    %12 = sbr.rel target = $region3
  $region8: #{lenet_forward.2} parent=0 // loop_exit
    _

</llo_original>
